<compile_context>
chip_gen: v6e
topology: v6e:2x2x1
jax: 0.10.0
libtpu: 0.0.40
codegen_flags: <defaults>
</compile_context>

<pallas_src>
import math
import jax
import jax.numpy as jnp
import numpy as np
from jax.experimental import pallas as pl
from jax.experimental.pallas import tpu as pltpu  # noqa: F401  (TPU backend)

# ----------------------------- config ---------------------------------------
VOCAB = 64          # config.vocab_size
N_SEG = 2           # segment types
D = 32              # config.model_dim
S = 8               # sequence length
B = 2               # batch size
H = 4               # num attention heads
HD = D // H         # head dim
FFN = 64            # feed-forward hidden dim
N_LAYERS = 2        # config.num_hidden_layers
EPS = 1e-5          # nn.LayerNorm default eps
F32 = jnp.float32
BS = B * S

# Packed small-vector layout: small[l, row, lane]
#   rows 0..11 : qkv bias for (tensor t, head h) at row t*H + h, lanes [0:HD]
ROW_BO = 12         # output-projection bias,  lanes [0:D]
ROW_B1 = 13         # FFN first bias,          lanes [0:FFN]
ROW_B2 = 14         # FFN second bias,         lanes [0:D]
ROW_LN1G = 15       # LN1 gamma
ROW_LN1B = 16       # LN1 beta
ROW_LN2G = 17       # LN2 gamma
ROW_LN2B = 18       # LN2 beta
SMALL_ROWS = 24
SMALL_COLS = 64     # widest vector is FFN = 64

# TODO(synk): nn.Dropout omitted (identity in eval mode); attention_mask=None
# not supported; token/segment embedding gathers + embedding sum are wrapper
# glue — all dense math (QKV/attention/FFN/LayerNorm) is inside the kernel.


# ----------------------------- fused kernel ----------------------------------
def encoder_kernel(x_ref, wqkv_ref, wo_ref, w1_ref, w2_ref, small_ref, o_ref):
    x = x_ref[...]                                   # (BS, D) activation slab
    scale = 1.0 / math.sqrt(HD)

    for li in range(N_LAYERS):                       # static unroll over layers
        def vec(row, width):
            # static (1, width) slice of the packed per-layer small vectors
            return small_ref[li, row:row + 1, 0:width]

        # ---- per-head Q/K/V projections: clean matmuls, no lane slicing ----
        q_heads, k_heads, v_heads = [], [], []
        for h in range(H):                           # static unroll over heads
            qh = jnp.dot(x, wqkv_ref[li, 0, h],
                         preferred_element_type=F32) + vec(0 * H + h, HD)
            kh = jnp.dot(x, wqkv_ref[li, 1, h],
                         preferred_element_type=F32) + vec(1 * H + h, HD)
            vh = jnp.dot(x, wqkv_ref[li, 2, h],
                         preferred_element_type=F32) + vec(2 * H + h, HD)
            q_heads.append(qh.reshape(B, S, HD))     # leading-dim split only
            k_heads.append(kh.reshape(B, S, HD))
            v_heads.append(vh.reshape(B, S, HD))

        # ---- fold heads into the batch axis: (H*B, S, HD) -------------------
        q = jnp.stack(q_heads, axis=0).reshape(H * B, S, HD)
        k = jnp.stack(k_heads, axis=0).reshape(H * B, S, HD)
        v = jnp.stack(v_heads, axis=0).reshape(H * B, S, HD)

        # ---- single batched attention einsum pair + single softmax ----------
        s = jnp.einsum("bqd,bkd->bqk", q, k,
                       preferred_element_type=F32) * scale      # (H*B, S, S)
        s = s - jnp.max(s, axis=-1, keepdims=True)
        p = jnp.exp(s)
        # TODO(synk): approx=True (EUP vrcp) is cheaper but may breach the
        # 1e-4 tolerance gate; keep exact reciprocal.
        p = p * pl.reciprocal(jnp.sum(p, axis=-1, keepdims=True), approx=False)
        ctx = jnp.einsum("bqk,bkd->bqd", p, v,
                         preferred_element_type=F32)             # (H*B, S, HD)
        ctx = ctx.reshape(H, B, S, HD)               # leading-dim split only

        # ---- output projection accumulated per head (no concatenate) --------
        attn = vec(ROW_BO, D)                        # (1, D) bias, broadcasts
        for h in range(H):
            ch = ctx[h].reshape(BS, HD)              # (B,S,HD) -> (BS,HD)
            attn = attn + jnp.dot(ch, wo_ref[li, h],
                                  preferred_element_type=F32)

        # ---- residual + post-LN ---------------------------------------------
        y = x + attn
        mu = jnp.mean(y, axis=-1, keepdims=True)
        var = jnp.mean((y - mu) ** 2, axis=-1, keepdims=True)
        x = ((y - mu) * jax.lax.rsqrt(var + EPS) * vec(ROW_LN1G, D)
             + vec(ROW_LN1B, D))

        # ---- FFN (ReLU MLP) + residual + post-LN -----------------------------
        hmid = jnp.maximum(
            jnp.dot(x, w1_ref[li], preferred_element_type=F32) + vec(ROW_B1, FFN),
            0.0)
        f = jnp.dot(hmid, w2_ref[li], preferred_element_type=F32) + vec(ROW_B2, D)
        y2 = x + f
        mu2 = jnp.mean(y2, axis=-1, keepdims=True)
        var2 = jnp.mean((y2 - mu2) ** 2, axis=-1, keepdims=True)
        x = ((y2 - mu2) * jax.lax.rsqrt(var2 + EPS) * vec(ROW_LN2G, D)
             + vec(ROW_LN2B, D))

    o_ref[...] = x


# ----------------------------- wrapper ---------------------------------------
def encoder_forward(input_tokens, segment_ids, kp):
    # Embedding gathers + embedding sum are plain-JAX glue (per perf review):
    # pass ONE activation slab into the kernel instead of three.
    emb = jnp.take(kp["emb_table"], input_tokens, axis=0)        # (B, S, D)
    seg = jnp.take(kp["seg_table"], segment_ids, axis=0)         # (B, S, D)
    x0 = (emb + kp["pe"][None] + seg).reshape(BS, D)

    out = pl.pallas_call(
        encoder_kernel,
        out_shape=jax.ShapeDtypeStruct((BS, D), F32),
        # Gridless single invocation: 6 whole-array operands resident in VMEM
        # (total footprint ~100 KiB << VMEM on v5e/v6e/v7x).
    )(x0, kp["wqkv"], kp["wo"], kp["w1"], kp["w2"], kp["small"])
    return out.reshape(B, S, D)


# ----------------------------- param packing ---------------------------------
def prepare_kernel_params(params):
    """Repack reference-layout params into the kernel layout (done once,
    outside jit): per-head weight blocks + one packed small-vector array."""
    # (L, D, 3D) -> (L, 3, H, D, HD): column index = t*D + h*HD + e
    wqkv_h = (params["wqkv"].reshape(N_LAYERS, D, 3, H, HD)
              .transpose(0, 2, 3, 1, 4))
    # (L, D, D) -> (L, H, HD, D): row index = h*HD + e
    wo_h = params["wo"].reshape(N_LAYERS, H, HD, D)

    small = np.zeros((N_LAYERS, SMALL_ROWS, SMALL_COLS), np.float32)
    bqkv = np.asarray(params["bqkv"]).reshape(N_LAYERS, 3, H, HD)
    for t in range(3):
        for h in range(H):
            small[:, t * H + h, :HD] = bqkv[:, t, h, :]
    small[:, ROW_BO, :D] = np.asarray(params["bo"])[:, 0, :]
    small[:, ROW_B1, :FFN] = np.asarray(params["b1"])[:, 0, :]
    small[:, ROW_B2, :D] = np.asarray(params["b2"])[:, 0, :]
    small[:, ROW_LN1G, :D] = np.asarray(params["ln1_g"])[:, 0, :]
    small[:, ROW_LN1B, :D] = np.asarray(params["ln1_b"])[:, 0, :]
    small[:, ROW_LN2G, :D] = np.asarray(params["ln2_g"])[:, 0, :]
    small[:, ROW_LN2B, :D] = np.asarray(params["ln2_b"])[:, 0, :]

    return dict(emb_table=params["emb_table"], seg_table=params["seg_table"],
                pe=params["pe"], wqkv=wqkv_h, wo=wo_h,
                w1=params["w1"], w2=params["w2"], small=jnp.asarray(small))


# ----------------------------- reference (pure JAX) ---------------------------
def _ln(y, g, b):
    mu = jnp.mean(y, axis=-1, keepdims=True)
    var = jnp.mean((y - mu) ** 2, axis=-1, keepdims=True)
    return (y - mu) * jax.lax.rsqrt(var + EPS) * g + b


def encoder_forward_ref(input_tokens, segment_ids, params):
    x = (jnp.take(params["emb_table"], input_tokens, axis=0)
         + params["pe"][None]
         + jnp.take(params["seg_table"], segment_ids, axis=0))
    for li in range(N_LAYERS):
        qkv = x @ params["wqkv"][li] + params["bqkv"][li]
        q, k, v = qkv[..., :D], qkv[..., D:2 * D], qkv[..., 2 * D:]
        q = q.reshape(B, S, H, HD).transpose(0, 2, 1, 3)
        k = k.reshape(B, S, H, HD).transpose(0, 2, 1, 3)
        v = v.reshape(B, S, H, HD).transpose(0, 2, 1, 3)
        s = jnp.einsum("bhqd,bhkd->bhqk", q, k) / math.sqrt(HD)
        a = jax.nn.softmax(s, axis=-1)
        ctx = jnp.einsum("bhqk,bhkd->bhqd", a, v).transpose(0, 2, 1, 3)
        ctx = ctx.reshape(B, S, D)
        x = _ln(x + ctx @ params["wo"][li] + params["bo"][li],
                params["ln1_g"][li], params["ln1_b"][li])
        f = (jnp.maximum(x @ params["w1"][li] + params["b1"][li], 0.0)
             @ params["w2"][li] + params["b2"][li])
        x = _ln(x + f, params["ln2_g"][li], params["ln2_b"][li])
    return x


# ----------------------------- param init ------------------------------------
def make_params(key):
    def normal(k, shape, scale=0.05):
        return (scale * jax.random.normal(k, shape)).astype(F32)

    keys = jax.random.split(key, 3 + N_LAYERS)
    emb_table = normal(keys[0], (VOCAB, D), scale=0.5)
    seg_table = normal(keys[1], (N_SEG, D), scale=0.5)

    # sinusoidal positional encoding
    pos = jnp.arange(S, dtype=F32)[:, None]
    i = jnp.arange(0, D, 2, dtype=F32)
    div = jnp.exp(-math.log(10000.0) * i / D)
    pe = jnp.zeros((S, D), F32)
    pe = pe.at[:, 0::2].set(jnp.sin(pos * div))
    pe = pe.at[:, 1::2].set(jnp.cos(pos * div))

    lists = {name: [] for name in
             ["wqkv", "bqkv", "wo", "bo", "ln1_g", "ln1_b",
              "w1", "b1", "w2", "b2", "ln2_g", "ln2_b"]}
    for li in range(N_LAYERS):
        k = jax.random.split(keys[3 + li], 12)
        lists["wqkv"].append(normal(k[0], (D, 3 * D)))
        lists["bqkv"].append(normal(k[1], (1, 3 * D), 0.02))
        lists["wo"].append(normal(k[2], (D, D)))
        lists["bo"].append(normal(k[3], (1, D), 0.02))
        lists["ln1_g"].append(1.0 + normal(k[4], (1, D), 0.1))
        lists["ln1_b"].append(normal(k[5], (1, D), 0.1))
        lists["w1"].append(normal(k[6], (D, FFN)))
        lists["b1"].append(normal(k[7], (1, FFN), 0.02))
        lists["w2"].append(normal(k[8], (FFN, D)))
        lists["b2"].append(normal(k[9], (1, D), 0.02))
        lists["ln2_g"].append(1.0 + normal(k[10], (1, D), 0.1))
        lists["ln2_b"].append(normal(k[11], (1, D), 0.1))

    params = dict(emb_table=emb_table, seg_table=seg_table, pe=pe)
    for name, vals in lists.items():
        params[name] = jnp.stack(vals, axis=0)      # leading layer axis
    return params


# ----------------------------- main -------------------------------------------
if __name__ == "__main__":
    key = jax.random.PRNGKey(0)
    kp_key, kt, ks = jax.random.split(key, 3)
    params = make_params(kp_key)
    kernel_params = prepare_kernel_params(params)     # packed once, outside jit

    input_tokens = jax.random.randint(kt, (B, S), 0, VOCAB, dtype=jnp.int32)
    segment_ids = jax.random.randint(ks, (B, S), 0, N_SEG, dtype=jnp.int32)

    fwd = jax.jit(encoder_forward)
    out = jax.block_until_ready(fwd(input_tokens, segment_ids, kernel_params))

    ref = jax.block_until_ready(
        encoder_forward_ref(input_tokens, segment_ids, params))
    assert out.shape == (B, S, D) and out.dtype == F32
    np.testing.assert_allclose(np.asarray(out), np.asarray(ref),
                               rtol=1e-4, atol=1e-4)

    print("KERNEL_OK")
</pallas_src>

<mosaic_0001>
module attributes {stable_mosaic.version = 11 : i64} {
  func.func @encoder_kernel(%arg0: memref<16x32xf32, #tpu.memory_space<vmem>>, %arg1: memref<2x3x4x32x8xf32, #tpu.memory_space<vmem>>, %arg2: memref<2x4x8x32xf32, #tpu.memory_space<vmem>>, %arg3: memref<2x32x64xf32, #tpu.memory_space<vmem>>, %arg4: memref<2x64x32xf32, #tpu.memory_space<vmem>>, %arg5: memref<2x24x64xf32, #tpu.memory_space<vmem>>, %arg6: memref<16x32xf32, #tpu.memory_space<vmem>>) attributes {dimension_semantics = [], scalar_prefetch = 0 : i64, scratch_operands = 0 : i64, tpu.core_type = #tpu.core_type<tc>} {
    %c0 = arith.constant 0 : index
    %c0_0 = arith.constant 0 : index
    %0 = vector.load %arg0[%c0, %c0_0] : memref<16x32xf32, #tpu.memory_space<vmem>>, vector<16x32xf32>
    %c0_1 = arith.constant 0 : index
    %c0_2 = arith.constant 0 : index
    %c0_3 = arith.constant 0 : index
    %c0_4 = arith.constant 0 : index
    %c0_5 = arith.constant 0 : index
    %1 = vector.load %arg1[%c0_1, %c0_2, %c0_3, %c0_4, %c0_5] : memref<2x3x4x32x8xf32, #tpu.memory_space<vmem>>, vector<1x1x1x32x8xf32>
    %2 = vector.shape_cast %1 : vector<1x1x1x32x8xf32> to vector<32x8xf32>
    %cst = arith.constant dense<0.000000e+00> : vector<16x8xf32>
    %3 = tpu.matmul %0, %2, %cst {dimension_numbers = #tpu.dot_dimension_numbers<[1], [0], [0], [1], [0, 0, 1, 1], [], []>} : vector<16x32xf32>, vector<32x8xf32>, vector<16x8xf32> -> vector<16x8xf32>
    %c0_6 = arith.constant 0 : index
    %c0_7 = arith.constant 0 : index
    %c0_8 = arith.constant 0 : index
    %4 = vector.load %arg5[%c0_6, %c0_7, %c0_8] : memref<2x24x64xf32, #tpu.memory_space<vmem>>, vector<1x1x8xf32>
    %5 = vector.shape_cast %4 : vector<1x1x8xf32> to vector<1x8xf32>
    %6 = vector.broadcast %5 : vector<1x8xf32> to vector<16x8xf32>
    %7 = arith.addf %3, %6 : vector<16x8xf32>
    %c0_9 = arith.constant 0 : index
    %c1 = arith.constant 1 : index
    %c0_10 = arith.constant 0 : index
    %c0_11 = arith.constant 0 : index
    %c0_12 = arith.constant 0 : index
    %8 = vector.load %arg1[%c0_9, %c1, %c0_10, %c0_11, %c0_12] : memref<2x3x4x32x8xf32, #tpu.memory_space<vmem>>, vector<1x1x1x32x8xf32>
    %9 = vector.shape_cast %8 : vector<1x1x1x32x8xf32> to vector<32x8xf32>
    %cst_13 = arith.constant dense<0.000000e+00> : vector<16x8xf32>
    %10 = tpu.matmul %0, %9, %cst_13 {dimension_numbers = #tpu.dot_dimension_numbers<[1], [0], [0], [1], [0, 0, 1, 1], [], []>} : vector<16x32xf32>, vector<32x8xf32>, vector<16x8xf32> -> vector<16x8xf32>
    %c0_14 = arith.constant 0 : index
    %c4 = arith.constant 4 : index
    %c0_15 = arith.constant 0 : index
    %11 = vector.load %arg5[%c0_14, %c4, %c0_15] : memref<2x24x64xf32, #tpu.memory_space<vmem>>, vector<1x1x8xf32>
    %12 = vector.shape_cast %11 : vector<1x1x8xf32> to vector<1x8xf32>
    %13 = vector.broadcast %12 : vector<1x8xf32> to vector<16x8xf32>
    %14 = arith.addf %10, %13 : vector<16x8xf32>
    %c0_16 = arith.constant 0 : index
    %c2 = arith.constant 2 : index
    %c0_17 = arith.constant 0 : index
    %c0_18 = arith.constant 0 : index
    %c0_19 = arith.constant 0 : index
    %15 = vector.load %arg1[%c0_16, %c2, %c0_17, %c0_18, %c0_19] : memref<2x3x4x32x8xf32, #tpu.memory_space<vmem>>, vector<1x1x1x32x8xf32>
    %16 = vector.shape_cast %15 : vector<1x1x1x32x8xf32> to vector<32x8xf32>
    %cst_20 = arith.constant dense<0.000000e+00> : vector<16x8xf32>
    %17 = tpu.matmul %0, %16, %cst_20 {dimension_numbers = #tpu.dot_dimension_numbers<[1], [0], [0], [1], [0, 0, 1, 1], [], []>} : vector<16x32xf32>, vector<32x8xf32>, vector<16x8xf32> -> vector<16x8xf32>
    %c0_21 = arith.constant 0 : index
    %c8 = arith.constant 8 : index
    %c0_22 = arith.constant 0 : index
    %18 = vector.load %arg5[%c0_21, %c8, %c0_22] : memref<2x24x64xf32, #tpu.memory_space<vmem>>, vector<1x1x8xf32>
    %19 = vector.shape_cast %18 : vector<1x1x8xf32> to vector<1x8xf32>
    %20 = vector.broadcast %19 : vector<1x8xf32> to vector<16x8xf32>
    %21 = arith.addf %17, %20 : vector<16x8xf32>
    %22 = vector.shape_cast %7 : vector<16x8xf32> to vector<2x8x8xf32>
    %23 = vector.shape_cast %14 : vector<16x8xf32> to vector<2x8x8xf32>
    %24 = vector.shape_cast %21 : vector<16x8xf32> to vector<2x8x8xf32>
    %c0_23 = arith.constant 0 : index
    %c0_24 = arith.constant 0 : index
    %c1_25 = arith.constant 1 : index
    %c0_26 = arith.constant 0 : index
    %c0_27 = arith.constant 0 : index
    %25 = vector.load %arg1[%c0_23, %c0_24, %c1_25, %c0_26, %c0_27] : memref<2x3x4x32x8xf32, #tpu.memory_space<vmem>>, vector<1x1x1x32x8xf32>
    %26 = vector.shape_cast %25 : vector<1x1x1x32x8xf32> to vector<32x8xf32>
    %cst_28 = arith.constant dense<0.000000e+00> : vector<16x8xf32>
    %27 = tpu.matmul %0, %26, %cst_28 {dimension_numbers = #tpu.dot_dimension_numbers<[1], [0], [0], [1], [0, 0, 1, 1], [], []>} : vector<16x32xf32>, vector<32x8xf32>, vector<16x8xf32> -> vector<16x8xf32>
    %c0_29 = arith.constant 0 : index
    %c1_30 = arith.constant 1 : index
    %c0_31 = arith.constant 0 : index
    %28 = vector.load %arg5[%c0_29, %c1_30, %c0_31] : memref<2x24x64xf32, #tpu.memory_space<vmem>>, vector<1x1x8xf32>
    %29 = vector.shape_cast %28 : vector<1x1x8xf32> to vector<1x8xf32>
    %30 = vector.broadcast %29 : vector<1x8xf32> to vector<16x8xf32>
    %31 = arith.addf %27, %30 : vector<16x8xf32>
    %c0_32 = arith.constant 0 : index
    %c1_33 = arith.constant 1 : index
    %c1_34 = arith.constant 1 : index
    %c0_35 = arith.constant 0 : index
    %c0_36 = arith.constant 0 : index
    %32 = vector.load %arg1[%c0_32, %c1_33, %c1_34, %c0_35, %c0_36] : memref<2x3x4x32x8xf32, #tpu.memory_space<vmem>>, vector<1x1x1x32x8xf32>
    %33 = vector.shape_cast %32 : vector<1x1x1x32x8xf32> to vector<32x8xf32>
    %cst_37 = arith.constant dense<0.000000e+00> : vector<16x8xf32>
    %34 = tpu.matmul %0, %33, %cst_37 {dimension_numbers = #tpu.dot_dimension_numbers<[1], [0], [0], [1], [0, 0, 1, 1], [], []>} : vector<16x32xf32>, vector<32x8xf32>, vector<16x8xf32> -> vector<16x8xf32>
    %c0_38 = arith.constant 0 : index
    %c5 = arith.constant 5 : index
    %c0_39 = arith.constant 0 : index
    %35 = vector.load %arg5[%c0_38, %c5, %c0_39] : memref<2x24x64xf32, #tpu.memory_space<vmem>>, vector<1x1x8xf32>
    %36 = vector.shape_cast %35 : vector<1x1x8xf32> to vector<1x8xf32>
    %37 = vector.broadcast %36 : vector<1x8xf32> to vector<16x8xf32>
    %38 = arith.addf %34, %37 : vector<16x8xf32>
    %c0_40 = arith.constant 0 : index
    %c2_41 = arith.constant 2 : index
    %c1_42 = arith.constant 1 : index
    %c0_43 = arith.constant 0 : index
    %c0_44 = arith.constant 0 : index
    %39 = vector.load %arg1[%c0_40, %c2_41, %c1_42, %c0_43, %c0_44] : memref<2x3x4x32x8xf32, #tpu.memory_space<vmem>>, vector<1x1x1x32x8xf32>
    %40 = vector.shape_cast %39 : vector<1x1x1x32x8xf32> to vector<32x8xf32>
    %cst_45 = arith.constant dense<0.000000e+00> : vector<16x8xf32>
    %41 = tpu.matmul %0, %40, %cst_45 {dimension_numbers = #tpu.dot_dimension_numbers<[1], [0], [0], [1], [0, 0, 1, 1], [], []>} : vector<16x32xf32>, vector<32x8xf32>, vector<16x8xf32> -> vector<16x8xf32>
    %c0_46 = arith.constant 0 : index
    %c9 = arith.constant 9 : index
    %c0_47 = arith.constant 0 : index
    %42 = vector.load %arg5[%c0_46, %c9, %c0_47] : memref<2x24x64xf32, #tpu.memory_space<vmem>>, vector<1x1x8xf32>
    %43 = vector.shape_cast %42 : vector<1x1x8xf32> to vector<1x8xf32>
    %44 = vector.broadcast %43 : vector<1x8xf32> to vector<16x8xf32>
    %45 = arith.addf %41, %44 : vector<16x8xf32>
    %46 = vector.shape_cast %31 : vector<16x8xf32> to vector<2x8x8xf32>
    %47 = vector.shape_cast %38 : vector<16x8xf32> to vector<2x8x8xf32>
    %48 = vector.shape_cast %45 : vector<16x8xf32> to vector<2x8x8xf32>
    %c0_48 = arith.constant 0 : index
    %c0_49 = arith.constant 0 : index
    %c2_50 = arith.constant 2 : index
    %c0_51 = arith.constant 0 : index
    %c0_52 = arith.constant 0 : index
    %49 = vector.load %arg1[%c0_48, %c0_49, %c2_50, %c0_51, %c0_52] : memref<2x3x4x32x8xf32, #tpu.memory_space<vmem>>, vector<1x1x1x32x8xf32>
    %50 = vector.shape_cast %49 : vector<1x1x1x32x8xf32> to vector<32x8xf32>
    %cst_53 = arith.constant dense<0.000000e+00> : vector<16x8xf32>
    %51 = tpu.matmul %0, %50, %cst_53 {dimension_numbers = #tpu.dot_dimension_numbers<[1], [0], [0], [1], [0, 0, 1, 1], [], []>} : vector<16x32xf32>, vector<32x8xf32>, vector<16x8xf32> -> vector<16x8xf32>
    %c0_54 = arith.constant 0 : index
    %c2_55 = arith.constant 2 : index
    %c0_56 = arith.constant 0 : index
    %52 = vector.load %arg5[%c0_54, %c2_55, %c0_56] : memref<2x24x64xf32, #tpu.memory_space<vmem>>, vector<1x1x8xf32>
    %53 = vector.shape_cast %52 : vector<1x1x8xf32> to vector<1x8xf32>
    %54 = vector.broadcast %53 : vector<1x8xf32> to vector<16x8xf32>
    %55 = arith.addf %51, %54 : vector<16x8xf32>
    %c0_57 = arith.constant 0 : index
    %c1_58 = arith.constant 1 : index
    %c2_59 = arith.constant 2 : index
    %c0_60 = arith.constant 0 : index
    %c0_61 = arith.constant 0 : index
    %56 = vector.load %arg1[%c0_57, %c1_58, %c2_59, %c0_60, %c0_61] : memref<2x3x4x32x8xf32, #tpu.memory_space<vmem>>, vector<1x1x1x32x8xf32>
    %57 = vector.shape_cast %56 : vector<1x1x1x32x8xf32> to vector<32x8xf32>
    %cst_62 = arith.constant dense<0.000000e+00> : vector<16x8xf32>
    %58 = tpu.matmul %0, %57, %cst_62 {dimension_numbers = #tpu.dot_dimension_numbers<[1], [0], [0], [1], [0, 0, 1, 1], [], []>} : vector<16x32xf32>, vector<32x8xf32>, vector<16x8xf32> -> vector<16x8xf32>
    %c0_63 = arith.constant 0 : index
    %c6 = arith.constant 6 : index
    %c0_64 = arith.constant 0 : index
    %59 = vector.load %arg5[%c0_63, %c6, %c0_64] : memref<2x24x64xf32, #tpu.memory_space<vmem>>, vector<1x1x8xf32>
    %60 = vector.shape_cast %59 : vector<1x1x8xf32> to vector<1x8xf32>
    %61 = vector.broadcast %60 : vector<1x8xf32> to vector<16x8xf32>
    %62 = arith.addf %58, %61 : vector<16x8xf32>
    %c0_65 = arith.constant 0 : index
    %c2_66 = arith.constant 2 : index
    %c2_67 = arith.constant 2 : index
    %c0_68 = arith.constant 0 : index
    %c0_69 = arith.constant 0 : index
    %63 = vector.load %arg1[%c0_65, %c2_66, %c2_67, %c0_68, %c0_69] : memref<2x3x4x32x8xf32, #tpu.memory_space<vmem>>, vector<1x1x1x32x8xf32>
    %64 = vector.shape_cast %63 : vector<1x1x1x32x8xf32> to vector<32x8xf32>
    %cst_70 = arith.constant dense<0.000000e+00> : vector<16x8xf32>
    %65 = tpu.matmul %0, %64, %cst_70 {dimension_numbers = #tpu.dot_dimension_numbers<[1], [0], [0], [1], [0, 0, 1, 1], [], []>} : vector<16x32xf32>, vector<32x8xf32>, vector<16x8xf32> -> vector<16x8xf32>
    %c0_71 = arith.constant 0 : index
    %c10 = arith.constant 10 : index
    %c0_72 = arith.constant 0 : index
    %66 = vector.load %arg5[%c0_71, %c10, %c0_72] : memref<2x24x64xf32, #tpu.memory_space<vmem>>, vector<1x1x8xf32>
    %67 = vector.shape_cast %66 : vector<1x1x8xf32> to vector<1x8xf32>
    %68 = vector.broadcast %67 : vector<1x8xf32> to vector<16x8xf32>
    %69 = arith.addf %65, %68 : vector<16x8xf32>
    %70 = vector.shape_cast %55 : vector<16x8xf32> to vector<2x8x8xf32>
    %71 = vector.shape_cast %62 : vector<16x8xf32> to vector<2x8x8xf32>
    %72 = vector.shape_cast %69 : vector<16x8xf32> to vector<2x8x8xf32>
    %c0_73 = arith.constant 0 : index
    %c0_74 = arith.constant 0 : index
    %c3 = arith.constant 3 : index
    %c0_75 = arith.constant 0 : index
    %c0_76 = arith.constant 0 : index
    %73 = vector.load %arg1[%c0_73, %c0_74, %c3, %c0_75, %c0_76] : memref<2x3x4x32x8xf32, #tpu.memory_space<vmem>>, vector<1x1x1x32x8xf32>
    %74 = vector.shape_cast %73 : vector<1x1x1x32x8xf32> to vector<32x8xf32>
    %cst_77 = arith.constant dense<0.000000e+00> : vector<16x8xf32>
    %75 = tpu.matmul %0, %74, %cst_77 {dimension_numbers = #tpu.dot_dimension_numbers<[1], [0], [0], [1], [0, 0, 1, 1], [], []>} : vector<16x32xf32>, vector<32x8xf32>, vector<16x8xf32> -> vector<16x8xf32>
    %c0_78 = arith.constant 0 : index
    %c3_79 = arith.constant 3 : index
    %c0_80 = arith.constant 0 : index
    %76 = vector.load %arg5[%c0_78, %c3_79, %c0_80] : memref<2x24x64xf32, #tpu.memory_space<vmem>>, vector<1x1x8xf32>
    %77 = vector.shape_cast %76 : vector<1x1x8xf32> to vector<1x8xf32>
    %78 = vector.broadcast %77 : vector<1x8xf32> to vector<16x8xf32>
    %79 = arith.addf %75, %78 : vector<16x8xf32>
    %c0_81 = arith.constant 0 : index
    %c1_82 = arith.constant 1 : index
    %c3_83 = arith.constant 3 : index
    %c0_84 = arith.constant 0 : index
    %c0_85 = arith.constant 0 : index
    %80 = vector.load %arg1[%c0_81, %c1_82, %c3_83, %c0_84, %c0_85] : memref<2x3x4x32x8xf32, #tpu.memory_space<vmem>>, vector<1x1x1x32x8xf32>
    %81 = vector.shape_cast %80 : vector<1x1x1x32x8xf32> to vector<32x8xf32>
    %cst_86 = arith.constant dense<0.000000e+00> : vector<16x8xf32>
    %82 = tpu.matmul %0, %81, %cst_86 {dimension_numbers = #tpu.dot_dimension_numbers<[1], [0], [0], [1], [0, 0, 1, 1], [], []>} : vector<16x32xf32>, vector<32x8xf32>, vector<16x8xf32> -> vector<16x8xf32>
    %c0_87 = arith.constant 0 : index
    %c7 = arith.constant 7 : index
    %c0_88 = arith.constant 0 : index
    %83 = vector.load %arg5[%c0_87, %c7, %c0_88] : memref<2x24x64xf32, #tpu.memory_space<vmem>>, vector<1x1x8xf32>
    %84 = vector.shape_cast %83 : vector<1x1x8xf32> to vector<1x8xf32>
    %85 = vector.broadcast %84 : vector<1x8xf32> to vector<16x8xf32>
    %86 = arith.addf %82, %85 : vector<16x8xf32>
    %c0_89 = arith.constant 0 : index
    %c2_90 = arith.constant 2 : index
    %c3_91 = arith.constant 3 : index
    %c0_92 = arith.constant 0 : index
    %c0_93 = arith.constant 0 : index
    %87 = vector.load %arg1[%c0_89, %c2_90, %c3_91, %c0_92, %c0_93] : memref<2x3x4x32x8xf32, #tpu.memory_space<vmem>>, vector<1x1x1x32x8xf32>
    %88 = vector.shape_cast %87 : vector<1x1x1x32x8xf32> to vector<32x8xf32>
    %cst_94 = arith.constant dense<0.000000e+00> : vector<16x8xf32>
    %89 = tpu.matmul %0, %88, %cst_94 {dimension_numbers = #tpu.dot_dimension_numbers<[1], [0], [0], [1], [0, 0, 1, 1], [], []>} : vector<16x32xf32>, vector<32x8xf32>, vector<16x8xf32> -> vector<16x8xf32>
    %c0_95 = arith.constant 0 : index
    %c11 = arith.constant 11 : index
    %c0_96 = arith.constant 0 : index
    %90 = vector.load %arg5[%c0_95, %c11, %c0_96] : memref<2x24x64xf32, #tpu.memory_space<vmem>>, vector<1x1x8xf32>
    %91 = vector.shape_cast %90 : vector<1x1x8xf32> to vector<1x8xf32>
    %92 = vector.broadcast %91 : vector<1x8xf32> to vector<16x8xf32>
    %93 = arith.addf %89, %92 : vector<16x8xf32>
    %94 = vector.shape_cast %79 : vector<16x8xf32> to vector<2x8x8xf32>
    %95 = vector.shape_cast %86 : vector<16x8xf32> to vector<2x8x8xf32>
    %96 = vector.shape_cast %93 : vector<16x8xf32> to vector<2x8x8xf32>
    %97 = vector.shape_cast %22 : vector<2x8x8xf32> to vector<1x2x8x8xf32>
    %98 = vector.shape_cast %46 : vector<2x8x8xf32> to vector<1x2x8x8xf32>
    %99 = vector.shape_cast %70 : vector<2x8x8xf32> to vector<1x2x8x8xf32>
    %100 = vector.shape_cast %94 : vector<2x8x8xf32> to vector<1x2x8x8xf32>
    %101 = tpu.concatenate %97, %98, %99, %100 in 0 : vector<1x2x8x8xf32>, vector<1x2x8x8xf32>, vector<1x2x8x8xf32>, vector<1x2x8x8xf32> -> vector<4x2x8x8xf32>
    %102 = vector.shape_cast %101 : vector<4x2x8x8xf32> to vector<8x8x8xf32>
    %103 = vector.shape_cast %23 : vector<2x8x8xf32> to vector<1x2x8x8xf32>
    %104 = vector.shape_cast %47 : vector<2x8x8xf32> to vector<1x2x8x8xf32>
    %105 = vector.shape_cast %71 : vector<2x8x8xf32> to vector<1x2x8x8xf32>
    %106 = vector.shape_cast %95 : vector<2x8x8xf32> to vector<1x2x8x8xf32>
    %107 = tpu.concatenate %103, %104, %105, %106 in 0 : vector<1x2x8x8xf32>, vector<1x2x8x8xf32>, vector<1x2x8x8xf32>, vector<1x2x8x8xf32> -> vector<4x2x8x8xf32>
    %108 = vector.shape_cast %107 : vector<4x2x8x8xf32> to vector<8x8x8xf32>
    %109 = vector.shape_cast %24 : vector<2x8x8xf32> to vector<1x2x8x8xf32>
    %110 = vector.shape_cast %48 : vector<2x8x8xf32> to vector<1x2x8x8xf32>
    %111 = vector.shape_cast %72 : vector<2x8x8xf32> to vector<1x2x8x8xf32>
    %112 = vector.shape_cast %96 : vector<2x8x8xf32> to vector<1x2x8x8xf32>
    %113 = tpu.concatenate %109, %110, %111, %112 in 0 : vector<1x2x8x8xf32>, vector<1x2x8x8xf32>, vector<1x2x8x8xf32>, vector<1x2x8x8xf32> -> vector<4x2x8x8xf32>
    %114 = vector.shape_cast %113 : vector<4x2x8x8xf32> to vector<8x8x8xf32>
    "tpu.trace_start"() <{level = 10 : i32, message = "bqd,bkd->bqk"}> : () -> ()
    %cst_97 = arith.constant dense<0.000000e+00> : vector<8x8x8xf32>
    %115 = tpu.matmul %102, %108, %cst_97 {dimension_numbers = #tpu.dot_dimension_numbers<[2], [2], [1], [1], [0, 0, 0, 1, 1, 1], [0], [0]>} : vector<8x8x8xf32>, vector<8x8x8xf32>, vector<8x8x8xf32> -> vector<8x8x8xf32>
    "tpu.trace_stop"() : () -> ()
    %cst_98 = arith.constant 0.353553385 : f32
    %116 = vector.broadcast %cst_98 : f32 to vector<8x8x8xf32>
    %117 = arith.mulf %115, %116 : vector<8x8x8xf32>
    %cst_99 = arith.constant dense<0xFF800000> : vector<8x8xf32>
    %118 = vector.multi_reduction <maximumf>, %117, %cst_99 [2] : vector<8x8x8xf32> to vector<8x8xf32>
    %119 = vector.shape_cast %118 : vector<8x8xf32> to vector<8x8x1xf32>
    %120 = vector.broadcast %119 : vector<8x8x1xf32> to vector<8x8x8xf32>
    %121 = arith.subf %117, %120 : vector<8x8x8xf32>
    %122 = math.exp %121 : vector<8x8x8xf32>
    %cst_100 = arith.constant dense<0.000000e+00> : vector<8x8xf32>
    %123 = vector.multi_reduction <add>, %122, %cst_100 [2] : vector<8x8x8xf32> to vector<8x8xf32>
    %124 = vector.shape_cast %123 : vector<8x8xf32> to vector<8x8x1xf32>
    %125 = tpu.reciprocal %124 : vector<8x8x1xf32> -> vector<8x8x1xf32>
    %126 = vector.broadcast %125 : vector<8x8x1xf32> to vector<8x8x8xf32>
    %127 = arith.mulf %122, %126 : vector<8x8x8xf32>
    "tpu.trace_start"() <{level = 10 : i32, message = "bqk,bkd->bqd"}> : () -> ()
    %cst_101 = arith.constant dense<0.000000e+00> : vector<8x8x8xf32>
    %128 = tpu.matmul %127, %114, %cst_101 {dimension_numbers = #tpu.dot_dimension_numbers<[2], [1], [1], [2], [0, 0, 0, 1, 1, 2], [0], [0]>} : vector<8x8x8xf32>, vector<8x8x8xf32>, vector<8x8x8xf32> -> vector<8x8x8xf32>
    "tpu.trace_stop"() : () -> ()
    %129 = vector.shape_cast %128 : vector<8x8x8xf32> to vector<4x2x8x8xf32>
    %c0_102 = arith.constant 0 : index
    %c12 = arith.constant 12 : index
    %c0_103 = arith.constant 0 : index
    %130 = vector.load %arg5[%c0_102, %c12, %c0_103] : memref<2x24x64xf32, #tpu.memory_space<vmem>>, vector<1x1x32xf32>
    %131 = vector.shape_cast %130 : vector<1x1x32xf32> to vector<1x32xf32>
    %132 = vector.extract_strided_slice %129 {offsets = [0, 0, 0, 0], sizes = [1, 2, 8, 8], strides = [1, 1, 1, 1]} : vector<4x2x8x8xf32> to vector<1x2x8x8xf32>
    %133 = vector.shape_cast %132 : vector<1x2x8x8xf32> to vector<2x8x8xf32>
    %134 = vector.shape_cast %133 : vector<2x8x8xf32> to vector<16x8xf32>
    %c0_104 = arith.constant 0 : index
    %c0_105 = arith.constant 0 : index
    %c0_106 = arith.constant 0 : index
    %c0_107 = arith.constant 0 : index
    %135 = vector.load %arg2[%c0_104, %c0_105, %c0_106, %c0_107] : memref<2x4x8x32xf32, #tpu.memory_space<vmem>>, vector<1x1x8x32xf32>
    %136 = vector.shape_cast %135 : vector<1x1x8x32xf32> to vector<8x32xf32>
    %cst_108 = arith.constant dense<0.000000e+00> : vector<16x32xf32>
    %137 = tpu.matmul %134, %136, %cst_108 {dimension_numbers = #tpu.dot_dimension_numbers<[1], [0], [0], [1], [0, 0, 1, 1], [], []>} : vector<16x8xf32>, vector<8x32xf32>, vector<16x32xf32> -> vector<16x32xf32>
    %138 = vector.broadcast %131 : vector<1x32xf32> to vector<16x32xf32>
    %139 = arith.addf %138, %137 : vector<16x32xf32>
    %140 = vector.extract_strided_slice %129 {offsets = [1, 0, 0, 0], sizes = [1, 2, 8, 8], strides = [1, 1, 1, 1]} : vector<4x2x8x8xf32> to vector<1x2x8x8xf32>
    %141 = vector.shape_cast %140 : vector<1x2x8x8xf32> to vector<2x8x8xf32>
    %142 = vector.shape_cast %141 : vector<2x8x8xf32> to vector<16x8xf32>
    %c0_109 = arith.constant 0 : index
    %c1_110 = arith.constant 1 : index
    %c0_111 = arith.constant 0 : index
    %c0_112 = arith.constant 0 : index
    %143 = vector.load %arg2[%c0_109, %c1_110, %c0_111, %c0_112] : memref<2x4x8x32xf32, #tpu.memory_space<vmem>>, vector<1x1x8x32xf32>
    %144 = vector.shape_cast %143 : vector<1x1x8x32xf32> to vector<8x32xf32>
    %cst_113 = arith.constant dense<0.000000e+00> : vector<16x32xf32>
    %145 = tpu.matmul %142, %144, %cst_113 {dimension_numbers = #tpu.dot_dimension_numbers<[1], [0], [0], [1], [0, 0, 1, 1], [], []>} : vector<16x8xf32>, vector<8x32xf32>, vector<16x32xf32> -> vector<16x32xf32>
    %146 = arith.addf %139, %145 : vector<16x32xf32>
    %147 = vector.extract_strided_slice %129 {offsets = [2, 0, 0, 0], sizes = [1, 2, 8, 8], strides = [1, 1, 1, 1]} : vector<4x2x8x8xf32> to vector<1x2x8x8xf32>
    %148 = vector.shape_cast %147 : vector<1x2x8x8xf32> to vector<2x8x8xf32>
    %149 = vector.shape_cast %148 : vector<2x8x8xf32> to vector<16x8xf32>
    %c0_114 = arith.constant 0 : index
    %c2_115 = arith.constant 2 : index
    %c0_116 = arith.constant 0 : index
    %c0_117 = arith.constant 0 : index
    %150 = vector.load %arg2[%c0_114, %c2_115, %c0_116, %c0_117] : memref<2x4x8x32xf32, #tpu.memory_space<vmem>>, vector<1x1x8x32xf32>
    %151 = vector.shape_cast %150 : vector<1x1x8x32xf32> to vector<8x32xf32>
    %cst_118 = arith.constant dense<0.000000e+00> : vector<16x32xf32>
    %152 = tpu.matmul %149, %151, %cst_118 {dimension_numbers = #tpu.dot_dimension_numbers<[1], [0], [0], [1], [0, 0, 1, 1], [], []>} : vector<16x8xf32>, vector<8x32xf32>, vector<16x32xf32> -> vector<16x32xf32>
    %153 = arith.addf %146, %152 : vector<16x32xf32>
    %154 = vector.extract_strided_slice %129 {offsets = [3, 0, 0, 0], sizes = [1, 2, 8, 8], strides = [1, 1, 1, 1]} : vector<4x2x8x8xf32> to vector<1x2x8x8xf32>
    %155 = vector.shape_cast %154 : vector<1x2x8x8xf32> to vector<2x8x8xf32>
    %156 = vector.shape_cast %155 : vector<2x8x8xf32> to vector<16x8xf32>
    %c0_119 = arith.constant 0 : index
    %c3_120 = arith.constant 3 : index
    %c0_121 = arith.constant 0 : index
    %c0_122 = arith.constant 0 : index
    %157 = vector.load %arg2[%c0_119, %c3_120, %c0_121, %c0_122] : memref<2x4x8x32xf32, #tpu.memory_space<vmem>>, vector<1x1x8x32xf32>
    %158 = vector.shape_cast %157 : vector<1x1x8x32xf32> to vector<8x32xf32>
    %cst_123 = arith.constant dense<0.000000e+00> : vector<16x32xf32>
    %159 = tpu.matmul %156, %158, %cst_123 {dimension_numbers = #tpu.dot_dimension_numbers<[1], [0], [0], [1], [0, 0, 1, 1], [], []>} : vector<16x8xf32>, vector<8x32xf32>, vector<16x32xf32> -> vector<16x32xf32>
    %160 = arith.addf %153, %159 : vector<16x32xf32>
    %161 = arith.addf %0, %160 : vector<16x32xf32>
    %cst_124 = arith.constant dense<0.000000e+00> : vector<16xf32>
    %162 = vector.multi_reduction <add>, %161, %cst_124 [1] : vector<16x32xf32> to vector<16xf32>
    %163 = vector.shape_cast %162 : vector<16xf32> to vector<16x1xf32>
    %cst_125 = arith.constant 3.200000e+01 : f32
    %164 = vector.broadcast %cst_125 : f32 to vector<16x1xf32>
    %165 = arith.divf %163, %164 : vector<16x1xf32>
    %166 = vector.broadcast %165 : vector<16x1xf32> to vector<16x32xf32>
    %167 = arith.subf %161, %166 : vector<16x32xf32>
    %168 = arith.mulf %167, %167 : vector<16x32xf32>
    %cst_126 = arith.constant dense<0.000000e+00> : vector<16xf32>
    %169 = vector.multi_reduction <add>, %168, %cst_126 [1] : vector<16x32xf32> to vector<16xf32>
    %170 = vector.shape_cast %169 : vector<16xf32> to vector<16x1xf32>
    %cst_127 = arith.constant 3.200000e+01 : f32
    %171 = vector.broadcast %cst_127 : f32 to vector<16x1xf32>
    %172 = arith.divf %170, %171 : vector<16x1xf32>
    %173 = vector.broadcast %165 : vector<16x1xf32> to vector<16x32xf32>
    %174 = arith.subf %161, %173 : vector<16x32xf32>
    %cst_128 = arith.constant 9.99999974E-6 : f32
    %175 = vector.broadcast %cst_128 : f32 to vector<16x1xf32>
    %176 = arith.addf %172, %175 : vector<16x1xf32>
    %177 = math.rsqrt %176 : vector<16x1xf32>
    %178 = vector.broadcast %177 : vector<16x1xf32> to vector<16x32xf32>
    %179 = arith.mulf %174, %178 : vector<16x32xf32>
    %c0_129 = arith.constant 0 : index
    %c15 = arith.constant 15 : index
    %c0_130 = arith.constant 0 : index
    %180 = vector.load %arg5[%c0_129, %c15, %c0_130] : memref<2x24x64xf32, #tpu.memory_space<vmem>>, vector<1x1x32xf32>
    %181 = vector.shape_cast %180 : vector<1x1x32xf32> to vector<1x32xf32>
    %182 = vector.broadcast %181 : vector<1x32xf32> to vector<16x32xf32>
    %183 = arith.mulf %179, %182 : vector<16x32xf32>
    %c0_131 = arith.constant 0 : index
    %c16 = arith.constant 16 : index
    %c0_132 = arith.constant 0 : index
    %184 = vector.load %arg5[%c0_131, %c16, %c0_132] : memref<2x24x64xf32, #tpu.memory_space<vmem>>, vector<1x1x32xf32>
    %185 = vector.shape_cast %184 : vector<1x1x32xf32> to vector<1x32xf32>
    %186 = vector.broadcast %185 : vector<1x32xf32> to vector<16x32xf32>
    %187 = arith.addf %183, %186 : vector<16x32xf32>
    %c0_133 = arith.constant 0 : index
    %c0_134 = arith.constant 0 : index
    %c0_135 = arith.constant 0 : index
    %188 = vector.load %arg3[%c0_133, %c0_134, %c0_135] : memref<2x32x64xf32, #tpu.memory_space<vmem>>, vector<1x32x64xf32>
    %189 = vector.shape_cast %188 : vector<1x32x64xf32> to vector<32x64xf32>
    %cst_136 = arith.constant dense<0.000000e+00> : vector<16x64xf32>
    %190 = tpu.matmul %187, %189, %cst_136 {dimension_numbers = #tpu.dot_dimension_numbers<[1], [0], [0], [1], [0, 0, 1, 1], [], []>} : vector<16x32xf32>, vector<32x64xf32>, vector<16x64xf32> -> vector<16x64xf32>
    %c0_137 = arith.constant 0 : index
    %c13 = arith.constant 13 : index
    %c0_138 = arith.constant 0 : index
    %191 = vector.load %arg5[%c0_137, %c13, %c0_138] : memref<2x24x64xf32, #tpu.memory_space<vmem>>, vector<1x1x64xf32>
    %192 = vector.shape_cast %191 : vector<1x1x64xf32> to vector<1x64xf32>
    %193 = vector.broadcast %192 : vector<1x64xf32> to vector<16x64xf32>
    %194 = arith.addf %190, %193 : vector<16x64xf32>
    %cst_139 = arith.constant 0.000000e+00 : f32
    %195 = vector.broadcast %cst_139 : f32 to vector<16x64xf32>
    %196 = arith.maximumf %194, %195 : vector<16x64xf32>
    %c0_140 = arith.constant 0 : index
    %c0_141 = arith.constant 0 : index
    %c0_142 = arith.constant 0 : index
    %197 = vector.load %arg4[%c0_140, %c0_141, %c0_142] : memref<2x64x32xf32, #tpu.memory_space<vmem>>, vector<1x64x32xf32>
    %198 = vector.shape_cast %197 : vector<1x64x32xf32> to vector<64x32xf32>
    %cst_143 = arith.constant dense<0.000000e+00> : vector<16x32xf32>
    %199 = tpu.matmul %196, %198, %cst_143 {dimension_numbers = #tpu.dot_dimension_numbers<[1], [0], [0], [1], [0, 0, 1, 1], [], []>} : vector<16x64xf32>, vector<64x32xf32>, vector<16x32xf32> -> vector<16x32xf32>
    %c0_144 = arith.constant 0 : index
    %c14 = arith.constant 14 : index
    %c0_145 = arith.constant 0 : index
    %200 = vector.load %arg5[%c0_144, %c14, %c0_145] : memref<2x24x64xf32, #tpu.memory_space<vmem>>, vector<1x1x32xf32>
    %201 = vector.shape_cast %200 : vector<1x1x32xf32> to vector<1x32xf32>
    %202 = vector.broadcast %201 : vector<1x32xf32> to vector<16x32xf32>
    %203 = arith.addf %199, %202 : vector<16x32xf32>
    %204 = arith.addf %187, %203 : vector<16x32xf32>
    %cst_146 = arith.constant dense<0.000000e+00> : vector<16xf32>
    %205 = vector.multi_reduction <add>, %204, %cst_146 [1] : vector<16x32xf32> to vector<16xf32>
    %206 = vector.shape_cast %205 : vector<16xf32> to vector<16x1xf32>
    %cst_147 = arith.constant 3.200000e+01 : f32
    %207 = vector.broadcast %cst_147 : f32 to vector<16x1xf32>
    %208 = arith.divf %206, %207 : vector<16x1xf32>
    %209 = vector.broadcast %208 : vector<16x1xf32> to vector<16x32xf32>
    %210 = arith.subf %204, %209 : vector<16x32xf32>
    %211 = arith.mulf %210, %210 : vector<16x32xf32>
    %cst_148 = arith.constant dense<0.000000e+00> : vector<16xf32>
    %212 = vector.multi_reduction <add>, %211, %cst_148 [1] : vector<16x32xf32> to vector<16xf32>
    %213 = vector.shape_cast %212 : vector<16xf32> to vector<16x1xf32>
    %cst_149 = arith.constant 3.200000e+01 : f32
    %214 = vector.broadcast %cst_149 : f32 to vector<16x1xf32>
    %215 = arith.divf %213, %214 : vector<16x1xf32>
    %216 = vector.broadcast %208 : vector<16x1xf32> to vector<16x32xf32>
    %217 = arith.subf %204, %216 : vector<16x32xf32>
    %cst_150 = arith.constant 9.99999974E-6 : f32
    %218 = vector.broadcast %cst_150 : f32 to vector<16x1xf32>
    %219 = arith.addf %215, %218 : vector<16x1xf32>
    %220 = math.rsqrt %219 : vector<16x1xf32>
    %221 = vector.broadcast %220 : vector<16x1xf32> to vector<16x32xf32>
    %222 = arith.mulf %217, %221 : vector<16x32xf32>
    %c0_151 = arith.constant 0 : index
    %c17 = arith.constant 17 : index
    %c0_152 = arith.constant 0 : index
    %223 = vector.load %arg5[%c0_151, %c17, %c0_152] : memref<2x24x64xf32, #tpu.memory_space<vmem>>, vector<1x1x32xf32>
    %224 = vector.shape_cast %223 : vector<1x1x32xf32> to vector<1x32xf32>
    %225 = vector.broadcast %224 : vector<1x32xf32> to vector<16x32xf32>
    %226 = arith.mulf %222, %225 : vector<16x32xf32>
    %c0_153 = arith.constant 0 : index
    %c18 = arith.constant 18 : index
    %c0_154 = arith.constant 0 : index
    %227 = vector.load %arg5[%c0_153, %c18, %c0_154] : memref<2x24x64xf32, #tpu.memory_space<vmem>>, vector<1x1x32xf32>
    %228 = vector.shape_cast %227 : vector<1x1x32xf32> to vector<1x32xf32>
    %229 = vector.broadcast %228 : vector<1x32xf32> to vector<16x32xf32>
    %230 = arith.addf %226, %229 : vector<16x32xf32>
    %c1_155 = arith.constant 1 : index
    %c0_156 = arith.constant 0 : index
    %c0_157 = arith.constant 0 : index
    %c0_158 = arith.constant 0 : index
    %c0_159 = arith.constant 0 : index
    %231 = vector.load %arg1[%c1_155, %c0_156, %c0_157, %c0_158, %c0_159] : memref<2x3x4x32x8xf32, #tpu.memory_space<vmem>>, vector<1x1x1x32x8xf32>
    %232 = vector.shape_cast %231 : vector<1x1x1x32x8xf32> to vector<32x8xf32>
    %cst_160 = arith.constant dense<0.000000e+00> : vector<16x8xf32>
    %233 = tpu.matmul %230, %232, %cst_160 {dimension_numbers = #tpu.dot_dimension_numbers<[1], [0], [0], [1], [0, 0, 1, 1], [], []>} : vector<16x32xf32>, vector<32x8xf32>, vector<16x8xf32> -> vector<16x8xf32>
    %c1_161 = arith.constant 1 : index
    %c0_162 = arith.constant 0 : index
    %c0_163 = arith.constant 0 : index
    %234 = vector.load %arg5[%c1_161, %c0_162, %c0_163] : memref<2x24x64xf32, #tpu.memory_space<vmem>>, vector<1x1x8xf32>
    %235 = vector.shape_cast %234 : vector<1x1x8xf32> to vector<1x8xf32>
    %236 = vector.broadcast %235 : vector<1x8xf32> to vector<16x8xf32>
    %237 = arith.addf %233, %236 : vector<16x8xf32>
    %c1_164 = arith.constant 1 : index
    %c1_165 = arith.constant 1 : index
    %c0_166 = arith.constant 0 : index
    %c0_167 = arith.constant 0 : index
    %c0_168 = arith.constant 0 : index
    %238 = vector.load %arg1[%c1_164, %c1_165, %c0_166, %c0_167, %c0_168] : memref<2x3x4x32x8xf32, #tpu.memory_space<vmem>>, vector<1x1x1x32x8xf32>
    %239 = vector.shape_cast %238 : vector<1x1x1x32x8xf32> to vector<32x8xf32>
    %cst_169 = arith.constant dense<0.000000e+00> : vector<16x8xf32>
    %240 = tpu.matmul %230, %239, %cst_169 {dimension_numbers = #tpu.dot_dimension_numbers<[1], [0], [0], [1], [0, 0, 1, 1], [], []>} : vector<16x32xf32>, vector<32x8xf32>, vector<16x8xf32> -> vector<16x8xf32>
    %c1_170 = arith.constant 1 : index
    %c4_171 = arith.constant 4 : index
    %c0_172 = arith.constant 0 : index
    %241 = vector.load %arg5[%c1_170, %c4_171, %c0_172] : memref<2x24x64xf32, #tpu.memory_space<vmem>>, vector<1x1x8xf32>
    %242 = vector.shape_cast %241 : vector<1x1x8xf32> to vector<1x8xf32>
    %243 = vector.broadcast %242 : vector<1x8xf32> to vector<16x8xf32>
    %244 = arith.addf %240, %243 : vector<16x8xf32>
    %c1_173 = arith.constant 1 : index
    %c2_174 = arith.constant 2 : index
    %c0_175 = arith.constant 0 : index
    %c0_176 = arith.constant 0 : index
    %c0_177 = arith.constant 0 : index
    %245 = vector.load %arg1[%c1_173, %c2_174, %c0_175, %c0_176, %c0_177] : memref<2x3x4x32x8xf32, #tpu.memory_space<vmem>>, vector<1x1x1x32x8xf32>
    %246 = vector.shape_cast %245 : vector<1x1x1x32x8xf32> to vector<32x8xf32>
    %cst_178 = arith.constant dense<0.000000e+00> : vector<16x8xf32>
    %247 = tpu.matmul %230, %246, %cst_178 {dimension_numbers = #tpu.dot_dimension_numbers<[1], [0], [0], [1], [0, 0, 1, 1], [], []>} : vector<16x32xf32>, vector<32x8xf32>, vector<16x8xf32> -> vector<16x8xf32>
    %c1_179 = arith.constant 1 : index
    %c8_180 = arith.constant 8 : index
    %c0_181 = arith.constant 0 : index
    %248 = vector.load %arg5[%c1_179, %c8_180, %c0_181] : memref<2x24x64xf32, #tpu.memory_space<vmem>>, vector<1x1x8xf32>
    %249 = vector.shape_cast %248 : vector<1x1x8xf32> to vector<1x8xf32>
    %250 = vector.broadcast %249 : vector<1x8xf32> to vector<16x8xf32>
    %251 = arith.addf %247, %250 : vector<16x8xf32>
    %252 = vector.shape_cast %237 : vector<16x8xf32> to vector<2x8x8xf32>
    %253 = vector.shape_cast %244 : vector<16x8xf32> to vector<2x8x8xf32>
    %254 = vector.shape_cast %251 : vector<16x8xf32> to vector<2x8x8xf32>
    %c1_182 = arith.constant 1 : index
    %c0_183 = arith.constant 0 : index
    %c1_184 = arith.constant 1 : index
    %c0_185 = arith.constant 0 : index
    %c0_186 = arith.constant 0 : index
    %255 = vector.load %arg1[%c1_182, %c0_183, %c1_184, %c0_185, %c0_186] : memref<2x3x4x32x8xf32, #tpu.memory_space<vmem>>, vector<1x1x1x32x8xf32>
    %256 = vector.shape_cast %255 : vector<1x1x1x32x8xf32> to vector<32x8xf32>
    %cst_187 = arith.constant dense<0.000000e+00> : vector<16x8xf32>
    %257 = tpu.matmul %230, %256, %cst_187 {dimension_numbers = #tpu.dot_dimension_numbers<[1], [0], [0], [1], [0, 0, 1, 1], [], []>} : vector<16x32xf32>, vector<32x8xf32>, vector<16x8xf32> -> vector<16x8xf32>
    %c1_188 = arith.constant 1 : index
    %c1_189 = arith.constant 1 : index
    %c0_190 = arith.constant 0 : index
    %258 = vector.load %arg5[%c1_188, %c1_189, %c0_190] : memref<2x24x64xf32, #tpu.memory_space<vmem>>, vector<1x1x8xf32>
    %259 = vector.shape_cast %258 : vector<1x1x8xf32> to vector<1x8xf32>
    %260 = vector.broadcast %259 : vector<1x8xf32> to vector<16x8xf32>
    %261 = arith.addf %257, %260 : vector<16x8xf32>
    %c1_191 = arith.constant 1 : index
    %c1_192 = arith.constant 1 : index
    %c1_193 = arith.constant 1 : index
    %c0_194 = arith.constant 0 : index
    %c0_195 = arith.constant 0 : index
    %262 = vector.load %arg1[%c1_191, %c1_192, %c1_193, %c0_194, %c0_195] : memref<2x3x4x32x8xf32, #tpu.memory_space<vmem>>, vector<1x1x1x32x8xf32>
    %263 = vector.shape_cast %262 : vector<1x1x1x32x8xf32> to vector<32x8xf32>
    %cst_196 = arith.constant dense<0.000000e+00> : vector<16x8xf32>
    %264 = tpu.matmul %230, %263, %cst_196 {dimension_numbers = #tpu.dot_dimension_numbers<[1], [0], [0], [1], [0, 0, 1, 1], [], []>} : vector<16x32xf32>, vector<32x8xf32>, vector<16x8xf32> -> vector<16x8xf32>
    %c1_197 = arith.constant 1 : index
    %c5_198 = arith.constant 5 : index
    %c0_199 = arith.constant 0 : index
    %265 = vector.load %arg5[%c1_197, %c5_198, %c0_199] : memref<2x24x64xf32, #tpu.memory_space<vmem>>, vector<1x1x8xf32>
    %266 = vector.shape_cast %265 : vector<1x1x8xf32> to vector<1x8xf32>
    %267 = vector.broadcast %266 : vector<1x8xf32> to vector<16x8xf32>
    %268 = arith.addf %264, %267 : vector<16x8xf32>
    %c1_200 = arith.constant 1 : index
    %c2_201 = arith.constant 2 : index
    %c1_202 = arith.constant 1 : index
    %c0_203 = arith.constant 0 : index
    %c0_204 = arith.constant 0 : index
    %269 = vector.load %arg1[%c1_200, %c2_201, %c1_202, %c0_203, %c0_204] : memref<2x3x4x32x8xf32, #tpu.memory_space<vmem>>, vector<1x1x1x32x8xf32>
    %270 = vector.shape_cast %269 : vector<1x1x1x32x8xf32> to vector<32x8xf32>
    %cst_205 = arith.constant dense<0.000000e+00> : vector<16x8xf32>
    %271 = tpu.matmul %230, %270, %cst_205 {dimension_numbers = #tpu.dot_dimension_numbers<[1], [0], [0], [1], [0, 0, 1, 1], [], []>} : vector<16x32xf32>, vector<32x8xf32>, vector<16x8xf32> -> vector<16x8xf32>
    %c1_206 = arith.constant 1 : index
    %c9_207 = arith.constant 9 : index
    %c0_208 = arith.constant 0 : index
    %272 = vector.load %arg5[%c1_206, %c9_207, %c0_208] : memref<2x24x64xf32, #tpu.memory_space<vmem>>, vector<1x1x8xf32>
    %273 = vector.shape_cast %272 : vector<1x1x8xf32> to vector<1x8xf32>
    %274 = vector.broadcast %273 : vector<1x8xf32> to vector<16x8xf32>
    %275 = arith.addf %271, %274 : vector<16x8xf32>
    %276 = vector.shape_cast %261 : vector<16x8xf32> to vector<2x8x8xf32>
    %277 = vector.shape_cast %268 : vector<16x8xf32> to vector<2x8x8xf32>
    %278 = vector.shape_cast %275 : vector<16x8xf32> to vector<2x8x8xf32>
    %c1_209 = arith.constant 1 : index
    %c0_210 = arith.constant 0 : index
    %c2_211 = arith.constant 2 : index
    %c0_212 = arith.constant 0 : index
    %c0_213 = arith.constant 0 : index
    %279 = vector.load %arg1[%c1_209, %c0_210, %c2_211, %c0_212, %c0_213] : memref<2x3x4x32x8xf32, #tpu.memory_space<vmem>>, vector<1x1x1x32x8xf32>
    %280 = vector.shape_cast %279 : vector<1x1x1x32x8xf32> to vector<32x8xf32>
    %cst_214 = arith.constant dense<0.000000e+00> : vector<16x8xf32>
    %281 = tpu.matmul %230, %280, %cst_214 {dimension_numbers = #tpu.dot_dimension_numbers<[1], [0], [0], [1], [0, 0, 1, 1], [], []>} : vector<16x32xf32>, vector<32x8xf32>, vector<16x8xf32> -> vector<16x8xf32>
    %c1_215 = arith.constant 1 : index
    %c2_216 = arith.constant 2 : index
    %c0_217 = arith.constant 0 : index
    %282 = vector.load %arg5[%c1_215, %c2_216, %c0_217] : memref<2x24x64xf32, #tpu.memory_space<vmem>>, vector<1x1x8xf32>
    %283 = vector.shape_cast %282 : vector<1x1x8xf32> to vector<1x8xf32>
    %284 = vector.broadcast %283 : vector<1x8xf32> to vector<16x8xf32>
    %285 = arith.addf %281, %284 : vector<16x8xf32>
    %c1_218 = arith.constant 1 : index
    %c1_219 = arith.constant 1 : index
    %c2_220 = arith.constant 2 : index
    %c0_221 = arith.constant 0 : index
    %c0_222 = arith.constant 0 : index
    %286 = vector.load %arg1[%c1_218, %c1_219, %c2_220, %c0_221, %c0_222] : memref<2x3x4x32x8xf32, #tpu.memory_space<vmem>>, vector<1x1x1x32x8xf32>
    %287 = vector.shape_cast %286 : vector<1x1x1x32x8xf32> to vector<32x8xf32>
    %cst_223 = arith.constant dense<0.000000e+00> : vector<16x8xf32>
    %288 = tpu.matmul %230, %287, %cst_223 {dimension_numbers = #tpu.dot_dimension_numbers<[1], [0], [0], [1], [0, 0, 1, 1], [], []>} : vector<16x32xf32>, vector<32x8xf32>, vector<16x8xf32> -> vector<16x8xf32>
    %c1_224 = arith.constant 1 : index
    %c6_225 = arith.constant 6 : index
    %c0_226 = arith.constant 0 : index
    %289 = vector.load %arg5[%c1_224, %c6_225, %c0_226] : memref<2x24x64xf32, #tpu.memory_space<vmem>>, vector<1x1x8xf32>
    %290 = vector.shape_cast %289 : vector<1x1x8xf32> to vector<1x8xf32>
    %291 = vector.broadcast %290 : vector<1x8xf32> to vector<16x8xf32>
    %292 = arith.addf %288, %291 : vector<16x8xf32>
    %c1_227 = arith.constant 1 : index
    %c2_228 = arith.constant 2 : index
    %c2_229 = arith.constant 2 : index
    %c0_230 = arith.constant 0 : index
    %c0_231 = arith.constant 0 : index
    %293 = vector.load %arg1[%c1_227, %c2_228, %c2_229, %c0_230, %c0_231] : memref<2x3x4x32x8xf32, #tpu.memory_space<vmem>>, vector<1x1x1x32x8xf32>
    %294 = vector.shape_cast %293 : vector<1x1x1x32x8xf32> to vector<32x8xf32>
    %cst_232 = arith.constant dense<0.000000e+00> : vector<16x8xf32>
    %295 = tpu.matmul %230, %294, %cst_232 {dimension_numbers = #tpu.dot_dimension_numbers<[1], [0], [0], [1], [0, 0, 1, 1], [], []>} : vector<16x32xf32>, vector<32x8xf32>, vector<16x8xf32> -> vector<16x8xf32>
    %c1_233 = arith.constant 1 : index
    %c10_234 = arith.constant 10 : index
    %c0_235 = arith.constant 0 : index
    %296 = vector.load %arg5[%c1_233, %c10_234, %c0_235] : memref<2x24x64xf32, #tpu.memory_space<vmem>>, vector<1x1x8xf32>
    %297 = vector.shape_cast %296 : vector<1x1x8xf32> to vector<1x8xf32>
    %298 = vector.broadcast %297 : vector<1x8xf32> to vector<16x8xf32>
    %299 = arith.addf %295, %298 : vector<16x8xf32>
    %300 = vector.shape_cast %285 : vector<16x8xf32> to vector<2x8x8xf32>
    %301 = vector.shape_cast %292 : vector<16x8xf32> to vector<2x8x8xf32>
    %302 = vector.shape_cast %299 : vector<16x8xf32> to vector<2x8x8xf32>
    %c1_236 = arith.constant 1 : index
    %c0_237 = arith.constant 0 : index
    %c3_238 = arith.constant 3 : index
    %c0_239 = arith.constant 0 : index
    %c0_240 = arith.constant 0 : index
    %303 = vector.load %arg1[%c1_236, %c0_237, %c3_238, %c0_239, %c0_240] : memref<2x3x4x32x8xf32, #tpu.memory_space<vmem>>, vector<1x1x1x32x8xf32>
    %304 = vector.shape_cast %303 : vector<1x1x1x32x8xf32> to vector<32x8xf32>
    %cst_241 = arith.constant dense<0.000000e+00> : vector<16x8xf32>
    %305 = tpu.matmul %230, %304, %cst_241 {dimension_numbers = #tpu.dot_dimension_numbers<[1], [0], [0], [1], [0, 0, 1, 1], [], []>} : vector<16x32xf32>, vector<32x8xf32>, vector<16x8xf32> -> vector<16x8xf32>
    %c1_242 = arith.constant 1 : index
    %c3_243 = arith.constant 3 : index
    %c0_244 = arith.constant 0 : index
    %306 = vector.load %arg5[%c1_242, %c3_243, %c0_244] : memref<2x24x64xf32, #tpu.memory_space<vmem>>, vector<1x1x8xf32>
    %307 = vector.shape_cast %306 : vector<1x1x8xf32> to vector<1x8xf32>
    %308 = vector.broadcast %307 : vector<1x8xf32> to vector<16x8xf32>
    %309 = arith.addf %305, %308 : vector<16x8xf32>
    %c1_245 = arith.constant 1 : index
    %c1_246 = arith.constant 1 : index
    %c3_247 = arith.constant 3 : index
    %c0_248 = arith.constant 0 : index
    %c0_249 = arith.constant 0 : index
    %310 = vector.load %arg1[%c1_245, %c1_246, %c3_247, %c0_248, %c0_249] : memref<2x3x4x32x8xf32, #tpu.memory_space<vmem>>, vector<1x1x1x32x8xf32>
    %311 = vector.shape_cast %310 : vector<1x1x1x32x8xf32> to vector<32x8xf32>
    %cst_250 = arith.constant dense<0.000000e+00> : vector<16x8xf32>
    %312 = tpu.matmul %230, %311, %cst_250 {dimension_numbers = #tpu.dot_dimension_numbers<[1], [0], [0], [1], [0, 0, 1, 1], [], []>} : vector<16x32xf32>, vector<32x8xf32>, vector<16x8xf32> -> vector<16x8xf32>
    %c1_251 = arith.constant 1 : index
    %c7_252 = arith.constant 7 : index
    %c0_253 = arith.constant 0 : index
    %313 = vector.load %arg5[%c1_251, %c7_252, %c0_253] : memref<2x24x64xf32, #tpu.memory_space<vmem>>, vector<1x1x8xf32>
    %314 = vector.shape_cast %313 : vector<1x1x8xf32> to vector<1x8xf32>
    %315 = vector.broadcast %314 : vector<1x8xf32> to vector<16x8xf32>
    %316 = arith.addf %312, %315 : vector<16x8xf32>
    %c1_254 = arith.constant 1 : index
    %c2_255 = arith.constant 2 : index
    %c3_256 = arith.constant 3 : index
    %c0_257 = arith.constant 0 : index
    %c0_258 = arith.constant 0 : index
    %317 = vector.load %arg1[%c1_254, %c2_255, %c3_256, %c0_257, %c0_258] : memref<2x3x4x32x8xf32, #tpu.memory_space<vmem>>, vector<1x1x1x32x8xf32>
    %318 = vector.shape_cast %317 : vector<1x1x1x32x8xf32> to vector<32x8xf32>
    %cst_259 = arith.constant dense<0.000000e+00> : vector<16x8xf32>
    %319 = tpu.matmul %230, %318, %cst_259 {dimension_numbers = #tpu.dot_dimension_numbers<[1], [0], [0], [1], [0, 0, 1, 1], [], []>} : vector<16x32xf32>, vector<32x8xf32>, vector<16x8xf32> -> vector<16x8xf32>
    %c1_260 = arith.constant 1 : index
    %c11_261 = arith.constant 11 : index
    %c0_262 = arith.constant 0 : index
    %320 = vector.load %arg5[%c1_260, %c11_261, %c0_262] : memref<2x24x64xf32, #tpu.memory_space<vmem>>, vector<1x1x8xf32>
    %321 = vector.shape_cast %320 : vector<1x1x8xf32> to vector<1x8xf32>
    %322 = vector.broadcast %321 : vector<1x8xf32> to vector<16x8xf32>
    %323 = arith.addf %319, %322 : vector<16x8xf32>
    %324 = vector.shape_cast %309 : vector<16x8xf32> to vector<2x8x8xf32>
    %325 = vector.shape_cast %316 : vector<16x8xf32> to vector<2x8x8xf32>
    %326 = vector.shape_cast %323 : vector<16x8xf32> to vector<2x8x8xf32>
    %327 = vector.shape_cast %252 : vector<2x8x8xf32> to vector<1x2x8x8xf32>
    %328 = vector.shape_cast %276 : vector<2x8x8xf32> to vector<1x2x8x8xf32>
    %329 = vector.shape_cast %300 : vector<2x8x8xf32> to vector<1x2x8x8xf32>
    %330 = vector.shape_cast %324 : vector<2x8x8xf32> to vector<1x2x8x8xf32>
    %331 = tpu.concatenate %327, %328, %329, %330 in 0 : vector<1x2x8x8xf32>, vector<1x2x8x8xf32>, vector<1x2x8x8xf32>, vector<1x2x8x8xf32> -> vector<4x2x8x8xf32>
    %332 = vector.shape_cast %331 : vector<4x2x8x8xf32> to vector<8x8x8xf32>
    %333 = vector.shape_cast %253 : vector<2x8x8xf32> to vector<1x2x8x8xf32>
    %334 = vector.shape_cast %277 : vector<2x8x8xf32> to vector<1x2x8x8xf32>
    %335 = vector.shape_cast %301 : vector<2x8x8xf32> to vector<1x2x8x8xf32>
    %336 = vector.shape_cast %325 : vector<2x8x8xf32> to vector<1x2x8x8xf32>
    %337 = tpu.concatenate %333, %334, %335, %336 in 0 : vector<1x2x8x8xf32>, vector<1x2x8x8xf32>, vector<1x2x8x8xf32>, vector<1x2x8x8xf32> -> vector<4x2x8x8xf32>
    %338 = vector.shape_cast %337 : vector<4x2x8x8xf32> to vector<8x8x8xf32>
    %339 = vector.shape_cast %254 : vector<2x8x8xf32> to vector<1x2x8x8xf32>
    %340 = vector.shape_cast %278 : vector<2x8x8xf32> to vector<1x2x8x8xf32>
    %341 = vector.shape_cast %302 : vector<2x8x8xf32> to vector<1x2x8x8xf32>
    %342 = vector.shape_cast %326 : vector<2x8x8xf32> to vector<1x2x8x8xf32>
    %343 = tpu.concatenate %339, %340, %341, %342 in 0 : vector<1x2x8x8xf32>, vector<1x2x8x8xf32>, vector<1x2x8x8xf32>, vector<1x2x8x8xf32> -> vector<4x2x8x8xf32>
    %344 = vector.shape_cast %343 : vector<4x2x8x8xf32> to vector<8x8x8xf32>
    "tpu.trace_start"() <{level = 10 : i32, message = "bqd,bkd->bqk"}> : () -> ()
    %cst_263 = arith.constant dense<0.000000e+00> : vector<8x8x8xf32>
    %345 = tpu.matmul %332, %338, %cst_263 {dimension_numbers = #tpu.dot_dimension_numbers<[2], [2], [1], [1], [0, 0, 0, 1, 1, 1], [0], [0]>} : vector<8x8x8xf32>, vector<8x8x8xf32>, vector<8x8x8xf32> -> vector<8x8x8xf32>
    "tpu.trace_stop"() : () -> ()
    %cst_264 = arith.constant 0.353553385 : f32
    %346 = vector.broadcast %cst_264 : f32 to vector<8x8x8xf32>
    %347 = arith.mulf %345, %346 : vector<8x8x8xf32>
    %cst_265 = arith.constant dense<0xFF800000> : vector<8x8xf32>
    %348 = vector.multi_reduction <maximumf>, %347, %cst_265 [2] : vector<8x8x8xf32> to vector<8x8xf32>
    %349 = vector.shape_cast %348 : vector<8x8xf32> to vector<8x8x1xf32>
    %350 = vector.broadcast %349 : vector<8x8x1xf32> to vector<8x8x8xf32>
    %351 = arith.subf %347, %350 : vector<8x8x8xf32>
    %352 = math.exp %351 : vector<8x8x8xf32>
    %cst_266 = arith.constant dense<0.000000e+00> : vector<8x8xf32>
    %353 = vector.multi_reduction <add>, %352, %cst_266 [2] : vector<8x8x8xf32> to vector<8x8xf32>
    %354 = vector.shape_cast %353 : vector<8x8xf32> to vector<8x8x1xf32>
    %355 = tpu.reciprocal %354 : vector<8x8x1xf32> -> vector<8x8x1xf32>
    %356 = vector.broadcast %355 : vector<8x8x1xf32> to vector<8x8x8xf32>
    %357 = arith.mulf %352, %356 : vector<8x8x8xf32>
    "tpu.trace_start"() <{level = 10 : i32, message = "bqk,bkd->bqd"}> : () -> ()
    %cst_267 = arith.constant dense<0.000000e+00> : vector<8x8x8xf32>
    %358 = tpu.matmul %357, %344, %cst_267 {dimension_numbers = #tpu.dot_dimension_numbers<[2], [1], [1], [2], [0, 0, 0, 1, 1, 2], [0], [0]>} : vector<8x8x8xf32>, vector<8x8x8xf32>, vector<8x8x8xf32> -> vector<8x8x8xf32>
    "tpu.trace_stop"() : () -> ()
    %359 = vector.shape_cast %358 : vector<8x8x8xf32> to vector<4x2x8x8xf32>
    %c1_268 = arith.constant 1 : index
    %c12_269 = arith.constant 12 : index
    %c0_270 = arith.constant 0 : index
    %360 = vector.load %arg5[%c1_268, %c12_269, %c0_270] : memref<2x24x64xf32, #tpu.memory_space<vmem>>, vector<1x1x32xf32>
    %361 = vector.shape_cast %360 : vector<1x1x32xf32> to vector<1x32xf32>
    %362 = vector.extract_strided_slice %359 {offsets = [0, 0, 0, 0], sizes = [1, 2, 8, 8], strides = [1, 1, 1, 1]} : vector<4x2x8x8xf32> to vector<1x2x8x8xf32>
    %363 = vector.shape_cast %362 : vector<1x2x8x8xf32> to vector<2x8x8xf32>
    %364 = vector.shape_cast %363 : vector<2x8x8xf32> to vector<16x8xf32>
    %c1_271 = arith.constant 1 : index
    %c0_272 = arith.constant 0 : index
    %c0_273 = arith.constant 0 : index
    %c0_274 = arith.constant 0 : index
    %365 = vector.load %arg2[%c1_271, %c0_272, %c0_273, %c0_274] : memref<2x4x8x32xf32, #tpu.memory_space<vmem>>, vector<1x1x8x32xf32>
    %366 = vector.shape_cast %365 : vector<1x1x8x32xf32> to vector<8x32xf32>
    %cst_275 = arith.constant dense<0.000000e+00> : vector<16x32xf32>
    %367 = tpu.matmul %364, %366, %cst_275 {dimension_numbers = #tpu.dot_dimension_numbers<[1], [0], [0], [1], [0, 0, 1, 1], [], []>} : vector<16x8xf32>, vector<8x32xf32>, vector<16x32xf32> -> vector<16x32xf32>
    %368 = vector.broadcast %361 : vector<1x32xf32> to vector<16x32xf32>
    %369 = arith.addf %368, %367 : vector<16x32xf32>
    %370 = vector.extract_strided_slice %359 {offsets = [1, 0, 0, 0], sizes = [1, 2, 8, 8], strides = [1, 1, 1, 1]} : vector<4x2x8x8xf32> to vector<1x2x8x8xf32>
    %371 = vector.shape_cast %370 : vector<1x2x8x8xf32> to vector<2x8x8xf32>
    %372 = vector.shape_cast %371 : vector<2x8x8xf32> to vector<16x8xf32>
    %c1_276 = arith.constant 1 : index
    %c1_277 = arith.constant 1 : index
    %c0_278 = arith.constant 0 : index
    %c0_279 = arith.constant 0 : index
    %373 = vector.load %arg2[%c1_276, %c1_277, %c0_278, %c0_279] : memref<2x4x8x32xf32, #tpu.memory_space<vmem>>, vector<1x1x8x32xf32>
    %374 = vector.shape_cast %373 : vector<1x1x8x32xf32> to vector<8x32xf32>
    %cst_280 = arith.constant dense<0.000000e+00> : vector<16x32xf32>
    %375 = tpu.matmul %372, %374, %cst_280 {dimension_numbers = #tpu.dot_dimension_numbers<[1], [0], [0], [1], [0, 0, 1, 1], [], []>} : vector<16x8xf32>, vector<8x32xf32>, vector<16x32xf32> -> vector<16x32xf32>
    %376 = arith.addf %369, %375 : vector<16x32xf32>
    %377 = vector.extract_strided_slice %359 {offsets = [2, 0, 0, 0], sizes = [1, 2, 8, 8], strides = [1, 1, 1, 1]} : vector<4x2x8x8xf32> to vector<1x2x8x8xf32>
    %378 = vector.shape_cast %377 : vector<1x2x8x8xf32> to vector<2x8x8xf32>
    %379 = vector.shape_cast %378 : vector<2x8x8xf32> to vector<16x8xf32>
    %c1_281 = arith.constant 1 : index
    %c2_282 = arith.constant 2 : index
    %c0_283 = arith.constant 0 : index
    %c0_284 = arith.constant 0 : index
    %380 = vector.load %arg2[%c1_281, %c2_282, %c0_283, %c0_284] : memref<2x4x8x32xf32, #tpu.memory_space<vmem>>, vector<1x1x8x32xf32>
    %381 = vector.shape_cast %380 : vector<1x1x8x32xf32> to vector<8x32xf32>
    %cst_285 = arith.constant dense<0.000000e+00> : vector<16x32xf32>
    %382 = tpu.matmul %379, %381, %cst_285 {dimension_numbers = #tpu.dot_dimension_numbers<[1], [0], [0], [1], [0, 0, 1, 1], [], []>} : vector<16x8xf32>, vector<8x32xf32>, vector<16x32xf32> -> vector<16x32xf32>
    %383 = arith.addf %376, %382 : vector<16x32xf32>
    %384 = vector.extract_strided_slice %359 {offsets = [3, 0, 0, 0], sizes = [1, 2, 8, 8], strides = [1, 1, 1, 1]} : vector<4x2x8x8xf32> to vector<1x2x8x8xf32>
    %385 = vector.shape_cast %384 : vector<1x2x8x8xf32> to vector<2x8x8xf32>
    %386 = vector.shape_cast %385 : vector<2x8x8xf32> to vector<16x8xf32>
    %c1_286 = arith.constant 1 : index
    %c3_287 = arith.constant 3 : index
    %c0_288 = arith.constant 0 : index
    %c0_289 = arith.constant 0 : index
    %387 = vector.load %arg2[%c1_286, %c3_287, %c0_288, %c0_289] : memref<2x4x8x32xf32, #tpu.memory_space<vmem>>, vector<1x1x8x32xf32>
    %388 = vector.shape_cast %387 : vector<1x1x8x32xf32> to vector<8x32xf32>
    %cst_290 = arith.constant dense<0.000000e+00> : vector<16x32xf32>
    %389 = tpu.matmul %386, %388, %cst_290 {dimension_numbers = #tpu.dot_dimension_numbers<[1], [0], [0], [1], [0, 0, 1, 1], [], []>} : vector<16x8xf32>, vector<8x32xf32>, vector<16x32xf32> -> vector<16x32xf32>
    %390 = arith.addf %383, %389 : vector<16x32xf32>
    %391 = arith.addf %230, %390 : vector<16x32xf32>
    %cst_291 = arith.constant dense<0.000000e+00> : vector<16xf32>
    %392 = vector.multi_reduction <add>, %391, %cst_291 [1] : vector<16x32xf32> to vector<16xf32>
    %393 = vector.shape_cast %392 : vector<16xf32> to vector<16x1xf32>
    %cst_292 = arith.constant 3.200000e+01 : f32
    %394 = vector.broadcast %cst_292 : f32 to vector<16x1xf32>
    %395 = arith.divf %393, %394 : vector<16x1xf32>
    %396 = vector.broadcast %395 : vector<16x1xf32> to vector<16x32xf32>
    %397 = arith.subf %391, %396 : vector<16x32xf32>
    %398 = arith.mulf %397, %397 : vector<16x32xf32>
    %cst_293 = arith.constant dense<0.000000e+00> : vector<16xf32>
    %399 = vector.multi_reduction <add>, %398, %cst_293 [1] : vector<16x32xf32> to vector<16xf32>
    %400 = vector.shape_cast %399 : vector<16xf32> to vector<16x1xf32>
    %cst_294 = arith.constant 3.200000e+01 : f32
    %401 = vector.broadcast %cst_294 : f32 to vector<16x1xf32>
    %402 = arith.divf %400, %401 : vector<16x1xf32>
    %403 = vector.broadcast %395 : vector<16x1xf32> to vector<16x32xf32>
    %404 = arith.subf %391, %403 : vector<16x32xf32>
    %cst_295 = arith.constant 9.99999974E-6 : f32
    %405 = vector.broadcast %cst_295 : f32 to vector<16x1xf32>
    %406 = arith.addf %402, %405 : vector<16x1xf32>
    %407 = math.rsqrt %406 : vector<16x1xf32>
    %408 = vector.broadcast %407 : vector<16x1xf32> to vector<16x32xf32>
    %409 = arith.mulf %404, %408 : vector<16x32xf32>
    %c1_296 = arith.constant 1 : index
    %c15_297 = arith.constant 15 : index
    %c0_298 = arith.constant 0 : index
    %410 = vector.load %arg5[%c1_296, %c15_297, %c0_298] : memref<2x24x64xf32, #tpu.memory_space<vmem>>, vector<1x1x32xf32>
    %411 = vector.shape_cast %410 : vector<1x1x32xf32> to vector<1x32xf32>
    %412 = vector.broadcast %411 : vector<1x32xf32> to vector<16x32xf32>
    %413 = arith.mulf %409, %412 : vector<16x32xf32>
    %c1_299 = arith.constant 1 : index
    %c16_300 = arith.constant 16 : index
    %c0_301 = arith.constant 0 : index
    %414 = vector.load %arg5[%c1_299, %c16_300, %c0_301] : memref<2x24x64xf32, #tpu.memory_space<vmem>>, vector<1x1x32xf32>
    %415 = vector.shape_cast %414 : vector<1x1x32xf32> to vector<1x32xf32>
    %416 = vector.broadcast %415 : vector<1x32xf32> to vector<16x32xf32>
    %417 = arith.addf %413, %416 : vector<16x32xf32>
    %c1_302 = arith.constant 1 : index
    %c0_303 = arith.constant 0 : index
    %c0_304 = arith.constant 0 : index
    %418 = vector.load %arg3[%c1_302, %c0_303, %c0_304] : memref<2x32x64xf32, #tpu.memory_space<vmem>>, vector<1x32x64xf32>
    %419 = vector.shape_cast %418 : vector<1x32x64xf32> to vector<32x64xf32>
    %cst_305 = arith.constant dense<0.000000e+00> : vector<16x64xf32>
    %420 = tpu.matmul %417, %419, %cst_305 {dimension_numbers = #tpu.dot_dimension_numbers<[1], [0], [0], [1], [0, 0, 1, 1], [], []>} : vector<16x32xf32>, vector<32x64xf32>, vector<16x64xf32> -> vector<16x64xf32>
    %c1_306 = arith.constant 1 : index
    %c13_307 = arith.constant 13 : index
    %c0_308 = arith.constant 0 : index
    %421 = vector.load %arg5[%c1_306, %c13_307, %c0_308] : memref<2x24x64xf32, #tpu.memory_space<vmem>>, vector<1x1x64xf32>
    %422 = vector.shape_cast %421 : vector<1x1x64xf32> to vector<1x64xf32>
    %423 = vector.broadcast %422 : vector<1x64xf32> to vector<16x64xf32>
    %424 = arith.addf %420, %423 : vector<16x64xf32>
    %cst_309 = arith.constant 0.000000e+00 : f32
    %425 = vector.broadcast %cst_309 : f32 to vector<16x64xf32>
    %426 = arith.maximumf %424, %425 : vector<16x64xf32>
    %c1_310 = arith.constant 1 : index
    %c0_311 = arith.constant 0 : index
    %c0_312 = arith.constant 0 : index
    %427 = vector.load %arg4[%c1_310, %c0_311, %c0_312] : memref<2x64x32xf32, #tpu.memory_space<vmem>>, vector<1x64x32xf32>
    %428 = vector.shape_cast %427 : vector<1x64x32xf32> to vector<64x32xf32>
    %cst_313 = arith.constant dense<0.000000e+00> : vector<16x32xf32>
    %429 = tpu.matmul %426, %428, %cst_313 {dimension_numbers = #tpu.dot_dimension_numbers<[1], [0], [0], [1], [0, 0, 1, 1], [], []>} : vector<16x64xf32>, vector<64x32xf32>, vector<16x32xf32> -> vector<16x32xf32>
    %c1_314 = arith.constant 1 : index
    %c14_315 = arith.constant 14 : index
    %c0_316 = arith.constant 0 : index
    %430 = vector.load %arg5[%c1_314, %c14_315, %c0_316] : memref<2x24x64xf32, #tpu.memory_space<vmem>>, vector<1x1x32xf32>
    %431 = vector.shape_cast %430 : vector<1x1x32xf32> to vector<1x32xf32>
    %432 = vector.broadcast %431 : vector<1x32xf32> to vector<16x32xf32>
    %433 = arith.addf %429, %432 : vector<16x32xf32>
    %434 = arith.addf %417, %433 : vector<16x32xf32>
    %cst_317 = arith.constant dense<0.000000e+00> : vector<16xf32>
    %435 = vector.multi_reduction <add>, %434, %cst_317 [1] : vector<16x32xf32> to vector<16xf32>
    %436 = vector.shape_cast %435 : vector<16xf32> to vector<16x1xf32>
    %cst_318 = arith.constant 3.200000e+01 : f32
    %437 = vector.broadcast %cst_318 : f32 to vector<16x1xf32>
    %438 = arith.divf %436, %437 : vector<16x1xf32>
    %439 = vector.broadcast %438 : vector<16x1xf32> to vector<16x32xf32>
    %440 = arith.subf %434, %439 : vector<16x32xf32>
    %441 = arith.mulf %440, %440 : vector<16x32xf32>
    %cst_319 = arith.constant dense<0.000000e+00> : vector<16xf32>
    %442 = vector.multi_reduction <add>, %441, %cst_319 [1] : vector<16x32xf32> to vector<16xf32>
    %443 = vector.shape_cast %442 : vector<16xf32> to vector<16x1xf32>
    %cst_320 = arith.constant 3.200000e+01 : f32
    %444 = vector.broadcast %cst_320 : f32 to vector<16x1xf32>
    %445 = arith.divf %443, %444 : vector<16x1xf32>
    %446 = vector.broadcast %438 : vector<16x1xf32> to vector<16x32xf32>
    %447 = arith.subf %434, %446 : vector<16x32xf32>
    %cst_321 = arith.constant 9.99999974E-6 : f32
    %448 = vector.broadcast %cst_321 : f32 to vector<16x1xf32>
    %449 = arith.addf %445, %448 : vector<16x1xf32>
    %450 = math.rsqrt %449 : vector<16x1xf32>
    %451 = vector.broadcast %450 : vector<16x1xf32> to vector<16x32xf32>
    %452 = arith.mulf %447, %451 : vector<16x32xf32>
    %c1_322 = arith.constant 1 : index
    %c17_323 = arith.constant 17 : index
    %c0_324 = arith.constant 0 : index
    %453 = vector.load %arg5[%c1_322, %c17_323, %c0_324] : memref<2x24x64xf32, #tpu.memory_space<vmem>>, vector<1x1x32xf32>
    %454 = vector.shape_cast %453 : vector<1x1x32xf32> to vector<1x32xf32>
    %455 = vector.broadcast %454 : vector<1x32xf32> to vector<16x32xf32>
    %456 = arith.mulf %452, %455 : vector<16x32xf32>
    %c1_325 = arith.constant 1 : index
    %c18_326 = arith.constant 18 : index
    %c0_327 = arith.constant 0 : index
    %457 = vector.load %arg5[%c1_325, %c18_326, %c0_327] : memref<2x24x64xf32, #tpu.memory_space<vmem>>, vector<1x1x32xf32>
    %458 = vector.shape_cast %457 : vector<1x1x32xf32> to vector<1x32xf32>
    %459 = vector.broadcast %458 : vector<1x32xf32> to vector<16x32xf32>
    %460 = arith.addf %456, %459 : vector<16x32xf32>
    %c0_328 = arith.constant 0 : index
    %c0_329 = arith.constant 0 : index
    %461 = vector.load %arg6[%c0_328, %c0_329] : memref<16x32xf32, #tpu.memory_space<vmem>>, vector<16x32xf32>
    tpu.vector_store %arg6[%c0_328, %c0_329], %460 {strides = array<i32>} : memref<16x32xf32, #tpu.memory_space<vmem>>, vector<16x32xf32>,
    return
  }
}

</mosaic_0001>

<llo_original>
// kernel: encoder_forward.1
$region0: #{encoder_forward.1}
  #allocation0 [shape = 'u32[]', space=smem, size = 0x4, offset = 0x4, fixed_abs, tag = 'smem constant byte address 0x4 - core index']
  #allocation1 [shape = 'u32[144,128]{1,0:T(1,128)}', space=vmem, size = 0x12000, scoped, tag = 'internal scratch']
  %s0 = inlined_call_operand.vmem [shape: f32[16,32], index: 0, kind: input, shape index: {}]
  %s1 = inlined_call_operand.vmem [shape: f32[2,3,4,32,8], index: 1, kind: input, shape index: {}]
  %s2 = inlined_call_operand.vmem [shape: f32[2,4,8,32], index: 2, kind: input, shape index: {}]
  %s3 = inlined_call_operand.vmem [shape: f32[2,32,64], index: 3, kind: input, shape index: {}]
  %s4 = inlined_call_operand.vmem [shape: f32[2,64,32], index: 4, kind: input, shape index: {}]
  %s5 = inlined_call_operand.vmem [shape: f32[2,24,64], index: 5, kind: input, shape index: {}]
  %s6 = inlined_call_operand.hbm [shape: f32[16,32], index: 6, kind: output, shape index: {}]
  %s7 = sld [smem:[#allocation0]]
  $region34: #{encoder_forward.1} parent=0
    _
  %s9 = ssub.s32 1, %s7
  %s10 = scalar_select 0, %s9, %s7
  $region1: #{encoder_forward.1} parent=0
    #allocation2 [shape = 'u8[8192]{0}', space=vmem, size = 0x2000, scoped, tag = 'output window, operand 0, single buffered']
    #allocation3 [shape = 's32[1]{0}', space=sflag, size = 0x4, scoped, tag = 'scoped memory for encoder_forward.1']
    %11 = vsyncpa [#allocation3], 0
    // Predicated region
    $region2: #{encoder_forward.1} parent=1 // pred_check
      _
    $region3: #{encoder_forward.1} parent=1 // pred_check_branch
      %13 = sbr.rel (0) target = $region5
    $region4: #{encoder_forward.1} parent=1 // pred_region
      _
    $region5: #{encoder_forward.1} parent=1 // pred_fallthru
      _
    // Predicated region
    $region6: #{encoder_forward.1} parent=1 // pred_check
      _
    $region7: #{encoder_forward.1} parent=1 // pred_check_branch
      %15 = sbr.rel (0) target = $region9
    $region8: #{encoder_forward.1} parent=1 // pred_region
      _
    $region9: #{encoder_forward.1} parent=1 // pred_fallthru
      _
    // Predicated region
    $region10: #{encoder_forward.1} parent=1 // pred_check
      _
    $region11: #{encoder_forward.1} parent=1 // pred_check_branch
      %17 = sbr.rel (0) target = $region13
    $region12: #{encoder_forward.1} parent=1 // pred_region
      _
    $region13: #{encoder_forward.1} parent=1 // pred_fallthru
      _
    // Predicated region
    $region14: #{encoder_forward.1} parent=1 // pred_check
      _
    $region15: #{encoder_forward.1} parent=1 // pred_check_branch
      %19 = sbr.rel (0) target = $region17
    $region16: #{encoder_forward.1} parent=1 // pred_region
      _
    $region17: #{encoder_forward.1} parent=1 // pred_fallthru
      _
    // Predicated region
    $region18: #{encoder_forward.1} parent=1 // pred_check
      _
    $region19: #{encoder_forward.1} parent=1 // pred_check_branch
      %21 = sbr.rel (0) target = $region21
    $region20: #{encoder_forward.1} parent=1 // pred_region
      _
    $region21: #{encoder_forward.1} parent=1 // pred_fallthru
      _
    // Predicated region
    $region22: #{encoder_forward.1} parent=1 // pred_check
      _
    $region23: #{encoder_forward.1} parent=1 // pred_check_branch
      %23 = sbr.rel (0) target = $region25
    $region24: #{encoder_forward.1} parent=1 // pred_region
      _
    $region25: #{encoder_forward.1} parent=1 // pred_fallthru
      _
    %v24 = vld [vmem:[%s0] sm:$0xff]
    %v25 = vld [vmem:[%s0 + $0x8] sm:$0xff]
    %v26 = vld [vmem:[%s1] sm:$0xff]
    %v27 = vld [vmem:[%s1 + $0x8] sm:$0xff]
    %v28 = vld [vmem:[%s1 + $0x10] sm:$0xff]
    %v29 = vld [vmem:[%s1 + $0x18] sm:$0xff]
    %v30 = vld [vmem:[%s5] sm:$0x1]
    %v31 = vlaneseq
    %v32 = vshrl.u32 %v31, 7
    %v33 = vsub.s32 0, %v32
    %v34 = vrot.slane %v30, %v33
    %vm35 = vcmask 261120
    %v37 = vsel %vm35, %v24, 0
    %v40 = vsel %vm35, %v25, 0
    %42 = vmatprep.subr.mxu0 0.0
    %43 = vmatpush1.msra.mxu0 0.0
    %44 = vmatprep.subr.mxu0 0.0
    %45 = vmatpush1.msra.mxu0 0.0
    %46 = vmatprep.subr.mxu0 0.0
    %47 = vmatpush1.msra.mxu0 0.0
    %48 = vmatprep.subr.mxu0 0.0
    %49 = vmatpush1.msra.mxu0 0.0
    %50 = vmatprep.subr.mxu0 0.0
    %51 = vmatpush1.msra.mxu0 0.0
    %52 = vmatprep.subr.mxu0 0.0
    %53 = vmatpush1.msra.mxu0 0.0
    %54 = vmatprep.subr.mxu0 0.0
    %55 = vmatpush1.msra.mxu0 0.0
    %56 = vmatprep.subr.mxu0 0.0
    %57 = vmatpush1.msra.mxu0 0.0
    %58 = vmatprep.subr.mxu0 0.0
    %59 = vmatpush1.msra.mxu0 0.0
    %60 = vmatprep.subr.mxu0 0.0
    %61 = vmatpush1.msra.mxu0 0.0
    %62 = vmatprep.subr.mxu0 0.0
    %63 = vmatpush1.msra.mxu0 0.0
    %64 = vmatprep.subr.mxu0 0.0
    %65 = vmatpush1.msra.mxu0 0.0
    %66 = vmatprep.subr.mxu0 0.0
    %67 = vmatpush1.msra.mxu0 %v29
    %68 = vmatprep.subr.mxu0 0.0
    %69 = vmatpush1.msra.mxu0 %v28
    %70 = vmatprep.subr.mxu0 0.0
    %71 = vmatpush1.msra.mxu0 %v27
    %72 = vmatprep.subr.mxu0 0.0
    %73 = vmatpush1.msra.mxu0 %v26
    %74 = vmatprep.subr.mxu0 0.0
    %75 = vmatpush2.msra.mxu0 0.0
    %76 = vmatprep.subr.mxu0 0.0
    %77 = vmatpush2.msra.mxu0 0.0
    %78 = vmatprep.subr.mxu0 0.0
    %79 = vmatpush2.msra.mxu0 0.0
    %80 = vmatprep.subr.mxu0 0.0
    %81 = vmatpush2.msra.mxu0 0.0
    %82 = vmatprep.subr.mxu0 0.0
    %83 = vmatpush2.msra.mxu0 0.0
    %84 = vmatprep.subr.mxu0 0.0
    %85 = vmatpush2.msra.mxu0 0.0
    %86 = vmatprep.subr.mxu0 0.0
    %87 = vmatpush2.msra.mxu0 0.0
    %88 = vmatprep.subr.mxu0 0.0
    %89 = vmatpush2.msra.mxu0 0.0
    %90 = vmatprep.subr.mxu0 0.0
    %91 = vmatpush2.msra.mxu0 0.0
    %92 = vmatprep.subr.mxu0 0.0
    %93 = vmatpush2.msra.mxu0 0.0
    %94 = vmatprep.subr.mxu0 0.0
    %95 = vmatpush2.msra.mxu0 0.0
    %96 = vmatprep.subr.mxu0 0.0
    %97 = vmatpush2.msra.mxu0 0.0
    %98 = vmatprep.subr.mxu0 0.0
    %99 = vmatpush2.msra.mxu0 0.0
    %100 = vmatprep.subr.mxu0 0.0
    %101 = vmatpush2.msra.mxu0 0.0
    %102 = vmatprep.subr.mxu0 0.0
    %103 = vmatpush2.msra.mxu0 0.0
    %104 = vmatprep.subr.mxu0 0.0
    %105 = vmatpush2.msra.mxu0 0.0
    %106 = vmatprep.mubr.f32.mxu0 0.0
    %107 = vmatmul.mubr.f32.gmra.mxu0 %v37
    %v108 = vpop.f32.mrf.mxu0
    %v109 = vadd.f32 %v34, %v108
    %v110 = vpop.f32.mrf.mxu0
    %111 = vmatprep.mubr.f32.mxu0 0.0
    %112 = vmatmul.mubr.f32.gmra.mxu0 %v40
    %v113 = vpop.f32.mrf.mxu0
    %v114 = vadd.f32 %v34, %v113
    %v115 = vpop.f32.mrf.mxu0
    %116 = vdwg.mxu0
    %s117 = scalar_lea.vmem %s1, 128
    %v118 = vld [vmem:[%s117] sm:$0xff]
    %v119 = vld [vmem:[%s117 + $0x8] sm:$0xff]
    %v120 = vld [vmem:[%s117 + $0x10] sm:$0xff]
    %v121 = vld [vmem:[%s117 + $0x18] sm:$0xff]
    %v122 = vld [vmem:[%s5 + $0x4] sm:$0x1]
    %v123 = vlaneseq
    %v124 = vshrl.u32 %v123, 7
    %v125 = vsub.s32 0, %v124
    %v126 = vrot.slane %v122, %v125
    %127 = vmatprep.subr.mxu0 0.0
    %128 = vmatpush1.msra.mxu0 0.0
    %129 = vmatprep.subr.mxu0 0.0
    %130 = vmatpush1.msra.mxu0 0.0
    %131 = vmatprep.subr.mxu0 0.0
    %132 = vmatpush1.msra.mxu0 0.0
    %133 = vmatprep.subr.mxu0 0.0
    %134 = vmatpush1.msra.mxu0 0.0
    %135 = vmatprep.subr.mxu0 0.0
    %136 = vmatpush1.msra.mxu0 0.0
    %137 = vmatprep.subr.mxu0 0.0
    %138 = vmatpush1.msra.mxu0 0.0
    %139 = vmatprep.subr.mxu0 0.0
    %140 = vmatpush1.msra.mxu0 0.0
    %141 = vmatprep.subr.mxu0 0.0
    %142 = vmatpush1.msra.mxu0 0.0
    %143 = vmatprep.subr.mxu0 0.0
    %144 = vmatpush1.msra.mxu0 0.0
    %145 = vmatprep.subr.mxu0 0.0
    %146 = vmatpush1.msra.mxu0 0.0
    %147 = vmatprep.subr.mxu0 0.0
    %148 = vmatpush1.msra.mxu0 0.0
    %149 = vmatprep.subr.mxu0 0.0
    %150 = vmatpush1.msra.mxu0 0.0
    %151 = vmatprep.subr.mxu0 0.0
    %152 = vmatpush1.msra.mxu0 %v121
    %153 = vmatprep.subr.mxu0 0.0
    %154 = vmatpush1.msra.mxu0 %v120
    %155 = vmatprep.subr.mxu0 0.0
    %156 = vmatpush1.msra.mxu0 %v119
    %157 = vmatprep.subr.mxu0 0.0
    %158 = vmatpush1.msra.mxu0 %v118
    %159 = vmatprep.subr.mxu0 0.0
    %160 = vmatpush2.msra.mxu0 0.0
    %161 = vmatprep.subr.mxu0 0.0
    %162 = vmatpush2.msra.mxu0 0.0
    %163 = vmatprep.subr.mxu0 0.0
    %164 = vmatpush2.msra.mxu0 0.0
    %165 = vmatprep.subr.mxu0 0.0
    %166 = vmatpush2.msra.mxu0 0.0
    %167 = vmatprep.subr.mxu0 0.0
    %168 = vmatpush2.msra.mxu0 0.0
    %169 = vmatprep.subr.mxu0 0.0
    %170 = vmatpush2.msra.mxu0 0.0
    %171 = vmatprep.subr.mxu0 0.0
    %172 = vmatpush2.msra.mxu0 0.0
    %173 = vmatprep.subr.mxu0 0.0
    %174 = vmatpush2.msra.mxu0 0.0
    %175 = vmatprep.subr.mxu0 0.0
    %176 = vmatpush2.msra.mxu0 0.0
    %177 = vmatprep.subr.mxu0 0.0
    %178 = vmatpush2.msra.mxu0 0.0
    %179 = vmatprep.subr.mxu0 0.0
    %180 = vmatpush2.msra.mxu0 0.0
    %181 = vmatprep.subr.mxu0 0.0
    %182 = vmatpush2.msra.mxu0 0.0
    %183 = vmatprep.subr.mxu0 0.0
    %184 = vmatpush2.msra.mxu0 0.0
    %185 = vmatprep.subr.mxu0 0.0
    %186 = vmatpush2.msra.mxu0 0.0
    %187 = vmatprep.subr.mxu0 0.0
    %188 = vmatpush2.msra.mxu0 0.0
    %189 = vmatprep.subr.mxu0 0.0
    %190 = vmatpush2.msra.mxu0 0.0
    %191 = vmatprep.mubr.f32.mxu0 0.0
    %192 = vmatmul.mubr.f32.gmra.mxu0 %v37
    %v193 = vpop.f32.mrf.mxu0
    %v194 = vadd.f32 %v126, %v193
    %v195 = vpop.f32.mrf.mxu0
    %196 = vmatprep.mubr.f32.mxu0 0.0
    %197 = vmatmul.mubr.f32.gmra.mxu0 %v40
    %v198 = vpop.f32.mrf.mxu0
    %v199 = vadd.f32 %v126, %v198
    %v200 = vpop.f32.mrf.mxu0
    %201 = vdwg.mxu0
    %s202 = scalar_lea.vmem %s1, 256
    %v203 = vld [vmem:[%s202] sm:$0xff]
    %v204 = vld [vmem:[%s202 + $0x8] sm:$0xff]
    %v205 = vld [vmem:[%s202 + $0x10] sm:$0xff]
    %v206 = vld [vmem:[%s202 + $0x18] sm:$0xff]
    %v207 = vld [vmem:[%s5 + $0x8] sm:$0x1]
    %v208 = vlaneseq
    %v209 = vshrl.u32 %v208, 7
    %v210 = vsub.s32 0, %v209
    %v211 = vrot.slane %v207, %v210
    %212 = vmatprep.subr.mxu0 0.0
    %213 = vmatpush1.msra.mxu0 0.0
    %214 = vmatprep.subr.mxu0 0.0
    %215 = vmatpush1.msra.mxu0 0.0
    %216 = vmatprep.subr.mxu0 0.0
    %217 = vmatpush1.msra.mxu0 0.0
    %218 = vmatprep.subr.mxu0 0.0
    %219 = vmatpush1.msra.mxu0 0.0
    %220 = vmatprep.subr.mxu0 0.0
    %221 = vmatpush1.msra.mxu0 0.0
    %222 = vmatprep.subr.mxu0 0.0
    %223 = vmatpush1.msra.mxu0 0.0
    %224 = vmatprep.subr.mxu0 0.0
    %225 = vmatpush1.msra.mxu0 0.0
    %226 = vmatprep.subr.mxu0 0.0
    %227 = vmatpush1.msra.mxu0 0.0
    %228 = vmatprep.subr.mxu0 0.0
    %229 = vmatpush1.msra.mxu0 0.0
    %230 = vmatprep.subr.mxu0 0.0
    %231 = vmatpush1.msra.mxu0 0.0
    %232 = vmatprep.subr.mxu0 0.0
    %233 = vmatpush1.msra.mxu0 0.0
    %234 = vmatprep.subr.mxu0 0.0
    %235 = vmatpush1.msra.mxu0 0.0
    %236 = vmatprep.subr.mxu0 0.0
    %237 = vmatpush1.msra.mxu0 %v206
    %238 = vmatprep.subr.mxu0 0.0
    %239 = vmatpush1.msra.mxu0 %v205
    %240 = vmatprep.subr.mxu0 0.0
    %241 = vmatpush1.msra.mxu0 %v204
    %242 = vmatprep.subr.mxu0 0.0
    %243 = vmatpush1.msra.mxu0 %v203
    %244 = vmatprep.subr.mxu0 0.0
    %245 = vmatpush2.msra.mxu0 0.0
    %246 = vmatprep.subr.mxu0 0.0
    %247 = vmatpush2.msra.mxu0 0.0
    %248 = vmatprep.subr.mxu0 0.0
    %249 = vmatpush2.msra.mxu0 0.0
    %250 = vmatprep.subr.mxu0 0.0
    %251 = vmatpush2.msra.mxu0 0.0
    %252 = vmatprep.subr.mxu0 0.0
    %253 = vmatpush2.msra.mxu0 0.0
    %254 = vmatprep.subr.mxu0 0.0
    %255 = vmatpush2.msra.mxu0 0.0
    %256 = vmatprep.subr.mxu0 0.0
    %257 = vmatpush2.msra.mxu0 0.0
    %258 = vmatprep.subr.mxu0 0.0
    %259 = vmatpush2.msra.mxu0 0.0
    %260 = vmatprep.subr.mxu0 0.0
    %261 = vmatpush2.msra.mxu0 0.0
    %262 = vmatprep.subr.mxu0 0.0
    %263 = vmatpush2.msra.mxu0 0.0
    %264 = vmatprep.subr.mxu0 0.0
    %265 = vmatpush2.msra.mxu0 0.0
    %266 = vmatprep.subr.mxu0 0.0
    %267 = vmatpush2.msra.mxu0 0.0
    %268 = vmatprep.subr.mxu0 0.0
    %269 = vmatpush2.msra.mxu0 0.0
    %270 = vmatprep.subr.mxu0 0.0
    %271 = vmatpush2.msra.mxu0 0.0
    %272 = vmatprep.subr.mxu0 0.0
    %273 = vmatpush2.msra.mxu0 0.0
    %274 = vmatprep.subr.mxu0 0.0
    %275 = vmatpush2.msra.mxu0 0.0
    %276 = vmatprep.mubr.f32.mxu0 0.0
    %277 = vmatmul.mubr.f32.gmra.mxu0 %v37
    %v278 = vpop.f32.mrf.mxu0
    %v279 = vadd.f32 %v211, %v278
    %v280 = vpop.f32.mrf.mxu0
    %281 = vmatprep.mubr.f32.mxu0 0.0
    %282 = vmatmul.mubr.f32.gmra.mxu0 %v40
    %v283 = vpop.f32.mrf.mxu0
    %v284 = vadd.f32 %v211, %v283
    %v285 = vpop.f32.mrf.mxu0
    %286 = vdwg.mxu0
    %s287 = scalar_lea.vmem %s1, 32
    %v288 = vld [vmem:[%s287] sm:$0xff]
    %v289 = vld [vmem:[%s287 + $0x8] sm:$0xff]
    %v290 = vld [vmem:[%s287 + $0x10] sm:$0xff]
    %v291 = vld [vmem:[%s287 + $0x18] sm:$0xff]
    %v292 = vld [vmem:[%s5 + $0x1] sm:$0x1]
    %v293 = vlaneseq
    %v294 = vshrl.u32 %v293, 7
    %v295 = vsub.s32 0, %v294
    %v296 = vrot.slane %v292, %v295
    %297 = vmatprep.subr.mxu0 0.0
    %298 = vmatpush1.msra.mxu0 0.0
    %299 = vmatprep.subr.mxu0 0.0
    %300 = vmatpush1.msra.mxu0 0.0
    %301 = vmatprep.subr.mxu0 0.0
    %302 = vmatpush1.msra.mxu0 0.0
    %303 = vmatprep.subr.mxu0 0.0
    %304 = vmatpush1.msra.mxu0 0.0
    %305 = vmatprep.subr.mxu0 0.0
    %306 = vmatpush1.msra.mxu0 0.0
    %307 = vmatprep.subr.mxu0 0.0
    %308 = vmatpush1.msra.mxu0 0.0
    %309 = vmatprep.subr.mxu0 0.0
    %310 = vmatpush1.msra.mxu0 0.0
    %311 = vmatprep.subr.mxu0 0.0
    %312 = vmatpush1.msra.mxu0 0.0
    %313 = vmatprep.subr.mxu0 0.0
    %314 = vmatpush1.msra.mxu0 0.0
    %315 = vmatprep.subr.mxu0 0.0
    %316 = vmatpush1.msra.mxu0 0.0
    %317 = vmatprep.subr.mxu0 0.0
    %318 = vmatpush1.msra.mxu0 0.0
    %319 = vmatprep.subr.mxu0 0.0
    %320 = vmatpush1.msra.mxu0 0.0
    %321 = vmatprep.subr.mxu0 0.0
    %322 = vmatpush1.msra.mxu0 %v291
    %323 = vmatprep.subr.mxu0 0.0
    %324 = vmatpush1.msra.mxu0 %v290
    %325 = vmatprep.subr.mxu0 0.0
    %326 = vmatpush1.msra.mxu0 %v289
    %327 = vmatprep.subr.mxu0 0.0
    %328 = vmatpush1.msra.mxu0 %v288
    %329 = vmatprep.subr.mxu0 0.0
    %330 = vmatpush2.msra.mxu0 0.0
    %331 = vmatprep.subr.mxu0 0.0
    %332 = vmatpush2.msra.mxu0 0.0
    %333 = vmatprep.subr.mxu0 0.0
    %334 = vmatpush2.msra.mxu0 0.0
    %335 = vmatprep.subr.mxu0 0.0
    %336 = vmatpush2.msra.mxu0 0.0
    %337 = vmatprep.subr.mxu0 0.0
    %338 = vmatpush2.msra.mxu0 0.0
    %339 = vmatprep.subr.mxu0 0.0
    %340 = vmatpush2.msra.mxu0 0.0
    %341 = vmatprep.subr.mxu0 0.0
    %342 = vmatpush2.msra.mxu0 0.0
    %343 = vmatprep.subr.mxu0 0.0
    %344 = vmatpush2.msra.mxu0 0.0
    %345 = vmatprep.subr.mxu0 0.0
    %346 = vmatpush2.msra.mxu0 0.0
    %347 = vmatprep.subr.mxu0 0.0
    %348 = vmatpush2.msra.mxu0 0.0
    %349 = vmatprep.subr.mxu0 0.0
    %350 = vmatpush2.msra.mxu0 0.0
    %351 = vmatprep.subr.mxu0 0.0
    %352 = vmatpush2.msra.mxu0 0.0
    %353 = vmatprep.subr.mxu0 0.0
    %354 = vmatpush2.msra.mxu0 0.0
    %355 = vmatprep.subr.mxu0 0.0
    %356 = vmatpush2.msra.mxu0 0.0
    %357 = vmatprep.subr.mxu0 0.0
    %358 = vmatpush2.msra.mxu0 0.0
    %359 = vmatprep.subr.mxu0 0.0
    %360 = vmatpush2.msra.mxu0 0.0
    %361 = vmatprep.mubr.f32.mxu0 0.0
    %362 = vmatmul.mubr.f32.gmra.mxu0 %v37
    %v363 = vpop.f32.mrf.mxu0
    %v364 = vadd.f32 %v296, %v363
    %v365 = vpop.f32.mrf.mxu0
    %366 = vmatprep.mubr.f32.mxu0 0.0
    %367 = vmatmul.mubr.f32.gmra.mxu0 %v40
    %v368 = vpop.f32.mrf.mxu0
    %v369 = vadd.f32 %v296, %v368
    %v370 = vpop.f32.mrf.mxu0
    %371 = vdwg.mxu0
    %s372 = scalar_lea.vmem %s1, 160
    %v373 = vld [vmem:[%s372] sm:$0xff]
    %v374 = vld [vmem:[%s372 + $0x8] sm:$0xff]
    %v375 = vld [vmem:[%s372 + $0x10] sm:$0xff]
    %v376 = vld [vmem:[%s372 + $0x18] sm:$0xff]
    %v377 = vld [vmem:[%s5 + $0x5] sm:$0x1]
    %v378 = vlaneseq
    %v379 = vshrl.u32 %v378, 7
    %v380 = vsub.s32 0, %v379
    %v381 = vrot.slane %v377, %v380
    %382 = vmatprep.subr.mxu0 0.0
    %383 = vmatpush1.msra.mxu0 0.0
    %384 = vmatprep.subr.mxu0 0.0
    %385 = vmatpush1.msra.mxu0 0.0
    %386 = vmatprep.subr.mxu0 0.0
    %387 = vmatpush1.msra.mxu0 0.0
    %388 = vmatprep.subr.mxu0 0.0
    %389 = vmatpush1.msra.mxu0 0.0
    %390 = vmatprep.subr.mxu0 0.0
    %391 = vmatpush1.msra.mxu0 0.0
    %392 = vmatprep.subr.mxu0 0.0
    %393 = vmatpush1.msra.mxu0 0.0
    %394 = vmatprep.subr.mxu0 0.0
    %395 = vmatpush1.msra.mxu0 0.0
    %396 = vmatprep.subr.mxu0 0.0
    %397 = vmatpush1.msra.mxu0 0.0
    %398 = vmatprep.subr.mxu0 0.0
    %399 = vmatpush1.msra.mxu0 0.0
    %400 = vmatprep.subr.mxu0 0.0
    %401 = vmatpush1.msra.mxu0 0.0
    %402 = vmatprep.subr.mxu0 0.0
    %403 = vmatpush1.msra.mxu0 0.0
    %404 = vmatprep.subr.mxu0 0.0
    %405 = vmatpush1.msra.mxu0 0.0
    %406 = vmatprep.subr.mxu0 0.0
    %407 = vmatpush1.msra.mxu0 %v376
    %408 = vmatprep.subr.mxu0 0.0
    %409 = vmatpush1.msra.mxu0 %v375
    %410 = vmatprep.subr.mxu0 0.0
    %411 = vmatpush1.msra.mxu0 %v374
    %412 = vmatprep.subr.mxu0 0.0
    %413 = vmatpush1.msra.mxu0 %v373
    %414 = vmatprep.subr.mxu0 0.0
    %415 = vmatpush2.msra.mxu0 0.0
    %416 = vmatprep.subr.mxu0 0.0
    %417 = vmatpush2.msra.mxu0 0.0
    %418 = vmatprep.subr.mxu0 0.0
    %419 = vmatpush2.msra.mxu0 0.0
    %420 = vmatprep.subr.mxu0 0.0
    %421 = vmatpush2.msra.mxu0 0.0
    %422 = vmatprep.subr.mxu0 0.0
    %423 = vmatpush2.msra.mxu0 0.0
    %424 = vmatprep.subr.mxu0 0.0
    %425 = vmatpush2.msra.mxu0 0.0
    %426 = vmatprep.subr.mxu0 0.0
    %427 = vmatpush2.msra.mxu0 0.0
    %428 = vmatprep.subr.mxu0 0.0
    %429 = vmatpush2.msra.mxu0 0.0
    %430 = vmatprep.subr.mxu0 0.0
    %431 = vmatpush2.msra.mxu0 0.0
    %432 = vmatprep.subr.mxu0 0.0
    %433 = vmatpush2.msra.mxu0 0.0
    %434 = vmatprep.subr.mxu0 0.0
    %435 = vmatpush2.msra.mxu0 0.0
    %436 = vmatprep.subr.mxu0 0.0
    %437 = vmatpush2.msra.mxu0 0.0
    %438 = vmatprep.subr.mxu0 0.0
    %439 = vmatpush2.msra.mxu0 0.0
    %440 = vmatprep.subr.mxu0 0.0
    %441 = vmatpush2.msra.mxu0 0.0
    %442 = vmatprep.subr.mxu0 0.0
    %443 = vmatpush2.msra.mxu0 0.0
    %444 = vmatprep.subr.mxu0 0.0
    %445 = vmatpush2.msra.mxu0 0.0
    %446 = vmatprep.mubr.f32.mxu0 0.0
    %447 = vmatmul.mubr.f32.gmra.mxu0 %v37
    %v448 = vpop.f32.mrf.mxu0
    %v449 = vadd.f32 %v381, %v448
    %v450 = vpop.f32.mrf.mxu0
    %451 = vmatprep.mubr.f32.mxu0 0.0
    %452 = vmatmul.mubr.f32.gmra.mxu0 %v40
    %v453 = vpop.f32.mrf.mxu0
    %v454 = vadd.f32 %v381, %v453
    %v455 = vpop.f32.mrf.mxu0
    %456 = vdwg.mxu0
    %s457 = scalar_lea.vmem %s1, 288
    %v458 = vld [vmem:[%s457] sm:$0xff]
    %v459 = vld [vmem:[%s457 + $0x8] sm:$0xff]
    %v460 = vld [vmem:[%s457 + $0x10] sm:$0xff]
    %v461 = vld [vmem:[%s457 + $0x18] sm:$0xff]
    %v462 = vld [vmem:[%s5 + $0x9] sm:$0x1]
    %v463 = vlaneseq
    %v464 = vshrl.u32 %v463, 7
    %v465 = vsub.s32 0, %v464
    %v466 = vrot.slane %v462, %v465
    %467 = vmatprep.subr.mxu0 0.0
    %468 = vmatpush1.msra.mxu0 0.0
    %469 = vmatprep.subr.mxu0 0.0
    %470 = vmatpush1.msra.mxu0 0.0
    %471 = vmatprep.subr.mxu0 0.0
    %472 = vmatpush1.msra.mxu0 0.0
    %473 = vmatprep.subr.mxu0 0.0
    %474 = vmatpush1.msra.mxu0 0.0
    %475 = vmatprep.subr.mxu0 0.0
    %476 = vmatpush1.msra.mxu0 0.0
    %477 = vmatprep.subr.mxu0 0.0
    %478 = vmatpush1.msra.mxu0 0.0
    %479 = vmatprep.subr.mxu0 0.0
    %480 = vmatpush1.msra.mxu0 0.0
    %481 = vmatprep.subr.mxu0 0.0
    %482 = vmatpush1.msra.mxu0 0.0
    %483 = vmatprep.subr.mxu0 0.0
    %484 = vmatpush1.msra.mxu0 0.0
    %485 = vmatprep.subr.mxu0 0.0
    %486 = vmatpush1.msra.mxu0 0.0
    %487 = vmatprep.subr.mxu0 0.0
    %488 = vmatpush1.msra.mxu0 0.0
    %489 = vmatprep.subr.mxu0 0.0
    %490 = vmatpush1.msra.mxu0 0.0
    %491 = vmatprep.subr.mxu0 0.0
    %492 = vmatpush1.msra.mxu0 %v461
    %493 = vmatprep.subr.mxu0 0.0
    %494 = vmatpush1.msra.mxu0 %v460
    %495 = vmatprep.subr.mxu0 0.0
    %496 = vmatpush1.msra.mxu0 %v459
    %497 = vmatprep.subr.mxu0 0.0
    %498 = vmatpush1.msra.mxu0 %v458
    %499 = vmatprep.subr.mxu0 0.0
    %500 = vmatpush2.msra.mxu0 0.0
    %501 = vmatprep.subr.mxu0 0.0
    %502 = vmatpush2.msra.mxu0 0.0
    %503 = vmatprep.subr.mxu0 0.0
    %504 = vmatpush2.msra.mxu0 0.0
    %505 = vmatprep.subr.mxu0 0.0
    %506 = vmatpush2.msra.mxu0 0.0
    %507 = vmatprep.subr.mxu0 0.0
    %508 = vmatpush2.msra.mxu0 0.0
    %509 = vmatprep.subr.mxu0 0.0
    %510 = vmatpush2.msra.mxu0 0.0
    %511 = vmatprep.subr.mxu0 0.0
    %512 = vmatpush2.msra.mxu0 0.0
    %513 = vmatprep.subr.mxu0 0.0
    %514 = vmatpush2.msra.mxu0 0.0
    %515 = vmatprep.subr.mxu0 0.0
    %516 = vmatpush2.msra.mxu0 0.0
    %517 = vmatprep.subr.mxu0 0.0
    %518 = vmatpush2.msra.mxu0 0.0
    %519 = vmatprep.subr.mxu0 0.0
    %520 = vmatpush2.msra.mxu0 0.0
    %521 = vmatprep.subr.mxu0 0.0
    %522 = vmatpush2.msra.mxu0 0.0
    %523 = vmatprep.subr.mxu0 0.0
    %524 = vmatpush2.msra.mxu0 0.0
    %525 = vmatprep.subr.mxu0 0.0
    %526 = vmatpush2.msra.mxu0 0.0
    %527 = vmatprep.subr.mxu0 0.0
    %528 = vmatpush2.msra.mxu0 0.0
    %529 = vmatprep.subr.mxu0 0.0
    %530 = vmatpush2.msra.mxu0 0.0
    %531 = vmatprep.mubr.f32.mxu0 0.0
    %532 = vmatmul.mubr.f32.gmra.mxu0 %v37
    %v533 = vpop.f32.mrf.mxu0
    %v534 = vadd.f32 %v466, %v533
    %v535 = vpop.f32.mrf.mxu0
    %536 = vmatprep.mubr.f32.mxu0 0.0
    %537 = vmatmul.mubr.f32.gmra.mxu0 %v40
    %v538 = vpop.f32.mrf.mxu0
    %v539 = vadd.f32 %v466, %v538
    %v540 = vpop.f32.mrf.mxu0
    %541 = vdwg.mxu0
    %s542 = scalar_lea.vmem %s1, 64
    %v543 = vld [vmem:[%s542] sm:$0xff]
    %v544 = vld [vmem:[%s542 + $0x8] sm:$0xff]
    %v545 = vld [vmem:[%s542 + $0x10] sm:$0xff]
    %v546 = vld [vmem:[%s542 + $0x18] sm:$0xff]
    %v547 = vld [vmem:[%s5 + $0x2] sm:$0x1]
    %v548 = vlaneseq
    %v549 = vshrl.u32 %v548, 7
    %v550 = vsub.s32 0, %v549
    %v551 = vrot.slane %v547, %v550
    %552 = vmatprep.subr.mxu0 0.0
    %553 = vmatpush1.msra.mxu0 0.0
    %554 = vmatprep.subr.mxu0 0.0
    %555 = vmatpush1.msra.mxu0 0.0
    %556 = vmatprep.subr.mxu0 0.0
    %557 = vmatpush1.msra.mxu0 0.0
    %558 = vmatprep.subr.mxu0 0.0
    %559 = vmatpush1.msra.mxu0 0.0
    %560 = vmatprep.subr.mxu0 0.0
    %561 = vmatpush1.msra.mxu0 0.0
    %562 = vmatprep.subr.mxu0 0.0
    %563 = vmatpush1.msra.mxu0 0.0
    %564 = vmatprep.subr.mxu0 0.0
    %565 = vmatpush1.msra.mxu0 0.0
    %566 = vmatprep.subr.mxu0 0.0
    %567 = vmatpush1.msra.mxu0 0.0
    %568 = vmatprep.subr.mxu0 0.0
    %569 = vmatpush1.msra.mxu0 0.0
    %570 = vmatprep.subr.mxu0 0.0
    %571 = vmatpush1.msra.mxu0 0.0
    %572 = vmatprep.subr.mxu0 0.0
    %573 = vmatpush1.msra.mxu0 0.0
    %574 = vmatprep.subr.mxu0 0.0
    %575 = vmatpush1.msra.mxu0 0.0
    %576 = vmatprep.subr.mxu0 0.0
    %577 = vmatpush1.msra.mxu0 %v546
    %578 = vmatprep.subr.mxu0 0.0
    %579 = vmatpush1.msra.mxu0 %v545
    %580 = vmatprep.subr.mxu0 0.0
    %581 = vmatpush1.msra.mxu0 %v544
    %582 = vmatprep.subr.mxu0 0.0
    %583 = vmatpush1.msra.mxu0 %v543
    %584 = vmatprep.subr.mxu0 0.0
    %585 = vmatpush2.msra.mxu0 0.0
    %586 = vmatprep.subr.mxu0 0.0
    %587 = vmatpush2.msra.mxu0 0.0
    %588 = vmatprep.subr.mxu0 0.0
    %589 = vmatpush2.msra.mxu0 0.0
    %590 = vmatprep.subr.mxu0 0.0
    %591 = vmatpush2.msra.mxu0 0.0
    %592 = vmatprep.subr.mxu0 0.0
    %593 = vmatpush2.msra.mxu0 0.0
    %594 = vmatprep.subr.mxu0 0.0
    %595 = vmatpush2.msra.mxu0 0.0
    %596 = vmatprep.subr.mxu0 0.0
    %597 = vmatpush2.msra.mxu0 0.0
    %598 = vmatprep.subr.mxu0 0.0
    %599 = vmatpush2.msra.mxu0 0.0
    %600 = vmatprep.subr.mxu0 0.0
    %601 = vmatpush2.msra.mxu0 0.0
    %602 = vmatprep.subr.mxu0 0.0
    %603 = vmatpush2.msra.mxu0 0.0
    %604 = vmatprep.subr.mxu0 0.0
    %605 = vmatpush2.msra.mxu0 0.0
    %606 = vmatprep.subr.mxu0 0.0
    %607 = vmatpush2.msra.mxu0 0.0
    %608 = vmatprep.subr.mxu0 0.0
    %609 = vmatpush2.msra.mxu0 0.0
    %610 = vmatprep.subr.mxu0 0.0
    %611 = vmatpush2.msra.mxu0 0.0
    %612 = vmatprep.subr.mxu0 0.0
    %613 = vmatpush2.msra.mxu0 0.0
    %614 = vmatprep.subr.mxu0 0.0
    %615 = vmatpush2.msra.mxu0 0.0
    %616 = vmatprep.mubr.f32.mxu0 0.0
    %617 = vmatmul.mubr.f32.gmra.mxu0 %v37
    %v618 = vpop.f32.mrf.mxu0
    %v619 = vadd.f32 %v551, %v618
    %v620 = vpop.f32.mrf.mxu0
    %621 = vmatprep.mubr.f32.mxu0 0.0
    %622 = vmatmul.mubr.f32.gmra.mxu0 %v40
    %v623 = vpop.f32.mrf.mxu0
    %v624 = vadd.f32 %v551, %v623
    %v625 = vpop.f32.mrf.mxu0
    %626 = vdwg.mxu0
    %s627 = scalar_lea.vmem %s1, 192
    %v628 = vld [vmem:[%s627] sm:$0xff]
    %v629 = vld [vmem:[%s627 + $0x8] sm:$0xff]
    %v630 = vld [vmem:[%s627 + $0x10] sm:$0xff]
    %v631 = vld [vmem:[%s627 + $0x18] sm:$0xff]
    %v632 = vld [vmem:[%s5 + $0x6] sm:$0x1]
    %v633 = vlaneseq
    %v634 = vshrl.u32 %v633, 7
    %v635 = vsub.s32 0, %v634
    %v636 = vrot.slane %v632, %v635
    %637 = vmatprep.subr.mxu0 0.0
    %638 = vmatpush1.msra.mxu0 0.0
    %639 = vmatprep.subr.mxu0 0.0
    %640 = vmatpush1.msra.mxu0 0.0
    %641 = vmatprep.subr.mxu0 0.0
    %642 = vmatpush1.msra.mxu0 0.0
    %643 = vmatprep.subr.mxu0 0.0
    %644 = vmatpush1.msra.mxu0 0.0
    %645 = vmatprep.subr.mxu0 0.0
    %646 = vmatpush1.msra.mxu0 0.0
    %647 = vmatprep.subr.mxu0 0.0
    %648 = vmatpush1.msra.mxu0 0.0
    %649 = vmatprep.subr.mxu0 0.0
    %650 = vmatpush1.msra.mxu0 0.0
    %651 = vmatprep.subr.mxu0 0.0
    %652 = vmatpush1.msra.mxu0 0.0
    %653 = vmatprep.subr.mxu0 0.0
    %654 = vmatpush1.msra.mxu0 0.0
    %655 = vmatprep.subr.mxu0 0.0
    %656 = vmatpush1.msra.mxu0 0.0
    %657 = vmatprep.subr.mxu0 0.0
    %658 = vmatpush1.msra.mxu0 0.0
    %659 = vmatprep.subr.mxu0 0.0
    %660 = vmatpush1.msra.mxu0 0.0
    %661 = vmatprep.subr.mxu0 0.0
    %662 = vmatpush1.msra.mxu0 %v631
    %663 = vmatprep.subr.mxu0 0.0
    %664 = vmatpush1.msra.mxu0 %v630
    %665 = vmatprep.subr.mxu0 0.0
    %666 = vmatpush1.msra.mxu0 %v629
    %667 = vmatprep.subr.mxu0 0.0
    %668 = vmatpush1.msra.mxu0 %v628
    %669 = vmatprep.subr.mxu0 0.0
    %670 = vmatpush2.msra.mxu0 0.0
    %671 = vmatprep.subr.mxu0 0.0
    %672 = vmatpush2.msra.mxu0 0.0
    %673 = vmatprep.subr.mxu0 0.0
    %674 = vmatpush2.msra.mxu0 0.0
    %675 = vmatprep.subr.mxu0 0.0
    %676 = vmatpush2.msra.mxu0 0.0
    %677 = vmatprep.subr.mxu0 0.0
    %678 = vmatpush2.msra.mxu0 0.0
    %679 = vmatprep.subr.mxu0 0.0
    %680 = vmatpush2.msra.mxu0 0.0
    %681 = vmatprep.subr.mxu0 0.0
    %682 = vmatpush2.msra.mxu0 0.0
    %683 = vmatprep.subr.mxu0 0.0
    %684 = vmatpush2.msra.mxu0 0.0
    %685 = vmatprep.subr.mxu0 0.0
    %686 = vmatpush2.msra.mxu0 0.0
    %687 = vmatprep.subr.mxu0 0.0
    %688 = vmatpush2.msra.mxu0 0.0
    %689 = vmatprep.subr.mxu0 0.0
    %690 = vmatpush2.msra.mxu0 0.0
    %691 = vmatprep.subr.mxu0 0.0
    %692 = vmatpush2.msra.mxu0 0.0
    %693 = vmatprep.subr.mxu0 0.0
    %694 = vmatpush2.msra.mxu0 0.0
    %695 = vmatprep.subr.mxu0 0.0
    %696 = vmatpush2.msra.mxu0 0.0
    %697 = vmatprep.subr.mxu0 0.0
    %698 = vmatpush2.msra.mxu0 0.0
    %699 = vmatprep.subr.mxu0 0.0
    %700 = vmatpush2.msra.mxu0 0.0
    %701 = vmatprep.mubr.f32.mxu0 0.0
    %702 = vmatmul.mubr.f32.gmra.mxu0 %v37
    %v703 = vpop.f32.mrf.mxu0
    %v704 = vadd.f32 %v636, %v703
    %v705 = vpop.f32.mrf.mxu0
    %706 = vmatprep.mubr.f32.mxu0 0.0
    %707 = vmatmul.mubr.f32.gmra.mxu0 %v40
    %v708 = vpop.f32.mrf.mxu0
    %v709 = vadd.f32 %v636, %v708
    %v710 = vpop.f32.mrf.mxu0
    %711 = vdwg.mxu0
    %s712 = scalar_lea.vmem %s1, 320
    %v713 = vld [vmem:[%s712] sm:$0xff]
    %v714 = vld [vmem:[%s712 + $0x8] sm:$0xff]
    %v715 = vld [vmem:[%s712 + $0x10] sm:$0xff]
    %v716 = vld [vmem:[%s712 + $0x18] sm:$0xff]
    %v717 = vld [vmem:[%s5 + $0xa] sm:$0x1]
    %v718 = vlaneseq
    %v719 = vshrl.u32 %v718, 7
    %v720 = vsub.s32 0, %v719
    %v721 = vrot.slane %v717, %v720
    %722 = vmatprep.subr.mxu0 0.0
    %723 = vmatpush1.msra.mxu0 0.0
    %724 = vmatprep.subr.mxu0 0.0
    %725 = vmatpush1.msra.mxu0 0.0
    %726 = vmatprep.subr.mxu0 0.0
    %727 = vmatpush1.msra.mxu0 0.0
    %728 = vmatprep.subr.mxu0 0.0
    %729 = vmatpush1.msra.mxu0 0.0
    %730 = vmatprep.subr.mxu0 0.0
    %731 = vmatpush1.msra.mxu0 0.0
    %732 = vmatprep.subr.mxu0 0.0
    %733 = vmatpush1.msra.mxu0 0.0
    %734 = vmatprep.subr.mxu0 0.0
    %735 = vmatpush1.msra.mxu0 0.0
    %736 = vmatprep.subr.mxu0 0.0
    %737 = vmatpush1.msra.mxu0 0.0
    %738 = vmatprep.subr.mxu0 0.0
    %739 = vmatpush1.msra.mxu0 0.0
    %740 = vmatprep.subr.mxu0 0.0
    %741 = vmatpush1.msra.mxu0 0.0
    %742 = vmatprep.subr.mxu0 0.0
    %743 = vmatpush1.msra.mxu0 0.0
    %744 = vmatprep.subr.mxu0 0.0
    %745 = vmatpush1.msra.mxu0 0.0
    %746 = vmatprep.subr.mxu0 0.0
    %747 = vmatpush1.msra.mxu0 %v716
    %748 = vmatprep.subr.mxu0 0.0
    %749 = vmatpush1.msra.mxu0 %v715
    %750 = vmatprep.subr.mxu0 0.0
    %751 = vmatpush1.msra.mxu0 %v714
    %752 = vmatprep.subr.mxu0 0.0
    %753 = vmatpush1.msra.mxu0 %v713
    %754 = vmatprep.subr.mxu0 0.0
    %755 = vmatpush2.msra.mxu0 0.0
    %756 = vmatprep.subr.mxu0 0.0
    %757 = vmatpush2.msra.mxu0 0.0
    %758 = vmatprep.subr.mxu0 0.0
    %759 = vmatpush2.msra.mxu0 0.0
    %760 = vmatprep.subr.mxu0 0.0
    %761 = vmatpush2.msra.mxu0 0.0
    %762 = vmatprep.subr.mxu0 0.0
    %763 = vmatpush2.msra.mxu0 0.0
    %764 = vmatprep.subr.mxu0 0.0
    %765 = vmatpush2.msra.mxu0 0.0
    %766 = vmatprep.subr.mxu0 0.0
    %767 = vmatpush2.msra.mxu0 0.0
    %768 = vmatprep.subr.mxu0 0.0
    %769 = vmatpush2.msra.mxu0 0.0
    %770 = vmatprep.subr.mxu0 0.0
    %771 = vmatpush2.msra.mxu0 0.0
    %772 = vmatprep.subr.mxu0 0.0
    %773 = vmatpush2.msra.mxu0 0.0
    %774 = vmatprep.subr.mxu0 0.0
    %775 = vmatpush2.msra.mxu0 0.0
    %776 = vmatprep.subr.mxu0 0.0
    %777 = vmatpush2.msra.mxu0 0.0
    %778 = vmatprep.subr.mxu0 0.0
    %779 = vmatpush2.msra.mxu0 0.0
    %780 = vmatprep.subr.mxu0 0.0
    %781 = vmatpush2.msra.mxu0 0.0
    %782 = vmatprep.subr.mxu0 0.0
    %783 = vmatpush2.msra.mxu0 0.0
    %784 = vmatprep.subr.mxu0 0.0
    %785 = vmatpush2.msra.mxu0 0.0
    %786 = vmatprep.mubr.f32.mxu0 0.0
    %787 = vmatmul.mubr.f32.gmra.mxu0 %v37
    %v788 = vpop.f32.mrf.mxu0
    %v789 = vadd.f32 %v721, %v788
    %v790 = vpop.f32.mrf.mxu0
    %791 = vmatprep.mubr.f32.mxu0 0.0
    %792 = vmatmul.mubr.f32.gmra.mxu0 %v40
    %v793 = vpop.f32.mrf.mxu0
    %v794 = vadd.f32 %v721, %v793
    %v795 = vpop.f32.mrf.mxu0
    %796 = vdwg.mxu0
    %s797 = scalar_lea.vmem %s1, 96
    %v798 = vld [vmem:[%s797] sm:$0xff]
    %v799 = vld [vmem:[%s797 + $0x8] sm:$0xff]
    %v800 = vld [vmem:[%s797 + $0x10] sm:$0xff]
    %v801 = vld [vmem:[%s797 + $0x18] sm:$0xff]
    %v802 = vld [vmem:[%s5 + $0x3] sm:$0x1]
    %v803 = vlaneseq
    %v804 = vshrl.u32 %v803, 7
    %v805 = vsub.s32 0, %v804
    %v806 = vrot.slane %v802, %v805
    %807 = vmatprep.subr.mxu0 0.0
    %808 = vmatpush1.msra.mxu0 0.0
    %809 = vmatprep.subr.mxu0 0.0
    %810 = vmatpush1.msra.mxu0 0.0
    %811 = vmatprep.subr.mxu0 0.0
    %812 = vmatpush1.msra.mxu0 0.0
    %813 = vmatprep.subr.mxu0 0.0
    %814 = vmatpush1.msra.mxu0 0.0
    %815 = vmatprep.subr.mxu0 0.0
    %816 = vmatpush1.msra.mxu0 0.0
    %817 = vmatprep.subr.mxu0 0.0
    %818 = vmatpush1.msra.mxu0 0.0
    %819 = vmatprep.subr.mxu0 0.0
    %820 = vmatpush1.msra.mxu0 0.0
    %821 = vmatprep.subr.mxu0 0.0
    %822 = vmatpush1.msra.mxu0 0.0
    %823 = vmatprep.subr.mxu0 0.0
    %824 = vmatpush1.msra.mxu0 0.0
    %825 = vmatprep.subr.mxu0 0.0
    %826 = vmatpush1.msra.mxu0 0.0
    %827 = vmatprep.subr.mxu0 0.0
    %828 = vmatpush1.msra.mxu0 0.0
    %829 = vmatprep.subr.mxu0 0.0
    %830 = vmatpush1.msra.mxu0 0.0
    %831 = vmatprep.subr.mxu0 0.0
    %832 = vmatpush1.msra.mxu0 %v801
    %833 = vmatprep.subr.mxu0 0.0
    %834 = vmatpush1.msra.mxu0 %v800
    %835 = vmatprep.subr.mxu0 0.0
    %836 = vmatpush1.msra.mxu0 %v799
    %837 = vmatprep.subr.mxu0 0.0
    %838 = vmatpush1.msra.mxu0 %v798
    %839 = vmatprep.subr.mxu0 0.0
    %840 = vmatpush2.msra.mxu0 0.0
    %841 = vmatprep.subr.mxu0 0.0
    %842 = vmatpush2.msra.mxu0 0.0
    %843 = vmatprep.subr.mxu0 0.0
    %844 = vmatpush2.msra.mxu0 0.0
    %845 = vmatprep.subr.mxu0 0.0
    %846 = vmatpush2.msra.mxu0 0.0
    %847 = vmatprep.subr.mxu0 0.0
    %848 = vmatpush2.msra.mxu0 0.0
    %849 = vmatprep.subr.mxu0 0.0
    %850 = vmatpush2.msra.mxu0 0.0
    %851 = vmatprep.subr.mxu0 0.0
    %852 = vmatpush2.msra.mxu0 0.0
    %853 = vmatprep.subr.mxu0 0.0
    %854 = vmatpush2.msra.mxu0 0.0
    %855 = vmatprep.subr.mxu0 0.0
    %856 = vmatpush2.msra.mxu0 0.0
    %857 = vmatprep.subr.mxu0 0.0
    %858 = vmatpush2.msra.mxu0 0.0
    %859 = vmatprep.subr.mxu0 0.0
    %860 = vmatpush2.msra.mxu0 0.0
    %861 = vmatprep.subr.mxu0 0.0
    %862 = vmatpush2.msra.mxu0 0.0
    %863 = vmatprep.subr.mxu0 0.0
    %864 = vmatpush2.msra.mxu0 0.0
    %865 = vmatprep.subr.mxu0 0.0
    %866 = vmatpush2.msra.mxu0 0.0
    %867 = vmatprep.subr.mxu0 0.0
    %868 = vmatpush2.msra.mxu0 0.0
    %869 = vmatprep.subr.mxu0 0.0
    %870 = vmatpush2.msra.mxu0 0.0
    %871 = vmatprep.mubr.f32.mxu0 0.0
    %872 = vmatmul.mubr.f32.gmra.mxu0 %v37
    %v873 = vpop.f32.mrf.mxu0
    %v874 = vadd.f32 %v806, %v873
    %v875 = vpop.f32.mrf.mxu0
    %876 = vmatprep.mubr.f32.mxu0 0.0
    %877 = vmatmul.mubr.f32.gmra.mxu0 %v40
    %v878 = vpop.f32.mrf.mxu0
    %v879 = vadd.f32 %v806, %v878
    %v880 = vpop.f32.mrf.mxu0
    %881 = vdwg.mxu0
    %s882 = scalar_lea.vmem %s1, 224
    %v883 = vld [vmem:[%s882] sm:$0xff]
    %v884 = vld [vmem:[%s882 + $0x8] sm:$0xff]
    %v885 = vld [vmem:[%s882 + $0x10] sm:$0xff]
    %v886 = vld [vmem:[%s882 + $0x18] sm:$0xff]
    %v887 = vld [vmem:[%s5 + $0x7] sm:$0x1]
    %v888 = vlaneseq
    %v889 = vshrl.u32 %v888, 7
    %v890 = vsub.s32 0, %v889
    %v891 = vrot.slane %v887, %v890
    %892 = vmatprep.subr.mxu0 0.0
    %893 = vmatpush1.msra.mxu0 0.0
    %894 = vmatprep.subr.mxu0 0.0
    %895 = vmatpush1.msra.mxu0 0.0
    %896 = vmatprep.subr.mxu0 0.0
    %897 = vmatpush1.msra.mxu0 0.0
    %898 = vmatprep.subr.mxu0 0.0
    %899 = vmatpush1.msra.mxu0 0.0
    %900 = vmatprep.subr.mxu0 0.0
    %901 = vmatpush1.msra.mxu0 0.0
    %902 = vmatprep.subr.mxu0 0.0
    %903 = vmatpush1.msra.mxu0 0.0
    %904 = vmatprep.subr.mxu0 0.0
    %905 = vmatpush1.msra.mxu0 0.0
    %906 = vmatprep.subr.mxu0 0.0
    %907 = vmatpush1.msra.mxu0 0.0
    %908 = vmatprep.subr.mxu0 0.0
    %909 = vmatpush1.msra.mxu0 0.0
    %910 = vmatprep.subr.mxu0 0.0
    %911 = vmatpush1.msra.mxu0 0.0
    %912 = vmatprep.subr.mxu0 0.0
    %913 = vmatpush1.msra.mxu0 0.0
    %914 = vmatprep.subr.mxu0 0.0
    %915 = vmatpush1.msra.mxu0 0.0
    %916 = vmatprep.subr.mxu0 0.0
    %917 = vmatpush1.msra.mxu0 %v886
    %918 = vmatprep.subr.mxu0 0.0
    %919 = vmatpush1.msra.mxu0 %v885
    %920 = vmatprep.subr.mxu0 0.0
    %921 = vmatpush1.msra.mxu0 %v884
    %922 = vmatprep.subr.mxu0 0.0
    %923 = vmatpush1.msra.mxu0 %v883
    %924 = vmatprep.subr.mxu0 0.0
    %925 = vmatpush2.msra.mxu0 0.0
    %926 = vmatprep.subr.mxu0 0.0
    %927 = vmatpush2.msra.mxu0 0.0
    %928 = vmatprep.subr.mxu0 0.0
    %929 = vmatpush2.msra.mxu0 0.0
    %930 = vmatprep.subr.mxu0 0.0
    %931 = vmatpush2.msra.mxu0 0.0
    %932 = vmatprep.subr.mxu0 0.0
    %933 = vmatpush2.msra.mxu0 0.0
    %934 = vmatprep.subr.mxu0 0.0
    %935 = vmatpush2.msra.mxu0 0.0
    %936 = vmatprep.subr.mxu0 0.0
    %937 = vmatpush2.msra.mxu0 0.0
    %938 = vmatprep.subr.mxu0 0.0
    %939 = vmatpush2.msra.mxu0 0.0
    %940 = vmatprep.subr.mxu0 0.0
    %941 = vmatpush2.msra.mxu0 0.0
    %942 = vmatprep.subr.mxu0 0.0
    %943 = vmatpush2.msra.mxu0 0.0
    %944 = vmatprep.subr.mxu0 0.0
    %945 = vmatpush2.msra.mxu0 0.0
    %946 = vmatprep.subr.mxu0 0.0
    %947 = vmatpush2.msra.mxu0 0.0
    %948 = vmatprep.subr.mxu0 0.0
    %949 = vmatpush2.msra.mxu0 0.0
    %950 = vmatprep.subr.mxu0 0.0
    %951 = vmatpush2.msra.mxu0 0.0
    %952 = vmatprep.subr.mxu0 0.0
    %953 = vmatpush2.msra.mxu0 0.0
    %954 = vmatprep.subr.mxu0 0.0
    %955 = vmatpush2.msra.mxu0 0.0
    %956 = vmatprep.mubr.f32.mxu0 0.0
    %957 = vmatmul.mubr.f32.gmra.mxu0 %v37
    %v958 = vpop.f32.mrf.mxu0
    %v959 = vadd.f32 %v891, %v958
    %v960 = vpop.f32.mrf.mxu0
    %961 = vmatprep.mubr.f32.mxu0 0.0
    %962 = vmatmul.mubr.f32.gmra.mxu0 %v40
    %v963 = vpop.f32.mrf.mxu0
    %v964 = vadd.f32 %v891, %v963
    %v965 = vpop.f32.mrf.mxu0
    %966 = vdwg.mxu0
    %s967 = scalar_lea.vmem %s1, 352
    %v968 = vld [vmem:[%s967] sm:$0xff]
    %v969 = vld [vmem:[%s967 + $0x8] sm:$0xff]
    %v970 = vld [vmem:[%s967 + $0x10] sm:$0xff]
    %v971 = vld [vmem:[%s967 + $0x18] sm:$0xff]
    %v972 = vld [vmem:[%s5 + $0xb] sm:$0x1]
    %v973 = vlaneseq
    %v974 = vshrl.u32 %v973, 7
    %v975 = vsub.s32 0, %v974
    %v976 = vrot.slane %v972, %v975
    %977 = vmatprep.subr.mxu0 0.0
    %978 = vmatpush1.msra.mxu0 0.0
    %979 = vmatprep.subr.mxu0 0.0
    %980 = vmatpush1.msra.mxu0 0.0
    %981 = vmatprep.subr.mxu0 0.0
    %982 = vmatpush1.msra.mxu0 0.0
    %983 = vmatprep.subr.mxu0 0.0
    %984 = vmatpush1.msra.mxu0 0.0
    %985 = vmatprep.subr.mxu0 0.0
    %986 = vmatpush1.msra.mxu0 0.0
    %987 = vmatprep.subr.mxu0 0.0
    %988 = vmatpush1.msra.mxu0 0.0
    %989 = vmatprep.subr.mxu0 0.0
    %990 = vmatpush1.msra.mxu0 0.0
    %991 = vmatprep.subr.mxu0 0.0
    %992 = vmatpush1.msra.mxu0 0.0
    %993 = vmatprep.subr.mxu0 0.0
    %994 = vmatpush1.msra.mxu0 0.0
    %995 = vmatprep.subr.mxu0 0.0
    %996 = vmatpush1.msra.mxu0 0.0
    %997 = vmatprep.subr.mxu0 0.0
    %998 = vmatpush1.msra.mxu0 0.0
    %999 = vmatprep.subr.mxu0 0.0
    %1000 = vmatpush1.msra.mxu0 0.0
    %1001 = vmatprep.subr.mxu0 0.0
    %1002 = vmatpush1.msra.mxu0 %v971
    %1003 = vmatprep.subr.mxu0 0.0
    %1004 = vmatpush1.msra.mxu0 %v970
    %1005 = vmatprep.subr.mxu0 0.0
    %1006 = vmatpush1.msra.mxu0 %v969
    %1007 = vmatprep.subr.mxu0 0.0
    %1008 = vmatpush1.msra.mxu0 %v968
    %1009 = vmatprep.subr.mxu0 0.0
    %1010 = vmatpush2.msra.mxu0 0.0
    %1011 = vmatprep.subr.mxu0 0.0
    %1012 = vmatpush2.msra.mxu0 0.0
    %1013 = vmatprep.subr.mxu0 0.0
    %1014 = vmatpush2.msra.mxu0 0.0
    %1015 = vmatprep.subr.mxu0 0.0
    %1016 = vmatpush2.msra.mxu0 0.0
    %1017 = vmatprep.subr.mxu0 0.0
    %1018 = vmatpush2.msra.mxu0 0.0
    %1019 = vmatprep.subr.mxu0 0.0
    %1020 = vmatpush2.msra.mxu0 0.0
    %1021 = vmatprep.subr.mxu0 0.0
    %1022 = vmatpush2.msra.mxu0 0.0
    %1023 = vmatprep.subr.mxu0 0.0
    %1024 = vmatpush2.msra.mxu0 0.0
    %1025 = vmatprep.subr.mxu0 0.0
    %1026 = vmatpush2.msra.mxu0 0.0
    %1027 = vmatprep.subr.mxu0 0.0
    %1028 = vmatpush2.msra.mxu0 0.0
    %1029 = vmatprep.subr.mxu0 0.0
    %1030 = vmatpush2.msra.mxu0 0.0
    %1031 = vmatprep.subr.mxu0 0.0
    %1032 = vmatpush2.msra.mxu0 0.0
    %1033 = vmatprep.subr.mxu0 0.0
    %1034 = vmatpush2.msra.mxu0 0.0
    %1035 = vmatprep.subr.mxu0 0.0
    %1036 = vmatpush2.msra.mxu0 0.0
    %1037 = vmatprep.subr.mxu0 0.0
    %1038 = vmatpush2.msra.mxu0 0.0
    %1039 = vmatprep.subr.mxu0 0.0
    %1040 = vmatpush2.msra.mxu0 0.0
    %1041 = vmatprep.mubr.f32.mxu0 0.0
    %1042 = vmatmul.mubr.f32.gmra.mxu0 %v37
    %v1043 = vpop.f32.mrf.mxu0
    %v1044 = vadd.f32 %v976, %v1043
    %v1045 = vpop.f32.mrf.mxu0
    %1046 = vmatprep.mubr.f32.mxu0 0.0
    %1047 = vmatmul.mubr.f32.gmra.mxu0 %v40
    %v1048 = vpop.f32.mrf.mxu0
    %v1049 = vadd.f32 %v976, %v1048
    %v1050 = vpop.f32.mrf.mxu0
    %1051 = vdwg.mxu0
    %vm1052 = vcmask 64512
    %v1054 = vsel %vm1052, %v109, 0
    %v1057 = vsel %vm1052, %v194, 0
    %1059 = vmatprep.subr.mxu0 0.0
    %1060 = vmatpush1.xpose.msra.mxu0 0.0
    %1061 = vmatprep.subr.mxu0 0.0
    %1062 = vmatpush1.xpose.msra.mxu0 0.0
    %1063 = vmatprep.subr.mxu0 0.0
    %1064 = vmatpush1.xpose.msra.mxu0 0.0
    %1065 = vmatprep.subr.mxu0 0.0
    %1066 = vmatpush1.xpose.msra.mxu0 0.0
    %1067 = vmatprep.subr.mxu0 0.0
    %1068 = vmatpush1.xpose.msra.mxu0 0.0
    %1069 = vmatprep.subr.mxu0 0.0
    %1070 = vmatpush1.xpose.msra.mxu0 0.0
    %1071 = vmatprep.subr.mxu0 0.0
    %1072 = vmatpush1.xpose.msra.mxu0 0.0
    %1073 = vmatprep.subr.mxu0 0.0
    %1074 = vmatpush1.xpose.msra.mxu0 0.0
    %1075 = vmatprep.subr.mxu0 0.0
    %1076 = vmatpush1.xpose.msra.mxu0 0.0
    %1077 = vmatprep.subr.mxu0 0.0
    %1078 = vmatpush1.xpose.msra.mxu0 0.0
    %1079 = vmatprep.subr.mxu0 0.0
    %1080 = vmatpush1.xpose.msra.mxu0 0.0
    %1081 = vmatprep.subr.mxu0 0.0
    %1082 = vmatpush1.xpose.msra.mxu0 0.0
    %1083 = vmatprep.subr.mxu0 0.0
    %1084 = vmatpush1.xpose.msra.mxu0 0.0
    %1085 = vmatprep.subr.mxu0 0.0
    %1086 = vmatpush1.xpose.msra.mxu0 0.0
    %1087 = vmatprep.subr.mxu0 0.0
    %1088 = vmatpush1.xpose.msra.mxu0 0.0
    %1089 = vmatprep.subr.mxu0 0.0
    %1090 = vmatpush1.xpose.msra.mxu0 %v1057
    %1091 = vmatprep.subr.mxu0 0.0
    %1092 = vmatpush2.xpose.msra.mxu0 0.0
    %1093 = vmatprep.subr.mxu0 0.0
    %1094 = vmatpush2.xpose.msra.mxu0 0.0
    %1095 = vmatprep.subr.mxu0 0.0
    %1096 = vmatpush2.xpose.msra.mxu0 0.0
    %1097 = vmatprep.subr.mxu0 0.0
    %1098 = vmatpush2.xpose.msra.mxu0 0.0
    %1099 = vmatprep.subr.mxu0 0.0
    %1100 = vmatpush2.xpose.msra.mxu0 0.0
    %1101 = vmatprep.subr.mxu0 0.0
    %1102 = vmatpush2.xpose.msra.mxu0 0.0
    %1103 = vmatprep.subr.mxu0 0.0
    %1104 = vmatpush2.xpose.msra.mxu0 0.0
    %1105 = vmatprep.subr.mxu0 0.0
    %1106 = vmatpush2.xpose.msra.mxu0 0.0
    %1107 = vmatprep.subr.mxu0 0.0
    %1108 = vmatpush2.xpose.msra.mxu0 0.0
    %1109 = vmatprep.subr.mxu0 0.0
    %1110 = vmatpush2.xpose.msra.mxu0 0.0
    %1111 = vmatprep.subr.mxu0 0.0
    %1112 = vmatpush2.xpose.msra.mxu0 0.0
    %1113 = vmatprep.subr.mxu0 0.0
    %1114 = vmatpush2.xpose.msra.mxu0 0.0
    %1115 = vmatprep.subr.mxu0 0.0
    %1116 = vmatpush2.xpose.msra.mxu0 0.0
    %1117 = vmatprep.subr.mxu0 0.0
    %1118 = vmatpush2.xpose.msra.mxu0 0.0
    %1119 = vmatprep.subr.mxu0 0.0
    %1120 = vmatpush2.xpose.msra.mxu0 0.0
    %1121 = vmatprep.subr.mxu0 0.0
    %1122 = vmatpush2.xpose.msra.mxu0 0.0
    %1123 = vmatprep.mubr.f32.mxu0 0.0
    %1124 = vmatmul.mubr.f32.gmra.mxu0 %v1054
    %v1125 = vpop.f32.mrf.mxu0
    %v1126 = vadd.f32 0.0, %v1125
    %v1127 = vpop.f32.mrf.mxu0
    %1128 = vdwg.mxu0
    %v1130 = vsel %vm1052, %v114, 0
    %v1133 = vsel %vm1052, %v199, 0
    %1135 = vmatprep.subr.mxu0 0.0
    %1136 = vmatpush1.xpose.msra.mxu0 0.0
    %1137 = vmatprep.subr.mxu0 0.0
    %1138 = vmatpush1.xpose.msra.mxu0 0.0
    %1139 = vmatprep.subr.mxu0 0.0
    %1140 = vmatpush1.xpose.msra.mxu0 0.0
    %1141 = vmatprep.subr.mxu0 0.0
    %1142 = vmatpush1.xpose.msra.mxu0 0.0
    %1143 = vmatprep.subr.mxu0 0.0
    %1144 = vmatpush1.xpose.msra.mxu0 0.0
    %1145 = vmatprep.subr.mxu0 0.0
    %1146 = vmatpush1.xpose.msra.mxu0 0.0
    %1147 = vmatprep.subr.mxu0 0.0
    %1148 = vmatpush1.xpose.msra.mxu0 0.0
    %1149 = vmatprep.subr.mxu0 0.0
    %1150 = vmatpush1.xpose.msra.mxu0 0.0
    %1151 = vmatprep.subr.mxu0 0.0
    %1152 = vmatpush1.xpose.msra.mxu0 0.0
    %1153 = vmatprep.subr.mxu0 0.0
    %1154 = vmatpush1.xpose.msra.mxu0 0.0
    %1155 = vmatprep.subr.mxu0 0.0
    %1156 = vmatpush1.xpose.msra.mxu0 0.0
    %1157 = vmatprep.subr.mxu0 0.0
    %1158 = vmatpush1.xpose.msra.mxu0 0.0
    %1159 = vmatprep.subr.mxu0 0.0
    %1160 = vmatpush1.xpose.msra.mxu0 0.0
    %1161 = vmatprep.subr.mxu0 0.0
    %1162 = vmatpush1.xpose.msra.mxu0 0.0
    %1163 = vmatprep.subr.mxu0 0.0
    %1164 = vmatpush1.xpose.msra.mxu0 0.0
    %1165 = vmatprep.subr.mxu0 0.0
    %1166 = vmatpush1.xpose.msra.mxu0 %v1133
    %1167 = vmatprep.subr.mxu0 0.0
    %1168 = vmatpush2.xpose.msra.mxu0 0.0
    %1169 = vmatprep.subr.mxu0 0.0
    %1170 = vmatpush2.xpose.msra.mxu0 0.0
    %1171 = vmatprep.subr.mxu0 0.0
    %1172 = vmatpush2.xpose.msra.mxu0 0.0
    %1173 = vmatprep.subr.mxu0 0.0
    %1174 = vmatpush2.xpose.msra.mxu0 0.0
    %1175 = vmatprep.subr.mxu0 0.0
    %1176 = vmatpush2.xpose.msra.mxu0 0.0
    %1177 = vmatprep.subr.mxu0 0.0
    %1178 = vmatpush2.xpose.msra.mxu0 0.0
    %1179 = vmatprep.subr.mxu0 0.0
    %1180 = vmatpush2.xpose.msra.mxu0 0.0
    %1181 = vmatprep.subr.mxu0 0.0
    %1182 = vmatpush2.xpose.msra.mxu0 0.0
    %1183 = vmatprep.subr.mxu0 0.0
    %1184 = vmatpush2.xpose.msra.mxu0 0.0
    %1185 = vmatprep.subr.mxu0 0.0
    %1186 = vmatpush2.xpose.msra.mxu0 0.0
    %1187 = vmatprep.subr.mxu0 0.0
    %1188 = vmatpush2.xpose.msra.mxu0 0.0
    %1189 = vmatprep.subr.mxu0 0.0
    %1190 = vmatpush2.xpose.msra.mxu0 0.0
    %1191 = vmatprep.subr.mxu0 0.0
    %1192 = vmatpush2.xpose.msra.mxu0 0.0
    %1193 = vmatprep.subr.mxu0 0.0
    %1194 = vmatpush2.xpose.msra.mxu0 0.0
    %1195 = vmatprep.subr.mxu0 0.0
    %1196 = vmatpush2.xpose.msra.mxu0 0.0
    %1197 = vmatprep.subr.mxu0 0.0
    %1198 = vmatpush2.xpose.msra.mxu0 0.0
    %1199 = vmatprep.mubr.f32.mxu0 0.0
    %1200 = vmatmul.mubr.f32.gmra.mxu0 %v1130
    %v1201 = vpop.f32.mrf.mxu0
    %v1202 = vadd.f32 0.0, %v1201
    %v1203 = vpop.f32.mrf.mxu0
    %1204 = vdwg.mxu0
    %v1206 = vsel %vm1052, %v364, 0
    %v1209 = vsel %vm1052, %v449, 0
    %1211 = vmatprep.subr.mxu0 0.0
    %1212 = vmatpush1.xpose.msra.mxu0 0.0
    %1213 = vmatprep.subr.mxu0 0.0
    %1214 = vmatpush1.xpose.msra.mxu0 0.0
    %1215 = vmatprep.subr.mxu0 0.0
    %1216 = vmatpush1.xpose.msra.mxu0 0.0
    %1217 = vmatprep.subr.mxu0 0.0
    %1218 = vmatpush1.xpose.msra.mxu0 0.0
    %1219 = vmatprep.subr.mxu0 0.0
    %1220 = vmatpush1.xpose.msra.mxu0 0.0
    %1221 = vmatprep.subr.mxu0 0.0
    %1222 = vmatpush1.xpose.msra.mxu0 0.0
    %1223 = vmatprep.subr.mxu0 0.0
    %1224 = vmatpush1.xpose.msra.mxu0 0.0
    %1225 = vmatprep.subr.mxu0 0.0
    %1226 = vmatpush1.xpose.msra.mxu0 0.0
    %1227 = vmatprep.subr.mxu0 0.0
    %1228 = vmatpush1.xpose.msra.mxu0 0.0
    %1229 = vmatprep.subr.mxu0 0.0
    %1230 = vmatpush1.xpose.msra.mxu0 0.0
    %1231 = vmatprep.subr.mxu0 0.0
    %1232 = vmatpush1.xpose.msra.mxu0 0.0
    %1233 = vmatprep.subr.mxu0 0.0
    %1234 = vmatpush1.xpose.msra.mxu0 0.0
    %1235 = vmatprep.subr.mxu0 0.0
    %1236 = vmatpush1.xpose.msra.mxu0 0.0
    %1237 = vmatprep.subr.mxu0 0.0
    %1238 = vmatpush1.xpose.msra.mxu0 0.0
    %1239 = vmatprep.subr.mxu0 0.0
    %1240 = vmatpush1.xpose.msra.mxu0 0.0
    %1241 = vmatprep.subr.mxu0 0.0
    %1242 = vmatpush1.xpose.msra.mxu0 %v1209
    %1243 = vmatprep.subr.mxu0 0.0
    %1244 = vmatpush2.xpose.msra.mxu0 0.0
    %1245 = vmatprep.subr.mxu0 0.0
    %1246 = vmatpush2.xpose.msra.mxu0 0.0
    %1247 = vmatprep.subr.mxu0 0.0
    %1248 = vmatpush2.xpose.msra.mxu0 0.0
    %1249 = vmatprep.subr.mxu0 0.0
    %1250 = vmatpush2.xpose.msra.mxu0 0.0
    %1251 = vmatprep.subr.mxu0 0.0
    %1252 = vmatpush2.xpose.msra.mxu0 0.0
    %1253 = vmatprep.subr.mxu0 0.0
    %1254 = vmatpush2.xpose.msra.mxu0 0.0
    %1255 = vmatprep.subr.mxu0 0.0
    %1256 = vmatpush2.xpose.msra.mxu0 0.0
    %1257 = vmatprep.subr.mxu0 0.0
    %1258 = vmatpush2.xpose.msra.mxu0 0.0
    %1259 = vmatprep.subr.mxu0 0.0
    %1260 = vmatpush2.xpose.msra.mxu0 0.0
    %1261 = vmatprep.subr.mxu0 0.0
    %1262 = vmatpush2.xpose.msra.mxu0 0.0
    %1263 = vmatprep.subr.mxu0 0.0
    %1264 = vmatpush2.xpose.msra.mxu0 0.0
    %1265 = vmatprep.subr.mxu0 0.0
    %1266 = vmatpush2.xpose.msra.mxu0 0.0
    %1267 = vmatprep.subr.mxu0 0.0
    %1268 = vmatpush2.xpose.msra.mxu0 0.0
    %1269 = vmatprep.subr.mxu0 0.0
    %1270 = vmatpush2.xpose.msra.mxu0 0.0
    %1271 = vmatprep.subr.mxu0 0.0
    %1272 = vmatpush2.xpose.msra.mxu0 0.0
    %1273 = vmatprep.subr.mxu0 0.0
    %1274 = vmatpush2.xpose.msra.mxu0 0.0
    %1275 = vmatprep.mubr.f32.mxu0 0.0
    %1276 = vmatmul.mubr.f32.gmra.mxu0 %v1206
    %v1277 = vpop.f32.mrf.mxu0
    %v1278 = vadd.f32 0.0, %v1277
    %v1279 = vpop.f32.mrf.mxu0
    %1280 = vdwg.mxu0
    %v1282 = vsel %vm1052, %v369, 0
    %v1285 = vsel %vm1052, %v454, 0
    %1287 = vmatprep.subr.mxu0 0.0
    %1288 = vmatpush1.xpose.msra.mxu0 0.0
    %1289 = vmatprep.subr.mxu0 0.0
    %1290 = vmatpush1.xpose.msra.mxu0 0.0
    %1291 = vmatprep.subr.mxu0 0.0
    %1292 = vmatpush1.xpose.msra.mxu0 0.0
    %1293 = vmatprep.subr.mxu0 0.0
    %1294 = vmatpush1.xpose.msra.mxu0 0.0
    %1295 = vmatprep.subr.mxu0 0.0
    %1296 = vmatpush1.xpose.msra.mxu0 0.0
    %1297 = vmatprep.subr.mxu0 0.0
    %1298 = vmatpush1.xpose.msra.mxu0 0.0
    %1299 = vmatprep.subr.mxu0 0.0
    %1300 = vmatpush1.xpose.msra.mxu0 0.0
    %1301 = vmatprep.subr.mxu0 0.0
    %1302 = vmatpush1.xpose.msra.mxu0 0.0
    %1303 = vmatprep.subr.mxu0 0.0
    %1304 = vmatpush1.xpose.msra.mxu0 0.0
    %1305 = vmatprep.subr.mxu0 0.0
    %1306 = vmatpush1.xpose.msra.mxu0 0.0
    %1307 = vmatprep.subr.mxu0 0.0
    %1308 = vmatpush1.xpose.msra.mxu0 0.0
    %1309 = vmatprep.subr.mxu0 0.0
    %1310 = vmatpush1.xpose.msra.mxu0 0.0
    %1311 = vmatprep.subr.mxu0 0.0
    %1312 = vmatpush1.xpose.msra.mxu0 0.0
    %1313 = vmatprep.subr.mxu0 0.0
    %1314 = vmatpush1.xpose.msra.mxu0 0.0
    %1315 = vmatprep.subr.mxu0 0.0
    %1316 = vmatpush1.xpose.msra.mxu0 0.0
    %1317 = vmatprep.subr.mxu0 0.0
    %1318 = vmatpush1.xpose.msra.mxu0 %v1285
    %1319 = vmatprep.subr.mxu0 0.0
    %1320 = vmatpush2.xpose.msra.mxu0 0.0
    %1321 = vmatprep.subr.mxu0 0.0
    %1322 = vmatpush2.xpose.msra.mxu0 0.0
    %1323 = vmatprep.subr.mxu0 0.0
    %1324 = vmatpush2.xpose.msra.mxu0 0.0
    %1325 = vmatprep.subr.mxu0 0.0
    %1326 = vmatpush2.xpose.msra.mxu0 0.0
    %1327 = vmatprep.subr.mxu0 0.0
    %1328 = vmatpush2.xpose.msra.mxu0 0.0
    %1329 = vmatprep.subr.mxu0 0.0
    %1330 = vmatpush2.xpose.msra.mxu0 0.0
    %1331 = vmatprep.subr.mxu0 0.0
    %1332 = vmatpush2.xpose.msra.mxu0 0.0
    %1333 = vmatprep.subr.mxu0 0.0
    %1334 = vmatpush2.xpose.msra.mxu0 0.0
    %1335 = vmatprep.subr.mxu0 0.0
    %1336 = vmatpush2.xpose.msra.mxu0 0.0
    %1337 = vmatprep.subr.mxu0 0.0
    %1338 = vmatpush2.xpose.msra.mxu0 0.0
    %1339 = vmatprep.subr.mxu0 0.0
    %1340 = vmatpush2.xpose.msra.mxu0 0.0
    %1341 = vmatprep.subr.mxu0 0.0
    %1342 = vmatpush2.xpose.msra.mxu0 0.0
    %1343 = vmatprep.subr.mxu0 0.0
    %1344 = vmatpush2.xpose.msra.mxu0 0.0
    %1345 = vmatprep.subr.mxu0 0.0
    %1346 = vmatpush2.xpose.msra.mxu0 0.0
    %1347 = vmatprep.subr.mxu0 0.0
    %1348 = vmatpush2.xpose.msra.mxu0 0.0
    %1349 = vmatprep.subr.mxu0 0.0
    %1350 = vmatpush2.xpose.msra.mxu0 0.0
    %1351 = vmatprep.mubr.f32.mxu0 0.0
    %1352 = vmatmul.mubr.f32.gmra.mxu0 %v1282
    %v1353 = vpop.f32.mrf.mxu0
    %v1354 = vadd.f32 0.0, %v1353
    %v1355 = vpop.f32.mrf.mxu0
    %1356 = vdwg.mxu0
    %v1358 = vsel %vm1052, %v619, 0
    %v1361 = vsel %vm1052, %v704, 0
    %1363 = vmatprep.subr.mxu0 0.0
    %1364 = vmatpush1.xpose.msra.mxu0 0.0
    %1365 = vmatprep.subr.mxu0 0.0
    %1366 = vmatpush1.xpose.msra.mxu0 0.0
    %1367 = vmatprep.subr.mxu0 0.0
    %1368 = vmatpush1.xpose.msra.mxu0 0.0
    %1369 = vmatprep.subr.mxu0 0.0
    %1370 = vmatpush1.xpose.msra.mxu0 0.0
    %1371 = vmatprep.subr.mxu0 0.0
    %1372 = vmatpush1.xpose.msra.mxu0 0.0
    %1373 = vmatprep.subr.mxu0 0.0
    %1374 = vmatpush1.xpose.msra.mxu0 0.0
    %1375 = vmatprep.subr.mxu0 0.0
    %1376 = vmatpush1.xpose.msra.mxu0 0.0
    %1377 = vmatprep.subr.mxu0 0.0
    %1378 = vmatpush1.xpose.msra.mxu0 0.0
    %1379 = vmatprep.subr.mxu0 0.0
    %1380 = vmatpush1.xpose.msra.mxu0 0.0
    %1381 = vmatprep.subr.mxu0 0.0
    %1382 = vmatpush1.xpose.msra.mxu0 0.0
    %1383 = vmatprep.subr.mxu0 0.0
    %1384 = vmatpush1.xpose.msra.mxu0 0.0
    %1385 = vmatprep.subr.mxu0 0.0
    %1386 = vmatpush1.xpose.msra.mxu0 0.0
    %1387 = vmatprep.subr.mxu0 0.0
    %1388 = vmatpush1.xpose.msra.mxu0 0.0
    %1389 = vmatprep.subr.mxu0 0.0
    %1390 = vmatpush1.xpose.msra.mxu0 0.0
    %1391 = vmatprep.subr.mxu0 0.0
    %1392 = vmatpush1.xpose.msra.mxu0 0.0
    %1393 = vmatprep.subr.mxu0 0.0
    %1394 = vmatpush1.xpose.msra.mxu0 %v1361
    %1395 = vmatprep.subr.mxu0 0.0
    %1396 = vmatpush2.xpose.msra.mxu0 0.0
    %1397 = vmatprep.subr.mxu0 0.0
    %1398 = vmatpush2.xpose.msra.mxu0 0.0
    %1399 = vmatprep.subr.mxu0 0.0
    %1400 = vmatpush2.xpose.msra.mxu0 0.0
    %1401 = vmatprep.subr.mxu0 0.0
    %1402 = vmatpush2.xpose.msra.mxu0 0.0
    %1403 = vmatprep.subr.mxu0 0.0
    %1404 = vmatpush2.xpose.msra.mxu0 0.0
    %1405 = vmatprep.subr.mxu0 0.0
    %1406 = vmatpush2.xpose.msra.mxu0 0.0
    %1407 = vmatprep.subr.mxu0 0.0
    %1408 = vmatpush2.xpose.msra.mxu0 0.0
    %1409 = vmatprep.subr.mxu0 0.0
    %1410 = vmatpush2.xpose.msra.mxu0 0.0
    %1411 = vmatprep.subr.mxu0 0.0
    %1412 = vmatpush2.xpose.msra.mxu0 0.0
    %1413 = vmatprep.subr.mxu0 0.0
    %1414 = vmatpush2.xpose.msra.mxu0 0.0
    %1415 = vmatprep.subr.mxu0 0.0
    %1416 = vmatpush2.xpose.msra.mxu0 0.0
    %1417 = vmatprep.subr.mxu0 0.0
    %1418 = vmatpush2.xpose.msra.mxu0 0.0
    %1419 = vmatprep.subr.mxu0 0.0
    %1420 = vmatpush2.xpose.msra.mxu0 0.0
    %1421 = vmatprep.subr.mxu0 0.0
    %1422 = vmatpush2.xpose.msra.mxu0 0.0
    %1423 = vmatprep.subr.mxu0 0.0
    %1424 = vmatpush2.xpose.msra.mxu0 0.0
    %1425 = vmatprep.subr.mxu0 0.0
    %1426 = vmatpush2.xpose.msra.mxu0 0.0
    %1427 = vmatprep.mubr.f32.mxu0 0.0
    %1428 = vmatmul.mubr.f32.gmra.mxu0 %v1358
    %v1429 = vpop.f32.mrf.mxu0
    %v1430 = vadd.f32 0.0, %v1429
    %v1431 = vpop.f32.mrf.mxu0
    %1432 = vdwg.mxu0
    %v1434 = vsel %vm1052, %v624, 0
    %v1437 = vsel %vm1052, %v709, 0
    %1439 = vmatprep.subr.mxu0 0.0
    %1440 = vmatpush1.xpose.msra.mxu0 0.0
    %1441 = vmatprep.subr.mxu0 0.0
    %1442 = vmatpush1.xpose.msra.mxu0 0.0
    %1443 = vmatprep.subr.mxu0 0.0
    %1444 = vmatpush1.xpose.msra.mxu0 0.0
    %1445 = vmatprep.subr.mxu0 0.0
    %1446 = vmatpush1.xpose.msra.mxu0 0.0
    %1447 = vmatprep.subr.mxu0 0.0
    %1448 = vmatpush1.xpose.msra.mxu0 0.0
    %1449 = vmatprep.subr.mxu0 0.0
    %1450 = vmatpush1.xpose.msra.mxu0 0.0
    %1451 = vmatprep.subr.mxu0 0.0
    %1452 = vmatpush1.xpose.msra.mxu0 0.0
    %1453 = vmatprep.subr.mxu0 0.0
    %1454 = vmatpush1.xpose.msra.mxu0 0.0
    %1455 = vmatprep.subr.mxu0 0.0
    %1456 = vmatpush1.xpose.msra.mxu0 0.0
    %1457 = vmatprep.subr.mxu0 0.0
    %1458 = vmatpush1.xpose.msra.mxu0 0.0
    %1459 = vmatprep.subr.mxu0 0.0
    %1460 = vmatpush1.xpose.msra.mxu0 0.0
    %1461 = vmatprep.subr.mxu0 0.0
    %1462 = vmatpush1.xpose.msra.mxu0 0.0
    %1463 = vmatprep.subr.mxu0 0.0
    %1464 = vmatpush1.xpose.msra.mxu0 0.0
    %1465 = vmatprep.subr.mxu0 0.0
    %1466 = vmatpush1.xpose.msra.mxu0 0.0
    %1467 = vmatprep.subr.mxu0 0.0
    %1468 = vmatpush1.xpose.msra.mxu0 0.0
    %1469 = vmatprep.subr.mxu0 0.0
    %1470 = vmatpush1.xpose.msra.mxu0 %v1437
    %1471 = vmatprep.subr.mxu0 0.0
    %1472 = vmatpush2.xpose.msra.mxu0 0.0
    %1473 = vmatprep.subr.mxu0 0.0
    %1474 = vmatpush2.xpose.msra.mxu0 0.0
    %1475 = vmatprep.subr.mxu0 0.0
    %1476 = vmatpush2.xpose.msra.mxu0 0.0
    %1477 = vmatprep.subr.mxu0 0.0
    %1478 = vmatpush2.xpose.msra.mxu0 0.0
    %1479 = vmatprep.subr.mxu0 0.0
    %1480 = vmatpush2.xpose.msra.mxu0 0.0
    %1481 = vmatprep.subr.mxu0 0.0
    %1482 = vmatpush2.xpose.msra.mxu0 0.0
    %1483 = vmatprep.subr.mxu0 0.0
    %1484 = vmatpush2.xpose.msra.mxu0 0.0
    %1485 = vmatprep.subr.mxu0 0.0
    %1486 = vmatpush2.xpose.msra.mxu0 0.0
    %1487 = vmatprep.subr.mxu0 0.0
    %1488 = vmatpush2.xpose.msra.mxu0 0.0
    %1489 = vmatprep.subr.mxu0 0.0
    %1490 = vmatpush2.xpose.msra.mxu0 0.0
    %1491 = vmatprep.subr.mxu0 0.0
    %1492 = vmatpush2.xpose.msra.mxu0 0.0
    %1493 = vmatprep.subr.mxu0 0.0
    %1494 = vmatpush2.xpose.msra.mxu0 0.0
    %1495 = vmatprep.subr.mxu0 0.0
    %1496 = vmatpush2.xpose.msra.mxu0 0.0
    %1497 = vmatprep.subr.mxu0 0.0
    %1498 = vmatpush2.xpose.msra.mxu0 0.0
    %1499 = vmatprep.subr.mxu0 0.0
    %1500 = vmatpush2.xpose.msra.mxu0 0.0
    %1501 = vmatprep.subr.mxu0 0.0
    %1502 = vmatpush2.xpose.msra.mxu0 0.0
    %1503 = vmatprep.mubr.f32.mxu0 0.0
    %1504 = vmatmul.mubr.f32.gmra.mxu0 %v1434
    %v1505 = vpop.f32.mrf.mxu0
    %v1506 = vadd.f32 0.0, %v1505
    %v1507 = vpop.f32.mrf.mxu0
    %1508 = vdwg.mxu0
    %v1510 = vsel %vm1052, %v874, 0
    %v1513 = vsel %vm1052, %v959, 0
    %1515 = vmatprep.subr.mxu0 0.0
    %1516 = vmatpush1.xpose.msra.mxu0 0.0
    %1517 = vmatprep.subr.mxu0 0.0
    %1518 = vmatpush1.xpose.msra.mxu0 0.0
    %1519 = vmatprep.subr.mxu0 0.0
    %1520 = vmatpush1.xpose.msra.mxu0 0.0
    %1521 = vmatprep.subr.mxu0 0.0
    %1522 = vmatpush1.xpose.msra.mxu0 0.0
    %1523 = vmatprep.subr.mxu0 0.0
    %1524 = vmatpush1.xpose.msra.mxu0 0.0
    %1525 = vmatprep.subr.mxu0 0.0
    %1526 = vmatpush1.xpose.msra.mxu0 0.0
    %1527 = vmatprep.subr.mxu0 0.0
    %1528 = vmatpush1.xpose.msra.mxu0 0.0
    %1529 = vmatprep.subr.mxu0 0.0
    %1530 = vmatpush1.xpose.msra.mxu0 0.0
    %1531 = vmatprep.subr.mxu0 0.0
    %1532 = vmatpush1.xpose.msra.mxu0 0.0
    %1533 = vmatprep.subr.mxu0 0.0
    %1534 = vmatpush1.xpose.msra.mxu0 0.0
    %1535 = vmatprep.subr.mxu0 0.0
    %1536 = vmatpush1.xpose.msra.mxu0 0.0
    %1537 = vmatprep.subr.mxu0 0.0
    %1538 = vmatpush1.xpose.msra.mxu0 0.0
    %1539 = vmatprep.subr.mxu0 0.0
    %1540 = vmatpush1.xpose.msra.mxu0 0.0
    %1541 = vmatprep.subr.mxu0 0.0
    %1542 = vmatpush1.xpose.msra.mxu0 0.0
    %1543 = vmatprep.subr.mxu0 0.0
    %1544 = vmatpush1.xpose.msra.mxu0 0.0
    %1545 = vmatprep.subr.mxu0 0.0
    %1546 = vmatpush1.xpose.msra.mxu0 %v1513
    %1547 = vmatprep.subr.mxu0 0.0
    %1548 = vmatpush2.xpose.msra.mxu0 0.0
    %1549 = vmatprep.subr.mxu0 0.0
    %1550 = vmatpush2.xpose.msra.mxu0 0.0
    %1551 = vmatprep.subr.mxu0 0.0
    %1552 = vmatpush2.xpose.msra.mxu0 0.0
    %1553 = vmatprep.subr.mxu0 0.0
    %1554 = vmatpush2.xpose.msra.mxu0 0.0
    %1555 = vmatprep.subr.mxu0 0.0
    %1556 = vmatpush2.xpose.msra.mxu0 0.0
    %1557 = vmatprep.subr.mxu0 0.0
    %1558 = vmatpush2.xpose.msra.mxu0 0.0
    %1559 = vmatprep.subr.mxu0 0.0
    %1560 = vmatpush2.xpose.msra.mxu0 0.0
    %1561 = vmatprep.subr.mxu0 0.0
    %1562 = vmatpush2.xpose.msra.mxu0 0.0
    %1563 = vmatprep.subr.mxu0 0.0
    %1564 = vmatpush2.xpose.msra.mxu0 0.0
    %1565 = vmatprep.subr.mxu0 0.0
    %1566 = vmatpush2.xpose.msra.mxu0 0.0
    %1567 = vmatprep.subr.mxu0 0.0
    %1568 = vmatpush2.xpose.msra.mxu0 0.0
    %1569 = vmatprep.subr.mxu0 0.0
    %1570 = vmatpush2.xpose.msra.mxu0 0.0
    %1571 = vmatprep.subr.mxu0 0.0
    %1572 = vmatpush2.xpose.msra.mxu0 0.0
    %1573 = vmatprep.subr.mxu0 0.0
    %1574 = vmatpush2.xpose.msra.mxu0 0.0
    %1575 = vmatprep.subr.mxu0 0.0
    %1576 = vmatpush2.xpose.msra.mxu0 0.0
    %1577 = vmatprep.subr.mxu0 0.0
    %1578 = vmatpush2.xpose.msra.mxu0 0.0
    %1579 = vmatprep.mubr.f32.mxu0 0.0
    %1580 = vmatmul.mubr.f32.gmra.mxu0 %v1510
    %v1581 = vpop.f32.mrf.mxu0
    %v1582 = vadd.f32 0.0, %v1581
    %v1583 = vpop.f32.mrf.mxu0
    %1584 = vdwg.mxu0
    %v1586 = vsel %vm1052, %v879, 0
    %v1589 = vsel %vm1052, %v964, 0
    %1591 = vmatprep.subr.mxu0 0.0
    %1592 = vmatpush1.xpose.msra.mxu0 0.0
    %1593 = vmatprep.subr.mxu0 0.0
    %1594 = vmatpush1.xpose.msra.mxu0 0.0
    %1595 = vmatprep.subr.mxu0 0.0
    %1596 = vmatpush1.xpose.msra.mxu0 0.0
    %1597 = vmatprep.subr.mxu0 0.0
    %1598 = vmatpush1.xpose.msra.mxu0 0.0
    %1599 = vmatprep.subr.mxu0 0.0
    %1600 = vmatpush1.xpose.msra.mxu0 0.0
    %1601 = vmatprep.subr.mxu0 0.0
    %1602 = vmatpush1.xpose.msra.mxu0 0.0
    %1603 = vmatprep.subr.mxu0 0.0
    %1604 = vmatpush1.xpose.msra.mxu0 0.0
    %1605 = vmatprep.subr.mxu0 0.0
    %1606 = vmatpush1.xpose.msra.mxu0 0.0
    %1607 = vmatprep.subr.mxu0 0.0
    %1608 = vmatpush1.xpose.msra.mxu0 0.0
    %1609 = vmatprep.subr.mxu0 0.0
    %1610 = vmatpush1.xpose.msra.mxu0 0.0
    %1611 = vmatprep.subr.mxu0 0.0
    %1612 = vmatpush1.xpose.msra.mxu0 0.0
    %1613 = vmatprep.subr.mxu0 0.0
    %1614 = vmatpush1.xpose.msra.mxu0 0.0
    %1615 = vmatprep.subr.mxu0 0.0
    %1616 = vmatpush1.xpose.msra.mxu0 0.0
    %1617 = vmatprep.subr.mxu0 0.0
    %1618 = vmatpush1.xpose.msra.mxu0 0.0
    %1619 = vmatprep.subr.mxu0 0.0
    %1620 = vmatpush1.xpose.msra.mxu0 0.0
    %1621 = vmatprep.subr.mxu0 0.0
    %1622 = vmatpush1.xpose.msra.mxu0 %v1589
    %1623 = vmatprep.subr.mxu0 0.0
    %1624 = vmatpush2.xpose.msra.mxu0 0.0
    %1625 = vmatprep.subr.mxu0 0.0
    %1626 = vmatpush2.xpose.msra.mxu0 0.0
    %1627 = vmatprep.subr.mxu0 0.0
    %1628 = vmatpush2.xpose.msra.mxu0 0.0
    %1629 = vmatprep.subr.mxu0 0.0
    %1630 = vmatpush2.xpose.msra.mxu0 0.0
    %1631 = vmatprep.subr.mxu0 0.0
    %1632 = vmatpush2.xpose.msra.mxu0 0.0
    %1633 = vmatprep.subr.mxu0 0.0
    %1634 = vmatpush2.xpose.msra.mxu0 0.0
    %1635 = vmatprep.subr.mxu0 0.0
    %1636 = vmatpush2.xpose.msra.mxu0 0.0
    %1637 = vmatprep.subr.mxu0 0.0
    %1638 = vmatpush2.xpose.msra.mxu0 0.0
    %1639 = vmatprep.subr.mxu0 0.0
    %1640 = vmatpush2.xpose.msra.mxu0 0.0
    %1641 = vmatprep.subr.mxu0 0.0
    %1642 = vmatpush2.xpose.msra.mxu0 0.0
    %1643 = vmatprep.subr.mxu0 0.0
    %1644 = vmatpush2.xpose.msra.mxu0 0.0
    %1645 = vmatprep.subr.mxu0 0.0
    %1646 = vmatpush2.xpose.msra.mxu0 0.0
    %1647 = vmatprep.subr.mxu0 0.0
    %1648 = vmatpush2.xpose.msra.mxu0 0.0
    %1649 = vmatprep.subr.mxu0 0.0
    %1650 = vmatpush2.xpose.msra.mxu0 0.0
    %1651 = vmatprep.subr.mxu0 0.0
    %1652 = vmatpush2.xpose.msra.mxu0 0.0
    %1653 = vmatprep.subr.mxu0 0.0
    %1654 = vmatpush2.xpose.msra.mxu0 0.0
    %1655 = vmatprep.mubr.f32.mxu0 0.0
    %1656 = vmatmul.mubr.f32.gmra.mxu0 %v1586
    %v1657 = vpop.f32.mrf.mxu0
    %v1658 = vadd.f32 0.0, %v1657
    %v1659 = vpop.f32.mrf.mxu0
    %1660 = vdwg.mxu0
    %v1661 = vmul.f32 %v1126, 0.35355338
    %v1662 = vmul.f32 %v1202, 0.35355338
    %v1663 = vmul.f32 %v1278, 0.35355338
    %v1664 = vmul.f32 %v1354, 0.35355338
    %v1665 = vmul.f32 %v1430, 0.35355338
    %v1666 = vmul.f32 %v1506, 0.35355338
    %v1667 = vmul.f32 %v1582, 0.35355338
    %v1668 = vmul.f32 %v1658, 0.35355338
    %v1669 = vsel %vm1052, %v1661, -inf
    %1670 = vmax.xlane.f32.xlu0 %v1669
    %v1671 = vpop.xlane.xlu0 %1670
    %v1672 = vsel %vm1052, %v1662, -inf
    %1673 = vmax.xlane.f32.xlu0 %v1672
    %v1674 = vpop.xlane.xlu0 %1673
    %v1675 = vsel %vm1052, %v1663, -inf
    %1676 = vmax.xlane.f32.xlu0 %v1675
    %v1677 = vpop.xlane.xlu0 %1676
    %v1678 = vsel %vm1052, %v1664, -inf
    %1679 = vmax.xlane.f32.xlu0 %v1678
    %v1680 = vpop.xlane.xlu0 %1679
    %v1681 = vsel %vm1052, %v1665, -inf
    %1682 = vmax.xlane.f32.xlu0 %v1681
    %v1683 = vpop.xlane.xlu0 %1682
    %v1684 = vsel %vm1052, %v1666, -inf
    %1685 = vmax.xlane.f32.xlu0 %v1684
    %v1686 = vpop.xlane.xlu0 %1685
    %v1687 = vsel %vm1052, %v1667, -inf
    %1688 = vmax.xlane.f32.xlu0 %v1687
    %v1689 = vpop.xlane.xlu0 %1688
    %v1690 = vsel %vm1052, %v1668, -inf
    %1691 = vmax.xlane.f32.xlu0 %v1690
    %v1692 = vpop.xlane.xlu0 %1691
    %v1693 = vsub.f32 %v1661, %v1671
    %v1694 = vsub.f32 %v1662, %v1674
    %v1695 = vsub.f32 %v1663, %v1677
    %v1696 = vsub.f32 %v1664, %v1680
    %v1697 = vsub.f32 %v1665, %v1683
    %v1698 = vsub.f32 %v1666, %v1686
    %v1699 = vsub.f32 %v1667, %v1689
    %v1700 = vsub.f32 %v1668, %v1692
    %v1701 = vmul.f32 %v1693, 1.442695
    %v1702 = vpow.pop %v1701
    %v1703 = vmul.f32 %v1694, 1.442695
    %v1704 = vpow.pop %v1703
    %v1705 = vmul.f32 %v1695, 1.442695
    %v1706 = vpow.pop %v1705
    %v1707 = vmul.f32 %v1696, 1.442695
    %v1708 = vpow.pop %v1707
    %v1709 = vmul.f32 %v1697, 1.442695
    %v1710 = vpow.pop %v1709
    %v1711 = vmul.f32 %v1698, 1.442695
    %v1712 = vpow.pop %v1711
    %v1713 = vmul.f32 %v1699, 1.442695
    %v1714 = vpow.pop %v1713
    %v1715 = vmul.f32 %v1700, 1.442695
    %v1716 = vpow.pop %v1715
    %v1717 = vsel %vm1052, %v1702, 0.0
    %1718 = vadd.xlane.f32.xlu0 %v1717
    %v1719 = vpop.xlane.xlu0 %1718
    %v1720 = vsel %vm1052, %v1704, 0.0
    %1721 = vadd.xlane.f32.xlu0 %v1720
    %v1722 = vpop.xlane.xlu0 %1721
    %v1723 = vsel %vm1052, %v1706, 0.0
    %1724 = vadd.xlane.f32.xlu0 %v1723
    %v1725 = vpop.xlane.xlu0 %1724
    %v1726 = vsel %vm1052, %v1708, 0.0
    %1727 = vadd.xlane.f32.xlu0 %v1726
    %v1728 = vpop.xlane.xlu0 %1727
    %v1729 = vsel %vm1052, %v1710, 0.0
    %1730 = vadd.xlane.f32.xlu0 %v1729
    %v1731 = vpop.xlane.xlu0 %1730
    %v1732 = vsel %vm1052, %v1712, 0.0
    %1733 = vadd.xlane.f32.xlu0 %v1732
    %v1734 = vpop.xlane.xlu0 %1733
    %v1735 = vsel %vm1052, %v1714, 0.0
    %1736 = vadd.xlane.f32.xlu0 %v1735
    %v1737 = vpop.xlane.xlu0 %1736
    %v1738 = vsel %vm1052, %v1716, 0.0
    %1739 = vadd.xlane.f32.xlu0 %v1738
    %v1740 = vpop.xlane.xlu0 %1739
    %v1741 = vrcp.pop %v1719
    %v1742 = vrcp.pop %v1722
    %v1743 = vrcp.pop %v1725
    %v1744 = vrcp.pop %v1728
    %v1745 = vrcp.pop %v1731
    %v1746 = vrcp.pop %v1734
    %v1747 = vrcp.pop %v1737
    %v1748 = vrcp.pop %v1740
    %v1749 = vmul.f32 %v1702, %v1741
    %v1750 = vmul.f32 %v1704, %v1742
    %v1751 = vmul.f32 %v1706, %v1743
    %v1752 = vmul.f32 %v1708, %v1744
    %v1753 = vmul.f32 %v1710, %v1745
    %v1754 = vmul.f32 %v1712, %v1746
    %v1755 = vmul.f32 %v1714, %v1747
    %v1756 = vmul.f32 %v1716, %v1748
    %v1758 = vsel %vm1052, %v1749, 0
    %1760 = vmatprep.subr.mxu0 0.0
    %1761 = vmatpush1.msra.mxu0 0.0
    %1762 = vmatprep.subr.mxu0 0.0
    %1763 = vmatpush1.msra.mxu0 0.0
    %1764 = vmatprep.subr.mxu0 0.0
    %1765 = vmatpush1.msra.mxu0 0.0
    %1766 = vmatprep.subr.mxu0 0.0
    %1767 = vmatpush1.msra.mxu0 0.0
    %1768 = vmatprep.subr.mxu0 0.0
    %1769 = vmatpush1.msra.mxu0 0.0
    %1770 = vmatprep.subr.mxu0 0.0
    %1771 = vmatpush1.msra.mxu0 0.0
    %1772 = vmatprep.subr.mxu0 0.0
    %1773 = vmatpush1.msra.mxu0 0.0
    %1774 = vmatprep.subr.mxu0 0.0
    %1775 = vmatpush1.msra.mxu0 0.0
    %1776 = vmatprep.subr.mxu0 0.0
    %1777 = vmatpush1.msra.mxu0 0.0
    %1778 = vmatprep.subr.mxu0 0.0
    %1779 = vmatpush1.msra.mxu0 0.0
    %1780 = vmatprep.subr.mxu0 0.0
    %1781 = vmatpush1.msra.mxu0 0.0
    %1782 = vmatprep.subr.mxu0 0.0
    %1783 = vmatpush1.msra.mxu0 0.0
    %1784 = vmatprep.subr.mxu0 0.0
    %1785 = vmatpush1.msra.mxu0 0.0
    %1786 = vmatprep.subr.mxu0 0.0
    %1787 = vmatpush1.msra.mxu0 0.0
    %1788 = vmatprep.subr.mxu0 0.0
    %1789 = vmatpush1.msra.mxu0 0.0
    %1790 = vmatprep.subr.mxu0 0.0
    %1791 = vmatpush1.msra.mxu0 %v279
    %1792 = vmatprep.subr.mxu0 0.0
    %1793 = vmatpush2.msra.mxu0 0.0
    %1794 = vmatprep.subr.mxu0 0.0
    %1795 = vmatpush2.msra.mxu0 0.0
    %1796 = vmatprep.subr.mxu0 0.0
    %1797 = vmatpush2.msra.mxu0 0.0
    %1798 = vmatprep.subr.mxu0 0.0
    %1799 = vmatpush2.msra.mxu0 0.0
    %1800 = vmatprep.subr.mxu0 0.0
    %1801 = vmatpush2.msra.mxu0 0.0
    %1802 = vmatprep.subr.mxu0 0.0
    %1803 = vmatpush2.msra.mxu0 0.0
    %1804 = vmatprep.subr.mxu0 0.0
    %1805 = vmatpush2.msra.mxu0 0.0
    %1806 = vmatprep.subr.mxu0 0.0
    %1807 = vmatpush2.msra.mxu0 0.0
    %1808 = vmatprep.subr.mxu0 0.0
    %1809 = vmatpush2.msra.mxu0 0.0
    %1810 = vmatprep.subr.mxu0 0.0
    %1811 = vmatpush2.msra.mxu0 0.0
    %1812 = vmatprep.subr.mxu0 0.0
    %1813 = vmatpush2.msra.mxu0 0.0
    %1814 = vmatprep.subr.mxu0 0.0
    %1815 = vmatpush2.msra.mxu0 0.0
    %1816 = vmatprep.subr.mxu0 0.0
    %1817 = vmatpush2.msra.mxu0 0.0
    %1818 = vmatprep.subr.mxu0 0.0
    %1819 = vmatpush2.msra.mxu0 0.0
    %1820 = vmatprep.subr.mxu0 0.0
    %1821 = vmatpush2.msra.mxu0 0.0
    %1822 = vmatprep.subr.mxu0 0.0
    %1823 = vmatpush2.msra.mxu0 0.0
    %1824 = vmatprep.mubr.f32.mxu0 0.0
    %1825 = vmatmul.mubr.f32.gmra.mxu0 %v1758
    %v1826 = vpop.f32.mrf.mxu0
    %v1827 = vadd.f32 0.0, %v1826
    %v1828 = vpop.f32.mrf.mxu0
    %1829 = vdwg.mxu0
    %v1831 = vsel %vm1052, %v1750, 0
    %1833 = vmatprep.subr.mxu0 0.0
    %1834 = vmatpush1.msra.mxu0 0.0
    %1835 = vmatprep.subr.mxu0 0.0
    %1836 = vmatpush1.msra.mxu0 0.0
    %1837 = vmatprep.subr.mxu0 0.0
    %1838 = vmatpush1.msra.mxu0 0.0
    %1839 = vmatprep.subr.mxu0 0.0
    %1840 = vmatpush1.msra.mxu0 0.0
    %1841 = vmatprep.subr.mxu0 0.0
    %1842 = vmatpush1.msra.mxu0 0.0
    %1843 = vmatprep.subr.mxu0 0.0
    %1844 = vmatpush1.msra.mxu0 0.0
    %1845 = vmatprep.subr.mxu0 0.0
    %1846 = vmatpush1.msra.mxu0 0.0
    %1847 = vmatprep.subr.mxu0 0.0
    %1848 = vmatpush1.msra.mxu0 0.0
    %1849 = vmatprep.subr.mxu0 0.0
    %1850 = vmatpush1.msra.mxu0 0.0
    %1851 = vmatprep.subr.mxu0 0.0
    %1852 = vmatpush1.msra.mxu0 0.0
    %1853 = vmatprep.subr.mxu0 0.0
    %1854 = vmatpush1.msra.mxu0 0.0
    %1855 = vmatprep.subr.mxu0 0.0
    %1856 = vmatpush1.msra.mxu0 0.0
    %1857 = vmatprep.subr.mxu0 0.0
    %1858 = vmatpush1.msra.mxu0 0.0
    %1859 = vmatprep.subr.mxu0 0.0
    %1860 = vmatpush1.msra.mxu0 0.0
    %1861 = vmatprep.subr.mxu0 0.0
    %1862 = vmatpush1.msra.mxu0 0.0
    %1863 = vmatprep.subr.mxu0 0.0
    %1864 = vmatpush1.msra.mxu0 %v284
    %1865 = vmatprep.subr.mxu0 0.0
    %1866 = vmatpush2.msra.mxu0 0.0
    %1867 = vmatprep.subr.mxu0 0.0
    %1868 = vmatpush2.msra.mxu0 0.0
    %1869 = vmatprep.subr.mxu0 0.0
    %1870 = vmatpush2.msra.mxu0 0.0
    %1871 = vmatprep.subr.mxu0 0.0
    %1872 = vmatpush2.msra.mxu0 0.0
    %1873 = vmatprep.subr.mxu0 0.0
    %1874 = vmatpush2.msra.mxu0 0.0
    %1875 = vmatprep.subr.mxu0 0.0
    %1876 = vmatpush2.msra.mxu0 0.0
    %1877 = vmatprep.subr.mxu0 0.0
    %1878 = vmatpush2.msra.mxu0 0.0
    %1879 = vmatprep.subr.mxu0 0.0
    %1880 = vmatpush2.msra.mxu0 0.0
    %1881 = vmatprep.subr.mxu0 0.0
    %1882 = vmatpush2.msra.mxu0 0.0
    %1883 = vmatprep.subr.mxu0 0.0
    %1884 = vmatpush2.msra.mxu0 0.0
    %1885 = vmatprep.subr.mxu0 0.0
    %1886 = vmatpush2.msra.mxu0 0.0
    %1887 = vmatprep.subr.mxu0 0.0
    %1888 = vmatpush2.msra.mxu0 0.0
    %1889 = vmatprep.subr.mxu0 0.0
    %1890 = vmatpush2.msra.mxu0 0.0
    %1891 = vmatprep.subr.mxu0 0.0
    %1892 = vmatpush2.msra.mxu0 0.0
    %1893 = vmatprep.subr.mxu0 0.0
    %1894 = vmatpush2.msra.mxu0 0.0
    %1895 = vmatprep.subr.mxu0 0.0
    %1896 = vmatpush2.msra.mxu0 0.0
    %1897 = vmatprep.mubr.f32.mxu0 0.0
    %1898 = vmatmul.mubr.f32.gmra.mxu0 %v1831
    %v1899 = vpop.f32.mrf.mxu0
    %v1900 = vadd.f32 0.0, %v1899
    %v1901 = vpop.f32.mrf.mxu0
    %1902 = vdwg.mxu0
    %v1904 = vsel %vm1052, %v1751, 0
    %1906 = vmatprep.subr.mxu0 0.0
    %1907 = vmatpush1.msra.mxu0 0.0
    %1908 = vmatprep.subr.mxu0 0.0
    %1909 = vmatpush1.msra.mxu0 0.0
    %1910 = vmatprep.subr.mxu0 0.0
    %1911 = vmatpush1.msra.mxu0 0.0
    %1912 = vmatprep.subr.mxu0 0.0
    %1913 = vmatpush1.msra.mxu0 0.0
    %1914 = vmatprep.subr.mxu0 0.0
    %1915 = vmatpush1.msra.mxu0 0.0
    %1916 = vmatprep.subr.mxu0 0.0
    %1917 = vmatpush1.msra.mxu0 0.0
    %1918 = vmatprep.subr.mxu0 0.0
    %1919 = vmatpush1.msra.mxu0 0.0
    %1920 = vmatprep.subr.mxu0 0.0
    %1921 = vmatpush1.msra.mxu0 0.0
    %1922 = vmatprep.subr.mxu0 0.0
    %1923 = vmatpush1.msra.mxu0 0.0
    %1924 = vmatprep.subr.mxu0 0.0
    %1925 = vmatpush1.msra.mxu0 0.0
    %1926 = vmatprep.subr.mxu0 0.0
    %1927 = vmatpush1.msra.mxu0 0.0
    %1928 = vmatprep.subr.mxu0 0.0
    %1929 = vmatpush1.msra.mxu0 0.0
    %1930 = vmatprep.subr.mxu0 0.0
    %1931 = vmatpush1.msra.mxu0 0.0
    %1932 = vmatprep.subr.mxu0 0.0
    %1933 = vmatpush1.msra.mxu0 0.0
    %1934 = vmatprep.subr.mxu0 0.0
    %1935 = vmatpush1.msra.mxu0 0.0
    %1936 = vmatprep.subr.mxu0 0.0
    %1937 = vmatpush1.msra.mxu0 %v534
    %1938 = vmatprep.subr.mxu0 0.0
    %1939 = vmatpush2.msra.mxu0 0.0
    %1940 = vmatprep.subr.mxu0 0.0
    %1941 = vmatpush2.msra.mxu0 0.0
    %1942 = vmatprep.subr.mxu0 0.0
    %1943 = vmatpush2.msra.mxu0 0.0
    %1944 = vmatprep.subr.mxu0 0.0
    %1945 = vmatpush2.msra.mxu0 0.0
    %1946 = vmatprep.subr.mxu0 0.0
    %1947 = vmatpush2.msra.mxu0 0.0
    %1948 = vmatprep.subr.mxu0 0.0
    %1949 = vmatpush2.msra.mxu0 0.0
    %1950 = vmatprep.subr.mxu0 0.0
    %1951 = vmatpush2.msra.mxu0 0.0
    %1952 = vmatprep.subr.mxu0 0.0
    %1953 = vmatpush2.msra.mxu0 0.0
    %1954 = vmatprep.subr.mxu0 0.0
    %1955 = vmatpush2.msra.mxu0 0.0
    %1956 = vmatprep.subr.mxu0 0.0
    %1957 = vmatpush2.msra.mxu0 0.0
    %1958 = vmatprep.subr.mxu0 0.0
    %1959 = vmatpush2.msra.mxu0 0.0
    %1960 = vmatprep.subr.mxu0 0.0
    %1961 = vmatpush2.msra.mxu0 0.0
    %1962 = vmatprep.subr.mxu0 0.0
    %1963 = vmatpush2.msra.mxu0 0.0
    %1964 = vmatprep.subr.mxu0 0.0
    %1965 = vmatpush2.msra.mxu0 0.0
    %1966 = vmatprep.subr.mxu0 0.0
    %1967 = vmatpush2.msra.mxu0 0.0
    %1968 = vmatprep.subr.mxu0 0.0
    %1969 = vmatpush2.msra.mxu0 0.0
    %1970 = vmatprep.mubr.f32.mxu0 0.0
    %1971 = vmatmul.mubr.f32.gmra.mxu0 %v1904
    %v1972 = vpop.f32.mrf.mxu0
    %v1973 = vadd.f32 0.0, %v1972
    %v1974 = vpop.f32.mrf.mxu0
    %1975 = vdwg.mxu0
    %v1977 = vsel %vm1052, %v1752, 0
    %1979 = vmatprep.subr.mxu0 0.0
    %1980 = vmatpush1.msra.mxu0 0.0
    %1981 = vmatprep.subr.mxu0 0.0
    %1982 = vmatpush1.msra.mxu0 0.0
    %1983 = vmatprep.subr.mxu0 0.0
    %1984 = vmatpush1.msra.mxu0 0.0
    %1985 = vmatprep.subr.mxu0 0.0
    %1986 = vmatpush1.msra.mxu0 0.0
    %1987 = vmatprep.subr.mxu0 0.0
    %1988 = vmatpush1.msra.mxu0 0.0
    %1989 = vmatprep.subr.mxu0 0.0
    %1990 = vmatpush1.msra.mxu0 0.0
    %1991 = vmatprep.subr.mxu0 0.0
    %1992 = vmatpush1.msra.mxu0 0.0
    %1993 = vmatprep.subr.mxu0 0.0
    %1994 = vmatpush1.msra.mxu0 0.0
    %1995 = vmatprep.subr.mxu0 0.0
    %1996 = vmatpush1.msra.mxu0 0.0
    %1997 = vmatprep.subr.mxu0 0.0
    %1998 = vmatpush1.msra.mxu0 0.0
    %1999 = vmatprep.subr.mxu0 0.0
    %2000 = vmatpush1.msra.mxu0 0.0
    %2001 = vmatprep.subr.mxu0 0.0
    %2002 = vmatpush1.msra.mxu0 0.0
    %2003 = vmatprep.subr.mxu0 0.0
    %2004 = vmatpush1.msra.mxu0 0.0
    %2005 = vmatprep.subr.mxu0 0.0
    %2006 = vmatpush1.msra.mxu0 0.0
    %2007 = vmatprep.subr.mxu0 0.0
    %2008 = vmatpush1.msra.mxu0 0.0
    %2009 = vmatprep.subr.mxu0 0.0
    %2010 = vmatpush1.msra.mxu0 %v539
    %2011 = vmatprep.subr.mxu0 0.0
    %2012 = vmatpush2.msra.mxu0 0.0
    %2013 = vmatprep.subr.mxu0 0.0
    %2014 = vmatpush2.msra.mxu0 0.0
    %2015 = vmatprep.subr.mxu0 0.0
    %2016 = vmatpush2.msra.mxu0 0.0
    %2017 = vmatprep.subr.mxu0 0.0
    %2018 = vmatpush2.msra.mxu0 0.0
    %2019 = vmatprep.subr.mxu0 0.0
    %2020 = vmatpush2.msra.mxu0 0.0
    %2021 = vmatprep.subr.mxu0 0.0
    %2022 = vmatpush2.msra.mxu0 0.0
    %2023 = vmatprep.subr.mxu0 0.0
    %2024 = vmatpush2.msra.mxu0 0.0
    %2025 = vmatprep.subr.mxu0 0.0
    %2026 = vmatpush2.msra.mxu0 0.0
    %2027 = vmatprep.subr.mxu0 0.0
    %2028 = vmatpush2.msra.mxu0 0.0
    %2029 = vmatprep.subr.mxu0 0.0
    %2030 = vmatpush2.msra.mxu0 0.0
    %2031 = vmatprep.subr.mxu0 0.0
    %2032 = vmatpush2.msra.mxu0 0.0
    %2033 = vmatprep.subr.mxu0 0.0
    %2034 = vmatpush2.msra.mxu0 0.0
    %2035 = vmatprep.subr.mxu0 0.0
    %2036 = vmatpush2.msra.mxu0 0.0
    %2037 = vmatprep.subr.mxu0 0.0
    %2038 = vmatpush2.msra.mxu0 0.0
    %2039 = vmatprep.subr.mxu0 0.0
    %2040 = vmatpush2.msra.mxu0 0.0
    %2041 = vmatprep.subr.mxu0 0.0
    %2042 = vmatpush2.msra.mxu0 0.0
    %2043 = vmatprep.mubr.f32.mxu0 0.0
    %2044 = vmatmul.mubr.f32.gmra.mxu0 %v1977
    %v2045 = vpop.f32.mrf.mxu0
    %v2046 = vadd.f32 0.0, %v2045
    %v2047 = vpop.f32.mrf.mxu0
    %2048 = vdwg.mxu0
    %v2050 = vsel %vm1052, %v1753, 0
    %2052 = vmatprep.subr.mxu0 0.0
    %2053 = vmatpush1.msra.mxu0 0.0
    %2054 = vmatprep.subr.mxu0 0.0
    %2055 = vmatpush1.msra.mxu0 0.0
    %2056 = vmatprep.subr.mxu0 0.0
    %2057 = vmatpush1.msra.mxu0 0.0
    %2058 = vmatprep.subr.mxu0 0.0
    %2059 = vmatpush1.msra.mxu0 0.0
    %2060 = vmatprep.subr.mxu0 0.0
    %2061 = vmatpush1.msra.mxu0 0.0
    %2062 = vmatprep.subr.mxu0 0.0
    %2063 = vmatpush1.msra.mxu0 0.0
    %2064 = vmatprep.subr.mxu0 0.0
    %2065 = vmatpush1.msra.mxu0 0.0
    %2066 = vmatprep.subr.mxu0 0.0
    %2067 = vmatpush1.msra.mxu0 0.0
    %2068 = vmatprep.subr.mxu0 0.0
    %2069 = vmatpush1.msra.mxu0 0.0
    %2070 = vmatprep.subr.mxu0 0.0
    %2071 = vmatpush1.msra.mxu0 0.0
    %2072 = vmatprep.subr.mxu0 0.0
    %2073 = vmatpush1.msra.mxu0 0.0
    %2074 = vmatprep.subr.mxu0 0.0
    %2075 = vmatpush1.msra.mxu0 0.0
    %2076 = vmatprep.subr.mxu0 0.0
    %2077 = vmatpush1.msra.mxu0 0.0
    %2078 = vmatprep.subr.mxu0 0.0
    %2079 = vmatpush1.msra.mxu0 0.0
    %2080 = vmatprep.subr.mxu0 0.0
    %2081 = vmatpush1.msra.mxu0 0.0
    %2082 = vmatprep.subr.mxu0 0.0
    %2083 = vmatpush1.msra.mxu0 %v789
    %2084 = vmatprep.subr.mxu0 0.0
    %2085 = vmatpush2.msra.mxu0 0.0
    %2086 = vmatprep.subr.mxu0 0.0
    %2087 = vmatpush2.msra.mxu0 0.0
    %2088 = vmatprep.subr.mxu0 0.0
    %2089 = vmatpush2.msra.mxu0 0.0
    %2090 = vmatprep.subr.mxu0 0.0
    %2091 = vmatpush2.msra.mxu0 0.0
    %2092 = vmatprep.subr.mxu0 0.0
    %2093 = vmatpush2.msra.mxu0 0.0
    %2094 = vmatprep.subr.mxu0 0.0
    %2095 = vmatpush2.msra.mxu0 0.0
    %2096 = vmatprep.subr.mxu0 0.0
    %2097 = vmatpush2.msra.mxu0 0.0
    %2098 = vmatprep.subr.mxu0 0.0
    %2099 = vmatpush2.msra.mxu0 0.0
    %2100 = vmatprep.subr.mxu0 0.0
    %2101 = vmatpush2.msra.mxu0 0.0
    %2102 = vmatprep.subr.mxu0 0.0
    %2103 = vmatpush2.msra.mxu0 0.0
    %2104 = vmatprep.subr.mxu0 0.0
    %2105 = vmatpush2.msra.mxu0 0.0
    %2106 = vmatprep.subr.mxu0 0.0
    %2107 = vmatpush2.msra.mxu0 0.0
    %2108 = vmatprep.subr.mxu0 0.0
    %2109 = vmatpush2.msra.mxu0 0.0
    %2110 = vmatprep.subr.mxu0 0.0
    %2111 = vmatpush2.msra.mxu0 0.0
    %2112 = vmatprep.subr.mxu0 0.0
    %2113 = vmatpush2.msra.mxu0 0.0
    %2114 = vmatprep.subr.mxu0 0.0
    %2115 = vmatpush2.msra.mxu0 0.0
    %2116 = vmatprep.mubr.f32.mxu0 0.0
    %2117 = vmatmul.mubr.f32.gmra.mxu0 %v2050
    %v2118 = vpop.f32.mrf.mxu0
    %v2119 = vadd.f32 0.0, %v2118
    %v2120 = vpop.f32.mrf.mxu0
    %2121 = vdwg.mxu0
    %v2123 = vsel %vm1052, %v1754, 0
    %2125 = vmatprep.subr.mxu0 0.0
    %2126 = vmatpush1.msra.mxu0 0.0
    %2127 = vmatprep.subr.mxu0 0.0
    %2128 = vmatpush1.msra.mxu0 0.0
    %2129 = vmatprep.subr.mxu0 0.0
    %2130 = vmatpush1.msra.mxu0 0.0
    %2131 = vmatprep.subr.mxu0 0.0
    %2132 = vmatpush1.msra.mxu0 0.0
    %2133 = vmatprep.subr.mxu0 0.0
    %2134 = vmatpush1.msra.mxu0 0.0
    %2135 = vmatprep.subr.mxu0 0.0
    %2136 = vmatpush1.msra.mxu0 0.0
    %2137 = vmatprep.subr.mxu0 0.0
    %2138 = vmatpush1.msra.mxu0 0.0
    %2139 = vmatprep.subr.mxu0 0.0
    %2140 = vmatpush1.msra.mxu0 0.0
    %2141 = vmatprep.subr.mxu0 0.0
    %2142 = vmatpush1.msra.mxu0 0.0
    %2143 = vmatprep.subr.mxu0 0.0
    %2144 = vmatpush1.msra.mxu0 0.0
    %2145 = vmatprep.subr.mxu0 0.0
    %2146 = vmatpush1.msra.mxu0 0.0
    %2147 = vmatprep.subr.mxu0 0.0
    %2148 = vmatpush1.msra.mxu0 0.0
    %2149 = vmatprep.subr.mxu0 0.0
    %2150 = vmatpush1.msra.mxu0 0.0
    %2151 = vmatprep.subr.mxu0 0.0
    %2152 = vmatpush1.msra.mxu0 0.0
    %2153 = vmatprep.subr.mxu0 0.0
    %2154 = vmatpush1.msra.mxu0 0.0
    %2155 = vmatprep.subr.mxu0 0.0
    %2156 = vmatpush1.msra.mxu0 %v794
    %2157 = vmatprep.subr.mxu0 0.0
    %2158 = vmatpush2.msra.mxu0 0.0
    %2159 = vmatprep.subr.mxu0 0.0
    %2160 = vmatpush2.msra.mxu0 0.0
    %2161 = vmatprep.subr.mxu0 0.0
    %2162 = vmatpush2.msra.mxu0 0.0
    %2163 = vmatprep.subr.mxu0 0.0
    %2164 = vmatpush2.msra.mxu0 0.0
    %2165 = vmatprep.subr.mxu0 0.0
    %2166 = vmatpush2.msra.mxu0 0.0
    %2167 = vmatprep.subr.mxu0 0.0
    %2168 = vmatpush2.msra.mxu0 0.0
    %2169 = vmatprep.subr.mxu0 0.0
    %2170 = vmatpush2.msra.mxu0 0.0
    %2171 = vmatprep.subr.mxu0 0.0
    %2172 = vmatpush2.msra.mxu0 0.0
    %2173 = vmatprep.subr.mxu0 0.0
    %2174 = vmatpush2.msra.mxu0 0.0
    %2175 = vmatprep.subr.mxu0 0.0
    %2176 = vmatpush2.msra.mxu0 0.0
    %2177 = vmatprep.subr.mxu0 0.0
    %2178 = vmatpush2.msra.mxu0 0.0
    %2179 = vmatprep.subr.mxu0 0.0
    %2180 = vmatpush2.msra.mxu0 0.0
    %2181 = vmatprep.subr.mxu0 0.0
    %2182 = vmatpush2.msra.mxu0 0.0
    %2183 = vmatprep.subr.mxu0 0.0
    %2184 = vmatpush2.msra.mxu0 0.0
    %2185 = vmatprep.subr.mxu0 0.0
    %2186 = vmatpush2.msra.mxu0 0.0
    %2187 = vmatprep.subr.mxu0 0.0
    %2188 = vmatpush2.msra.mxu0 0.0
    %2189 = vmatprep.mubr.f32.mxu0 0.0
    %2190 = vmatmul.mubr.f32.gmra.mxu0 %v2123
    %v2191 = vpop.f32.mrf.mxu0
    %v2192 = vadd.f32 0.0, %v2191
    %v2193 = vpop.f32.mrf.mxu0
    %2194 = vdwg.mxu0
    %v2196 = vsel %vm1052, %v1755, 0
    %2198 = vmatprep.subr.mxu0 0.0
    %2199 = vmatpush1.msra.mxu0 0.0
    %2200 = vmatprep.subr.mxu0 0.0
    %2201 = vmatpush1.msra.mxu0 0.0
    %2202 = vmatprep.subr.mxu0 0.0
    %2203 = vmatpush1.msra.mxu0 0.0
    %2204 = vmatprep.subr.mxu0 0.0
    %2205 = vmatpush1.msra.mxu0 0.0
    %2206 = vmatprep.subr.mxu0 0.0
    %2207 = vmatpush1.msra.mxu0 0.0
    %2208 = vmatprep.subr.mxu0 0.0
    %2209 = vmatpush1.msra.mxu0 0.0
    %2210 = vmatprep.subr.mxu0 0.0
    %2211 = vmatpush1.msra.mxu0 0.0
    %2212 = vmatprep.subr.mxu0 0.0
    %2213 = vmatpush1.msra.mxu0 0.0
    %2214 = vmatprep.subr.mxu0 0.0
    %2215 = vmatpush1.msra.mxu0 0.0
    %2216 = vmatprep.subr.mxu0 0.0
    %2217 = vmatpush1.msra.mxu0 0.0
    %2218 = vmatprep.subr.mxu0 0.0
    %2219 = vmatpush1.msra.mxu0 0.0
    %2220 = vmatprep.subr.mxu0 0.0
    %2221 = vmatpush1.msra.mxu0 0.0
    %2222 = vmatprep.subr.mxu0 0.0
    %2223 = vmatpush1.msra.mxu0 0.0
    %2224 = vmatprep.subr.mxu0 0.0
    %2225 = vmatpush1.msra.mxu0 0.0
    %2226 = vmatprep.subr.mxu0 0.0
    %2227 = vmatpush1.msra.mxu0 0.0
    %2228 = vmatprep.subr.mxu0 0.0
    %2229 = vmatpush1.msra.mxu0 %v1044
    %2230 = vmatprep.subr.mxu0 0.0
    %2231 = vmatpush2.msra.mxu0 0.0
    %2232 = vmatprep.subr.mxu0 0.0
    %2233 = vmatpush2.msra.mxu0 0.0
    %2234 = vmatprep.subr.mxu0 0.0
    %2235 = vmatpush2.msra.mxu0 0.0
    %2236 = vmatprep.subr.mxu0 0.0
    %2237 = vmatpush2.msra.mxu0 0.0
    %2238 = vmatprep.subr.mxu0 0.0
    %2239 = vmatpush2.msra.mxu0 0.0
    %2240 = vmatprep.subr.mxu0 0.0
    %2241 = vmatpush2.msra.mxu0 0.0
    %2242 = vmatprep.subr.mxu0 0.0
    %2243 = vmatpush2.msra.mxu0 0.0
    %2244 = vmatprep.subr.mxu0 0.0
    %2245 = vmatpush2.msra.mxu0 0.0
    %2246 = vmatprep.subr.mxu0 0.0
    %2247 = vmatpush2.msra.mxu0 0.0
    %2248 = vmatprep.subr.mxu0 0.0
    %2249 = vmatpush2.msra.mxu0 0.0
    %2250 = vmatprep.subr.mxu0 0.0
    %2251 = vmatpush2.msra.mxu0 0.0
    %2252 = vmatprep.subr.mxu0 0.0
    %2253 = vmatpush2.msra.mxu0 0.0
    %2254 = vmatprep.subr.mxu0 0.0
    %2255 = vmatpush2.msra.mxu0 0.0
    %2256 = vmatprep.subr.mxu0 0.0
    %2257 = vmatpush2.msra.mxu0 0.0
    %2258 = vmatprep.subr.mxu0 0.0
    %2259 = vmatpush2.msra.mxu0 0.0
    %2260 = vmatprep.subr.mxu0 0.0
    %2261 = vmatpush2.msra.mxu0 0.0
    %2262 = vmatprep.mubr.f32.mxu0 0.0
    %2263 = vmatmul.mubr.f32.gmra.mxu0 %v2196
    %v2264 = vpop.f32.mrf.mxu0
    %v2265 = vadd.f32 0.0, %v2264
    %v2266 = vpop.f32.mrf.mxu0
    %2267 = vdwg.mxu0
    %v2269 = vsel %vm1052, %v1756, 0
    %2271 = vmatprep.subr.mxu0 0.0
    %2272 = vmatpush1.msra.mxu0 0.0
    %2273 = vmatprep.subr.mxu0 0.0
    %2274 = vmatpush1.msra.mxu0 0.0
    %2275 = vmatprep.subr.mxu0 0.0
    %2276 = vmatpush1.msra.mxu0 0.0
    %2277 = vmatprep.subr.mxu0 0.0
    %2278 = vmatpush1.msra.mxu0 0.0
    %2279 = vmatprep.subr.mxu0 0.0
    %2280 = vmatpush1.msra.mxu0 0.0
    %2281 = vmatprep.subr.mxu0 0.0
    %2282 = vmatpush1.msra.mxu0 0.0
    %2283 = vmatprep.subr.mxu0 0.0
    %2284 = vmatpush1.msra.mxu0 0.0
    %2285 = vmatprep.subr.mxu0 0.0
    %2286 = vmatpush1.msra.mxu0 0.0
    %2287 = vmatprep.subr.mxu0 0.0
    %2288 = vmatpush1.msra.mxu0 0.0
    %2289 = vmatprep.subr.mxu0 0.0
    %2290 = vmatpush1.msra.mxu0 0.0
    %2291 = vmatprep.subr.mxu0 0.0
    %2292 = vmatpush1.msra.mxu0 0.0
    %2293 = vmatprep.subr.mxu0 0.0
    %2294 = vmatpush1.msra.mxu0 0.0
    %2295 = vmatprep.subr.mxu0 0.0
    %2296 = vmatpush1.msra.mxu0 0.0
    %2297 = vmatprep.subr.mxu0 0.0
    %2298 = vmatpush1.msra.mxu0 0.0
    %2299 = vmatprep.subr.mxu0 0.0
    %2300 = vmatpush1.msra.mxu0 0.0
    %2301 = vmatprep.subr.mxu0 0.0
    %2302 = vmatpush1.msra.mxu0 %v1049
    %2303 = vmatprep.subr.mxu0 0.0
    %2304 = vmatpush2.msra.mxu0 0.0
    %2305 = vmatprep.subr.mxu0 0.0
    %2306 = vmatpush2.msra.mxu0 0.0
    %2307 = vmatprep.subr.mxu0 0.0
    %2308 = vmatpush2.msra.mxu0 0.0
    %2309 = vmatprep.subr.mxu0 0.0
    %2310 = vmatpush2.msra.mxu0 0.0
    %2311 = vmatprep.subr.mxu0 0.0
    %2312 = vmatpush2.msra.mxu0 0.0
    %2313 = vmatprep.subr.mxu0 0.0
    %2314 = vmatpush2.msra.mxu0 0.0
    %2315 = vmatprep.subr.mxu0 0.0
    %2316 = vmatpush2.msra.mxu0 0.0
    %2317 = vmatprep.subr.mxu0 0.0
    %2318 = vmatpush2.msra.mxu0 0.0
    %2319 = vmatprep.subr.mxu0 0.0
    %2320 = vmatpush2.msra.mxu0 0.0
    %2321 = vmatprep.subr.mxu0 0.0
    %2322 = vmatpush2.msra.mxu0 0.0
    %2323 = vmatprep.subr.mxu0 0.0
    %2324 = vmatpush2.msra.mxu0 0.0
    %2325 = vmatprep.subr.mxu0 0.0
    %2326 = vmatpush2.msra.mxu0 0.0
    %2327 = vmatprep.subr.mxu0 0.0
    %2328 = vmatpush2.msra.mxu0 0.0
    %2329 = vmatprep.subr.mxu0 0.0
    %2330 = vmatpush2.msra.mxu0 0.0
    %2331 = vmatprep.subr.mxu0 0.0
    %2332 = vmatpush2.msra.mxu0 0.0
    %2333 = vmatprep.subr.mxu0 0.0
    %2334 = vmatpush2.msra.mxu0 0.0
    %2335 = vmatprep.mubr.f32.mxu0 0.0
    %2336 = vmatmul.mubr.f32.gmra.mxu0 %v2269
    %v2337 = vpop.f32.mrf.mxu0
    %v2338 = vadd.f32 0.0, %v2337
    %v2339 = vpop.f32.mrf.mxu0
    %2340 = vdwg.mxu0
    %v2341 = vld [vmem:[%s5 + $0xc] sm:$0x1]
    %v2342 = vld [vmem:[%s2] sm:$0xff]
    %v2344 = vsel %vm1052, %v1827, 0
    %v2347 = vsel %vm1052, %v1900, 0
    %2349 = vmatprep.subr.mxu0 0.0
    %2350 = vmatpush1.msra.mxu0 0.0
    %2351 = vmatprep.subr.mxu0 0.0
    %2352 = vmatpush1.msra.mxu0 0.0
    %2353 = vmatprep.subr.mxu0 0.0
    %2354 = vmatpush1.msra.mxu0 0.0
    %2355 = vmatprep.subr.mxu0 0.0
    %2356 = vmatpush1.msra.mxu0 0.0
    %2357 = vmatprep.subr.mxu0 0.0
    %2358 = vmatpush1.msra.mxu0 0.0
    %2359 = vmatprep.subr.mxu0 0.0
    %2360 = vmatpush1.msra.mxu0 0.0
    %2361 = vmatprep.subr.mxu0 0.0
    %2362 = vmatpush1.msra.mxu0 0.0
    %2363 = vmatprep.subr.mxu0 0.0
    %2364 = vmatpush1.msra.mxu0 0.0
    %2365 = vmatprep.subr.mxu0 0.0
    %2366 = vmatpush1.msra.mxu0 0.0
    %2367 = vmatprep.subr.mxu0 0.0
    %2368 = vmatpush1.msra.mxu0 0.0
    %2369 = vmatprep.subr.mxu0 0.0
    %2370 = vmatpush1.msra.mxu0 0.0
    %2371 = vmatprep.subr.mxu0 0.0
    %2372 = vmatpush1.msra.mxu0 0.0
    %2373 = vmatprep.subr.mxu0 0.0
    %2374 = vmatpush1.msra.mxu0 0.0
    %2375 = vmatprep.subr.mxu0 0.0
    %2376 = vmatpush1.msra.mxu0 0.0
    %2377 = vmatprep.subr.mxu0 0.0
    %2378 = vmatpush1.msra.mxu0 0.0
    %2379 = vmatprep.subr.mxu0 0.0
    %2380 = vmatpush1.msra.mxu0 %v2342
    %2381 = vmatprep.subr.mxu0 0.0
    %2382 = vmatpush2.msra.mxu0 0.0
    %2383 = vmatprep.subr.mxu0 0.0
    %2384 = vmatpush2.msra.mxu0 0.0
    %2385 = vmatprep.subr.mxu0 0.0
    %2386 = vmatpush2.msra.mxu0 0.0
    %2387 = vmatprep.subr.mxu0 0.0
    %2388 = vmatpush2.msra.mxu0 0.0
    %2389 = vmatprep.subr.mxu0 0.0
    %2390 = vmatpush2.msra.mxu0 0.0
    %2391 = vmatprep.subr.mxu0 0.0
    %2392 = vmatpush2.msra.mxu0 0.0
    %2393 = vmatprep.subr.mxu0 0.0
    %2394 = vmatpush2.msra.mxu0 0.0
    %2395 = vmatprep.subr.mxu0 0.0
    %2396 = vmatpush2.msra.mxu0 0.0
    %2397 = vmatprep.subr.mxu0 0.0
    %2398 = vmatpush2.msra.mxu0 0.0
    %2399 = vmatprep.subr.mxu0 0.0
    %2400 = vmatpush2.msra.mxu0 0.0
    %2401 = vmatprep.subr.mxu0 0.0
    %2402 = vmatpush2.msra.mxu0 0.0
    %2403 = vmatprep.subr.mxu0 0.0
    %2404 = vmatpush2.msra.mxu0 0.0
    %2405 = vmatprep.subr.mxu0 0.0
    %2406 = vmatpush2.msra.mxu0 0.0
    %2407 = vmatprep.subr.mxu0 0.0
    %2408 = vmatpush2.msra.mxu0 0.0
    %2409 = vmatprep.subr.mxu0 0.0
    %2410 = vmatpush2.msra.mxu0 0.0
    %2411 = vmatprep.subr.mxu0 0.0
    %2412 = vmatpush2.msra.mxu0 0.0
    %2413 = vmatprep.mubr.f32.mxu0 0.0
    %2414 = vmatmul.mubr.f32.gmra.mxu0 %v2344
    %v2415 = vpop.f32.mrf.mxu0
    %v2416 = vadd.f32 0.0, %v2415
    %v2417 = vpop.f32.mrf.mxu0
    %2418 = vmatprep.mubr.f32.mxu0 0.0
    %2419 = vmatmul.mubr.f32.gmra.mxu0 %v2347
    %v2420 = vpop.f32.mrf.mxu0
    %v2421 = vadd.f32 0.0, %v2420
    %v2422 = vpop.f32.mrf.mxu0
    %2423 = vdwg.mxu0
    %v2424 = vlaneseq
    %v2425 = vshrl.u32 %v2424, 7
    %v2426 = vsub.s32 0, %v2425
    %v2427 = vrot.slane %v2341, %v2426
    %v2428 = vadd.f32 %v2427, %v2416
    %v2429 = vadd.f32 %v2427, %v2421
    %s2430 = scalar_lea.vmem %s2, 8
    %v2431 = vld [vmem:[%s2430] sm:$0xff]
    %v2433 = vsel %vm1052, %v1973, 0
    %v2436 = vsel %vm1052, %v2046, 0
    %2438 = vmatprep.subr.mxu0 0.0
    %2439 = vmatpush1.msra.mxu0 0.0
    %2440 = vmatprep.subr.mxu0 0.0
    %2441 = vmatpush1.msra.mxu0 0.0
    %2442 = vmatprep.subr.mxu0 0.0
    %2443 = vmatpush1.msra.mxu0 0.0
    %2444 = vmatprep.subr.mxu0 0.0
    %2445 = vmatpush1.msra.mxu0 0.0
    %2446 = vmatprep.subr.mxu0 0.0
    %2447 = vmatpush1.msra.mxu0 0.0
    %2448 = vmatprep.subr.mxu0 0.0
    %2449 = vmatpush1.msra.mxu0 0.0
    %2450 = vmatprep.subr.mxu0 0.0
    %2451 = vmatpush1.msra.mxu0 0.0
    %2452 = vmatprep.subr.mxu0 0.0
    %2453 = vmatpush1.msra.mxu0 0.0
    %2454 = vmatprep.subr.mxu0 0.0
    %2455 = vmatpush1.msra.mxu0 0.0
    %2456 = vmatprep.subr.mxu0 0.0
    %2457 = vmatpush1.msra.mxu0 0.0
    %2458 = vmatprep.subr.mxu0 0.0
    %2459 = vmatpush1.msra.mxu0 0.0
    %2460 = vmatprep.subr.mxu0 0.0
    %2461 = vmatpush1.msra.mxu0 0.0
    %2462 = vmatprep.subr.mxu0 0.0
    %2463 = vmatpush1.msra.mxu0 0.0
    %2464 = vmatprep.subr.mxu0 0.0
    %2465 = vmatpush1.msra.mxu0 0.0
    %2466 = vmatprep.subr.mxu0 0.0
    %2467 = vmatpush1.msra.mxu0 0.0
    %2468 = vmatprep.subr.mxu0 0.0
    %2469 = vmatpush1.msra.mxu0 %v2431
    %2470 = vmatprep.subr.mxu0 0.0
    %2471 = vmatpush2.msra.mxu0 0.0
    %2472 = vmatprep.subr.mxu0 0.0
    %2473 = vmatpush2.msra.mxu0 0.0
    %2474 = vmatprep.subr.mxu0 0.0
    %2475 = vmatpush2.msra.mxu0 0.0
    %2476 = vmatprep.subr.mxu0 0.0
    %2477 = vmatpush2.msra.mxu0 0.0
    %2478 = vmatprep.subr.mxu0 0.0
    %2479 = vmatpush2.msra.mxu0 0.0
    %2480 = vmatprep.subr.mxu0 0.0
    %2481 = vmatpush2.msra.mxu0 0.0
    %2482 = vmatprep.subr.mxu0 0.0
    %2483 = vmatpush2.msra.mxu0 0.0
    %2484 = vmatprep.subr.mxu0 0.0
    %2485 = vmatpush2.msra.mxu0 0.0
    %2486 = vmatprep.subr.mxu0 0.0
    %2487 = vmatpush2.msra.mxu0 0.0
    %2488 = vmatprep.subr.mxu0 0.0
    %2489 = vmatpush2.msra.mxu0 0.0
    %2490 = vmatprep.subr.mxu0 0.0
    %2491 = vmatpush2.msra.mxu0 0.0
    %2492 = vmatprep.subr.mxu0 0.0
    %2493 = vmatpush2.msra.mxu0 0.0
    %2494 = vmatprep.subr.mxu0 0.0
    %2495 = vmatpush2.msra.mxu0 0.0
    %2496 = vmatprep.subr.mxu0 0.0
    %2497 = vmatpush2.msra.mxu0 0.0
    %2498 = vmatprep.subr.mxu0 0.0
    %2499 = vmatpush2.msra.mxu0 0.0
    %2500 = vmatprep.subr.mxu0 0.0
    %2501 = vmatpush2.msra.mxu0 0.0
    %2502 = vmatprep.mubr.f32.mxu0 0.0
    %2503 = vmatmul.mubr.f32.gmra.mxu0 %v2433
    %v2504 = vpop.f32.mrf.mxu0
    %v2505 = vadd.f32 0.0, %v2504
    %v2506 = vpop.f32.mrf.mxu0
    %2507 = vmatprep.mubr.f32.mxu0 0.0
    %2508 = vmatmul.mubr.f32.gmra.mxu0 %v2436
    %v2509 = vpop.f32.mrf.mxu0
    %v2510 = vadd.f32 0.0, %v2509
    %v2511 = vpop.f32.mrf.mxu0
    %2512 = vdwg.mxu0
    %v2513 = vadd.f32 %v2428, %v2505
    %v2514 = vadd.f32 %v2429, %v2510
    %s2515 = scalar_lea.vmem %s2, 16
    %v2516 = vld [vmem:[%s2515] sm:$0xff]
    %v2518 = vsel %vm1052, %v2119, 0
    %v2521 = vsel %vm1052, %v2192, 0
    %2523 = vmatprep.subr.mxu0 0.0
    %2524 = vmatpush1.msra.mxu0 0.0
    %2525 = vmatprep.subr.mxu0 0.0
    %2526 = vmatpush1.msra.mxu0 0.0
    %2527 = vmatprep.subr.mxu0 0.0
    %2528 = vmatpush1.msra.mxu0 0.0
    %2529 = vmatprep.subr.mxu0 0.0
    %2530 = vmatpush1.msra.mxu0 0.0
    %2531 = vmatprep.subr.mxu0 0.0
    %2532 = vmatpush1.msra.mxu0 0.0
    %2533 = vmatprep.subr.mxu0 0.0
    %2534 = vmatpush1.msra.mxu0 0.0
    %2535 = vmatprep.subr.mxu0 0.0
    %2536 = vmatpush1.msra.mxu0 0.0
    %2537 = vmatprep.subr.mxu0 0.0
    %2538 = vmatpush1.msra.mxu0 0.0
    %2539 = vmatprep.subr.mxu0 0.0
    %2540 = vmatpush1.msra.mxu0 0.0
    %2541 = vmatprep.subr.mxu0 0.0
    %2542 = vmatpush1.msra.mxu0 0.0
    %2543 = vmatprep.subr.mxu0 0.0
    %2544 = vmatpush1.msra.mxu0 0.0
    %2545 = vmatprep.subr.mxu0 0.0
    %2546 = vmatpush1.msra.mxu0 0.0
    %2547 = vmatprep.subr.mxu0 0.0
    %2548 = vmatpush1.msra.mxu0 0.0
    %2549 = vmatprep.subr.mxu0 0.0
    %2550 = vmatpush1.msra.mxu0 0.0
    %2551 = vmatprep.subr.mxu0 0.0
    %2552 = vmatpush1.msra.mxu0 0.0
    %2553 = vmatprep.subr.mxu0 0.0
    %2554 = vmatpush1.msra.mxu0 %v2516
    %2555 = vmatprep.subr.mxu0 0.0
    %2556 = vmatpush2.msra.mxu0 0.0
    %2557 = vmatprep.subr.mxu0 0.0
    %2558 = vmatpush2.msra.mxu0 0.0
    %2559 = vmatprep.subr.mxu0 0.0
    %2560 = vmatpush2.msra.mxu0 0.0
    %2561 = vmatprep.subr.mxu0 0.0
    %2562 = vmatpush2.msra.mxu0 0.0
    %2563 = vmatprep.subr.mxu0 0.0
    %2564 = vmatpush2.msra.mxu0 0.0
    %2565 = vmatprep.subr.mxu0 0.0
    %2566 = vmatpush2.msra.mxu0 0.0
    %2567 = vmatprep.subr.mxu0 0.0
    %2568 = vmatpush2.msra.mxu0 0.0
    %2569 = vmatprep.subr.mxu0 0.0
    %2570 = vmatpush2.msra.mxu0 0.0
    %2571 = vmatprep.subr.mxu0 0.0
    %2572 = vmatpush2.msra.mxu0 0.0
    %2573 = vmatprep.subr.mxu0 0.0
    %2574 = vmatpush2.msra.mxu0 0.0
    %2575 = vmatprep.subr.mxu0 0.0
    %2576 = vmatpush2.msra.mxu0 0.0
    %2577 = vmatprep.subr.mxu0 0.0
    %2578 = vmatpush2.msra.mxu0 0.0
    %2579 = vmatprep.subr.mxu0 0.0
    %2580 = vmatpush2.msra.mxu0 0.0
    %2581 = vmatprep.subr.mxu0 0.0
    %2582 = vmatpush2.msra.mxu0 0.0
    %2583 = vmatprep.subr.mxu0 0.0
    %2584 = vmatpush2.msra.mxu0 0.0
    %2585 = vmatprep.subr.mxu0 0.0
    %2586 = vmatpush2.msra.mxu0 0.0
    %2587 = vmatprep.mubr.f32.mxu0 0.0
    %2588 = vmatmul.mubr.f32.gmra.mxu0 %v2518
    %v2589 = vpop.f32.mrf.mxu0
    %v2590 = vadd.f32 0.0, %v2589
    %v2591 = vpop.f32.mrf.mxu0
    %2592 = vmatprep.mubr.f32.mxu0 0.0
    %2593 = vmatmul.mubr.f32.gmra.mxu0 %v2521
    %v2594 = vpop.f32.mrf.mxu0
    %v2595 = vadd.f32 0.0, %v2594
    %v2596 = vpop.f32.mrf.mxu0
    %2597 = vdwg.mxu0
    %v2598 = vadd.f32 %v2513, %v2590
    %v2599 = vadd.f32 %v2514, %v2595
    %s2600 = scalar_lea.vmem %s2, 24
    %v2601 = vld [vmem:[%s2600] sm:$0xff]
    %v2603 = vsel %vm1052, %v2265, 0
    %v2606 = vsel %vm1052, %v2338, 0
    %2608 = vmatprep.subr.mxu0 0.0
    %2609 = vmatpush1.msra.mxu0 0.0
    %2610 = vmatprep.subr.mxu0 0.0
    %2611 = vmatpush1.msra.mxu0 0.0
    %2612 = vmatprep.subr.mxu0 0.0
    %2613 = vmatpush1.msra.mxu0 0.0
    %2614 = vmatprep.subr.mxu0 0.0
    %2615 = vmatpush1.msra.mxu0 0.0
    %2616 = vmatprep.subr.mxu0 0.0
    %2617 = vmatpush1.msra.mxu0 0.0
    %2618 = vmatprep.subr.mxu0 0.0
    %2619 = vmatpush1.msra.mxu0 0.0
    %2620 = vmatprep.subr.mxu0 0.0
    %2621 = vmatpush1.msra.mxu0 0.0
    %2622 = vmatprep.subr.mxu0 0.0
    %2623 = vmatpush1.msra.mxu0 0.0
    %2624 = vmatprep.subr.mxu0 0.0
    %2625 = vmatpush1.msra.mxu0 0.0
    %2626 = vmatprep.subr.mxu0 0.0
    %2627 = vmatpush1.msra.mxu0 0.0
    %2628 = vmatprep.subr.mxu0 0.0
    %2629 = vmatpush1.msra.mxu0 0.0
    %2630 = vmatprep.subr.mxu0 0.0
    %2631 = vmatpush1.msra.mxu0 0.0
    %2632 = vmatprep.subr.mxu0 0.0
    %2633 = vmatpush1.msra.mxu0 0.0
    %2634 = vmatprep.subr.mxu0 0.0
    %2635 = vmatpush1.msra.mxu0 0.0
    %2636 = vmatprep.subr.mxu0 0.0
    %2637 = vmatpush1.msra.mxu0 0.0
    %2638 = vmatprep.subr.mxu0 0.0
    %2639 = vmatpush1.msra.mxu0 %v2601
    %2640 = vmatprep.subr.mxu0 0.0
    %2641 = vmatpush2.msra.mxu0 0.0
    %2642 = vmatprep.subr.mxu0 0.0
    %2643 = vmatpush2.msra.mxu0 0.0
    %2644 = vmatprep.subr.mxu0 0.0
    %2645 = vmatpush2.msra.mxu0 0.0
    %2646 = vmatprep.subr.mxu0 0.0
    %2647 = vmatpush2.msra.mxu0 0.0
    %2648 = vmatprep.subr.mxu0 0.0
    %2649 = vmatpush2.msra.mxu0 0.0
    %2650 = vmatprep.subr.mxu0 0.0
    %2651 = vmatpush2.msra.mxu0 0.0
    %2652 = vmatprep.subr.mxu0 0.0
    %2653 = vmatpush2.msra.mxu0 0.0
    %2654 = vmatprep.subr.mxu0 0.0
    %2655 = vmatpush2.msra.mxu0 0.0
    %2656 = vmatprep.subr.mxu0 0.0
    %2657 = vmatpush2.msra.mxu0 0.0
    %2658 = vmatprep.subr.mxu0 0.0
    %2659 = vmatpush2.msra.mxu0 0.0
    %2660 = vmatprep.subr.mxu0 0.0
    %2661 = vmatpush2.msra.mxu0 0.0
    %2662 = vmatprep.subr.mxu0 0.0
    %2663 = vmatpush2.msra.mxu0 0.0
    %2664 = vmatprep.subr.mxu0 0.0
    %2665 = vmatpush2.msra.mxu0 0.0
    %2666 = vmatprep.subr.mxu0 0.0
    %2667 = vmatpush2.msra.mxu0 0.0
    %2668 = vmatprep.subr.mxu0 0.0
    %2669 = vmatpush2.msra.mxu0 0.0
    %2670 = vmatprep.subr.mxu0 0.0
    %2671 = vmatpush2.msra.mxu0 0.0
    %2672 = vmatprep.mubr.f32.mxu0 0.0
    %2673 = vmatmul.mubr.f32.gmra.mxu0 %v2603
    %v2674 = vpop.f32.mrf.mxu0
    %v2675 = vadd.f32 0.0, %v2674
    %v2676 = vpop.f32.mrf.mxu0
    %2677 = vmatprep.mubr.f32.mxu0 0.0
    %2678 = vmatmul.mubr.f32.gmra.mxu0 %v2606
    %v2679 = vpop.f32.mrf.mxu0
    %v2680 = vadd.f32 0.0, %v2679
    %v2681 = vpop.f32.mrf.mxu0
    %2682 = vdwg.mxu0
    %v2683 = vadd.f32 %v2598, %v2675
    %v2684 = vadd.f32 %v2599, %v2680
    %v2685 = vadd.f32 %v24, %v2683
    %v2686 = vadd.f32 %v25, %v2684
    %v2687 = vsel %vm35, %v2685, 0.0
    %2688 = vadd.xlane.f32.xlu0 %v2687
    %v2689 = vpop.xlane.xlu0 %2688
    %v2690 = vsel %vm35, %v2686, 0.0
    %2691 = vadd.xlane.f32.xlu0 %v2690
    %v2692 = vpop.xlane.xlu0 %2691
    %v2693 = vrcp.pop 32.0
    %v2694 = vmul.f32 %v2689, %v2693
    %v2695 = vmul.f32 %v2692, %v2693
    %v2696 = vsub.f32 %v2685, %v2694
    %v2697 = vsub.f32 %v2686, %v2695
    %v2698 = vmul.f32 %v2696, %v2696
    %v2699 = vmul.f32 %v2697, %v2697
    %v2700 = vsel %vm35, %v2698, 0.0
    %2701 = vadd.xlane.f32.xlu0 %v2700
    %v2702 = vpop.xlane.xlu0 %2701
    %v2703 = vsel %vm35, %v2699, 0.0
    %2704 = vadd.xlane.f32.xlu0 %v2703
    %v2705 = vpop.xlane.xlu0 %2704
    %v2706 = vmul.f32 %v2702, %v2693
    %v2707 = vmul.f32 %v2705, %v2693
    %v2708 = vadd.f32 %v2706, 1e-05
    %v2709 = vadd.f32 %v2707, 1e-05
    %v2710 = vrsqrt.pop %v2708
    %v2711 = vrsqrt.pop %v2709
    %v2712 = vmul.f32 %v2696, %v2710
    %v2713 = vmul.f32 %v2697, %v2711
    %v2714 = vld [vmem:[%s5 + $0xf] sm:$0x1]
    %v2715 = vlaneseq
    %v2716 = vshrl.u32 %v2715, 7
    %v2717 = vsub.s32 0, %v2716
    %v2718 = vrot.slane %v2714, %v2717
    %v2719 = vmul.f32 %v2712, %v2718
    %v2720 = vmul.f32 %v2713, %v2718
    %v2721 = vld [vmem:[%s5 + $0x10] sm:$0x1]
    %v2722 = vlaneseq
    %v2723 = vshrl.u32 %v2722, 7
    %v2724 = vsub.s32 0, %v2723
    %v2725 = vrot.slane %v2721, %v2724
    %v2726 = vadd.f32 %v2719, %v2725
    %v2727 = vadd.f32 %v2720, %v2725
    %v2728 = vld [vmem:[%s3] sm:$0xff]
    %v2729 = vld [vmem:[%s3 + $0x8] sm:$0xff]
    %v2730 = vld [vmem:[%s3 + $0x10] sm:$0xff]
    %v2731 = vld [vmem:[%s3 + $0x18] sm:$0xff]
    %v2732 = vld [vmem:[%s5 + $0xd] sm:$0x1]
    %v2733 = vlaneseq
    %v2734 = vshrl.u32 %v2733, 7
    %v2735 = vsub.s32 0, %v2734
    %v2736 = vrot.slane %v2732, %v2735
    %v2738 = vsel %vm35, %v2726, 0
    %v2741 = vsel %vm35, %v2727, 0
    %2743 = vmatprep.subr.mxu0 0.0
    %2744 = vmatpush1.msra.mxu0 0.0
    %2745 = vmatprep.subr.mxu0 0.0
    %2746 = vmatpush1.msra.mxu0 0.0
    %2747 = vmatprep.subr.mxu0 0.0
    %2748 = vmatpush1.msra.mxu0 0.0
    %2749 = vmatprep.subr.mxu0 0.0
    %2750 = vmatpush1.msra.mxu0 0.0
    %2751 = vmatprep.subr.mxu0 0.0
    %2752 = vmatpush1.msra.mxu0 0.0
    %2753 = vmatprep.subr.mxu0 0.0
    %2754 = vmatpush1.msra.mxu0 0.0
    %2755 = vmatprep.subr.mxu0 0.0
    %2756 = vmatpush1.msra.mxu0 0.0
    %2757 = vmatprep.subr.mxu0 0.0
    %2758 = vmatpush1.msra.mxu0 0.0
    %2759 = vmatprep.subr.mxu0 0.0
    %2760 = vmatpush1.msra.mxu0 0.0
    %2761 = vmatprep.subr.mxu0 0.0
    %2762 = vmatpush1.msra.mxu0 0.0
    %2763 = vmatprep.subr.mxu0 0.0
    %2764 = vmatpush1.msra.mxu0 0.0
    %2765 = vmatprep.subr.mxu0 0.0
    %2766 = vmatpush1.msra.mxu0 0.0
    %2767 = vmatprep.subr.mxu0 0.0
    %2768 = vmatpush1.msra.mxu0 %v2731
    %2769 = vmatprep.subr.mxu0 0.0
    %2770 = vmatpush1.msra.mxu0 %v2730
    %2771 = vmatprep.subr.mxu0 0.0
    %2772 = vmatpush1.msra.mxu0 %v2729
    %2773 = vmatprep.subr.mxu0 0.0
    %2774 = vmatpush1.msra.mxu0 %v2728
    %2775 = vmatprep.subr.mxu0 0.0
    %2776 = vmatpush2.msra.mxu0 0.0
    %2777 = vmatprep.subr.mxu0 0.0
    %2778 = vmatpush2.msra.mxu0 0.0
    %2779 = vmatprep.subr.mxu0 0.0
    %2780 = vmatpush2.msra.mxu0 0.0
    %2781 = vmatprep.subr.mxu0 0.0
    %2782 = vmatpush2.msra.mxu0 0.0
    %2783 = vmatprep.subr.mxu0 0.0
    %2784 = vmatpush2.msra.mxu0 0.0
    %2785 = vmatprep.subr.mxu0 0.0
    %2786 = vmatpush2.msra.mxu0 0.0
    %2787 = vmatprep.subr.mxu0 0.0
    %2788 = vmatpush2.msra.mxu0 0.0
    %2789 = vmatprep.subr.mxu0 0.0
    %2790 = vmatpush2.msra.mxu0 0.0
    %2791 = vmatprep.subr.mxu0 0.0
    %2792 = vmatpush2.msra.mxu0 0.0
    %2793 = vmatprep.subr.mxu0 0.0
    %2794 = vmatpush2.msra.mxu0 0.0
    %2795 = vmatprep.subr.mxu0 0.0
    %2796 = vmatpush2.msra.mxu0 0.0
    %2797 = vmatprep.subr.mxu0 0.0
    %2798 = vmatpush2.msra.mxu0 0.0
    %2799 = vmatprep.subr.mxu0 0.0
    %2800 = vmatpush2.msra.mxu0 0.0
    %2801 = vmatprep.subr.mxu0 0.0
    %2802 = vmatpush2.msra.mxu0 0.0
    %2803 = vmatprep.subr.mxu0 0.0
    %2804 = vmatpush2.msra.mxu0 0.0
    %2805 = vmatprep.subr.mxu0 0.0
    %2806 = vmatpush2.msra.mxu0 0.0
    %2807 = vmatprep.mubr.f32.mxu0 0.0
    %2808 = vmatmul.mubr.f32.gmra.mxu0 %v2738
    %v2809 = vpop.f32.mrf.mxu0
    %v2810 = vadd.f32 %v2736, %v2809
    %v2811 = vpop.f32.mrf.mxu0
    %2812 = vmatprep.mubr.f32.mxu0 0.0
    %2813 = vmatmul.mubr.f32.gmra.mxu0 %v2741
    %v2814 = vpop.f32.mrf.mxu0
    %v2815 = vadd.f32 %v2736, %v2814
    %v2816 = vpop.f32.mrf.mxu0
    %2817 = vdwg.mxu0
    %v2818 = vmax.f32 %v2810, 0.0
    %v2819 = vmax.f32 %v2815, 0.0
    %v2820 = vld [vmem:[%s4] sm:$0xff]
    %v2821 = vld [vmem:[%s4 + $0x8] sm:$0xff]
    %v2822 = vld [vmem:[%s4 + $0x10] sm:$0xff]
    %v2823 = vld [vmem:[%s4 + $0x18] sm:$0xff]
    %v2824 = vld [vmem:[%s4 + $0x20] sm:$0xff]
    %v2825 = vld [vmem:[%s4 + $0x28] sm:$0xff]
    %v2826 = vld [vmem:[%s4 + $0x30] sm:$0xff]
    %v2827 = vld [vmem:[%s4 + $0x38] sm:$0xff]
    %v2828 = vld [vmem:[%s5 + $0xe] sm:$0x1]
    %v2829 = vlaneseq
    %v2830 = vshrl.u32 %v2829, 7
    %v2831 = vsub.s32 0, %v2830
    %v2832 = vrot.slane %v2828, %v2831
    %vm2833 = vcmask 523264
    %v2835 = vsel %vm2833, %v2818, 0
    %v2838 = vsel %vm2833, %v2819, 0
    %2840 = vmatprep.subr.mxu0 0.0
    %2841 = vmatpush1.msra.mxu0 0.0
    %2842 = vmatprep.subr.mxu0 0.0
    %2843 = vmatpush1.msra.mxu0 0.0
    %2844 = vmatprep.subr.mxu0 0.0
    %2845 = vmatpush1.msra.mxu0 0.0
    %2846 = vmatprep.subr.mxu0 0.0
    %2847 = vmatpush1.msra.mxu0 0.0
    %2848 = vmatprep.subr.mxu0 0.0
    %2849 = vmatpush1.msra.mxu0 0.0
    %2850 = vmatprep.subr.mxu0 0.0
    %2851 = vmatpush1.msra.mxu0 0.0
    %2852 = vmatprep.subr.mxu0 0.0
    %2853 = vmatpush1.msra.mxu0 0.0
    %2854 = vmatprep.subr.mxu0 0.0
    %2855 = vmatpush1.msra.mxu0 0.0
    %2856 = vmatprep.subr.mxu0 0.0
    %2857 = vmatpush1.msra.mxu0 %v2827
    %2858 = vmatprep.subr.mxu0 0.0
    %2859 = vmatpush1.msra.mxu0 %v2826
    %2860 = vmatprep.subr.mxu0 0.0
    %2861 = vmatpush1.msra.mxu0 %v2825
    %2862 = vmatprep.subr.mxu0 0.0
    %2863 = vmatpush1.msra.mxu0 %v2824
    %2864 = vmatprep.subr.mxu0 0.0
    %2865 = vmatpush1.msra.mxu0 %v2823
    %2866 = vmatprep.subr.mxu0 0.0
    %2867 = vmatpush1.msra.mxu0 %v2822
    %2868 = vmatprep.subr.mxu0 0.0
    %2869 = vmatpush1.msra.mxu0 %v2821
    %2870 = vmatprep.subr.mxu0 0.0
    %2871 = vmatpush1.msra.mxu0 %v2820
    %2872 = vmatprep.subr.mxu0 0.0
    %2873 = vmatpush2.msra.mxu0 0.0
    %2874 = vmatprep.subr.mxu0 0.0
    %2875 = vmatpush2.msra.mxu0 0.0
    %2876 = vmatprep.subr.mxu0 0.0
    %2877 = vmatpush2.msra.mxu0 0.0
    %2878 = vmatprep.subr.mxu0 0.0
    %2879 = vmatpush2.msra.mxu0 0.0
    %2880 = vmatprep.subr.mxu0 0.0
    %2881 = vmatpush2.msra.mxu0 0.0
    %2882 = vmatprep.subr.mxu0 0.0
    %2883 = vmatpush2.msra.mxu0 0.0
    %2884 = vmatprep.subr.mxu0 0.0
    %2885 = vmatpush2.msra.mxu0 0.0
    %2886 = vmatprep.subr.mxu0 0.0
    %2887 = vmatpush2.msra.mxu0 0.0
    %2888 = vmatprep.subr.mxu0 0.0
    %2889 = vmatpush2.msra.mxu0 0.0
    %2890 = vmatprep.subr.mxu0 0.0
    %2891 = vmatpush2.msra.mxu0 0.0
    %2892 = vmatprep.subr.mxu0 0.0
    %2893 = vmatpush2.msra.mxu0 0.0
    %2894 = vmatprep.subr.mxu0 0.0
    %2895 = vmatpush2.msra.mxu0 0.0
    %2896 = vmatprep.subr.mxu0 0.0
    %2897 = vmatpush2.msra.mxu0 0.0
    %2898 = vmatprep.subr.mxu0 0.0
    %2899 = vmatpush2.msra.mxu0 0.0
    %2900 = vmatprep.subr.mxu0 0.0
    %2901 = vmatpush2.msra.mxu0 0.0
    %2902 = vmatprep.subr.mxu0 0.0
    %2903 = vmatpush2.msra.mxu0 0.0
    %2904 = vmatprep.mubr.f32.mxu0 0.0
    %2905 = vmatmul.mubr.f32.gmra.mxu0 %v2835
    %v2906 = vpop.f32.mrf.mxu0
    %v2907 = vadd.f32 %v2832, %v2906
    %v2908 = vpop.f32.mrf.mxu0
    %2909 = vmatprep.mubr.f32.mxu0 0.0
    %2910 = vmatmul.mubr.f32.gmra.mxu0 %v2838
    %v2911 = vpop.f32.mrf.mxu0
    %v2912 = vadd.f32 %v2832, %v2911
    %v2913 = vpop.f32.mrf.mxu0
    %2914 = vdwg.mxu0
    %v2915 = vadd.f32 %v2726, %v2907
    %v2916 = vadd.f32 %v2727, %v2912
    %v2917 = vsel %vm35, %v2915, 0.0
    %2918 = vadd.xlane.f32.xlu0 %v2917
    %v2919 = vpop.xlane.xlu0 %2918
    %v2920 = vsel %vm35, %v2916, 0.0
    %2921 = vadd.xlane.f32.xlu0 %v2920
    %v2922 = vpop.xlane.xlu0 %2921
    %v2923 = vmul.f32 %v2919, %v2693
    %v2924 = vmul.f32 %v2922, %v2693
    %v2925 = vsub.f32 %v2915, %v2923
    %v2926 = vsub.f32 %v2916, %v2924
    %v2927 = vmul.f32 %v2925, %v2925
    %v2928 = vmul.f32 %v2926, %v2926
    %v2929 = vsel %vm35, %v2927, 0.0
    %2930 = vadd.xlane.f32.xlu0 %v2929
    %v2931 = vpop.xlane.xlu0 %2930
    %v2932 = vsel %vm35, %v2928, 0.0
    %2933 = vadd.xlane.f32.xlu0 %v2932
    %v2934 = vpop.xlane.xlu0 %2933
    %v2935 = vmul.f32 %v2931, %v2693
    %v2936 = vmul.f32 %v2934, %v2693
    %v2937 = vadd.f32 %v2935, 1e-05
    %v2938 = vadd.f32 %v2936, 1e-05
    %v2939 = vrsqrt.pop %v2937
    %v2940 = vrsqrt.pop %v2938
    %v2941 = vmul.f32 %v2925, %v2939
    %v2942 = vmul.f32 %v2926, %v2940
    %v2943 = vld [vmem:[%s5 + $0x11] sm:$0x1]
    %v2944 = vlaneseq
    %v2945 = vshrl.u32 %v2944, 7
    %v2946 = vsub.s32 0, %v2945
    %v2947 = vrot.slane %v2943, %v2946
    %v2948 = vmul.f32 %v2941, %v2947
    %v2949 = vmul.f32 %v2942, %v2947
    %v2950 = vld [vmem:[%s5 + $0x12] sm:$0x1]
    %v2951 = vlaneseq
    %v2952 = vshrl.u32 %v2951, 7
    %v2953 = vsub.s32 0, %v2952
    %v2954 = vrot.slane %v2950, %v2953
    %v2955 = vadd.f32 %v2948, %v2954
    %v2956 = vadd.f32 %v2949, %v2954
    %s2957 = scalar_lea.vmem %s1, 384
    %v2958 = vld [vmem:[%s2957] sm:$0xff]
    %v2959 = vld [vmem:[%s2957 + $0x8] sm:$0xff]
    %v2960 = vld [vmem:[%s2957 + $0x10] sm:$0xff]
    %v2961 = vld [vmem:[%s2957 + $0x18] sm:$0xff]
    %s2962 = scalar_lea.vmem %s5, 24
    %v2963 = vld [vmem:[%s2962] sm:$0x1]
    %v2964 = vlaneseq
    %v2965 = vshrl.u32 %v2964, 7
    %v2966 = vsub.s32 0, %v2965
    %v2967 = vrot.slane %v2963, %v2966
    %v2969 = vsel %vm35, %v2955, 0
    %v2972 = vsel %vm35, %v2956, 0
    %2974 = vmatprep.subr.mxu0 0.0
    %2975 = vmatpush1.msra.mxu0 0.0
    %2976 = vmatprep.subr.mxu0 0.0
    %2977 = vmatpush1.msra.mxu0 0.0
    %2978 = vmatprep.subr.mxu0 0.0
    %2979 = vmatpush1.msra.mxu0 0.0
    %2980 = vmatprep.subr.mxu0 0.0
    %2981 = vmatpush1.msra.mxu0 0.0
    %2982 = vmatprep.subr.mxu0 0.0
    %2983 = vmatpush1.msra.mxu0 0.0
    %2984 = vmatprep.subr.mxu0 0.0
    %2985 = vmatpush1.msra.mxu0 0.0
    %2986 = vmatprep.subr.mxu0 0.0
    %2987 = vmatpush1.msra.mxu0 0.0
    %2988 = vmatprep.subr.mxu0 0.0
    %2989 = vmatpush1.msra.mxu0 0.0
    %2990 = vmatprep.subr.mxu0 0.0
    %2991 = vmatpush1.msra.mxu0 0.0
    %2992 = vmatprep.subr.mxu0 0.0
    %2993 = vmatpush1.msra.mxu0 0.0
    %2994 = vmatprep.subr.mxu0 0.0
    %2995 = vmatpush1.msra.mxu0 0.0
    %2996 = vmatprep.subr.mxu0 0.0
    %2997 = vmatpush1.msra.mxu0 0.0
    %2998 = vmatprep.subr.mxu0 0.0
    %2999 = vmatpush1.msra.mxu0 %v2961
    %3000 = vmatprep.subr.mxu0 0.0
    %3001 = vmatpush1.msra.mxu0 %v2960
    %3002 = vmatprep.subr.mxu0 0.0
    %3003 = vmatpush1.msra.mxu0 %v2959
    %3004 = vmatprep.subr.mxu0 0.0
    %3005 = vmatpush1.msra.mxu0 %v2958
    %3006 = vmatprep.subr.mxu0 0.0
    %3007 = vmatpush2.msra.mxu0 0.0
    %3008 = vmatprep.subr.mxu0 0.0
    %3009 = vmatpush2.msra.mxu0 0.0
    %3010 = vmatprep.subr.mxu0 0.0
    %3011 = vmatpush2.msra.mxu0 0.0
    %3012 = vmatprep.subr.mxu0 0.0
    %3013 = vmatpush2.msra.mxu0 0.0
    %3014 = vmatprep.subr.mxu0 0.0
    %3015 = vmatpush2.msra.mxu0 0.0
    %3016 = vmatprep.subr.mxu0 0.0
    %3017 = vmatpush2.msra.mxu0 0.0
    %3018 = vmatprep.subr.mxu0 0.0
    %3019 = vmatpush2.msra.mxu0 0.0
    %3020 = vmatprep.subr.mxu0 0.0
    %3021 = vmatpush2.msra.mxu0 0.0
    %3022 = vmatprep.subr.mxu0 0.0
    %3023 = vmatpush2.msra.mxu0 0.0
    %3024 = vmatprep.subr.mxu0 0.0
    %3025 = vmatpush2.msra.mxu0 0.0
    %3026 = vmatprep.subr.mxu0 0.0
    %3027 = vmatpush2.msra.mxu0 0.0
    %3028 = vmatprep.subr.mxu0 0.0
    %3029 = vmatpush2.msra.mxu0 0.0
    %3030 = vmatprep.subr.mxu0 0.0
    %3031 = vmatpush2.msra.mxu0 0.0
    %3032 = vmatprep.subr.mxu0 0.0
    %3033 = vmatpush2.msra.mxu0 0.0
    %3034 = vmatprep.subr.mxu0 0.0
    %3035 = vmatpush2.msra.mxu0 0.0
    %3036 = vmatprep.subr.mxu0 0.0
    %3037 = vmatpush2.msra.mxu0 0.0
    %3038 = vmatprep.mubr.f32.mxu0 0.0
    %3039 = vmatmul.mubr.f32.gmra.mxu0 %v2969
    %v3040 = vpop.f32.mrf.mxu0
    %v3041 = vadd.f32 %v2967, %v3040
    %v3042 = vpop.f32.mrf.mxu0
    %3043 = vmatprep.mubr.f32.mxu0 0.0
    %3044 = vmatmul.mubr.f32.gmra.mxu0 %v2972
    %v3045 = vpop.f32.mrf.mxu0
    %v3046 = vadd.f32 %v2967, %v3045
    %v3047 = vpop.f32.mrf.mxu0
    %3048 = vdwg.mxu0
    %s3049 = scalar_lea.vmem %s1, 512
    %v3050 = vld [vmem:[%s3049] sm:$0xff]
    %v3051 = vld [vmem:[%s3049 + $0x8] sm:$0xff]
    %v3052 = vld [vmem:[%s3049 + $0x10] sm:$0xff]
    %v3053 = vld [vmem:[%s3049 + $0x18] sm:$0xff]
    %v3054 = vld [vmem:[%s2962 + $0x4] sm:$0x1]
    %v3055 = vlaneseq
    %v3056 = vshrl.u32 %v3055, 7
    %v3057 = vsub.s32 0, %v3056
    %v3058 = vrot.slane %v3054, %v3057
    %3059 = vmatprep.subr.mxu0 0.0
    %3060 = vmatpush1.msra.mxu0 0.0
    %3061 = vmatprep.subr.mxu0 0.0
    %3062 = vmatpush1.msra.mxu0 0.0
    %3063 = vmatprep.subr.mxu0 0.0
    %3064 = vmatpush1.msra.mxu0 0.0
    %3065 = vmatprep.subr.mxu0 0.0
    %3066 = vmatpush1.msra.mxu0 0.0
    %3067 = vmatprep.subr.mxu0 0.0
    %3068 = vmatpush1.msra.mxu0 0.0
    %3069 = vmatprep.subr.mxu0 0.0
    %3070 = vmatpush1.msra.mxu0 0.0
    %3071 = vmatprep.subr.mxu0 0.0
    %3072 = vmatpush1.msra.mxu0 0.0
    %3073 = vmatprep.subr.mxu0 0.0
    %3074 = vmatpush1.msra.mxu0 0.0
    %3075 = vmatprep.subr.mxu0 0.0
    %3076 = vmatpush1.msra.mxu0 0.0
    %3077 = vmatprep.subr.mxu0 0.0
    %3078 = vmatpush1.msra.mxu0 0.0
    %3079 = vmatprep.subr.mxu0 0.0
    %3080 = vmatpush1.msra.mxu0 0.0
    %3081 = vmatprep.subr.mxu0 0.0
    %3082 = vmatpush1.msra.mxu0 0.0
    %3083 = vmatprep.subr.mxu0 0.0
    %3084 = vmatpush1.msra.mxu0 %v3053
    %3085 = vmatprep.subr.mxu0 0.0
    %3086 = vmatpush1.msra.mxu0 %v3052
    %3087 = vmatprep.subr.mxu0 0.0
    %3088 = vmatpush1.msra.mxu0 %v3051
    %3089 = vmatprep.subr.mxu0 0.0
    %3090 = vmatpush1.msra.mxu0 %v3050
    %3091 = vmatprep.subr.mxu0 0.0
    %3092 = vmatpush2.msra.mxu0 0.0
    %3093 = vmatprep.subr.mxu0 0.0
    %3094 = vmatpush2.msra.mxu0 0.0
    %3095 = vmatprep.subr.mxu0 0.0
    %3096 = vmatpush2.msra.mxu0 0.0
    %3097 = vmatprep.subr.mxu0 0.0
    %3098 = vmatpush2.msra.mxu0 0.0
    %3099 = vmatprep.subr.mxu0 0.0
    %3100 = vmatpush2.msra.mxu0 0.0
    %3101 = vmatprep.subr.mxu0 0.0
    %3102 = vmatpush2.msra.mxu0 0.0
    %3103 = vmatprep.subr.mxu0 0.0
    %3104 = vmatpush2.msra.mxu0 0.0
    %3105 = vmatprep.subr.mxu0 0.0
    %3106 = vmatpush2.msra.mxu0 0.0
    %3107 = vmatprep.subr.mxu0 0.0
    %3108 = vmatpush2.msra.mxu0 0.0
    %3109 = vmatprep.subr.mxu0 0.0
    %3110 = vmatpush2.msra.mxu0 0.0
    %3111 = vmatprep.subr.mxu0 0.0
    %3112 = vmatpush2.msra.mxu0 0.0
    %3113 = vmatprep.subr.mxu0 0.0
    %3114 = vmatpush2.msra.mxu0 0.0
    %3115 = vmatprep.subr.mxu0 0.0
    %3116 = vmatpush2.msra.mxu0 0.0
    %3117 = vmatprep.subr.mxu0 0.0
    %3118 = vmatpush2.msra.mxu0 0.0
    %3119 = vmatprep.subr.mxu0 0.0
    %3120 = vmatpush2.msra.mxu0 0.0
    %3121 = vmatprep.subr.mxu0 0.0
    %3122 = vmatpush2.msra.mxu0 0.0
    %3123 = vmatprep.mubr.f32.mxu0 0.0
    %3124 = vmatmul.mubr.f32.gmra.mxu0 %v2969
    %v3125 = vpop.f32.mrf.mxu0
    %v3126 = vadd.f32 %v3058, %v3125
    %v3127 = vpop.f32.mrf.mxu0
    %3128 = vmatprep.mubr.f32.mxu0 0.0
    %3129 = vmatmul.mubr.f32.gmra.mxu0 %v2972
    %v3130 = vpop.f32.mrf.mxu0
    %v3131 = vadd.f32 %v3058, %v3130
    %v3132 = vpop.f32.mrf.mxu0
    %3133 = vdwg.mxu0
    %s3134 = scalar_lea.vmem %s1, 640
    %v3135 = vld [vmem:[%s3134] sm:$0xff]
    %v3136 = vld [vmem:[%s3134 + $0x8] sm:$0xff]
    %v3137 = vld [vmem:[%s3134 + $0x10] sm:$0xff]
    %v3138 = vld [vmem:[%s3134 + $0x18] sm:$0xff]
    %v3139 = vld [vmem:[%s2962 + $0x8] sm:$0x1]
    %v3140 = vlaneseq
    %v3141 = vshrl.u32 %v3140, 7
    %v3142 = vsub.s32 0, %v3141
    %v3143 = vrot.slane %v3139, %v3142
    %3144 = vmatprep.subr.mxu0 0.0
    %3145 = vmatpush1.msra.mxu0 0.0
    %3146 = vmatprep.subr.mxu0 0.0
    %3147 = vmatpush1.msra.mxu0 0.0
    %3148 = vmatprep.subr.mxu0 0.0
    %3149 = vmatpush1.msra.mxu0 0.0
    %3150 = vmatprep.subr.mxu0 0.0
    %3151 = vmatpush1.msra.mxu0 0.0
    %3152 = vmatprep.subr.mxu0 0.0
    %3153 = vmatpush1.msra.mxu0 0.0
    %3154 = vmatprep.subr.mxu0 0.0
    %3155 = vmatpush1.msra.mxu0 0.0
    %3156 = vmatprep.subr.mxu0 0.0
    %3157 = vmatpush1.msra.mxu0 0.0
    %3158 = vmatprep.subr.mxu0 0.0
    %3159 = vmatpush1.msra.mxu0 0.0
    %3160 = vmatprep.subr.mxu0 0.0
    %3161 = vmatpush1.msra.mxu0 0.0
    %3162 = vmatprep.subr.mxu0 0.0
    %3163 = vmatpush1.msra.mxu0 0.0
    %3164 = vmatprep.subr.mxu0 0.0
    %3165 = vmatpush1.msra.mxu0 0.0
    %3166 = vmatprep.subr.mxu0 0.0
    %3167 = vmatpush1.msra.mxu0 0.0
    %3168 = vmatprep.subr.mxu0 0.0
    %3169 = vmatpush1.msra.mxu0 %v3138
    %3170 = vmatprep.subr.mxu0 0.0
    %3171 = vmatpush1.msra.mxu0 %v3137
    %3172 = vmatprep.subr.mxu0 0.0
    %3173 = vmatpush1.msra.mxu0 %v3136
    %3174 = vmatprep.subr.mxu0 0.0
    %3175 = vmatpush1.msra.mxu0 %v3135
    %3176 = vmatprep.subr.mxu0 0.0
    %3177 = vmatpush2.msra.mxu0 0.0
    %3178 = vmatprep.subr.mxu0 0.0
    %3179 = vmatpush2.msra.mxu0 0.0
    %3180 = vmatprep.subr.mxu0 0.0
    %3181 = vmatpush2.msra.mxu0 0.0
    %3182 = vmatprep.subr.mxu0 0.0
    %3183 = vmatpush2.msra.mxu0 0.0
    %3184 = vmatprep.subr.mxu0 0.0
    %3185 = vmatpush2.msra.mxu0 0.0
    %3186 = vmatprep.subr.mxu0 0.0
    %3187 = vmatpush2.msra.mxu0 0.0
    %3188 = vmatprep.subr.mxu0 0.0
    %3189 = vmatpush2.msra.mxu0 0.0
    %3190 = vmatprep.subr.mxu0 0.0
    %3191 = vmatpush2.msra.mxu0 0.0
    %3192 = vmatprep.subr.mxu0 0.0
    %3193 = vmatpush2.msra.mxu0 0.0
    %3194 = vmatprep.subr.mxu0 0.0
    %3195 = vmatpush2.msra.mxu0 0.0
    %3196 = vmatprep.subr.mxu0 0.0
    %3197 = vmatpush2.msra.mxu0 0.0
    %3198 = vmatprep.subr.mxu0 0.0
    %3199 = vmatpush2.msra.mxu0 0.0
    %3200 = vmatprep.subr.mxu0 0.0
    %3201 = vmatpush2.msra.mxu0 0.0
    %3202 = vmatprep.subr.mxu0 0.0
    %3203 = vmatpush2.msra.mxu0 0.0
    %3204 = vmatprep.subr.mxu0 0.0
    %3205 = vmatpush2.msra.mxu0 0.0
    %3206 = vmatprep.subr.mxu0 0.0
    %3207 = vmatpush2.msra.mxu0 0.0
    %3208 = vmatprep.mubr.f32.mxu0 0.0
    %3209 = vmatmul.mubr.f32.gmra.mxu0 %v2969
    %v3210 = vpop.f32.mrf.mxu0
    %v3211 = vadd.f32 %v3143, %v3210
    %v3212 = vpop.f32.mrf.mxu0
    %3213 = vmatprep.mubr.f32.mxu0 0.0
    %3214 = vmatmul.mubr.f32.gmra.mxu0 %v2972
    %v3215 = vpop.f32.mrf.mxu0
    %v3216 = vadd.f32 %v3143, %v3215
    %v3217 = vpop.f32.mrf.mxu0
    %3218 = vdwg.mxu0
    %s3219 = scalar_lea.vmem %s1, 416
    %v3220 = vld [vmem:[%s3219] sm:$0xff]
    %v3221 = vld [vmem:[%s3219 + $0x8] sm:$0xff]
    %v3222 = vld [vmem:[%s3219 + $0x10] sm:$0xff]
    %v3223 = vld [vmem:[%s3219 + $0x18] sm:$0xff]
    %v3224 = vld [vmem:[%s2962 + $0x1] sm:$0x1]
    %v3225 = vlaneseq
    %v3226 = vshrl.u32 %v3225, 7
    %v3227 = vsub.s32 0, %v3226
    %v3228 = vrot.slane %v3224, %v3227
    %3229 = vmatprep.subr.mxu0 0.0
    %3230 = vmatpush1.msra.mxu0 0.0
    %3231 = vmatprep.subr.mxu0 0.0
    %3232 = vmatpush1.msra.mxu0 0.0
    %3233 = vmatprep.subr.mxu0 0.0
    %3234 = vmatpush1.msra.mxu0 0.0
    %3235 = vmatprep.subr.mxu0 0.0
    %3236 = vmatpush1.msra.mxu0 0.0
    %3237 = vmatprep.subr.mxu0 0.0
    %3238 = vmatpush1.msra.mxu0 0.0
    %3239 = vmatprep.subr.mxu0 0.0
    %3240 = vmatpush1.msra.mxu0 0.0
    %3241 = vmatprep.subr.mxu0 0.0
    %3242 = vmatpush1.msra.mxu0 0.0
    %3243 = vmatprep.subr.mxu0 0.0
    %3244 = vmatpush1.msra.mxu0 0.0
    %3245 = vmatprep.subr.mxu0 0.0
    %3246 = vmatpush1.msra.mxu0 0.0
    %3247 = vmatprep.subr.mxu0 0.0
    %3248 = vmatpush1.msra.mxu0 0.0
    %3249 = vmatprep.subr.mxu0 0.0
    %3250 = vmatpush1.msra.mxu0 0.0
    %3251 = vmatprep.subr.mxu0 0.0
    %3252 = vmatpush1.msra.mxu0 0.0
    %3253 = vmatprep.subr.mxu0 0.0
    %3254 = vmatpush1.msra.mxu0 %v3223
    %3255 = vmatprep.subr.mxu0 0.0
    %3256 = vmatpush1.msra.mxu0 %v3222
    %3257 = vmatprep.subr.mxu0 0.0
    %3258 = vmatpush1.msra.mxu0 %v3221
    %3259 = vmatprep.subr.mxu0 0.0
    %3260 = vmatpush1.msra.mxu0 %v3220
    %3261 = vmatprep.subr.mxu0 0.0
    %3262 = vmatpush2.msra.mxu0 0.0
    %3263 = vmatprep.subr.mxu0 0.0
    %3264 = vmatpush2.msra.mxu0 0.0
    %3265 = vmatprep.subr.mxu0 0.0
    %3266 = vmatpush2.msra.mxu0 0.0
    %3267 = vmatprep.subr.mxu0 0.0
    %3268 = vmatpush2.msra.mxu0 0.0
    %3269 = vmatprep.subr.mxu0 0.0
    %3270 = vmatpush2.msra.mxu0 0.0
    %3271 = vmatprep.subr.mxu0 0.0
    %3272 = vmatpush2.msra.mxu0 0.0
    %3273 = vmatprep.subr.mxu0 0.0
    %3274 = vmatpush2.msra.mxu0 0.0
    %3275 = vmatprep.subr.mxu0 0.0
    %3276 = vmatpush2.msra.mxu0 0.0
    %3277 = vmatprep.subr.mxu0 0.0
    %3278 = vmatpush2.msra.mxu0 0.0
    %3279 = vmatprep.subr.mxu0 0.0
    %3280 = vmatpush2.msra.mxu0 0.0
    %3281 = vmatprep.subr.mxu0 0.0
    %3282 = vmatpush2.msra.mxu0 0.0
    %3283 = vmatprep.subr.mxu0 0.0
    %3284 = vmatpush2.msra.mxu0 0.0
    %3285 = vmatprep.subr.mxu0 0.0
    %3286 = vmatpush2.msra.mxu0 0.0
    %3287 = vmatprep.subr.mxu0 0.0
    %3288 = vmatpush2.msra.mxu0 0.0
    %3289 = vmatprep.subr.mxu0 0.0
    %3290 = vmatpush2.msra.mxu0 0.0
    %3291 = vmatprep.subr.mxu0 0.0
    %3292 = vmatpush2.msra.mxu0 0.0
    %3293 = vmatprep.mubr.f32.mxu0 0.0
    %3294 = vmatmul.mubr.f32.gmra.mxu0 %v2969
    %v3295 = vpop.f32.mrf.mxu0
    %v3296 = vadd.f32 %v3228, %v3295
    %v3297 = vpop.f32.mrf.mxu0
    %3298 = vmatprep.mubr.f32.mxu0 0.0
    %3299 = vmatmul.mubr.f32.gmra.mxu0 %v2972
    %v3300 = vpop.f32.mrf.mxu0
    %v3301 = vadd.f32 %v3228, %v3300
    %v3302 = vpop.f32.mrf.mxu0
    %3303 = vdwg.mxu0
    %s3304 = scalar_lea.vmem %s1, 544
    %v3305 = vld [vmem:[%s3304] sm:$0xff]
    %v3306 = vld [vmem:[%s3304 + $0x8] sm:$0xff]
    %v3307 = vld [vmem:[%s3304 + $0x10] sm:$0xff]
    %v3308 = vld [vmem:[%s3304 + $0x18] sm:$0xff]
    %v3309 = vld [vmem:[%s2962 + $0x5] sm:$0x1]
    %v3310 = vlaneseq
    %v3311 = vshrl.u32 %v3310, 7
    %v3312 = vsub.s32 0, %v3311
    %v3313 = vrot.slane %v3309, %v3312
    %3314 = vmatprep.subr.mxu0 0.0
    %3315 = vmatpush1.msra.mxu0 0.0
    %3316 = vmatprep.subr.mxu0 0.0
    %3317 = vmatpush1.msra.mxu0 0.0
    %3318 = vmatprep.subr.mxu0 0.0
    %3319 = vmatpush1.msra.mxu0 0.0
    %3320 = vmatprep.subr.mxu0 0.0
    %3321 = vmatpush1.msra.mxu0 0.0
    %3322 = vmatprep.subr.mxu0 0.0
    %3323 = vmatpush1.msra.mxu0 0.0
    %3324 = vmatprep.subr.mxu0 0.0
    %3325 = vmatpush1.msra.mxu0 0.0
    %3326 = vmatprep.subr.mxu0 0.0
    %3327 = vmatpush1.msra.mxu0 0.0
    %3328 = vmatprep.subr.mxu0 0.0
    %3329 = vmatpush1.msra.mxu0 0.0
    %3330 = vmatprep.subr.mxu0 0.0
    %3331 = vmatpush1.msra.mxu0 0.0
    %3332 = vmatprep.subr.mxu0 0.0
    %3333 = vmatpush1.msra.mxu0 0.0
    %3334 = vmatprep.subr.mxu0 0.0
    %3335 = vmatpush1.msra.mxu0 0.0
    %3336 = vmatprep.subr.mxu0 0.0
    %3337 = vmatpush1.msra.mxu0 0.0
    %3338 = vmatprep.subr.mxu0 0.0
    %3339 = vmatpush1.msra.mxu0 %v3308
    %3340 = vmatprep.subr.mxu0 0.0
    %3341 = vmatpush1.msra.mxu0 %v3307
    %3342 = vmatprep.subr.mxu0 0.0
    %3343 = vmatpush1.msra.mxu0 %v3306
    %3344 = vmatprep.subr.mxu0 0.0
    %3345 = vmatpush1.msra.mxu0 %v3305
    %3346 = vmatprep.subr.mxu0 0.0
    %3347 = vmatpush2.msra.mxu0 0.0
    %3348 = vmatprep.subr.mxu0 0.0
    %3349 = vmatpush2.msra.mxu0 0.0
    %3350 = vmatprep.subr.mxu0 0.0
    %3351 = vmatpush2.msra.mxu0 0.0
    %3352 = vmatprep.subr.mxu0 0.0
    %3353 = vmatpush2.msra.mxu0 0.0
    %3354 = vmatprep.subr.mxu0 0.0
    %3355 = vmatpush2.msra.mxu0 0.0
    %3356 = vmatprep.subr.mxu0 0.0
    %3357 = vmatpush2.msra.mxu0 0.0
    %3358 = vmatprep.subr.mxu0 0.0
    %3359 = vmatpush2.msra.mxu0 0.0
    %3360 = vmatprep.subr.mxu0 0.0
    %3361 = vmatpush2.msra.mxu0 0.0
    %3362 = vmatprep.subr.mxu0 0.0
    %3363 = vmatpush2.msra.mxu0 0.0
    %3364 = vmatprep.subr.mxu0 0.0
    %3365 = vmatpush2.msra.mxu0 0.0
    %3366 = vmatprep.subr.mxu0 0.0
    %3367 = vmatpush2.msra.mxu0 0.0
    %3368 = vmatprep.subr.mxu0 0.0
    %3369 = vmatpush2.msra.mxu0 0.0
    %3370 = vmatprep.subr.mxu0 0.0
    %3371 = vmatpush2.msra.mxu0 0.0
    %3372 = vmatprep.subr.mxu0 0.0
    %3373 = vmatpush2.msra.mxu0 0.0
    %3374 = vmatprep.subr.mxu0 0.0
    %3375 = vmatpush2.msra.mxu0 0.0
    %3376 = vmatprep.subr.mxu0 0.0
    %3377 = vmatpush2.msra.mxu0 0.0
    %3378 = vmatprep.mubr.f32.mxu0 0.0
    %3379 = vmatmul.mubr.f32.gmra.mxu0 %v2969
    %v3380 = vpop.f32.mrf.mxu0
    %v3381 = vadd.f32 %v3313, %v3380
    %v3382 = vpop.f32.mrf.mxu0
    %3383 = vmatprep.mubr.f32.mxu0 0.0
    %3384 = vmatmul.mubr.f32.gmra.mxu0 %v2972
    %v3385 = vpop.f32.mrf.mxu0
    %v3386 = vadd.f32 %v3313, %v3385
    %v3387 = vpop.f32.mrf.mxu0
    %3388 = vdwg.mxu0
    %s3389 = scalar_lea.vmem %s1, 672
    %v3390 = vld [vmem:[%s3389] sm:$0xff]
    %v3391 = vld [vmem:[%s3389 + $0x8] sm:$0xff]
    %v3392 = vld [vmem:[%s3389 + $0x10] sm:$0xff]
    %v3393 = vld [vmem:[%s3389 + $0x18] sm:$0xff]
    %v3394 = vld [vmem:[%s2962 + $0x9] sm:$0x1]
    %v3395 = vlaneseq
    %v3396 = vshrl.u32 %v3395, 7
    %v3397 = vsub.s32 0, %v3396
    %v3398 = vrot.slane %v3394, %v3397
    %3399 = vmatprep.subr.mxu0 0.0
    %3400 = vmatpush1.msra.mxu0 0.0
    %3401 = vmatprep.subr.mxu0 0.0
    %3402 = vmatpush1.msra.mxu0 0.0
    %3403 = vmatprep.subr.mxu0 0.0
    %3404 = vmatpush1.msra.mxu0 0.0
    %3405 = vmatprep.subr.mxu0 0.0
    %3406 = vmatpush1.msra.mxu0 0.0
    %3407 = vmatprep.subr.mxu0 0.0
    %3408 = vmatpush1.msra.mxu0 0.0
    %3409 = vmatprep.subr.mxu0 0.0
    %3410 = vmatpush1.msra.mxu0 0.0
    %3411 = vmatprep.subr.mxu0 0.0
    %3412 = vmatpush1.msra.mxu0 0.0
    %3413 = vmatprep.subr.mxu0 0.0
    %3414 = vmatpush1.msra.mxu0 0.0
    %3415 = vmatprep.subr.mxu0 0.0
    %3416 = vmatpush1.msra.mxu0 0.0
    %3417 = vmatprep.subr.mxu0 0.0
    %3418 = vmatpush1.msra.mxu0 0.0
    %3419 = vmatprep.subr.mxu0 0.0
    %3420 = vmatpush1.msra.mxu0 0.0
    %3421 = vmatprep.subr.mxu0 0.0
    %3422 = vmatpush1.msra.mxu0 0.0
    %3423 = vmatprep.subr.mxu0 0.0
    %3424 = vmatpush1.msra.mxu0 %v3393
    %3425 = vmatprep.subr.mxu0 0.0
    %3426 = vmatpush1.msra.mxu0 %v3392
    %3427 = vmatprep.subr.mxu0 0.0
    %3428 = vmatpush1.msra.mxu0 %v3391
    %3429 = vmatprep.subr.mxu0 0.0
    %3430 = vmatpush1.msra.mxu0 %v3390
    %3431 = vmatprep.subr.mxu0 0.0
    %3432 = vmatpush2.msra.mxu0 0.0
    %3433 = vmatprep.subr.mxu0 0.0
    %3434 = vmatpush2.msra.mxu0 0.0
    %3435 = vmatprep.subr.mxu0 0.0
    %3436 = vmatpush2.msra.mxu0 0.0
    %3437 = vmatprep.subr.mxu0 0.0
    %3438 = vmatpush2.msra.mxu0 0.0
    %3439 = vmatprep.subr.mxu0 0.0
    %3440 = vmatpush2.msra.mxu0 0.0
    %3441 = vmatprep.subr.mxu0 0.0
    %3442 = vmatpush2.msra.mxu0 0.0
    %3443 = vmatprep.subr.mxu0 0.0
    %3444 = vmatpush2.msra.mxu0 0.0
    %3445 = vmatprep.subr.mxu0 0.0
    %3446 = vmatpush2.msra.mxu0 0.0
    %3447 = vmatprep.subr.mxu0 0.0
    %3448 = vmatpush2.msra.mxu0 0.0
    %3449 = vmatprep.subr.mxu0 0.0
    %3450 = vmatpush2.msra.mxu0 0.0
    %3451 = vmatprep.subr.mxu0 0.0
    %3452 = vmatpush2.msra.mxu0 0.0
    %3453 = vmatprep.subr.mxu0 0.0
    %3454 = vmatpush2.msra.mxu0 0.0
    %3455 = vmatprep.subr.mxu0 0.0
    %3456 = vmatpush2.msra.mxu0 0.0
    %3457 = vmatprep.subr.mxu0 0.0
    %3458 = vmatpush2.msra.mxu0 0.0
    %3459 = vmatprep.subr.mxu0 0.0
    %3460 = vmatpush2.msra.mxu0 0.0
    %3461 = vmatprep.subr.mxu0 0.0
    %3462 = vmatpush2.msra.mxu0 0.0
    %3463 = vmatprep.mubr.f32.mxu0 0.0
    %3464 = vmatmul.mubr.f32.gmra.mxu0 %v2969
    %v3465 = vpop.f32.mrf.mxu0
    %v3466 = vadd.f32 %v3398, %v3465
    %v3467 = vpop.f32.mrf.mxu0
    %3468 = vmatprep.mubr.f32.mxu0 0.0
    %3469 = vmatmul.mubr.f32.gmra.mxu0 %v2972
    %v3470 = vpop.f32.mrf.mxu0
    %v3471 = vadd.f32 %v3398, %v3470
    %v3472 = vpop.f32.mrf.mxu0
    %3473 = vdwg.mxu0
    %s3474 = scalar_lea.vmem %s1, 448
    %v3475 = vld [vmem:[%s3474] sm:$0xff]
    %v3476 = vld [vmem:[%s3474 + $0x8] sm:$0xff]
    %v3477 = vld [vmem:[%s3474 + $0x10] sm:$0xff]
    %v3478 = vld [vmem:[%s3474 + $0x18] sm:$0xff]
    %v3479 = vld [vmem:[%s2962 + $0x2] sm:$0x1]
    %v3480 = vlaneseq
    %v3481 = vshrl.u32 %v3480, 7
    %v3482 = vsub.s32 0, %v3481
    %v3483 = vrot.slane %v3479, %v3482
    %3484 = vmatprep.subr.mxu0 0.0
    %3485 = vmatpush1.msra.mxu0 0.0
    %3486 = vmatprep.subr.mxu0 0.0
    %3487 = vmatpush1.msra.mxu0 0.0
    %3488 = vmatprep.subr.mxu0 0.0
    %3489 = vmatpush1.msra.mxu0 0.0
    %3490 = vmatprep.subr.mxu0 0.0
    %3491 = vmatpush1.msra.mxu0 0.0
    %3492 = vmatprep.subr.mxu0 0.0
    %3493 = vmatpush1.msra.mxu0 0.0
    %3494 = vmatprep.subr.mxu0 0.0
    %3495 = vmatpush1.msra.mxu0 0.0
    %3496 = vmatprep.subr.mxu0 0.0
    %3497 = vmatpush1.msra.mxu0 0.0
    %3498 = vmatprep.subr.mxu0 0.0
    %3499 = vmatpush1.msra.mxu0 0.0
    %3500 = vmatprep.subr.mxu0 0.0
    %3501 = vmatpush1.msra.mxu0 0.0
    %3502 = vmatprep.subr.mxu0 0.0
    %3503 = vmatpush1.msra.mxu0 0.0
    %3504 = vmatprep.subr.mxu0 0.0
    %3505 = vmatpush1.msra.mxu0 0.0
    %3506 = vmatprep.subr.mxu0 0.0
    %3507 = vmatpush1.msra.mxu0 0.0
    %3508 = vmatprep.subr.mxu0 0.0
    %3509 = vmatpush1.msra.mxu0 %v3478
    %3510 = vmatprep.subr.mxu0 0.0
    %3511 = vmatpush1.msra.mxu0 %v3477
    %3512 = vmatprep.subr.mxu0 0.0
    %3513 = vmatpush1.msra.mxu0 %v3476
    %3514 = vmatprep.subr.mxu0 0.0
    %3515 = vmatpush1.msra.mxu0 %v3475
    %3516 = vmatprep.subr.mxu0 0.0
    %3517 = vmatpush2.msra.mxu0 0.0
    %3518 = vmatprep.subr.mxu0 0.0
    %3519 = vmatpush2.msra.mxu0 0.0
    %3520 = vmatprep.subr.mxu0 0.0
    %3521 = vmatpush2.msra.mxu0 0.0
    %3522 = vmatprep.subr.mxu0 0.0
    %3523 = vmatpush2.msra.mxu0 0.0
    %3524 = vmatprep.subr.mxu0 0.0
    %3525 = vmatpush2.msra.mxu0 0.0
    %3526 = vmatprep.subr.mxu0 0.0
    %3527 = vmatpush2.msra.mxu0 0.0
    %3528 = vmatprep.subr.mxu0 0.0
    %3529 = vmatpush2.msra.mxu0 0.0
    %3530 = vmatprep.subr.mxu0 0.0
    %3531 = vmatpush2.msra.mxu0 0.0
    %3532 = vmatprep.subr.mxu0 0.0
    %3533 = vmatpush2.msra.mxu0 0.0
    %3534 = vmatprep.subr.mxu0 0.0
    %3535 = vmatpush2.msra.mxu0 0.0
    %3536 = vmatprep.subr.mxu0 0.0
    %3537 = vmatpush2.msra.mxu0 0.0
    %3538 = vmatprep.subr.mxu0 0.0
    %3539 = vmatpush2.msra.mxu0 0.0
    %3540 = vmatprep.subr.mxu0 0.0
    %3541 = vmatpush2.msra.mxu0 0.0
    %3542 = vmatprep.subr.mxu0 0.0
    %3543 = vmatpush2.msra.mxu0 0.0
    %3544 = vmatprep.subr.mxu0 0.0
    %3545 = vmatpush2.msra.mxu0 0.0
    %3546 = vmatprep.subr.mxu0 0.0
    %3547 = vmatpush2.msra.mxu0 0.0
    %3548 = vmatprep.mubr.f32.mxu0 0.0
    %3549 = vmatmul.mubr.f32.gmra.mxu0 %v2969
    %v3550 = vpop.f32.mrf.mxu0
    %v3551 = vadd.f32 %v3483, %v3550
    %v3552 = vpop.f32.mrf.mxu0
    %3553 = vmatprep.mubr.f32.mxu0 0.0
    %3554 = vmatmul.mubr.f32.gmra.mxu0 %v2972
    %v3555 = vpop.f32.mrf.mxu0
    %v3556 = vadd.f32 %v3483, %v3555
    %v3557 = vpop.f32.mrf.mxu0
    %3558 = vdwg.mxu0
    %s3559 = scalar_lea.vmem %s1, 576
    %v3560 = vld [vmem:[%s3559] sm:$0xff]
    %v3561 = vld [vmem:[%s3559 + $0x8] sm:$0xff]
    %v3562 = vld [vmem:[%s3559 + $0x10] sm:$0xff]
    %v3563 = vld [vmem:[%s3559 + $0x18] sm:$0xff]
    %v3564 = vld [vmem:[%s2962 + $0x6] sm:$0x1]
    %v3565 = vlaneseq
    %v3566 = vshrl.u32 %v3565, 7
    %v3567 = vsub.s32 0, %v3566
    %v3568 = vrot.slane %v3564, %v3567
    %3569 = vmatprep.subr.mxu0 0.0
    %3570 = vmatpush1.msra.mxu0 0.0
    %3571 = vmatprep.subr.mxu0 0.0
    %3572 = vmatpush1.msra.mxu0 0.0
    %3573 = vmatprep.subr.mxu0 0.0
    %3574 = vmatpush1.msra.mxu0 0.0
    %3575 = vmatprep.subr.mxu0 0.0
    %3576 = vmatpush1.msra.mxu0 0.0
    %3577 = vmatprep.subr.mxu0 0.0
    %3578 = vmatpush1.msra.mxu0 0.0
    %3579 = vmatprep.subr.mxu0 0.0
    %3580 = vmatpush1.msra.mxu0 0.0
    %3581 = vmatprep.subr.mxu0 0.0
    %3582 = vmatpush1.msra.mxu0 0.0
    %3583 = vmatprep.subr.mxu0 0.0
    %3584 = vmatpush1.msra.mxu0 0.0
    %3585 = vmatprep.subr.mxu0 0.0
    %3586 = vmatpush1.msra.mxu0 0.0
    %3587 = vmatprep.subr.mxu0 0.0
    %3588 = vmatpush1.msra.mxu0 0.0
    %3589 = vmatprep.subr.mxu0 0.0
    %3590 = vmatpush1.msra.mxu0 0.0
    %3591 = vmatprep.subr.mxu0 0.0
    %3592 = vmatpush1.msra.mxu0 0.0
    %3593 = vmatprep.subr.mxu0 0.0
    %3594 = vmatpush1.msra.mxu0 %v3563
    %3595 = vmatprep.subr.mxu0 0.0
    %3596 = vmatpush1.msra.mxu0 %v3562
    %3597 = vmatprep.subr.mxu0 0.0
    %3598 = vmatpush1.msra.mxu0 %v3561
    %3599 = vmatprep.subr.mxu0 0.0
    %3600 = vmatpush1.msra.mxu0 %v3560
    %3601 = vmatprep.subr.mxu0 0.0
    %3602 = vmatpush2.msra.mxu0 0.0
    %3603 = vmatprep.subr.mxu0 0.0
    %3604 = vmatpush2.msra.mxu0 0.0
    %3605 = vmatprep.subr.mxu0 0.0
    %3606 = vmatpush2.msra.mxu0 0.0
    %3607 = vmatprep.subr.mxu0 0.0
    %3608 = vmatpush2.msra.mxu0 0.0
    %3609 = vmatprep.subr.mxu0 0.0
    %3610 = vmatpush2.msra.mxu0 0.0
    %3611 = vmatprep.subr.mxu0 0.0
    %3612 = vmatpush2.msra.mxu0 0.0
    %3613 = vmatprep.subr.mxu0 0.0
    %3614 = vmatpush2.msra.mxu0 0.0
    %3615 = vmatprep.subr.mxu0 0.0
    %3616 = vmatpush2.msra.mxu0 0.0
    %3617 = vmatprep.subr.mxu0 0.0
    %3618 = vmatpush2.msra.mxu0 0.0
    %3619 = vmatprep.subr.mxu0 0.0
    %3620 = vmatpush2.msra.mxu0 0.0
    %3621 = vmatprep.subr.mxu0 0.0
    %3622 = vmatpush2.msra.mxu0 0.0
    %3623 = vmatprep.subr.mxu0 0.0
    %3624 = vmatpush2.msra.mxu0 0.0
    %3625 = vmatprep.subr.mxu0 0.0
    %3626 = vmatpush2.msra.mxu0 0.0
    %3627 = vmatprep.subr.mxu0 0.0
    %3628 = vmatpush2.msra.mxu0 0.0
    %3629 = vmatprep.subr.mxu0 0.0
    %3630 = vmatpush2.msra.mxu0 0.0
    %3631 = vmatprep.subr.mxu0 0.0
    %3632 = vmatpush2.msra.mxu0 0.0
    %3633 = vmatprep.mubr.f32.mxu0 0.0
    %3634 = vmatmul.mubr.f32.gmra.mxu0 %v2969
    %v3635 = vpop.f32.mrf.mxu0
    %v3636 = vadd.f32 %v3568, %v3635
    %v3637 = vpop.f32.mrf.mxu0
    %3638 = vmatprep.mubr.f32.mxu0 0.0
    %3639 = vmatmul.mubr.f32.gmra.mxu0 %v2972
    %v3640 = vpop.f32.mrf.mxu0
    %v3641 = vadd.f32 %v3568, %v3640
    %v3642 = vpop.f32.mrf.mxu0
    %3643 = vdwg.mxu0
    %s3644 = scalar_lea.vmem %s1, 704
    %v3645 = vld [vmem:[%s3644] sm:$0xff]
    %v3646 = vld [vmem:[%s3644 + $0x8] sm:$0xff]
    %v3647 = vld [vmem:[%s3644 + $0x10] sm:$0xff]
    %v3648 = vld [vmem:[%s3644 + $0x18] sm:$0xff]
    %v3649 = vld [vmem:[%s2962 + $0xa] sm:$0x1]
    %v3650 = vlaneseq
    %v3651 = vshrl.u32 %v3650, 7
    %v3652 = vsub.s32 0, %v3651
    %v3653 = vrot.slane %v3649, %v3652
    %3654 = vmatprep.subr.mxu0 0.0
    %3655 = vmatpush1.msra.mxu0 0.0
    %3656 = vmatprep.subr.mxu0 0.0
    %3657 = vmatpush1.msra.mxu0 0.0
    %3658 = vmatprep.subr.mxu0 0.0
    %3659 = vmatpush1.msra.mxu0 0.0
    %3660 = vmatprep.subr.mxu0 0.0
    %3661 = vmatpush1.msra.mxu0 0.0
    %3662 = vmatprep.subr.mxu0 0.0
    %3663 = vmatpush1.msra.mxu0 0.0
    %3664 = vmatprep.subr.mxu0 0.0
    %3665 = vmatpush1.msra.mxu0 0.0
    %3666 = vmatprep.subr.mxu0 0.0
    %3667 = vmatpush1.msra.mxu0 0.0
    %3668 = vmatprep.subr.mxu0 0.0
    %3669 = vmatpush1.msra.mxu0 0.0
    %3670 = vmatprep.subr.mxu0 0.0
    %3671 = vmatpush1.msra.mxu0 0.0
    %3672 = vmatprep.subr.mxu0 0.0
    %3673 = vmatpush1.msra.mxu0 0.0
    %3674 = vmatprep.subr.mxu0 0.0
    %3675 = vmatpush1.msra.mxu0 0.0
    %3676 = vmatprep.subr.mxu0 0.0
    %3677 = vmatpush1.msra.mxu0 0.0
    %3678 = vmatprep.subr.mxu0 0.0
    %3679 = vmatpush1.msra.mxu0 %v3648
    %3680 = vmatprep.subr.mxu0 0.0
    %3681 = vmatpush1.msra.mxu0 %v3647
    %3682 = vmatprep.subr.mxu0 0.0
    %3683 = vmatpush1.msra.mxu0 %v3646
    %3684 = vmatprep.subr.mxu0 0.0
    %3685 = vmatpush1.msra.mxu0 %v3645
    %3686 = vmatprep.subr.mxu0 0.0
    %3687 = vmatpush2.msra.mxu0 0.0
    %3688 = vmatprep.subr.mxu0 0.0
    %3689 = vmatpush2.msra.mxu0 0.0
    %3690 = vmatprep.subr.mxu0 0.0
    %3691 = vmatpush2.msra.mxu0 0.0
    %3692 = vmatprep.subr.mxu0 0.0
    %3693 = vmatpush2.msra.mxu0 0.0
    %3694 = vmatprep.subr.mxu0 0.0
    %3695 = vmatpush2.msra.mxu0 0.0
    %3696 = vmatprep.subr.mxu0 0.0
    %3697 = vmatpush2.msra.mxu0 0.0
    %3698 = vmatprep.subr.mxu0 0.0
    %3699 = vmatpush2.msra.mxu0 0.0
    %3700 = vmatprep.subr.mxu0 0.0
    %3701 = vmatpush2.msra.mxu0 0.0
    %3702 = vmatprep.subr.mxu0 0.0
    %3703 = vmatpush2.msra.mxu0 0.0
    %3704 = vmatprep.subr.mxu0 0.0
    %3705 = vmatpush2.msra.mxu0 0.0
    %3706 = vmatprep.subr.mxu0 0.0
    %3707 = vmatpush2.msra.mxu0 0.0
    %3708 = vmatprep.subr.mxu0 0.0
    %3709 = vmatpush2.msra.mxu0 0.0
    %3710 = vmatprep.subr.mxu0 0.0
    %3711 = vmatpush2.msra.mxu0 0.0
    %3712 = vmatprep.subr.mxu0 0.0
    %3713 = vmatpush2.msra.mxu0 0.0
    %3714 = vmatprep.subr.mxu0 0.0
    %3715 = vmatpush2.msra.mxu0 0.0
    %3716 = vmatprep.subr.mxu0 0.0
    %3717 = vmatpush2.msra.mxu0 0.0
    %3718 = vmatprep.mubr.f32.mxu0 0.0
    %3719 = vmatmul.mubr.f32.gmra.mxu0 %v2969
    %v3720 = vpop.f32.mrf.mxu0
    %v3721 = vadd.f32 %v3653, %v3720
    %v3722 = vpop.f32.mrf.mxu0
    %3723 = vmatprep.mubr.f32.mxu0 0.0
    %3724 = vmatmul.mubr.f32.gmra.mxu0 %v2972
    %v3725 = vpop.f32.mrf.mxu0
    %v3726 = vadd.f32 %v3653, %v3725
    %v3727 = vpop.f32.mrf.mxu0
    %3728 = vdwg.mxu0
    %s3729 = scalar_lea.vmem %s1, 480
    %v3730 = vld [vmem:[%s3729] sm:$0xff]
    %v3731 = vld [vmem:[%s3729 + $0x8] sm:$0xff]
    %v3732 = vld [vmem:[%s3729 + $0x10] sm:$0xff]
    %v3733 = vld [vmem:[%s3729 + $0x18] sm:$0xff]
    %v3734 = vld [vmem:[%s2962 + $0x3] sm:$0x1]
    %v3735 = vlaneseq
    %v3736 = vshrl.u32 %v3735, 7
    %v3737 = vsub.s32 0, %v3736
    %v3738 = vrot.slane %v3734, %v3737
    %3739 = vmatprep.subr.mxu0 0.0
    %3740 = vmatpush1.msra.mxu0 0.0
    %3741 = vmatprep.subr.mxu0 0.0
    %3742 = vmatpush1.msra.mxu0 0.0
    %3743 = vmatprep.subr.mxu0 0.0
    %3744 = vmatpush1.msra.mxu0 0.0
    %3745 = vmatprep.subr.mxu0 0.0
    %3746 = vmatpush1.msra.mxu0 0.0
    %3747 = vmatprep.subr.mxu0 0.0
    %3748 = vmatpush1.msra.mxu0 0.0
    %3749 = vmatprep.subr.mxu0 0.0
    %3750 = vmatpush1.msra.mxu0 0.0
    %3751 = vmatprep.subr.mxu0 0.0
    %3752 = vmatpush1.msra.mxu0 0.0
    %3753 = vmatprep.subr.mxu0 0.0
    %3754 = vmatpush1.msra.mxu0 0.0
    %3755 = vmatprep.subr.mxu0 0.0
    %3756 = vmatpush1.msra.mxu0 0.0
    %3757 = vmatprep.subr.mxu0 0.0
    %3758 = vmatpush1.msra.mxu0 0.0
    %3759 = vmatprep.subr.mxu0 0.0
    %3760 = vmatpush1.msra.mxu0 0.0
    %3761 = vmatprep.subr.mxu0 0.0
    %3762 = vmatpush1.msra.mxu0 0.0
    %3763 = vmatprep.subr.mxu0 0.0
    %3764 = vmatpush1.msra.mxu0 %v3733
    %3765 = vmatprep.subr.mxu0 0.0
    %3766 = vmatpush1.msra.mxu0 %v3732
    %3767 = vmatprep.subr.mxu0 0.0
    %3768 = vmatpush1.msra.mxu0 %v3731
    %3769 = vmatprep.subr.mxu0 0.0
    %3770 = vmatpush1.msra.mxu0 %v3730
    %3771 = vmatprep.subr.mxu0 0.0
    %3772 = vmatpush2.msra.mxu0 0.0
    %3773 = vmatprep.subr.mxu0 0.0
    %3774 = vmatpush2.msra.mxu0 0.0
    %3775 = vmatprep.subr.mxu0 0.0
    %3776 = vmatpush2.msra.mxu0 0.0
    %3777 = vmatprep.subr.mxu0 0.0
    %3778 = vmatpush2.msra.mxu0 0.0
    %3779 = vmatprep.subr.mxu0 0.0
    %3780 = vmatpush2.msra.mxu0 0.0
    %3781 = vmatprep.subr.mxu0 0.0
    %3782 = vmatpush2.msra.mxu0 0.0
    %3783 = vmatprep.subr.mxu0 0.0
    %3784 = vmatpush2.msra.mxu0 0.0
    %3785 = vmatprep.subr.mxu0 0.0
    %3786 = vmatpush2.msra.mxu0 0.0
    %3787 = vmatprep.subr.mxu0 0.0
    %3788 = vmatpush2.msra.mxu0 0.0
    %3789 = vmatprep.subr.mxu0 0.0
    %3790 = vmatpush2.msra.mxu0 0.0
    %3791 = vmatprep.subr.mxu0 0.0
    %3792 = vmatpush2.msra.mxu0 0.0
    %3793 = vmatprep.subr.mxu0 0.0
    %3794 = vmatpush2.msra.mxu0 0.0
    %3795 = vmatprep.subr.mxu0 0.0
    %3796 = vmatpush2.msra.mxu0 0.0
    %3797 = vmatprep.subr.mxu0 0.0
    %3798 = vmatpush2.msra.mxu0 0.0
    %3799 = vmatprep.subr.mxu0 0.0
    %3800 = vmatpush2.msra.mxu0 0.0
    %3801 = vmatprep.subr.mxu0 0.0
    %3802 = vmatpush2.msra.mxu0 0.0
    %3803 = vmatprep.mubr.f32.mxu0 0.0
    %3804 = vmatmul.mubr.f32.gmra.mxu0 %v2969
    %v3805 = vpop.f32.mrf.mxu0
    %v3806 = vadd.f32 %v3738, %v3805
    %v3807 = vpop.f32.mrf.mxu0
    %3808 = vmatprep.mubr.f32.mxu0 0.0
    %3809 = vmatmul.mubr.f32.gmra.mxu0 %v2972
    %v3810 = vpop.f32.mrf.mxu0
    %v3811 = vadd.f32 %v3738, %v3810
    %v3812 = vpop.f32.mrf.mxu0
    %3813 = vdwg.mxu0
    %s3814 = scalar_lea.vmem %s1, 608
    %v3815 = vld [vmem:[%s3814] sm:$0xff]
    %v3816 = vld [vmem:[%s3814 + $0x8] sm:$0xff]
    %v3817 = vld [vmem:[%s3814 + $0x10] sm:$0xff]
    %v3818 = vld [vmem:[%s3814 + $0x18] sm:$0xff]
    %v3819 = vld [vmem:[%s2962 + $0x7] sm:$0x1]
    %v3820 = vlaneseq
    %v3821 = vshrl.u32 %v3820, 7
    %v3822 = vsub.s32 0, %v3821
    %v3823 = vrot.slane %v3819, %v3822
    %3824 = vmatprep.subr.mxu0 0.0
    %3825 = vmatpush1.msra.mxu0 0.0
    %3826 = vmatprep.subr.mxu0 0.0
    %3827 = vmatpush1.msra.mxu0 0.0
    %3828 = vmatprep.subr.mxu0 0.0
    %3829 = vmatpush1.msra.mxu0 0.0
    %3830 = vmatprep.subr.mxu0 0.0
    %3831 = vmatpush1.msra.mxu0 0.0
    %3832 = vmatprep.subr.mxu0 0.0
    %3833 = vmatpush1.msra.mxu0 0.0
    %3834 = vmatprep.subr.mxu0 0.0
    %3835 = vmatpush1.msra.mxu0 0.0
    %3836 = vmatprep.subr.mxu0 0.0
    %3837 = vmatpush1.msra.mxu0 0.0
    %3838 = vmatprep.subr.mxu0 0.0
    %3839 = vmatpush1.msra.mxu0 0.0
    %3840 = vmatprep.subr.mxu0 0.0
    %3841 = vmatpush1.msra.mxu0 0.0
    %3842 = vmatprep.subr.mxu0 0.0
    %3843 = vmatpush1.msra.mxu0 0.0
    %3844 = vmatprep.subr.mxu0 0.0
    %3845 = vmatpush1.msra.mxu0 0.0
    %3846 = vmatprep.subr.mxu0 0.0
    %3847 = vmatpush1.msra.mxu0 0.0
    %3848 = vmatprep.subr.mxu0 0.0
    %3849 = vmatpush1.msra.mxu0 %v3818
    %3850 = vmatprep.subr.mxu0 0.0
    %3851 = vmatpush1.msra.mxu0 %v3817
    %3852 = vmatprep.subr.mxu0 0.0
    %3853 = vmatpush1.msra.mxu0 %v3816
    %3854 = vmatprep.subr.mxu0 0.0
    %3855 = vmatpush1.msra.mxu0 %v3815
    %3856 = vmatprep.subr.mxu0 0.0
    %3857 = vmatpush2.msra.mxu0 0.0
    %3858 = vmatprep.subr.mxu0 0.0
    %3859 = vmatpush2.msra.mxu0 0.0
    %3860 = vmatprep.subr.mxu0 0.0
    %3861 = vmatpush2.msra.mxu0 0.0
    %3862 = vmatprep.subr.mxu0 0.0
    %3863 = vmatpush2.msra.mxu0 0.0
    %3864 = vmatprep.subr.mxu0 0.0
    %3865 = vmatpush2.msra.mxu0 0.0
    %3866 = vmatprep.subr.mxu0 0.0
    %3867 = vmatpush2.msra.mxu0 0.0
    %3868 = vmatprep.subr.mxu0 0.0
    %3869 = vmatpush2.msra.mxu0 0.0
    %3870 = vmatprep.subr.mxu0 0.0
    %3871 = vmatpush2.msra.mxu0 0.0
    %3872 = vmatprep.subr.mxu0 0.0
    %3873 = vmatpush2.msra.mxu0 0.0
    %3874 = vmatprep.subr.mxu0 0.0
    %3875 = vmatpush2.msra.mxu0 0.0
    %3876 = vmatprep.subr.mxu0 0.0
    %3877 = vmatpush2.msra.mxu0 0.0
    %3878 = vmatprep.subr.mxu0 0.0
    %3879 = vmatpush2.msra.mxu0 0.0
    %3880 = vmatprep.subr.mxu0 0.0
    %3881 = vmatpush2.msra.mxu0 0.0
    %3882 = vmatprep.subr.mxu0 0.0
    %3883 = vmatpush2.msra.mxu0 0.0
    %3884 = vmatprep.subr.mxu0 0.0
    %3885 = vmatpush2.msra.mxu0 0.0
    %3886 = vmatprep.subr.mxu0 0.0
    %3887 = vmatpush2.msra.mxu0 0.0
    %3888 = vmatprep.mubr.f32.mxu0 0.0
    %3889 = vmatmul.mubr.f32.gmra.mxu0 %v2969
    %v3890 = vpop.f32.mrf.mxu0
    %v3891 = vadd.f32 %v3823, %v3890
    %v3892 = vpop.f32.mrf.mxu0
    %3893 = vmatprep.mubr.f32.mxu0 0.0
    %3894 = vmatmul.mubr.f32.gmra.mxu0 %v2972
    %v3895 = vpop.f32.mrf.mxu0
    %v3896 = vadd.f32 %v3823, %v3895
    %v3897 = vpop.f32.mrf.mxu0
    %3898 = vdwg.mxu0
    %s3899 = scalar_lea.vmem %s1, 736
    %v3900 = vld [vmem:[%s3899] sm:$0xff]
    %v3901 = vld [vmem:[%s3899 + $0x8] sm:$0xff]
    %v3902 = vld [vmem:[%s3899 + $0x10] sm:$0xff]
    %v3903 = vld [vmem:[%s3899 + $0x18] sm:$0xff]
    %v3904 = vld [vmem:[%s2962 + $0xb] sm:$0x1]
    %v3905 = vlaneseq
    %v3906 = vshrl.u32 %v3905, 7
    %v3907 = vsub.s32 0, %v3906
    %v3908 = vrot.slane %v3904, %v3907
    %3909 = vmatprep.subr.mxu0 0.0
    %3910 = vmatpush1.msra.mxu0 0.0
    %3911 = vmatprep.subr.mxu0 0.0
    %3912 = vmatpush1.msra.mxu0 0.0
    %3913 = vmatprep.subr.mxu0 0.0
    %3914 = vmatpush1.msra.mxu0 0.0
    %3915 = vmatprep.subr.mxu0 0.0
    %3916 = vmatpush1.msra.mxu0 0.0
    %3917 = vmatprep.subr.mxu0 0.0
    %3918 = vmatpush1.msra.mxu0 0.0
    %3919 = vmatprep.subr.mxu0 0.0
    %3920 = vmatpush1.msra.mxu0 0.0
    %3921 = vmatprep.subr.mxu0 0.0
    %3922 = vmatpush1.msra.mxu0 0.0
    %3923 = vmatprep.subr.mxu0 0.0
    %3924 = vmatpush1.msra.mxu0 0.0
    %3925 = vmatprep.subr.mxu0 0.0
    %3926 = vmatpush1.msra.mxu0 0.0
    %3927 = vmatprep.subr.mxu0 0.0
    %3928 = vmatpush1.msra.mxu0 0.0
    %3929 = vmatprep.subr.mxu0 0.0
    %3930 = vmatpush1.msra.mxu0 0.0
    %3931 = vmatprep.subr.mxu0 0.0
    %3932 = vmatpush1.msra.mxu0 0.0
    %3933 = vmatprep.subr.mxu0 0.0
    %3934 = vmatpush1.msra.mxu0 %v3903
    %3935 = vmatprep.subr.mxu0 0.0
    %3936 = vmatpush1.msra.mxu0 %v3902
    %3937 = vmatprep.subr.mxu0 0.0
    %3938 = vmatpush1.msra.mxu0 %v3901
    %3939 = vmatprep.subr.mxu0 0.0
    %3940 = vmatpush1.msra.mxu0 %v3900
    %3941 = vmatprep.subr.mxu0 0.0
    %3942 = vmatpush2.msra.mxu0 0.0
    %3943 = vmatprep.subr.mxu0 0.0
    %3944 = vmatpush2.msra.mxu0 0.0
    %3945 = vmatprep.subr.mxu0 0.0
    %3946 = vmatpush2.msra.mxu0 0.0
    %3947 = vmatprep.subr.mxu0 0.0
    %3948 = vmatpush2.msra.mxu0 0.0
    %3949 = vmatprep.subr.mxu0 0.0
    %3950 = vmatpush2.msra.mxu0 0.0
    %3951 = vmatprep.subr.mxu0 0.0
    %3952 = vmatpush2.msra.mxu0 0.0
    %3953 = vmatprep.subr.mxu0 0.0
    %3954 = vmatpush2.msra.mxu0 0.0
    %3955 = vmatprep.subr.mxu0 0.0
    %3956 = vmatpush2.msra.mxu0 0.0
    %3957 = vmatprep.subr.mxu0 0.0
    %3958 = vmatpush2.msra.mxu0 0.0
    %3959 = vmatprep.subr.mxu0 0.0
    %3960 = vmatpush2.msra.mxu0 0.0
    %3961 = vmatprep.subr.mxu0 0.0
    %3962 = vmatpush2.msra.mxu0 0.0
    %3963 = vmatprep.subr.mxu0 0.0
    %3964 = vmatpush2.msra.mxu0 0.0
    %3965 = vmatprep.subr.mxu0 0.0
    %3966 = vmatpush2.msra.mxu0 0.0
    %3967 = vmatprep.subr.mxu0 0.0
    %3968 = vmatpush2.msra.mxu0 0.0
    %3969 = vmatprep.subr.mxu0 0.0
    %3970 = vmatpush2.msra.mxu0 0.0
    %3971 = vmatprep.subr.mxu0 0.0
    %3972 = vmatpush2.msra.mxu0 0.0
    %3973 = vmatprep.mubr.f32.mxu0 0.0
    %3974 = vmatmul.mubr.f32.gmra.mxu0 %v2969
    %v3975 = vpop.f32.mrf.mxu0
    %v3976 = vadd.f32 %v3908, %v3975
    %v3977 = vpop.f32.mrf.mxu0
    %3978 = vmatprep.mubr.f32.mxu0 0.0
    %3979 = vmatmul.mubr.f32.gmra.mxu0 %v2972
    %v3980 = vpop.f32.mrf.mxu0
    %v3981 = vadd.f32 %v3908, %v3980
    %v3982 = vpop.f32.mrf.mxu0
    %3983 = vdwg.mxu0
    %v3985 = vsel %vm1052, %v3041, 0
    %v3988 = vsel %vm1052, %v3126, 0
    %3990 = vmatprep.subr.mxu0 0.0
    %3991 = vmatpush1.xpose.msra.mxu0 0.0
    %3992 = vmatprep.subr.mxu0 0.0
    %3993 = vmatpush1.xpose.msra.mxu0 0.0
    %3994 = vmatprep.subr.mxu0 0.0
    %3995 = vmatpush1.xpose.msra.mxu0 0.0
    %3996 = vmatprep.subr.mxu0 0.0
    %3997 = vmatpush1.xpose.msra.mxu0 0.0
    %3998 = vmatprep.subr.mxu0 0.0
    %3999 = vmatpush1.xpose.msra.mxu0 0.0
    %4000 = vmatprep.subr.mxu0 0.0
    %4001 = vmatpush1.xpose.msra.mxu0 0.0
    %4002 = vmatprep.subr.mxu0 0.0
    %4003 = vmatpush1.xpose.msra.mxu0 0.0
    %4004 = vmatprep.subr.mxu0 0.0
    %4005 = vmatpush1.xpose.msra.mxu0 0.0
    %4006 = vmatprep.subr.mxu0 0.0
    %4007 = vmatpush1.xpose.msra.mxu0 0.0
    %4008 = vmatprep.subr.mxu0 0.0
    %4009 = vmatpush1.xpose.msra.mxu0 0.0
    %4010 = vmatprep.subr.mxu0 0.0
    %4011 = vmatpush1.xpose.msra.mxu0 0.0
    %4012 = vmatprep.subr.mxu0 0.0
    %4013 = vmatpush1.xpose.msra.mxu0 0.0
    %4014 = vmatprep.subr.mxu0 0.0
    %4015 = vmatpush1.xpose.msra.mxu0 0.0
    %4016 = vmatprep.subr.mxu0 0.0
    %4017 = vmatpush1.xpose.msra.mxu0 0.0
    %4018 = vmatprep.subr.mxu0 0.0
    %4019 = vmatpush1.xpose.msra.mxu0 0.0
    %4020 = vmatprep.subr.mxu0 0.0
    %4021 = vmatpush1.xpose.msra.mxu0 %v3988
    %4022 = vmatprep.subr.mxu0 0.0
    %4023 = vmatpush2.xpose.msra.mxu0 0.0
    %4024 = vmatprep.subr.mxu0 0.0
    %4025 = vmatpush2.xpose.msra.mxu0 0.0
    %4026 = vmatprep.subr.mxu0 0.0
    %4027 = vmatpush2.xpose.msra.mxu0 0.0
    %4028 = vmatprep.subr.mxu0 0.0
    %4029 = vmatpush2.xpose.msra.mxu0 0.0
    %4030 = vmatprep.subr.mxu0 0.0
    %4031 = vmatpush2.xpose.msra.mxu0 0.0
    %4032 = vmatprep.subr.mxu0 0.0
    %4033 = vmatpush2.xpose.msra.mxu0 0.0
    %4034 = vmatprep.subr.mxu0 0.0
    %4035 = vmatpush2.xpose.msra.mxu0 0.0
    %4036 = vmatprep.subr.mxu0 0.0
    %4037 = vmatpush2.xpose.msra.mxu0 0.0
    %4038 = vmatprep.subr.mxu0 0.0
    %4039 = vmatpush2.xpose.msra.mxu0 0.0
    %4040 = vmatprep.subr.mxu0 0.0
    %4041 = vmatpush2.xpose.msra.mxu0 0.0
    %4042 = vmatprep.subr.mxu0 0.0
    %4043 = vmatpush2.xpose.msra.mxu0 0.0
    %4044 = vmatprep.subr.mxu0 0.0
    %4045 = vmatpush2.xpose.msra.mxu0 0.0
    %4046 = vmatprep.subr.mxu0 0.0
    %4047 = vmatpush2.xpose.msra.mxu0 0.0
    %4048 = vmatprep.subr.mxu0 0.0
    %4049 = vmatpush2.xpose.msra.mxu0 0.0
    %4050 = vmatprep.subr.mxu0 0.0
    %4051 = vmatpush2.xpose.msra.mxu0 0.0
    %4052 = vmatprep.subr.mxu0 0.0
    %4053 = vmatpush2.xpose.msra.mxu0 0.0
    %4054 = vmatprep.mubr.f32.mxu0 0.0
    %4055 = vmatmul.mubr.f32.gmra.mxu0 %v3985
    %v4056 = vpop.f32.mrf.mxu0
    %v4057 = vadd.f32 0.0, %v4056
    %v4058 = vpop.f32.mrf.mxu0
    %4059 = vdwg.mxu0
    %v4061 = vsel %vm1052, %v3046, 0
    %v4064 = vsel %vm1052, %v3131, 0
    %4066 = vmatprep.subr.mxu0 0.0
    %4067 = vmatpush1.xpose.msra.mxu0 0.0
    %4068 = vmatprep.subr.mxu0 0.0
    %4069 = vmatpush1.xpose.msra.mxu0 0.0
    %4070 = vmatprep.subr.mxu0 0.0
    %4071 = vmatpush1.xpose.msra.mxu0 0.0
    %4072 = vmatprep.subr.mxu0 0.0
    %4073 = vmatpush1.xpose.msra.mxu0 0.0
    %4074 = vmatprep.subr.mxu0 0.0
    %4075 = vmatpush1.xpose.msra.mxu0 0.0
    %4076 = vmatprep.subr.mxu0 0.0
    %4077 = vmatpush1.xpose.msra.mxu0 0.0
    %4078 = vmatprep.subr.mxu0 0.0
    %4079 = vmatpush1.xpose.msra.mxu0 0.0
    %4080 = vmatprep.subr.mxu0 0.0
    %4081 = vmatpush1.xpose.msra.mxu0 0.0
    %4082 = vmatprep.subr.mxu0 0.0
    %4083 = vmatpush1.xpose.msra.mxu0 0.0
    %4084 = vmatprep.subr.mxu0 0.0
    %4085 = vmatpush1.xpose.msra.mxu0 0.0
    %4086 = vmatprep.subr.mxu0 0.0
    %4087 = vmatpush1.xpose.msra.mxu0 0.0
    %4088 = vmatprep.subr.mxu0 0.0
    %4089 = vmatpush1.xpose.msra.mxu0 0.0
    %4090 = vmatprep.subr.mxu0 0.0
    %4091 = vmatpush1.xpose.msra.mxu0 0.0
    %4092 = vmatprep.subr.mxu0 0.0
    %4093 = vmatpush1.xpose.msra.mxu0 0.0
    %4094 = vmatprep.subr.mxu0 0.0
    %4095 = vmatpush1.xpose.msra.mxu0 0.0
    %4096 = vmatprep.subr.mxu0 0.0
    %4097 = vmatpush1.xpose.msra.mxu0 %v4064
    %4098 = vmatprep.subr.mxu0 0.0
    %4099 = vmatpush2.xpose.msra.mxu0 0.0
    %4100 = vmatprep.subr.mxu0 0.0
    %4101 = vmatpush2.xpose.msra.mxu0 0.0
    %4102 = vmatprep.subr.mxu0 0.0
    %4103 = vmatpush2.xpose.msra.mxu0 0.0
    %4104 = vmatprep.subr.mxu0 0.0
    %4105 = vmatpush2.xpose.msra.mxu0 0.0
    %4106 = vmatprep.subr.mxu0 0.0
    %4107 = vmatpush2.xpose.msra.mxu0 0.0
    %4108 = vmatprep.subr.mxu0 0.0
    %4109 = vmatpush2.xpose.msra.mxu0 0.0
    %4110 = vmatprep.subr.mxu0 0.0
    %4111 = vmatpush2.xpose.msra.mxu0 0.0
    %4112 = vmatprep.subr.mxu0 0.0
    %4113 = vmatpush2.xpose.msra.mxu0 0.0
    %4114 = vmatprep.subr.mxu0 0.0
    %4115 = vmatpush2.xpose.msra.mxu0 0.0
    %4116 = vmatprep.subr.mxu0 0.0
    %4117 = vmatpush2.xpose.msra.mxu0 0.0
    %4118 = vmatprep.subr.mxu0 0.0
    %4119 = vmatpush2.xpose.msra.mxu0 0.0
    %4120 = vmatprep.subr.mxu0 0.0
    %4121 = vmatpush2.xpose.msra.mxu0 0.0
    %4122 = vmatprep.subr.mxu0 0.0
    %4123 = vmatpush2.xpose.msra.mxu0 0.0
    %4124 = vmatprep.subr.mxu0 0.0
    %4125 = vmatpush2.xpose.msra.mxu0 0.0
    %4126 = vmatprep.subr.mxu0 0.0
    %4127 = vmatpush2.xpose.msra.mxu0 0.0
    %4128 = vmatprep.subr.mxu0 0.0
    %4129 = vmatpush2.xpose.msra.mxu0 0.0
    %4130 = vmatprep.mubr.f32.mxu0 0.0
    %4131 = vmatmul.mubr.f32.gmra.mxu0 %v4061
    %v4132 = vpop.f32.mrf.mxu0
    %v4133 = vadd.f32 0.0, %v4132
    %v4134 = vpop.f32.mrf.mxu0
    %4135 = vdwg.mxu0
    %v4137 = vsel %vm1052, %v3296, 0
    %v4140 = vsel %vm1052, %v3381, 0
    %4142 = vmatprep.subr.mxu0 0.0
    %4143 = vmatpush1.xpose.msra.mxu0 0.0
    %4144 = vmatprep.subr.mxu0 0.0
    %4145 = vmatpush1.xpose.msra.mxu0 0.0
    %4146 = vmatprep.subr.mxu0 0.0
    %4147 = vmatpush1.xpose.msra.mxu0 0.0
    %4148 = vmatprep.subr.mxu0 0.0
    %4149 = vmatpush1.xpose.msra.mxu0 0.0
    %4150 = vmatprep.subr.mxu0 0.0
    %4151 = vmatpush1.xpose.msra.mxu0 0.0
    %4152 = vmatprep.subr.mxu0 0.0
    %4153 = vmatpush1.xpose.msra.mxu0 0.0
    %4154 = vmatprep.subr.mxu0 0.0
    %4155 = vmatpush1.xpose.msra.mxu0 0.0
    %4156 = vmatprep.subr.mxu0 0.0
    %4157 = vmatpush1.xpose.msra.mxu0 0.0
    %4158 = vmatprep.subr.mxu0 0.0
    %4159 = vmatpush1.xpose.msra.mxu0 0.0
    %4160 = vmatprep.subr.mxu0 0.0
    %4161 = vmatpush1.xpose.msra.mxu0 0.0
    %4162 = vmatprep.subr.mxu0 0.0
    %4163 = vmatpush1.xpose.msra.mxu0 0.0
    %4164 = vmatprep.subr.mxu0 0.0
    %4165 = vmatpush1.xpose.msra.mxu0 0.0
    %4166 = vmatprep.subr.mxu0 0.0
    %4167 = vmatpush1.xpose.msra.mxu0 0.0
    %4168 = vmatprep.subr.mxu0 0.0
    %4169 = vmatpush1.xpose.msra.mxu0 0.0
    %4170 = vmatprep.subr.mxu0 0.0
    %4171 = vmatpush1.xpose.msra.mxu0 0.0
    %4172 = vmatprep.subr.mxu0 0.0
    %4173 = vmatpush1.xpose.msra.mxu0 %v4140
    %4174 = vmatprep.subr.mxu0 0.0
    %4175 = vmatpush2.xpose.msra.mxu0 0.0
    %4176 = vmatprep.subr.mxu0 0.0
    %4177 = vmatpush2.xpose.msra.mxu0 0.0
    %4178 = vmatprep.subr.mxu0 0.0
    %4179 = vmatpush2.xpose.msra.mxu0 0.0
    %4180 = vmatprep.subr.mxu0 0.0
    %4181 = vmatpush2.xpose.msra.mxu0 0.0
    %4182 = vmatprep.subr.mxu0 0.0
    %4183 = vmatpush2.xpose.msra.mxu0 0.0
    %4184 = vmatprep.subr.mxu0 0.0
    %4185 = vmatpush2.xpose.msra.mxu0 0.0
    %4186 = vmatprep.subr.mxu0 0.0
    %4187 = vmatpush2.xpose.msra.mxu0 0.0
    %4188 = vmatprep.subr.mxu0 0.0
    %4189 = vmatpush2.xpose.msra.mxu0 0.0
    %4190 = vmatprep.subr.mxu0 0.0
    %4191 = vmatpush2.xpose.msra.mxu0 0.0
    %4192 = vmatprep.subr.mxu0 0.0
    %4193 = vmatpush2.xpose.msra.mxu0 0.0
    %4194 = vmatprep.subr.mxu0 0.0
    %4195 = vmatpush2.xpose.msra.mxu0 0.0
    %4196 = vmatprep.subr.mxu0 0.0
    %4197 = vmatpush2.xpose.msra.mxu0 0.0
    %4198 = vmatprep.subr.mxu0 0.0
    %4199 = vmatpush2.xpose.msra.mxu0 0.0
    %4200 = vmatprep.subr.mxu0 0.0
    %4201 = vmatpush2.xpose.msra.mxu0 0.0
    %4202 = vmatprep.subr.mxu0 0.0
    %4203 = vmatpush2.xpose.msra.mxu0 0.0
    %4204 = vmatprep.subr.mxu0 0.0
    %4205 = vmatpush2.xpose.msra.mxu0 0.0
    %4206 = vmatprep.mubr.f32.mxu0 0.0
    %4207 = vmatmul.mubr.f32.gmra.mxu0 %v4137
    %v4208 = vpop.f32.mrf.mxu0
    %v4209 = vadd.f32 0.0, %v4208
    %v4210 = vpop.f32.mrf.mxu0
    %4211 = vdwg.mxu0
    %v4213 = vsel %vm1052, %v3301, 0
    %v4216 = vsel %vm1052, %v3386, 0
    %4218 = vmatprep.subr.mxu0 0.0
    %4219 = vmatpush1.xpose.msra.mxu0 0.0
    %4220 = vmatprep.subr.mxu0 0.0
    %4221 = vmatpush1.xpose.msra.mxu0 0.0
    %4222 = vmatprep.subr.mxu0 0.0
    %4223 = vmatpush1.xpose.msra.mxu0 0.0
    %4224 = vmatprep.subr.mxu0 0.0
    %4225 = vmatpush1.xpose.msra.mxu0 0.0
    %4226 = vmatprep.subr.mxu0 0.0
    %4227 = vmatpush1.xpose.msra.mxu0 0.0
    %4228 = vmatprep.subr.mxu0 0.0
    %4229 = vmatpush1.xpose.msra.mxu0 0.0
    %4230 = vmatprep.subr.mxu0 0.0
    %4231 = vmatpush1.xpose.msra.mxu0 0.0
    %4232 = vmatprep.subr.mxu0 0.0
    %4233 = vmatpush1.xpose.msra.mxu0 0.0
    %4234 = vmatprep.subr.mxu0 0.0
    %4235 = vmatpush1.xpose.msra.mxu0 0.0
    %4236 = vmatprep.subr.mxu0 0.0
    %4237 = vmatpush1.xpose.msra.mxu0 0.0
    %4238 = vmatprep.subr.mxu0 0.0
    %4239 = vmatpush1.xpose.msra.mxu0 0.0
    %4240 = vmatprep.subr.mxu0 0.0
    %4241 = vmatpush1.xpose.msra.mxu0 0.0
    %4242 = vmatprep.subr.mxu0 0.0
    %4243 = vmatpush1.xpose.msra.mxu0 0.0
    %4244 = vmatprep.subr.mxu0 0.0
    %4245 = vmatpush1.xpose.msra.mxu0 0.0
    %4246 = vmatprep.subr.mxu0 0.0
    %4247 = vmatpush1.xpose.msra.mxu0 0.0
    %4248 = vmatprep.subr.mxu0 0.0
    %4249 = vmatpush1.xpose.msra.mxu0 %v4216
    %4250 = vmatprep.subr.mxu0 0.0
    %4251 = vmatpush2.xpose.msra.mxu0 0.0
    %4252 = vmatprep.subr.mxu0 0.0
    %4253 = vmatpush2.xpose.msra.mxu0 0.0
    %4254 = vmatprep.subr.mxu0 0.0
    %4255 = vmatpush2.xpose.msra.mxu0 0.0
    %4256 = vmatprep.subr.mxu0 0.0
    %4257 = vmatpush2.xpose.msra.mxu0 0.0
    %4258 = vmatprep.subr.mxu0 0.0
    %4259 = vmatpush2.xpose.msra.mxu0 0.0
    %4260 = vmatprep.subr.mxu0 0.0
    %4261 = vmatpush2.xpose.msra.mxu0 0.0
    %4262 = vmatprep.subr.mxu0 0.0
    %4263 = vmatpush2.xpose.msra.mxu0 0.0
    %4264 = vmatprep.subr.mxu0 0.0
    %4265 = vmatpush2.xpose.msra.mxu0 0.0
    %4266 = vmatprep.subr.mxu0 0.0
    %4267 = vmatpush2.xpose.msra.mxu0 0.0
    %4268 = vmatprep.subr.mxu0 0.0
    %4269 = vmatpush2.xpose.msra.mxu0 0.0
    %4270 = vmatprep.subr.mxu0 0.0
    %4271 = vmatpush2.xpose.msra.mxu0 0.0
    %4272 = vmatprep.subr.mxu0 0.0
    %4273 = vmatpush2.xpose.msra.mxu0 0.0
    %4274 = vmatprep.subr.mxu0 0.0
    %4275 = vmatpush2.xpose.msra.mxu0 0.0
    %4276 = vmatprep.subr.mxu0 0.0
    %4277 = vmatpush2.xpose.msra.mxu0 0.0
    %4278 = vmatprep.subr.mxu0 0.0
    %4279 = vmatpush2.xpose.msra.mxu0 0.0
    %4280 = vmatprep.subr.mxu0 0.0
    %4281 = vmatpush2.xpose.msra.mxu0 0.0
    %4282 = vmatprep.mubr.f32.mxu0 0.0
    %4283 = vmatmul.mubr.f32.gmra.mxu0 %v4213
    %v4284 = vpop.f32.mrf.mxu0
    %v4285 = vadd.f32 0.0, %v4284
    %v4286 = vpop.f32.mrf.mxu0
    %4287 = vdwg.mxu0
    %v4289 = vsel %vm1052, %v3551, 0
    %v4292 = vsel %vm1052, %v3636, 0
    %4294 = vmatprep.subr.mxu0 0.0
    %4295 = vmatpush1.xpose.msra.mxu0 0.0
    %4296 = vmatprep.subr.mxu0 0.0
    %4297 = vmatpush1.xpose.msra.mxu0 0.0
    %4298 = vmatprep.subr.mxu0 0.0
    %4299 = vmatpush1.xpose.msra.mxu0 0.0
    %4300 = vmatprep.subr.mxu0 0.0
    %4301 = vmatpush1.xpose.msra.mxu0 0.0
    %4302 = vmatprep.subr.mxu0 0.0
    %4303 = vmatpush1.xpose.msra.mxu0 0.0
    %4304 = vmatprep.subr.mxu0 0.0
    %4305 = vmatpush1.xpose.msra.mxu0 0.0
    %4306 = vmatprep.subr.mxu0 0.0
    %4307 = vmatpush1.xpose.msra.mxu0 0.0
    %4308 = vmatprep.subr.mxu0 0.0
    %4309 = vmatpush1.xpose.msra.mxu0 0.0
    %4310 = vmatprep.subr.mxu0 0.0
    %4311 = vmatpush1.xpose.msra.mxu0 0.0
    %4312 = vmatprep.subr.mxu0 0.0
    %4313 = vmatpush1.xpose.msra.mxu0 0.0
    %4314 = vmatprep.subr.mxu0 0.0
    %4315 = vmatpush1.xpose.msra.mxu0 0.0
    %4316 = vmatprep.subr.mxu0 0.0
    %4317 = vmatpush1.xpose.msra.mxu0 0.0
    %4318 = vmatprep.subr.mxu0 0.0
    %4319 = vmatpush1.xpose.msra.mxu0 0.0
    %4320 = vmatprep.subr.mxu0 0.0
    %4321 = vmatpush1.xpose.msra.mxu0 0.0
    %4322 = vmatprep.subr.mxu0 0.0
    %4323 = vmatpush1.xpose.msra.mxu0 0.0
    %4324 = vmatprep.subr.mxu0 0.0
    %4325 = vmatpush1.xpose.msra.mxu0 %v4292
    %4326 = vmatprep.subr.mxu0 0.0
    %4327 = vmatpush2.xpose.msra.mxu0 0.0
    %4328 = vmatprep.subr.mxu0 0.0
    %4329 = vmatpush2.xpose.msra.mxu0 0.0
    %4330 = vmatprep.subr.mxu0 0.0
    %4331 = vmatpush2.xpose.msra.mxu0 0.0
    %4332 = vmatprep.subr.mxu0 0.0
    %4333 = vmatpush2.xpose.msra.mxu0 0.0
    %4334 = vmatprep.subr.mxu0 0.0
    %4335 = vmatpush2.xpose.msra.mxu0 0.0
    %4336 = vmatprep.subr.mxu0 0.0
    %4337 = vmatpush2.xpose.msra.mxu0 0.0
    %4338 = vmatprep.subr.mxu0 0.0
    %4339 = vmatpush2.xpose.msra.mxu0 0.0
    %4340 = vmatprep.subr.mxu0 0.0
    %4341 = vmatpush2.xpose.msra.mxu0 0.0
    %4342 = vmatprep.subr.mxu0 0.0
    %4343 = vmatpush2.xpose.msra.mxu0 0.0
    %4344 = vmatprep.subr.mxu0 0.0
    %4345 = vmatpush2.xpose.msra.mxu0 0.0
    %4346 = vmatprep.subr.mxu0 0.0
    %4347 = vmatpush2.xpose.msra.mxu0 0.0
    %4348 = vmatprep.subr.mxu0 0.0
    %4349 = vmatpush2.xpose.msra.mxu0 0.0
    %4350 = vmatprep.subr.mxu0 0.0
    %4351 = vmatpush2.xpose.msra.mxu0 0.0
    %4352 = vmatprep.subr.mxu0 0.0
    %4353 = vmatpush2.xpose.msra.mxu0 0.0
    %4354 = vmatprep.subr.mxu0 0.0
    %4355 = vmatpush2.xpose.msra.mxu0 0.0
    %4356 = vmatprep.subr.mxu0 0.0
    %4357 = vmatpush2.xpose.msra.mxu0 0.0
    %4358 = vmatprep.mubr.f32.mxu0 0.0
    %4359 = vmatmul.mubr.f32.gmra.mxu0 %v4289
    %v4360 = vpop.f32.mrf.mxu0
    %v4361 = vadd.f32 0.0, %v4360
    %v4362 = vpop.f32.mrf.mxu0
    %4363 = vdwg.mxu0
    %v4365 = vsel %vm1052, %v3556, 0
    %v4368 = vsel %vm1052, %v3641, 0
    %4370 = vmatprep.subr.mxu0 0.0
    %4371 = vmatpush1.xpose.msra.mxu0 0.0
    %4372 = vmatprep.subr.mxu0 0.0
    %4373 = vmatpush1.xpose.msra.mxu0 0.0
    %4374 = vmatprep.subr.mxu0 0.0
    %4375 = vmatpush1.xpose.msra.mxu0 0.0
    %4376 = vmatprep.subr.mxu0 0.0
    %4377 = vmatpush1.xpose.msra.mxu0 0.0
    %4378 = vmatprep.subr.mxu0 0.0
    %4379 = vmatpush1.xpose.msra.mxu0 0.0
    %4380 = vmatprep.subr.mxu0 0.0
    %4381 = vmatpush1.xpose.msra.mxu0 0.0
    %4382 = vmatprep.subr.mxu0 0.0
    %4383 = vmatpush1.xpose.msra.mxu0 0.0
    %4384 = vmatprep.subr.mxu0 0.0
    %4385 = vmatpush1.xpose.msra.mxu0 0.0
    %4386 = vmatprep.subr.mxu0 0.0
    %4387 = vmatpush1.xpose.msra.mxu0 0.0
    %4388 = vmatprep.subr.mxu0 0.0
    %4389 = vmatpush1.xpose.msra.mxu0 0.0
    %4390 = vmatprep.subr.mxu0 0.0
    %4391 = vmatpush1.xpose.msra.mxu0 0.0
    %4392 = vmatprep.subr.mxu0 0.0
    %4393 = vmatpush1.xpose.msra.mxu0 0.0
    %4394 = vmatprep.subr.mxu0 0.0
    %4395 = vmatpush1.xpose.msra.mxu0 0.0
    %4396 = vmatprep.subr.mxu0 0.0
    %4397 = vmatpush1.xpose.msra.mxu0 0.0
    %4398 = vmatprep.subr.mxu0 0.0
    %4399 = vmatpush1.xpose.msra.mxu0 0.0
    %4400 = vmatprep.subr.mxu0 0.0
    %4401 = vmatpush1.xpose.msra.mxu0 %v4368
    %4402 = vmatprep.subr.mxu0 0.0
    %4403 = vmatpush2.xpose.msra.mxu0 0.0
    %4404 = vmatprep.subr.mxu0 0.0
    %4405 = vmatpush2.xpose.msra.mxu0 0.0
    %4406 = vmatprep.subr.mxu0 0.0
    %4407 = vmatpush2.xpose.msra.mxu0 0.0
    %4408 = vmatprep.subr.mxu0 0.0
    %4409 = vmatpush2.xpose.msra.mxu0 0.0
    %4410 = vmatprep.subr.mxu0 0.0
    %4411 = vmatpush2.xpose.msra.mxu0 0.0
    %4412 = vmatprep.subr.mxu0 0.0
    %4413 = vmatpush2.xpose.msra.mxu0 0.0
    %4414 = vmatprep.subr.mxu0 0.0
    %4415 = vmatpush2.xpose.msra.mxu0 0.0
    %4416 = vmatprep.subr.mxu0 0.0
    %4417 = vmatpush2.xpose.msra.mxu0 0.0
    %4418 = vmatprep.subr.mxu0 0.0
    %4419 = vmatpush2.xpose.msra.mxu0 0.0
    %4420 = vmatprep.subr.mxu0 0.0
    %4421 = vmatpush2.xpose.msra.mxu0 0.0
    %4422 = vmatprep.subr.mxu0 0.0
    %4423 = vmatpush2.xpose.msra.mxu0 0.0
    %4424 = vmatprep.subr.mxu0 0.0
    %4425 = vmatpush2.xpose.msra.mxu0 0.0
    %4426 = vmatprep.subr.mxu0 0.0
    %4427 = vmatpush2.xpose.msra.mxu0 0.0
    %4428 = vmatprep.subr.mxu0 0.0
    %4429 = vmatpush2.xpose.msra.mxu0 0.0
    %4430 = vmatprep.subr.mxu0 0.0
    %4431 = vmatpush2.xpose.msra.mxu0 0.0
    %4432 = vmatprep.subr.mxu0 0.0
    %4433 = vmatpush2.xpose.msra.mxu0 0.0
    %4434 = vmatprep.mubr.f32.mxu0 0.0
    %4435 = vmatmul.mubr.f32.gmra.mxu0 %v4365
    %v4436 = vpop.f32.mrf.mxu0
    %v4437 = vadd.f32 0.0, %v4436
    %v4438 = vpop.f32.mrf.mxu0
    %4439 = vdwg.mxu0
    %v4441 = vsel %vm1052, %v3806, 0
    %v4444 = vsel %vm1052, %v3891, 0
    %4446 = vmatprep.subr.mxu0 0.0
    %4447 = vmatpush1.xpose.msra.mxu0 0.0
    %4448 = vmatprep.subr.mxu0 0.0
    %4449 = vmatpush1.xpose.msra.mxu0 0.0
    %4450 = vmatprep.subr.mxu0 0.0
    %4451 = vmatpush1.xpose.msra.mxu0 0.0
    %4452 = vmatprep.subr.mxu0 0.0
    %4453 = vmatpush1.xpose.msra.mxu0 0.0
    %4454 = vmatprep.subr.mxu0 0.0
    %4455 = vmatpush1.xpose.msra.mxu0 0.0
    %4456 = vmatprep.subr.mxu0 0.0
    %4457 = vmatpush1.xpose.msra.mxu0 0.0
    %4458 = vmatprep.subr.mxu0 0.0
    %4459 = vmatpush1.xpose.msra.mxu0 0.0
    %4460 = vmatprep.subr.mxu0 0.0
    %4461 = vmatpush1.xpose.msra.mxu0 0.0
    %4462 = vmatprep.subr.mxu0 0.0
    %4463 = vmatpush1.xpose.msra.mxu0 0.0
    %4464 = vmatprep.subr.mxu0 0.0
    %4465 = vmatpush1.xpose.msra.mxu0 0.0
    %4466 = vmatprep.subr.mxu0 0.0
    %4467 = vmatpush1.xpose.msra.mxu0 0.0
    %4468 = vmatprep.subr.mxu0 0.0
    %4469 = vmatpush1.xpose.msra.mxu0 0.0
    %4470 = vmatprep.subr.mxu0 0.0
    %4471 = vmatpush1.xpose.msra.mxu0 0.0
    %4472 = vmatprep.subr.mxu0 0.0
    %4473 = vmatpush1.xpose.msra.mxu0 0.0
    %4474 = vmatprep.subr.mxu0 0.0
    %4475 = vmatpush1.xpose.msra.mxu0 0.0
    %4476 = vmatprep.subr.mxu0 0.0
    %4477 = vmatpush1.xpose.msra.mxu0 %v4444
    %4478 = vmatprep.subr.mxu0 0.0
    %4479 = vmatpush2.xpose.msra.mxu0 0.0
    %4480 = vmatprep.subr.mxu0 0.0
    %4481 = vmatpush2.xpose.msra.mxu0 0.0
    %4482 = vmatprep.subr.mxu0 0.0
    %4483 = vmatpush2.xpose.msra.mxu0 0.0
    %4484 = vmatprep.subr.mxu0 0.0
    %4485 = vmatpush2.xpose.msra.mxu0 0.0
    %4486 = vmatprep.subr.mxu0 0.0
    %4487 = vmatpush2.xpose.msra.mxu0 0.0
    %4488 = vmatprep.subr.mxu0 0.0
    %4489 = vmatpush2.xpose.msra.mxu0 0.0
    %4490 = vmatprep.subr.mxu0 0.0
    %4491 = vmatpush2.xpose.msra.mxu0 0.0
    %4492 = vmatprep.subr.mxu0 0.0
    %4493 = vmatpush2.xpose.msra.mxu0 0.0
    %4494 = vmatprep.subr.mxu0 0.0
    %4495 = vmatpush2.xpose.msra.mxu0 0.0
    %4496 = vmatprep.subr.mxu0 0.0
    %4497 = vmatpush2.xpose.msra.mxu0 0.0
    %4498 = vmatprep.subr.mxu0 0.0
    %4499 = vmatpush2.xpose.msra.mxu0 0.0
    %4500 = vmatprep.subr.mxu0 0.0
    %4501 = vmatpush2.xpose.msra.mxu0 0.0
    %4502 = vmatprep.subr.mxu0 0.0
    %4503 = vmatpush2.xpose.msra.mxu0 0.0
    %4504 = vmatprep.subr.mxu0 0.0
    %4505 = vmatpush2.xpose.msra.mxu0 0.0
    %4506 = vmatprep.subr.mxu0 0.0
    %4507 = vmatpush2.xpose.msra.mxu0 0.0
    %4508 = vmatprep.subr.mxu0 0.0
    %4509 = vmatpush2.xpose.msra.mxu0 0.0
    %4510 = vmatprep.mubr.f32.mxu0 0.0
    %4511 = vmatmul.mubr.f32.gmra.mxu0 %v4441
    %v4512 = vpop.f32.mrf.mxu0
    %v4513 = vadd.f32 0.0, %v4512
    %v4514 = vpop.f32.mrf.mxu0
    %4515 = vdwg.mxu0
    %v4517 = vsel %vm1052, %v3811, 0
    %v4520 = vsel %vm1052, %v3896, 0
    %4522 = vmatprep.subr.mxu0 0.0
    %4523 = vmatpush1.xpose.msra.mxu0 0.0
    %4524 = vmatprep.subr.mxu0 0.0
    %4525 = vmatpush1.xpose.msra.mxu0 0.0
    %4526 = vmatprep.subr.mxu0 0.0
    %4527 = vmatpush1.xpose.msra.mxu0 0.0
    %4528 = vmatprep.subr.mxu0 0.0
    %4529 = vmatpush1.xpose.msra.mxu0 0.0
    %4530 = vmatprep.subr.mxu0 0.0
    %4531 = vmatpush1.xpose.msra.mxu0 0.0
    %4532 = vmatprep.subr.mxu0 0.0
    %4533 = vmatpush1.xpose.msra.mxu0 0.0
    %4534 = vmatprep.subr.mxu0 0.0
    %4535 = vmatpush1.xpose.msra.mxu0 0.0
    %4536 = vmatprep.subr.mxu0 0.0
    %4537 = vmatpush1.xpose.msra.mxu0 0.0
    %4538 = vmatprep.subr.mxu0 0.0
    %4539 = vmatpush1.xpose.msra.mxu0 0.0
    %4540 = vmatprep.subr.mxu0 0.0
    %4541 = vmatpush1.xpose.msra.mxu0 0.0
    %4542 = vmatprep.subr.mxu0 0.0
    %4543 = vmatpush1.xpose.msra.mxu0 0.0
    %4544 = vmatprep.subr.mxu0 0.0
    %4545 = vmatpush1.xpose.msra.mxu0 0.0
    %4546 = vmatprep.subr.mxu0 0.0
    %4547 = vmatpush1.xpose.msra.mxu0 0.0
    %4548 = vmatprep.subr.mxu0 0.0
    %4549 = vmatpush1.xpose.msra.mxu0 0.0
    %4550 = vmatprep.subr.mxu0 0.0
    %4551 = vmatpush1.xpose.msra.mxu0 0.0
    %4552 = vmatprep.subr.mxu0 0.0
    %4553 = vmatpush1.xpose.msra.mxu0 %v4520
    %4554 = vmatprep.subr.mxu0 0.0
    %4555 = vmatpush2.xpose.msra.mxu0 0.0
    %4556 = vmatprep.subr.mxu0 0.0
    %4557 = vmatpush2.xpose.msra.mxu0 0.0
    %4558 = vmatprep.subr.mxu0 0.0
    %4559 = vmatpush2.xpose.msra.mxu0 0.0
    %4560 = vmatprep.subr.mxu0 0.0
    %4561 = vmatpush2.xpose.msra.mxu0 0.0
    %4562 = vmatprep.subr.mxu0 0.0
    %4563 = vmatpush2.xpose.msra.mxu0 0.0
    %4564 = vmatprep.subr.mxu0 0.0
    %4565 = vmatpush2.xpose.msra.mxu0 0.0
    %4566 = vmatprep.subr.mxu0 0.0
    %4567 = vmatpush2.xpose.msra.mxu0 0.0
    %4568 = vmatprep.subr.mxu0 0.0
    %4569 = vmatpush2.xpose.msra.mxu0 0.0
    %4570 = vmatprep.subr.mxu0 0.0
    %4571 = vmatpush2.xpose.msra.mxu0 0.0
    %4572 = vmatprep.subr.mxu0 0.0
    %4573 = vmatpush2.xpose.msra.mxu0 0.0
    %4574 = vmatprep.subr.mxu0 0.0
    %4575 = vmatpush2.xpose.msra.mxu0 0.0
    %4576 = vmatprep.subr.mxu0 0.0
    %4577 = vmatpush2.xpose.msra.mxu0 0.0
    %4578 = vmatprep.subr.mxu0 0.0
    %4579 = vmatpush2.xpose.msra.mxu0 0.0
    %4580 = vmatprep.subr.mxu0 0.0
    %4581 = vmatpush2.xpose.msra.mxu0 0.0
    %4582 = vmatprep.subr.mxu0 0.0
    %4583 = vmatpush2.xpose.msra.mxu0 0.0
    %4584 = vmatprep.subr.mxu0 0.0
    %4585 = vmatpush2.xpose.msra.mxu0 0.0
    %4586 = vmatprep.mubr.f32.mxu0 0.0
    %4587 = vmatmul.mubr.f32.gmra.mxu0 %v4517
    %v4588 = vpop.f32.mrf.mxu0
    %v4589 = vadd.f32 0.0, %v4588
    %v4590 = vpop.f32.mrf.mxu0
    %4591 = vdwg.mxu0
    %v4592 = vmul.f32 %v4057, 0.35355338
    %v4593 = vmul.f32 %v4133, 0.35355338
    %v4594 = vmul.f32 %v4209, 0.35355338
    %v4595 = vmul.f32 %v4285, 0.35355338
    %v4596 = vmul.f32 %v4361, 0.35355338
    %v4597 = vmul.f32 %v4437, 0.35355338
    %v4598 = vmul.f32 %v4513, 0.35355338
    %v4599 = vmul.f32 %v4589, 0.35355338
    %v4600 = vsel %vm1052, %v4592, -inf
    %4601 = vmax.xlane.f32.xlu0 %v4600
    %v4602 = vpop.xlane.xlu0 %4601
    %v4603 = vsel %vm1052, %v4593, -inf
    %4604 = vmax.xlane.f32.xlu0 %v4603
    %v4605 = vpop.xlane.xlu0 %4604
    %v4606 = vsel %vm1052, %v4594, -inf
    %4607 = vmax.xlane.f32.xlu0 %v4606
    %v4608 = vpop.xlane.xlu0 %4607
    %v4609 = vsel %vm1052, %v4595, -inf
    %4610 = vmax.xlane.f32.xlu0 %v4609
    %v4611 = vpop.xlane.xlu0 %4610
    %v4612 = vsel %vm1052, %v4596, -inf
    %4613 = vmax.xlane.f32.xlu0 %v4612
    %v4614 = vpop.xlane.xlu0 %4613
    %v4615 = vsel %vm1052, %v4597, -inf
    %4616 = vmax.xlane.f32.xlu0 %v4615
    %v4617 = vpop.xlane.xlu0 %4616
    %v4618 = vsel %vm1052, %v4598, -inf
    %4619 = vmax.xlane.f32.xlu0 %v4618
    %v4620 = vpop.xlane.xlu0 %4619
    %v4621 = vsel %vm1052, %v4599, -inf
    %4622 = vmax.xlane.f32.xlu0 %v4621
    %v4623 = vpop.xlane.xlu0 %4622
    %v4624 = vsub.f32 %v4592, %v4602
    %v4625 = vsub.f32 %v4593, %v4605
    %v4626 = vsub.f32 %v4594, %v4608
    %v4627 = vsub.f32 %v4595, %v4611
    %v4628 = vsub.f32 %v4596, %v4614
    %v4629 = vsub.f32 %v4597, %v4617
    %v4630 = vsub.f32 %v4598, %v4620
    %v4631 = vsub.f32 %v4599, %v4623
    %v4632 = vmul.f32 %v4624, 1.442695
    %v4633 = vpow.pop %v4632
    %v4634 = vmul.f32 %v4625, 1.442695
    %v4635 = vpow.pop %v4634
    %v4636 = vmul.f32 %v4626, 1.442695
    %v4637 = vpow.pop %v4636
    %v4638 = vmul.f32 %v4627, 1.442695
    %v4639 = vpow.pop %v4638
    %v4640 = vmul.f32 %v4628, 1.442695
    %v4641 = vpow.pop %v4640
    %v4642 = vmul.f32 %v4629, 1.442695
    %v4643 = vpow.pop %v4642
    %v4644 = vmul.f32 %v4630, 1.442695
    %v4645 = vpow.pop %v4644
    %v4646 = vmul.f32 %v4631, 1.442695
    %v4647 = vpow.pop %v4646
    %v4648 = vsel %vm1052, %v4633, 0.0
    %4649 = vadd.xlane.f32.xlu0 %v4648
    %v4650 = vpop.xlane.xlu0 %4649
    %v4651 = vsel %vm1052, %v4635, 0.0
    %4652 = vadd.xlane.f32.xlu0 %v4651
    %v4653 = vpop.xlane.xlu0 %4652
    %v4654 = vsel %vm1052, %v4637, 0.0
    %4655 = vadd.xlane.f32.xlu0 %v4654
    %v4656 = vpop.xlane.xlu0 %4655
    %v4657 = vsel %vm1052, %v4639, 0.0
    %4658 = vadd.xlane.f32.xlu0 %v4657
    %v4659 = vpop.xlane.xlu0 %4658
    %v4660 = vsel %vm1052, %v4641, 0.0
    %4661 = vadd.xlane.f32.xlu0 %v4660
    %v4662 = vpop.xlane.xlu0 %4661
    %v4663 = vsel %vm1052, %v4643, 0.0
    %4664 = vadd.xlane.f32.xlu0 %v4663
    %v4665 = vpop.xlane.xlu0 %4664
    %v4666 = vsel %vm1052, %v4645, 0.0
    %4667 = vadd.xlane.f32.xlu0 %v4666
    %v4668 = vpop.xlane.xlu0 %4667
    %v4669 = vsel %vm1052, %v4647, 0.0
    %4670 = vadd.xlane.f32.xlu0 %v4669
    %v4671 = vpop.xlane.xlu0 %4670
    %v4672 = vrcp.pop %v4650
    %v4673 = vrcp.pop %v4653
    %v4674 = vrcp.pop %v4656
    %v4675 = vrcp.pop %v4659
    %v4676 = vrcp.pop %v4662
    %v4677 = vrcp.pop %v4665
    %v4678 = vrcp.pop %v4668
    %v4679 = vrcp.pop %v4671
    %v4680 = vmul.f32 %v4633, %v4672
    %v4681 = vmul.f32 %v4635, %v4673
    %v4682 = vmul.f32 %v4637, %v4674
    %v4683 = vmul.f32 %v4639, %v4675
    %v4684 = vmul.f32 %v4641, %v4676
    %v4685 = vmul.f32 %v4643, %v4677
    %v4686 = vmul.f32 %v4645, %v4678
    %v4687 = vmul.f32 %v4647, %v4679
    %v4689 = vsel %vm1052, %v4680, 0
    %4691 = vmatprep.subr.mxu0 0.0
    %4692 = vmatpush1.msra.mxu0 0.0
    %4693 = vmatprep.subr.mxu0 0.0
    %4694 = vmatpush1.msra.mxu0 0.0
    %4695 = vmatprep.subr.mxu0 0.0
    %4696 = vmatpush1.msra.mxu0 0.0
    %4697 = vmatprep.subr.mxu0 0.0
    %4698 = vmatpush1.msra.mxu0 0.0
    %4699 = vmatprep.subr.mxu0 0.0
    %4700 = vmatpush1.msra.mxu0 0.0
    %4701 = vmatprep.subr.mxu0 0.0
    %4702 = vmatpush1.msra.mxu0 0.0
    %4703 = vmatprep.subr.mxu0 0.0
    %4704 = vmatpush1.msra.mxu0 0.0
    %4705 = vmatprep.subr.mxu0 0.0
    %4706 = vmatpush1.msra.mxu0 0.0
    %4707 = vmatprep.subr.mxu0 0.0
    %4708 = vmatpush1.msra.mxu0 0.0
    %4709 = vmatprep.subr.mxu0 0.0
    %4710 = vmatpush1.msra.mxu0 0.0
    %4711 = vmatprep.subr.mxu0 0.0
    %4712 = vmatpush1.msra.mxu0 0.0
    %4713 = vmatprep.subr.mxu0 0.0
    %4714 = vmatpush1.msra.mxu0 0.0
    %4715 = vmatprep.subr.mxu0 0.0
    %4716 = vmatpush1.msra.mxu0 0.0
    %4717 = vmatprep.subr.mxu0 0.0
    %4718 = vmatpush1.msra.mxu0 0.0
    %4719 = vmatprep.subr.mxu0 0.0
    %4720 = vmatpush1.msra.mxu0 0.0
    %4721 = vmatprep.subr.mxu0 0.0
    %4722 = vmatpush1.msra.mxu0 %v3211
    %4723 = vmatprep.subr.mxu0 0.0
    %4724 = vmatpush2.msra.mxu0 0.0
    %4725 = vmatprep.subr.mxu0 0.0
    %4726 = vmatpush2.msra.mxu0 0.0
    %4727 = vmatprep.subr.mxu0 0.0
    %4728 = vmatpush2.msra.mxu0 0.0
    %4729 = vmatprep.subr.mxu0 0.0
    %4730 = vmatpush2.msra.mxu0 0.0
    %4731 = vmatprep.subr.mxu0 0.0
    %4732 = vmatpush2.msra.mxu0 0.0
    %4733 = vmatprep.subr.mxu0 0.0
    %4734 = vmatpush2.msra.mxu0 0.0
    %4735 = vmatprep.subr.mxu0 0.0
    %4736 = vmatpush2.msra.mxu0 0.0
    %4737 = vmatprep.subr.mxu0 0.0
    %4738 = vmatpush2.msra.mxu0 0.0
    %4739 = vmatprep.subr.mxu0 0.0
    %4740 = vmatpush2.msra.mxu0 0.0
    %4741 = vmatprep.subr.mxu0 0.0
    %4742 = vmatpush2.msra.mxu0 0.0
    %4743 = vmatprep.subr.mxu0 0.0
    %4744 = vmatpush2.msra.mxu0 0.0
    %4745 = vmatprep.subr.mxu0 0.0
    %4746 = vmatpush2.msra.mxu0 0.0
    %4747 = vmatprep.subr.mxu0 0.0
    %4748 = vmatpush2.msra.mxu0 0.0
    %4749 = vmatprep.subr.mxu0 0.0
    %4750 = vmatpush2.msra.mxu0 0.0
    %4751 = vmatprep.subr.mxu0 0.0
    %4752 = vmatpush2.msra.mxu0 0.0
    %4753 = vmatprep.subr.mxu0 0.0
    %4754 = vmatpush2.msra.mxu0 0.0
    %4755 = vmatprep.mubr.f32.mxu0 0.0
    %4756 = vmatmul.mubr.f32.gmra.mxu0 %v4689
    %v4757 = vpop.f32.mrf.mxu0
    %v4758 = vadd.f32 0.0, %v4757
    %v4759 = vpop.f32.mrf.mxu0
    %4760 = vdwg.mxu0
    %v4762 = vsel %vm1052, %v4681, 0
    %4764 = vmatprep.subr.mxu0 0.0
    %4765 = vmatpush1.msra.mxu0 0.0
    %4766 = vmatprep.subr.mxu0 0.0
    %4767 = vmatpush1.msra.mxu0 0.0
    %4768 = vmatprep.subr.mxu0 0.0
    %4769 = vmatpush1.msra.mxu0 0.0
    %4770 = vmatprep.subr.mxu0 0.0
    %4771 = vmatpush1.msra.mxu0 0.0
    %4772 = vmatprep.subr.mxu0 0.0
    %4773 = vmatpush1.msra.mxu0 0.0
    %4774 = vmatprep.subr.mxu0 0.0
    %4775 = vmatpush1.msra.mxu0 0.0
    %4776 = vmatprep.subr.mxu0 0.0
    %4777 = vmatpush1.msra.mxu0 0.0
    %4778 = vmatprep.subr.mxu0 0.0
    %4779 = vmatpush1.msra.mxu0 0.0
    %4780 = vmatprep.subr.mxu0 0.0
    %4781 = vmatpush1.msra.mxu0 0.0
    %4782 = vmatprep.subr.mxu0 0.0
    %4783 = vmatpush1.msra.mxu0 0.0
    %4784 = vmatprep.subr.mxu0 0.0
    %4785 = vmatpush1.msra.mxu0 0.0
    %4786 = vmatprep.subr.mxu0 0.0
    %4787 = vmatpush1.msra.mxu0 0.0
    %4788 = vmatprep.subr.mxu0 0.0
    %4789 = vmatpush1.msra.mxu0 0.0
    %4790 = vmatprep.subr.mxu0 0.0
    %4791 = vmatpush1.msra.mxu0 0.0
    %4792 = vmatprep.subr.mxu0 0.0
    %4793 = vmatpush1.msra.mxu0 0.0
    %4794 = vmatprep.subr.mxu0 0.0
    %4795 = vmatpush1.msra.mxu0 %v3216
    %4796 = vmatprep.subr.mxu0 0.0
    %4797 = vmatpush2.msra.mxu0 0.0
    %4798 = vmatprep.subr.mxu0 0.0
    %4799 = vmatpush2.msra.mxu0 0.0
    %4800 = vmatprep.subr.mxu0 0.0
    %4801 = vmatpush2.msra.mxu0 0.0
    %4802 = vmatprep.subr.mxu0 0.0
    %4803 = vmatpush2.msra.mxu0 0.0
    %4804 = vmatprep.subr.mxu0 0.0
    %4805 = vmatpush2.msra.mxu0 0.0
    %4806 = vmatprep.subr.mxu0 0.0
    %4807 = vmatpush2.msra.mxu0 0.0
    %4808 = vmatprep.subr.mxu0 0.0
    %4809 = vmatpush2.msra.mxu0 0.0
    %4810 = vmatprep.subr.mxu0 0.0
    %4811 = vmatpush2.msra.mxu0 0.0
    %4812 = vmatprep.subr.mxu0 0.0
    %4813 = vmatpush2.msra.mxu0 0.0
    %4814 = vmatprep.subr.mxu0 0.0
    %4815 = vmatpush2.msra.mxu0 0.0
    %4816 = vmatprep.subr.mxu0 0.0
    %4817 = vmatpush2.msra.mxu0 0.0
    %4818 = vmatprep.subr.mxu0 0.0
    %4819 = vmatpush2.msra.mxu0 0.0
    %4820 = vmatprep.subr.mxu0 0.0
    %4821 = vmatpush2.msra.mxu0 0.0
    %4822 = vmatprep.subr.mxu0 0.0
    %4823 = vmatpush2.msra.mxu0 0.0
    %4824 = vmatprep.subr.mxu0 0.0
    %4825 = vmatpush2.msra.mxu0 0.0
    %4826 = vmatprep.subr.mxu0 0.0
    %4827 = vmatpush2.msra.mxu0 0.0
    %4828 = vmatprep.mubr.f32.mxu0 0.0
    %4829 = vmatmul.mubr.f32.gmra.mxu0 %v4762
    %v4830 = vpop.f32.mrf.mxu0
    %v4831 = vadd.f32 0.0, %v4830
    %v4832 = vpop.f32.mrf.mxu0
    %4833 = vdwg.mxu0
    %v4835 = vsel %vm1052, %v4682, 0
    %4837 = vmatprep.subr.mxu0 0.0
    %4838 = vmatpush1.msra.mxu0 0.0
    %4839 = vmatprep.subr.mxu0 0.0
    %4840 = vmatpush1.msra.mxu0 0.0
    %4841 = vmatprep.subr.mxu0 0.0
    %4842 = vmatpush1.msra.mxu0 0.0
    %4843 = vmatprep.subr.mxu0 0.0
    %4844 = vmatpush1.msra.mxu0 0.0
    %4845 = vmatprep.subr.mxu0 0.0
    %4846 = vmatpush1.msra.mxu0 0.0
    %4847 = vmatprep.subr.mxu0 0.0
    %4848 = vmatpush1.msra.mxu0 0.0
    %4849 = vmatprep.subr.mxu0 0.0
    %4850 = vmatpush1.msra.mxu0 0.0
    %4851 = vmatprep.subr.mxu0 0.0
    %4852 = vmatpush1.msra.mxu0 0.0
    %4853 = vmatprep.subr.mxu0 0.0
    %4854 = vmatpush1.msra.mxu0 0.0
    %4855 = vmatprep.subr.mxu0 0.0
    %4856 = vmatpush1.msra.mxu0 0.0
    %4857 = vmatprep.subr.mxu0 0.0
    %4858 = vmatpush1.msra.mxu0 0.0
    %4859 = vmatprep.subr.mxu0 0.0
    %4860 = vmatpush1.msra.mxu0 0.0
    %4861 = vmatprep.subr.mxu0 0.0
    %4862 = vmatpush1.msra.mxu0 0.0
    %4863 = vmatprep.subr.mxu0 0.0
    %4864 = vmatpush1.msra.mxu0 0.0
    %4865 = vmatprep.subr.mxu0 0.0
    %4866 = vmatpush1.msra.mxu0 0.0
    %4867 = vmatprep.subr.mxu0 0.0
    %4868 = vmatpush1.msra.mxu0 %v3466
    %4869 = vmatprep.subr.mxu0 0.0
    %4870 = vmatpush2.msra.mxu0 0.0
    %4871 = vmatprep.subr.mxu0 0.0
    %4872 = vmatpush2.msra.mxu0 0.0
    %4873 = vmatprep.subr.mxu0 0.0
    %4874 = vmatpush2.msra.mxu0 0.0
    %4875 = vmatprep.subr.mxu0 0.0
    %4876 = vmatpush2.msra.mxu0 0.0
    %4877 = vmatprep.subr.mxu0 0.0
    %4878 = vmatpush2.msra.mxu0 0.0
    %4879 = vmatprep.subr.mxu0 0.0
    %4880 = vmatpush2.msra.mxu0 0.0
    %4881 = vmatprep.subr.mxu0 0.0
    %4882 = vmatpush2.msra.mxu0 0.0
    %4883 = vmatprep.subr.mxu0 0.0
    %4884 = vmatpush2.msra.mxu0 0.0
    %4885 = vmatprep.subr.mxu0 0.0
    %4886 = vmatpush2.msra.mxu0 0.0
    %4887 = vmatprep.subr.mxu0 0.0
    %4888 = vmatpush2.msra.mxu0 0.0
    %4889 = vmatprep.subr.mxu0 0.0
    %4890 = vmatpush2.msra.mxu0 0.0
    %4891 = vmatprep.subr.mxu0 0.0
    %4892 = vmatpush2.msra.mxu0 0.0
    %4893 = vmatprep.subr.mxu0 0.0
    %4894 = vmatpush2.msra.mxu0 0.0
    %4895 = vmatprep.subr.mxu0 0.0
    %4896 = vmatpush2.msra.mxu0 0.0
    %4897 = vmatprep.subr.mxu0 0.0
    %4898 = vmatpush2.msra.mxu0 0.0
    %4899 = vmatprep.subr.mxu0 0.0
    %4900 = vmatpush2.msra.mxu0 0.0
    %4901 = vmatprep.mubr.f32.mxu0 0.0
    %4902 = vmatmul.mubr.f32.gmra.mxu0 %v4835
    %v4903 = vpop.f32.mrf.mxu0
    %v4904 = vadd.f32 0.0, %v4903
    %v4905 = vpop.f32.mrf.mxu0
    %4906 = vdwg.mxu0
    %v4908 = vsel %vm1052, %v4683, 0
    %4910 = vmatprep.subr.mxu0 0.0
    %4911 = vmatpush1.msra.mxu0 0.0
    %4912 = vmatprep.subr.mxu0 0.0
    %4913 = vmatpush1.msra.mxu0 0.0
    %4914 = vmatprep.subr.mxu0 0.0
    %4915 = vmatpush1.msra.mxu0 0.0
    %4916 = vmatprep.subr.mxu0 0.0
    %4917 = vmatpush1.msra.mxu0 0.0
    %4918 = vmatprep.subr.mxu0 0.0
    %4919 = vmatpush1.msra.mxu0 0.0
    %4920 = vmatprep.subr.mxu0 0.0
    %4921 = vmatpush1.msra.mxu0 0.0
    %4922 = vmatprep.subr.mxu0 0.0
    %4923 = vmatpush1.msra.mxu0 0.0
    %4924 = vmatprep.subr.mxu0 0.0
    %4925 = vmatpush1.msra.mxu0 0.0
    %4926 = vmatprep.subr.mxu0 0.0
    %4927 = vmatpush1.msra.mxu0 0.0
    %4928 = vmatprep.subr.mxu0 0.0
    %4929 = vmatpush1.msra.mxu0 0.0
    %4930 = vmatprep.subr.mxu0 0.0
    %4931 = vmatpush1.msra.mxu0 0.0
    %4932 = vmatprep.subr.mxu0 0.0
    %4933 = vmatpush1.msra.mxu0 0.0
    %4934 = vmatprep.subr.mxu0 0.0
    %4935 = vmatpush1.msra.mxu0 0.0
    %4936 = vmatprep.subr.mxu0 0.0
    %4937 = vmatpush1.msra.mxu0 0.0
    %4938 = vmatprep.subr.mxu0 0.0
    %4939 = vmatpush1.msra.mxu0 0.0
    %4940 = vmatprep.subr.mxu0 0.0
    %4941 = vmatpush1.msra.mxu0 %v3471
    %4942 = vmatprep.subr.mxu0 0.0
    %4943 = vmatpush2.msra.mxu0 0.0
    %4944 = vmatprep.subr.mxu0 0.0
    %4945 = vmatpush2.msra.mxu0 0.0
    %4946 = vmatprep.subr.mxu0 0.0
    %4947 = vmatpush2.msra.mxu0 0.0
    %4948 = vmatprep.subr.mxu0 0.0
    %4949 = vmatpush2.msra.mxu0 0.0
    %4950 = vmatprep.subr.mxu0 0.0
    %4951 = vmatpush2.msra.mxu0 0.0
    %4952 = vmatprep.subr.mxu0 0.0
    %4953 = vmatpush2.msra.mxu0 0.0
    %4954 = vmatprep.subr.mxu0 0.0
    %4955 = vmatpush2.msra.mxu0 0.0
    %4956 = vmatprep.subr.mxu0 0.0
    %4957 = vmatpush2.msra.mxu0 0.0
    %4958 = vmatprep.subr.mxu0 0.0
    %4959 = vmatpush2.msra.mxu0 0.0
    %4960 = vmatprep.subr.mxu0 0.0
    %4961 = vmatpush2.msra.mxu0 0.0
    %4962 = vmatprep.subr.mxu0 0.0
    %4963 = vmatpush2.msra.mxu0 0.0
    %4964 = vmatprep.subr.mxu0 0.0
    %4965 = vmatpush2.msra.mxu0 0.0
    %4966 = vmatprep.subr.mxu0 0.0
    %4967 = vmatpush2.msra.mxu0 0.0
    %4968 = vmatprep.subr.mxu0 0.0
    %4969 = vmatpush2.msra.mxu0 0.0
    %4970 = vmatprep.subr.mxu0 0.0
    %4971 = vmatpush2.msra.mxu0 0.0
    %4972 = vmatprep.subr.mxu0 0.0
    %4973 = vmatpush2.msra.mxu0 0.0
    %4974 = vmatprep.mubr.f32.mxu0 0.0
    %4975 = vmatmul.mubr.f32.gmra.mxu0 %v4908
    %v4976 = vpop.f32.mrf.mxu0
    %v4977 = vadd.f32 0.0, %v4976
    %v4978 = vpop.f32.mrf.mxu0
    %4979 = vdwg.mxu0
    %v4981 = vsel %vm1052, %v4684, 0
    %4983 = vmatprep.subr.mxu0 0.0
    %4984 = vmatpush1.msra.mxu0 0.0
    %4985 = vmatprep.subr.mxu0 0.0
    %4986 = vmatpush1.msra.mxu0 0.0
    %4987 = vmatprep.subr.mxu0 0.0
    %4988 = vmatpush1.msra.mxu0 0.0
    %4989 = vmatprep.subr.mxu0 0.0
    %4990 = vmatpush1.msra.mxu0 0.0
    %4991 = vmatprep.subr.mxu0 0.0
    %4992 = vmatpush1.msra.mxu0 0.0
    %4993 = vmatprep.subr.mxu0 0.0
    %4994 = vmatpush1.msra.mxu0 0.0
    %4995 = vmatprep.subr.mxu0 0.0
    %4996 = vmatpush1.msra.mxu0 0.0
    %4997 = vmatprep.subr.mxu0 0.0
    %4998 = vmatpush1.msra.mxu0 0.0
    %4999 = vmatprep.subr.mxu0 0.0
    %5000 = vmatpush1.msra.mxu0 0.0
    %5001 = vmatprep.subr.mxu0 0.0
    %5002 = vmatpush1.msra.mxu0 0.0
    %5003 = vmatprep.subr.mxu0 0.0
    %5004 = vmatpush1.msra.mxu0 0.0
    %5005 = vmatprep.subr.mxu0 0.0
    %5006 = vmatpush1.msra.mxu0 0.0
    %5007 = vmatprep.subr.mxu0 0.0
    %5008 = vmatpush1.msra.mxu0 0.0
    %5009 = vmatprep.subr.mxu0 0.0
    %5010 = vmatpush1.msra.mxu0 0.0
    %5011 = vmatprep.subr.mxu0 0.0
    %5012 = vmatpush1.msra.mxu0 0.0
    %5013 = vmatprep.subr.mxu0 0.0
    %5014 = vmatpush1.msra.mxu0 %v3721
    %5015 = vmatprep.subr.mxu0 0.0
    %5016 = vmatpush2.msra.mxu0 0.0
    %5017 = vmatprep.subr.mxu0 0.0
    %5018 = vmatpush2.msra.mxu0 0.0
    %5019 = vmatprep.subr.mxu0 0.0
    %5020 = vmatpush2.msra.mxu0 0.0
    %5021 = vmatprep.subr.mxu0 0.0
    %5022 = vmatpush2.msra.mxu0 0.0
    %5023 = vmatprep.subr.mxu0 0.0
    %5024 = vmatpush2.msra.mxu0 0.0
    %5025 = vmatprep.subr.mxu0 0.0
    %5026 = vmatpush2.msra.mxu0 0.0
    %5027 = vmatprep.subr.mxu0 0.0
    %5028 = vmatpush2.msra.mxu0 0.0
    %5029 = vmatprep.subr.mxu0 0.0
    %5030 = vmatpush2.msra.mxu0 0.0
    %5031 = vmatprep.subr.mxu0 0.0
    %5032 = vmatpush2.msra.mxu0 0.0
    %5033 = vmatprep.subr.mxu0 0.0
    %5034 = vmatpush2.msra.mxu0 0.0
    %5035 = vmatprep.subr.mxu0 0.0
    %5036 = vmatpush2.msra.mxu0 0.0
    %5037 = vmatprep.subr.mxu0 0.0
    %5038 = vmatpush2.msra.mxu0 0.0
    %5039 = vmatprep.subr.mxu0 0.0
    %5040 = vmatpush2.msra.mxu0 0.0
    %5041 = vmatprep.subr.mxu0 0.0
    %5042 = vmatpush2.msra.mxu0 0.0
    %5043 = vmatprep.subr.mxu0 0.0
    %5044 = vmatpush2.msra.mxu0 0.0
    %5045 = vmatprep.subr.mxu0 0.0
    %5046 = vmatpush2.msra.mxu0 0.0
    %5047 = vmatprep.mubr.f32.mxu0 0.0
    %5048 = vmatmul.mubr.f32.gmra.mxu0 %v4981
    %v5049 = vpop.f32.mrf.mxu0
    %v5050 = vadd.f32 0.0, %v5049
    %v5051 = vpop.f32.mrf.mxu0
    %5052 = vdwg.mxu0
    %v5054 = vsel %vm1052, %v4685, 0
    %5056 = vmatprep.subr.mxu0 0.0
    %5057 = vmatpush1.msra.mxu0 0.0
    %5058 = vmatprep.subr.mxu0 0.0
    %5059 = vmatpush1.msra.mxu0 0.0
    %5060 = vmatprep.subr.mxu0 0.0
    %5061 = vmatpush1.msra.mxu0 0.0
    %5062 = vmatprep.subr.mxu0 0.0
    %5063 = vmatpush1.msra.mxu0 0.0
    %5064 = vmatprep.subr.mxu0 0.0
    %5065 = vmatpush1.msra.mxu0 0.0
    %5066 = vmatprep.subr.mxu0 0.0
    %5067 = vmatpush1.msra.mxu0 0.0
    %5068 = vmatprep.subr.mxu0 0.0
    %5069 = vmatpush1.msra.mxu0 0.0
    %5070 = vmatprep.subr.mxu0 0.0
    %5071 = vmatpush1.msra.mxu0 0.0
    %5072 = vmatprep.subr.mxu0 0.0
    %5073 = vmatpush1.msra.mxu0 0.0
    %5074 = vmatprep.subr.mxu0 0.0
    %5075 = vmatpush1.msra.mxu0 0.0
    %5076 = vmatprep.subr.mxu0 0.0
    %5077 = vmatpush1.msra.mxu0 0.0
    %5078 = vmatprep.subr.mxu0 0.0
    %5079 = vmatpush1.msra.mxu0 0.0
    %5080 = vmatprep.subr.mxu0 0.0
    %5081 = vmatpush1.msra.mxu0 0.0
    %5082 = vmatprep.subr.mxu0 0.0
    %5083 = vmatpush1.msra.mxu0 0.0
    %5084 = vmatprep.subr.mxu0 0.0
    %5085 = vmatpush1.msra.mxu0 0.0
    %5086 = vmatprep.subr.mxu0 0.0
    %5087 = vmatpush1.msra.mxu0 %v3726
    %5088 = vmatprep.subr.mxu0 0.0
    %5089 = vmatpush2.msra.mxu0 0.0
    %5090 = vmatprep.subr.mxu0 0.0
    %5091 = vmatpush2.msra.mxu0 0.0
    %5092 = vmatprep.subr.mxu0 0.0
    %5093 = vmatpush2.msra.mxu0 0.0
    %5094 = vmatprep.subr.mxu0 0.0
    %5095 = vmatpush2.msra.mxu0 0.0
    %5096 = vmatprep.subr.mxu0 0.0
    %5097 = vmatpush2.msra.mxu0 0.0
    %5098 = vmatprep.subr.mxu0 0.0
    %5099 = vmatpush2.msra.mxu0 0.0
    %5100 = vmatprep.subr.mxu0 0.0
    %5101 = vmatpush2.msra.mxu0 0.0
    %5102 = vmatprep.subr.mxu0 0.0
    %5103 = vmatpush2.msra.mxu0 0.0
    %5104 = vmatprep.subr.mxu0 0.0
    %5105 = vmatpush2.msra.mxu0 0.0
    %5106 = vmatprep.subr.mxu0 0.0
    %5107 = vmatpush2.msra.mxu0 0.0
    %5108 = vmatprep.subr.mxu0 0.0
    %5109 = vmatpush2.msra.mxu0 0.0
    %5110 = vmatprep.subr.mxu0 0.0
    %5111 = vmatpush2.msra.mxu0 0.0
    %5112 = vmatprep.subr.mxu0 0.0
    %5113 = vmatpush2.msra.mxu0 0.0
    %5114 = vmatprep.subr.mxu0 0.0
    %5115 = vmatpush2.msra.mxu0 0.0
    %5116 = vmatprep.subr.mxu0 0.0
    %5117 = vmatpush2.msra.mxu0 0.0
    %5118 = vmatprep.subr.mxu0 0.0
    %5119 = vmatpush2.msra.mxu0 0.0
    %5120 = vmatprep.mubr.f32.mxu0 0.0
    %5121 = vmatmul.mubr.f32.gmra.mxu0 %v5054
    %v5122 = vpop.f32.mrf.mxu0
    %v5123 = vadd.f32 0.0, %v5122
    %v5124 = vpop.f32.mrf.mxu0
    %5125 = vdwg.mxu0
    %v5127 = vsel %vm1052, %v4686, 0
    %5129 = vmatprep.subr.mxu0 0.0
    %5130 = vmatpush1.msra.mxu0 0.0
    %5131 = vmatprep.subr.mxu0 0.0
    %5132 = vmatpush1.msra.mxu0 0.0
    %5133 = vmatprep.subr.mxu0 0.0
    %5134 = vmatpush1.msra.mxu0 0.0
    %5135 = vmatprep.subr.mxu0 0.0
    %5136 = vmatpush1.msra.mxu0 0.0
    %5137 = vmatprep.subr.mxu0 0.0
    %5138 = vmatpush1.msra.mxu0 0.0
    %5139 = vmatprep.subr.mxu0 0.0
    %5140 = vmatpush1.msra.mxu0 0.0
    %5141 = vmatprep.subr.mxu0 0.0
    %5142 = vmatpush1.msra.mxu0 0.0
    %5143 = vmatprep.subr.mxu0 0.0
    %5144 = vmatpush1.msra.mxu0 0.0
    %5145 = vmatprep.subr.mxu0 0.0
    %5146 = vmatpush1.msra.mxu0 0.0
    %5147 = vmatprep.subr.mxu0 0.0
    %5148 = vmatpush1.msra.mxu0 0.0
    %5149 = vmatprep.subr.mxu0 0.0
    %5150 = vmatpush1.msra.mxu0 0.0
    %5151 = vmatprep.subr.mxu0 0.0
    %5152 = vmatpush1.msra.mxu0 0.0
    %5153 = vmatprep.subr.mxu0 0.0
    %5154 = vmatpush1.msra.mxu0 0.0
    %5155 = vmatprep.subr.mxu0 0.0
    %5156 = vmatpush1.msra.mxu0 0.0
    %5157 = vmatprep.subr.mxu0 0.0
    %5158 = vmatpush1.msra.mxu0 0.0
    %5159 = vmatprep.subr.mxu0 0.0
    %5160 = vmatpush1.msra.mxu0 %v3976
    %5161 = vmatprep.subr.mxu0 0.0
    %5162 = vmatpush2.msra.mxu0 0.0
    %5163 = vmatprep.subr.mxu0 0.0
    %5164 = vmatpush2.msra.mxu0 0.0
    %5165 = vmatprep.subr.mxu0 0.0
    %5166 = vmatpush2.msra.mxu0 0.0
    %5167 = vmatprep.subr.mxu0 0.0
    %5168 = vmatpush2.msra.mxu0 0.0
    %5169 = vmatprep.subr.mxu0 0.0
    %5170 = vmatpush2.msra.mxu0 0.0
    %5171 = vmatprep.subr.mxu0 0.0
    %5172 = vmatpush2.msra.mxu0 0.0
    %5173 = vmatprep.subr.mxu0 0.0
    %5174 = vmatpush2.msra.mxu0 0.0
    %5175 = vmatprep.subr.mxu0 0.0
    %5176 = vmatpush2.msra.mxu0 0.0
    %5177 = vmatprep.subr.mxu0 0.0
    %5178 = vmatpush2.msra.mxu0 0.0
    %5179 = vmatprep.subr.mxu0 0.0
    %5180 = vmatpush2.msra.mxu0 0.0
    %5181 = vmatprep.subr.mxu0 0.0
    %5182 = vmatpush2.msra.mxu0 0.0
    %5183 = vmatprep.subr.mxu0 0.0
    %5184 = vmatpush2.msra.mxu0 0.0
    %5185 = vmatprep.subr.mxu0 0.0
    %5186 = vmatpush2.msra.mxu0 0.0
    %5187 = vmatprep.subr.mxu0 0.0
    %5188 = vmatpush2.msra.mxu0 0.0
    %5189 = vmatprep.subr.mxu0 0.0
    %5190 = vmatpush2.msra.mxu0 0.0
    %5191 = vmatprep.subr.mxu0 0.0
    %5192 = vmatpush2.msra.mxu0 0.0
    %5193 = vmatprep.mubr.f32.mxu0 0.0
    %5194 = vmatmul.mubr.f32.gmra.mxu0 %v5127
    %v5195 = vpop.f32.mrf.mxu0
    %v5196 = vadd.f32 0.0, %v5195
    %v5197 = vpop.f32.mrf.mxu0
    %5198 = vdwg.mxu0
    %v5200 = vsel %vm1052, %v4687, 0
    %5202 = vmatprep.subr.mxu0 0.0
    %5203 = vmatpush1.msra.mxu0 0.0
    %5204 = vmatprep.subr.mxu0 0.0
    %5205 = vmatpush1.msra.mxu0 0.0
    %5206 = vmatprep.subr.mxu0 0.0
    %5207 = vmatpush1.msra.mxu0 0.0
    %5208 = vmatprep.subr.mxu0 0.0
    %5209 = vmatpush1.msra.mxu0 0.0
    %5210 = vmatprep.subr.mxu0 0.0
    %5211 = vmatpush1.msra.mxu0 0.0
    %5212 = vmatprep.subr.mxu0 0.0
    %5213 = vmatpush1.msra.mxu0 0.0
    %5214 = vmatprep.subr.mxu0 0.0
    %5215 = vmatpush1.msra.mxu0 0.0
    %5216 = vmatprep.subr.mxu0 0.0
    %5217 = vmatpush1.msra.mxu0 0.0
    %5218 = vmatprep.subr.mxu0 0.0
    %5219 = vmatpush1.msra.mxu0 0.0
    %5220 = vmatprep.subr.mxu0 0.0
    %5221 = vmatpush1.msra.mxu0 0.0
    %5222 = vmatprep.subr.mxu0 0.0
    %5223 = vmatpush1.msra.mxu0 0.0
    %5224 = vmatprep.subr.mxu0 0.0
    %5225 = vmatpush1.msra.mxu0 0.0
    %5226 = vmatprep.subr.mxu0 0.0
    %5227 = vmatpush1.msra.mxu0 0.0
    %5228 = vmatprep.subr.mxu0 0.0
    %5229 = vmatpush1.msra.mxu0 0.0
    %5230 = vmatprep.subr.mxu0 0.0
    %5231 = vmatpush1.msra.mxu0 0.0
    %5232 = vmatprep.subr.mxu0 0.0
    %5233 = vmatpush1.msra.mxu0 %v3981
    %5234 = vmatprep.subr.mxu0 0.0
    %5235 = vmatpush2.msra.mxu0 0.0
    %5236 = vmatprep.subr.mxu0 0.0
    %5237 = vmatpush2.msra.mxu0 0.0
    %5238 = vmatprep.subr.mxu0 0.0
    %5239 = vmatpush2.msra.mxu0 0.0
    %5240 = vmatprep.subr.mxu0 0.0
    %5241 = vmatpush2.msra.mxu0 0.0
    %5242 = vmatprep.subr.mxu0 0.0
    %5243 = vmatpush2.msra.mxu0 0.0
    %5244 = vmatprep.subr.mxu0 0.0
    %5245 = vmatpush2.msra.mxu0 0.0
    %5246 = vmatprep.subr.mxu0 0.0
    %5247 = vmatpush2.msra.mxu0 0.0
    %5248 = vmatprep.subr.mxu0 0.0
    %5249 = vmatpush2.msra.mxu0 0.0
    %5250 = vmatprep.subr.mxu0 0.0
    %5251 = vmatpush2.msra.mxu0 0.0
    %5252 = vmatprep.subr.mxu0 0.0
    %5253 = vmatpush2.msra.mxu0 0.0
    %5254 = vmatprep.subr.mxu0 0.0
    %5255 = vmatpush2.msra.mxu0 0.0
    %5256 = vmatprep.subr.mxu0 0.0
    %5257 = vmatpush2.msra.mxu0 0.0
    %5258 = vmatprep.subr.mxu0 0.0
    %5259 = vmatpush2.msra.mxu0 0.0
    %5260 = vmatprep.subr.mxu0 0.0
    %5261 = vmatpush2.msra.mxu0 0.0
    %5262 = vmatprep.subr.mxu0 0.0
    %5263 = vmatpush2.msra.mxu0 0.0
    %5264 = vmatprep.subr.mxu0 0.0
    %5265 = vmatpush2.msra.mxu0 0.0
    %5266 = vmatprep.mubr.f32.mxu0 0.0
    %5267 = vmatmul.mubr.f32.gmra.mxu0 %v5200
    %v5268 = vpop.f32.mrf.mxu0
    %v5269 = vadd.f32 0.0, %v5268
    %v5270 = vpop.f32.mrf.mxu0
    %5271 = vdwg.mxu0
    %v5272 = vld [vmem:[%s2962 + $0xc] sm:$0x1]
    %s5273 = scalar_lea.vmem %s2, 32
    %v5274 = vld [vmem:[%s5273] sm:$0xff]
    %v5276 = vsel %vm1052, %v4758, 0
    %v5279 = vsel %vm1052, %v4831, 0
    %5281 = vmatprep.subr.mxu0 0.0
    %5282 = vmatpush1.msra.mxu0 0.0
    %5283 = vmatprep.subr.mxu0 0.0
    %5284 = vmatpush1.msra.mxu0 0.0
    %5285 = vmatprep.subr.mxu0 0.0
    %5286 = vmatpush1.msra.mxu0 0.0
    %5287 = vmatprep.subr.mxu0 0.0
    %5288 = vmatpush1.msra.mxu0 0.0
    %5289 = vmatprep.subr.mxu0 0.0
    %5290 = vmatpush1.msra.mxu0 0.0
    %5291 = vmatprep.subr.mxu0 0.0
    %5292 = vmatpush1.msra.mxu0 0.0
    %5293 = vmatprep.subr.mxu0 0.0
    %5294 = vmatpush1.msra.mxu0 0.0
    %5295 = vmatprep.subr.mxu0 0.0
    %5296 = vmatpush1.msra.mxu0 0.0
    %5297 = vmatprep.subr.mxu0 0.0
    %5298 = vmatpush1.msra.mxu0 0.0
    %5299 = vmatprep.subr.mxu0 0.0
    %5300 = vmatpush1.msra.mxu0 0.0
    %5301 = vmatprep.subr.mxu0 0.0
    %5302 = vmatpush1.msra.mxu0 0.0
    %5303 = vmatprep.subr.mxu0 0.0
    %5304 = vmatpush1.msra.mxu0 0.0
    %5305 = vmatprep.subr.mxu0 0.0
    %5306 = vmatpush1.msra.mxu0 0.0
    %5307 = vmatprep.subr.mxu0 0.0
    %5308 = vmatpush1.msra.mxu0 0.0
    %5309 = vmatprep.subr.mxu0 0.0
    %5310 = vmatpush1.msra.mxu0 0.0
    %5311 = vmatprep.subr.mxu0 0.0
    %5312 = vmatpush1.msra.mxu0 %v5274
    %5313 = vmatprep.subr.mxu0 0.0
    %5314 = vmatpush2.msra.mxu0 0.0
    %5315 = vmatprep.subr.mxu0 0.0
    %5316 = vmatpush2.msra.mxu0 0.0
    %5317 = vmatprep.subr.mxu0 0.0
    %5318 = vmatpush2.msra.mxu0 0.0
    %5319 = vmatprep.subr.mxu0 0.0
    %5320 = vmatpush2.msra.mxu0 0.0
    %5321 = vmatprep.subr.mxu0 0.0
    %5322 = vmatpush2.msra.mxu0 0.0
    %5323 = vmatprep.subr.mxu0 0.0
    %5324 = vmatpush2.msra.mxu0 0.0
    %5325 = vmatprep.subr.mxu0 0.0
    %5326 = vmatpush2.msra.mxu0 0.0
    %5327 = vmatprep.subr.mxu0 0.0
    %5328 = vmatpush2.msra.mxu0 0.0
    %5329 = vmatprep.subr.mxu0 0.0
    %5330 = vmatpush2.msra.mxu0 0.0
    %5331 = vmatprep.subr.mxu0 0.0
    %5332 = vmatpush2.msra.mxu0 0.0
    %5333 = vmatprep.subr.mxu0 0.0
    %5334 = vmatpush2.msra.mxu0 0.0
    %5335 = vmatprep.subr.mxu0 0.0
    %5336 = vmatpush2.msra.mxu0 0.0
    %5337 = vmatprep.subr.mxu0 0.0
    %5338 = vmatpush2.msra.mxu0 0.0
    %5339 = vmatprep.subr.mxu0 0.0
    %5340 = vmatpush2.msra.mxu0 0.0
    %5341 = vmatprep.subr.mxu0 0.0
    %5342 = vmatpush2.msra.mxu0 0.0
    %5343 = vmatprep.subr.mxu0 0.0
    %5344 = vmatpush2.msra.mxu0 0.0
    %5345 = vmatprep.mubr.f32.mxu0 0.0
    %5346 = vmatmul.mubr.f32.gmra.mxu0 %v5276
    %v5347 = vpop.f32.mrf.mxu0
    %v5348 = vadd.f32 0.0, %v5347
    %v5349 = vpop.f32.mrf.mxu0
    %5350 = vmatprep.mubr.f32.mxu0 0.0
    %5351 = vmatmul.mubr.f32.gmra.mxu0 %v5279
    %v5352 = vpop.f32.mrf.mxu0
    %v5353 = vadd.f32 0.0, %v5352
    %v5354 = vpop.f32.mrf.mxu0
    %5355 = vdwg.mxu0
    %v5356 = vlaneseq
    %v5357 = vshrl.u32 %v5356, 7
    %v5358 = vsub.s32 0, %v5357
    %v5359 = vrot.slane %v5272, %v5358
    %v5360 = vadd.f32 %v5359, %v5348
    %v5361 = vadd.f32 %v5359, %v5353
    %s5362 = scalar_lea.vmem %s2, 40
    %v5363 = vld [vmem:[%s5362] sm:$0xff]
    %v5365 = vsel %vm1052, %v4904, 0
    %v5368 = vsel %vm1052, %v4977, 0
    %5370 = vmatprep.subr.mxu0 0.0
    %5371 = vmatpush1.msra.mxu0 0.0
    %5372 = vmatprep.subr.mxu0 0.0
    %5373 = vmatpush1.msra.mxu0 0.0
    %5374 = vmatprep.subr.mxu0 0.0
    %5375 = vmatpush1.msra.mxu0 0.0
    %5376 = vmatprep.subr.mxu0 0.0
    %5377 = vmatpush1.msra.mxu0 0.0
    %5378 = vmatprep.subr.mxu0 0.0
    %5379 = vmatpush1.msra.mxu0 0.0
    %5380 = vmatprep.subr.mxu0 0.0
    %5381 = vmatpush1.msra.mxu0 0.0
    %5382 = vmatprep.subr.mxu0 0.0
    %5383 = vmatpush1.msra.mxu0 0.0
    %5384 = vmatprep.subr.mxu0 0.0
    %5385 = vmatpush1.msra.mxu0 0.0
    %5386 = vmatprep.subr.mxu0 0.0
    %5387 = vmatpush1.msra.mxu0 0.0
    %5388 = vmatprep.subr.mxu0 0.0
    %5389 = vmatpush1.msra.mxu0 0.0
    %5390 = vmatprep.subr.mxu0 0.0
    %5391 = vmatpush1.msra.mxu0 0.0
    %5392 = vmatprep.subr.mxu0 0.0
    %5393 = vmatpush1.msra.mxu0 0.0
    %5394 = vmatprep.subr.mxu0 0.0
    %5395 = vmatpush1.msra.mxu0 0.0
    %5396 = vmatprep.subr.mxu0 0.0
    %5397 = vmatpush1.msra.mxu0 0.0
    %5398 = vmatprep.subr.mxu0 0.0
    %5399 = vmatpush1.msra.mxu0 0.0
    %5400 = vmatprep.subr.mxu0 0.0
    %5401 = vmatpush1.msra.mxu0 %v5363
    %5402 = vmatprep.subr.mxu0 0.0
    %5403 = vmatpush2.msra.mxu0 0.0
    %5404 = vmatprep.subr.mxu0 0.0
    %5405 = vmatpush2.msra.mxu0 0.0
    %5406 = vmatprep.subr.mxu0 0.0
    %5407 = vmatpush2.msra.mxu0 0.0
    %5408 = vmatprep.subr.mxu0 0.0
    %5409 = vmatpush2.msra.mxu0 0.0
    %5410 = vmatprep.subr.mxu0 0.0
    %5411 = vmatpush2.msra.mxu0 0.0
    %5412 = vmatprep.subr.mxu0 0.0
    %5413 = vmatpush2.msra.mxu0 0.0
    %5414 = vmatprep.subr.mxu0 0.0
    %5415 = vmatpush2.msra.mxu0 0.0
    %5416 = vmatprep.subr.mxu0 0.0
    %5417 = vmatpush2.msra.mxu0 0.0
    %5418 = vmatprep.subr.mxu0 0.0
    %5419 = vmatpush2.msra.mxu0 0.0
    %5420 = vmatprep.subr.mxu0 0.0
    %5421 = vmatpush2.msra.mxu0 0.0
    %5422 = vmatprep.subr.mxu0 0.0
    %5423 = vmatpush2.msra.mxu0 0.0
    %5424 = vmatprep.subr.mxu0 0.0
    %5425 = vmatpush2.msra.mxu0 0.0
    %5426 = vmatprep.subr.mxu0 0.0
    %5427 = vmatpush2.msra.mxu0 0.0
    %5428 = vmatprep.subr.mxu0 0.0
    %5429 = vmatpush2.msra.mxu0 0.0
    %5430 = vmatprep.subr.mxu0 0.0
    %5431 = vmatpush2.msra.mxu0 0.0
    %5432 = vmatprep.subr.mxu0 0.0
    %5433 = vmatpush2.msra.mxu0 0.0
    %5434 = vmatprep.mubr.f32.mxu0 0.0
    %5435 = vmatmul.mubr.f32.gmra.mxu0 %v5365
    %v5436 = vpop.f32.mrf.mxu0
    %v5437 = vadd.f32 0.0, %v5436
    %v5438 = vpop.f32.mrf.mxu0
    %5439 = vmatprep.mubr.f32.mxu0 0.0
    %5440 = vmatmul.mubr.f32.gmra.mxu0 %v5368
    %v5441 = vpop.f32.mrf.mxu0
    %v5442 = vadd.f32 0.0, %v5441
    %v5443 = vpop.f32.mrf.mxu0
    %5444 = vdwg.mxu0
    %v5445 = vadd.f32 %v5360, %v5437
    %v5446 = vadd.f32 %v5361, %v5442
    %s5447 = scalar_lea.vmem %s2, 48
    %v5448 = vld [vmem:[%s5447] sm:$0xff]
    %v5450 = vsel %vm1052, %v5050, 0
    %v5453 = vsel %vm1052, %v5123, 0
    %5455 = vmatprep.subr.mxu0 0.0
    %5456 = vmatpush1.msra.mxu0 0.0
    %5457 = vmatprep.subr.mxu0 0.0
    %5458 = vmatpush1.msra.mxu0 0.0
    %5459 = vmatprep.subr.mxu0 0.0
    %5460 = vmatpush1.msra.mxu0 0.0
    %5461 = vmatprep.subr.mxu0 0.0
    %5462 = vmatpush1.msra.mxu0 0.0
    %5463 = vmatprep.subr.mxu0 0.0
    %5464 = vmatpush1.msra.mxu0 0.0
    %5465 = vmatprep.subr.mxu0 0.0
    %5466 = vmatpush1.msra.mxu0 0.0
    %5467 = vmatprep.subr.mxu0 0.0
    %5468 = vmatpush1.msra.mxu0 0.0
    %5469 = vmatprep.subr.mxu0 0.0
    %5470 = vmatpush1.msra.mxu0 0.0
    %5471 = vmatprep.subr.mxu0 0.0
    %5472 = vmatpush1.msra.mxu0 0.0
    %5473 = vmatprep.subr.mxu0 0.0
    %5474 = vmatpush1.msra.mxu0 0.0
    %5475 = vmatprep.subr.mxu0 0.0
    %5476 = vmatpush1.msra.mxu0 0.0
    %5477 = vmatprep.subr.mxu0 0.0
    %5478 = vmatpush1.msra.mxu0 0.0
    %5479 = vmatprep.subr.mxu0 0.0
    %5480 = vmatpush1.msra.mxu0 0.0
    %5481 = vmatprep.subr.mxu0 0.0
    %5482 = vmatpush1.msra.mxu0 0.0
    %5483 = vmatprep.subr.mxu0 0.0
    %5484 = vmatpush1.msra.mxu0 0.0
    %5485 = vmatprep.subr.mxu0 0.0
    %5486 = vmatpush1.msra.mxu0 %v5448
    %5487 = vmatprep.subr.mxu0 0.0
    %5488 = vmatpush2.msra.mxu0 0.0
    %5489 = vmatprep.subr.mxu0 0.0
    %5490 = vmatpush2.msra.mxu0 0.0
    %5491 = vmatprep.subr.mxu0 0.0
    %5492 = vmatpush2.msra.mxu0 0.0
    %5493 = vmatprep.subr.mxu0 0.0
    %5494 = vmatpush2.msra.mxu0 0.0
    %5495 = vmatprep.subr.mxu0 0.0
    %5496 = vmatpush2.msra.mxu0 0.0
    %5497 = vmatprep.subr.mxu0 0.0
    %5498 = vmatpush2.msra.mxu0 0.0
    %5499 = vmatprep.subr.mxu0 0.0
    %5500 = vmatpush2.msra.mxu0 0.0
    %5501 = vmatprep.subr.mxu0 0.0
    %5502 = vmatpush2.msra.mxu0 0.0
    %5503 = vmatprep.subr.mxu0 0.0
    %5504 = vmatpush2.msra.mxu0 0.0
    %5505 = vmatprep.subr.mxu0 0.0
    %5506 = vmatpush2.msra.mxu0 0.0
    %5507 = vmatprep.subr.mxu0 0.0
    %5508 = vmatpush2.msra.mxu0 0.0
    %5509 = vmatprep.subr.mxu0 0.0
    %5510 = vmatpush2.msra.mxu0 0.0
    %5511 = vmatprep.subr.mxu0 0.0
    %5512 = vmatpush2.msra.mxu0 0.0
    %5513 = vmatprep.subr.mxu0 0.0
    %5514 = vmatpush2.msra.mxu0 0.0
    %5515 = vmatprep.subr.mxu0 0.0
    %5516 = vmatpush2.msra.mxu0 0.0
    %5517 = vmatprep.subr.mxu0 0.0
    %5518 = vmatpush2.msra.mxu0 0.0
    %5519 = vmatprep.mubr.f32.mxu0 0.0
    %5520 = vmatmul.mubr.f32.gmra.mxu0 %v5450
    %v5521 = vpop.f32.mrf.mxu0
    %v5522 = vadd.f32 0.0, %v5521
    %v5523 = vpop.f32.mrf.mxu0
    %5524 = vmatprep.mubr.f32.mxu0 0.0
    %5525 = vmatmul.mubr.f32.gmra.mxu0 %v5453
    %v5526 = vpop.f32.mrf.mxu0
    %v5527 = vadd.f32 0.0, %v5526
    %v5528 = vpop.f32.mrf.mxu0
    %5529 = vdwg.mxu0
    %v5530 = vadd.f32 %v5445, %v5522
    %v5531 = vadd.f32 %v5446, %v5527
    %s5532 = scalar_lea.vmem %s2, 56
    %v5533 = vld [vmem:[%s5532] sm:$0xff]
    %v5535 = vsel %vm1052, %v5196, 0
    %v5538 = vsel %vm1052, %v5269, 0
    %5540 = vmatprep.subr.mxu0 0.0
    %5541 = vmatpush1.msra.mxu0 0.0
    %5542 = vmatprep.subr.mxu0 0.0
    %5543 = vmatpush1.msra.mxu0 0.0
    %5544 = vmatprep.subr.mxu0 0.0
    %5545 = vmatpush1.msra.mxu0 0.0
    %5546 = vmatprep.subr.mxu0 0.0
    %5547 = vmatpush1.msra.mxu0 0.0
    %5548 = vmatprep.subr.mxu0 0.0
    %5549 = vmatpush1.msra.mxu0 0.0
    %5550 = vmatprep.subr.mxu0 0.0
    %5551 = vmatpush1.msra.mxu0 0.0
    %5552 = vmatprep.subr.mxu0 0.0
    %5553 = vmatpush1.msra.mxu0 0.0
    %5554 = vmatprep.subr.mxu0 0.0
    %5555 = vmatpush1.msra.mxu0 0.0
    %5556 = vmatprep.subr.mxu0 0.0
    %5557 = vmatpush1.msra.mxu0 0.0
    %5558 = vmatprep.subr.mxu0 0.0
    %5559 = vmatpush1.msra.mxu0 0.0
    %5560 = vmatprep.subr.mxu0 0.0
    %5561 = vmatpush1.msra.mxu0 0.0
    %5562 = vmatprep.subr.mxu0 0.0
    %5563 = vmatpush1.msra.mxu0 0.0
    %5564 = vmatprep.subr.mxu0 0.0
    %5565 = vmatpush1.msra.mxu0 0.0
    %5566 = vmatprep.subr.mxu0 0.0
    %5567 = vmatpush1.msra.mxu0 0.0
    %5568 = vmatprep.subr.mxu0 0.0
    %5569 = vmatpush1.msra.mxu0 0.0
    %5570 = vmatprep.subr.mxu0 0.0
    %5571 = vmatpush1.msra.mxu0 %v5533
    %5572 = vmatprep.subr.mxu0 0.0
    %5573 = vmatpush2.msra.mxu0 0.0
    %5574 = vmatprep.subr.mxu0 0.0
    %5575 = vmatpush2.msra.mxu0 0.0
    %5576 = vmatprep.subr.mxu0 0.0
    %5577 = vmatpush2.msra.mxu0 0.0
    %5578 = vmatprep.subr.mxu0 0.0
    %5579 = vmatpush2.msra.mxu0 0.0
    %5580 = vmatprep.subr.mxu0 0.0
    %5581 = vmatpush2.msra.mxu0 0.0
    %5582 = vmatprep.subr.mxu0 0.0
    %5583 = vmatpush2.msra.mxu0 0.0
    %5584 = vmatprep.subr.mxu0 0.0
    %5585 = vmatpush2.msra.mxu0 0.0
    %5586 = vmatprep.subr.mxu0 0.0
    %5587 = vmatpush2.msra.mxu0 0.0
    %5588 = vmatprep.subr.mxu0 0.0
    %5589 = vmatpush2.msra.mxu0 0.0
    %5590 = vmatprep.subr.mxu0 0.0
    %5591 = vmatpush2.msra.mxu0 0.0
    %5592 = vmatprep.subr.mxu0 0.0
    %5593 = vmatpush2.msra.mxu0 0.0
    %5594 = vmatprep.subr.mxu0 0.0
    %5595 = vmatpush2.msra.mxu0 0.0
    %5596 = vmatprep.subr.mxu0 0.0
    %5597 = vmatpush2.msra.mxu0 0.0
    %5598 = vmatprep.subr.mxu0 0.0
    %5599 = vmatpush2.msra.mxu0 0.0
    %5600 = vmatprep.subr.mxu0 0.0
    %5601 = vmatpush2.msra.mxu0 0.0
    %5602 = vmatprep.subr.mxu0 0.0
    %5603 = vmatpush2.msra.mxu0 0.0
    %5604 = vmatprep.mubr.f32.mxu0 0.0
    %5605 = vmatmul.mubr.f32.gmra.mxu0 %v5535
    %v5606 = vpop.f32.mrf.mxu0
    %v5607 = vadd.f32 0.0, %v5606
    %v5608 = vpop.f32.mrf.mxu0
    %5609 = vmatprep.mubr.f32.mxu0 0.0
    %5610 = vmatmul.mubr.f32.gmra.mxu0 %v5538
    %v5611 = vpop.f32.mrf.mxu0
    %v5612 = vadd.f32 0.0, %v5611
    %v5613 = vpop.f32.mrf.mxu0
    %5614 = vdwg.mxu0
    %v5615 = vadd.f32 %v5530, %v5607
    %v5616 = vadd.f32 %v5531, %v5612
    %v5617 = vadd.f32 %v2955, %v5615
    %v5618 = vadd.f32 %v2956, %v5616
    %v5619 = vsel %vm35, %v5617, 0.0
    %5620 = vadd.xlane.f32.xlu0 %v5619
    %v5621 = vpop.xlane.xlu0 %5620
    %v5622 = vsel %vm35, %v5618, 0.0
    %5623 = vadd.xlane.f32.xlu0 %v5622
    %v5624 = vpop.xlane.xlu0 %5623
    %v5625 = vmul.f32 %v5621, %v2693
    %v5626 = vmul.f32 %v5624, %v2693
    %v5627 = vsub.f32 %v5617, %v5625
    %v5628 = vsub.f32 %v5618, %v5626
    %v5629 = vmul.f32 %v5627, %v5627
    %v5630 = vmul.f32 %v5628, %v5628
    %v5631 = vsel %vm35, %v5629, 0.0
    %5632 = vadd.xlane.f32.xlu0 %v5631
    %v5633 = vpop.xlane.xlu0 %5632
    %v5634 = vsel %vm35, %v5630, 0.0
    %5635 = vadd.xlane.f32.xlu0 %v5634
    %v5636 = vpop.xlane.xlu0 %5635
    %v5637 = vmul.f32 %v5633, %v2693
    %v5638 = vmul.f32 %v5636, %v2693
    %v5639 = vadd.f32 %v5637, 1e-05
    %v5640 = vadd.f32 %v5638, 1e-05
    %v5641 = vrsqrt.pop %v5639
    %v5642 = vrsqrt.pop %v5640
    %v5643 = vmul.f32 %v5627, %v5641
    %v5644 = vmul.f32 %v5628, %v5642
    %v5645 = vld [vmem:[%s2962 + $0xf] sm:$0x1]
    %v5646 = vlaneseq
    %v5647 = vshrl.u32 %v5646, 7
    %v5648 = vsub.s32 0, %v5647
    %v5649 = vrot.slane %v5645, %v5648
    %v5650 = vmul.f32 %v5643, %v5649
    %v5651 = vmul.f32 %v5644, %v5649
    %v5652 = vld [vmem:[%s2962 + $0x10] sm:$0x1]
    %v5653 = vlaneseq
    %v5654 = vshrl.u32 %v5653, 7
    %v5655 = vsub.s32 0, %v5654
    %v5656 = vrot.slane %v5652, %v5655
    %v5657 = vadd.f32 %v5650, %v5656
    %v5658 = vadd.f32 %v5651, %v5656
    %s5659 = scalar_lea.vmem %s3, 32
    %v5660 = vld [vmem:[%s5659] sm:$0xff]
    %v5661 = vld [vmem:[%s5659 + $0x8] sm:$0xff]
    %v5662 = vld [vmem:[%s5659 + $0x10] sm:$0xff]
    %v5663 = vld [vmem:[%s5659 + $0x18] sm:$0xff]
    %v5664 = vld [vmem:[%s2962 + $0xd] sm:$0x1]
    %v5665 = vlaneseq
    %v5666 = vshrl.u32 %v5665, 7
    %v5667 = vsub.s32 0, %v5666
    %v5668 = vrot.slane %v5664, %v5667
    %v5670 = vsel %vm35, %v5657, 0
    %v5673 = vsel %vm35, %v5658, 0
    %5675 = vmatprep.subr.mxu0 0.0
    %5676 = vmatpush1.msra.mxu0 0.0
    %5677 = vmatprep.subr.mxu0 0.0
    %5678 = vmatpush1.msra.mxu0 0.0
    %5679 = vmatprep.subr.mxu0 0.0
    %5680 = vmatpush1.msra.mxu0 0.0
    %5681 = vmatprep.subr.mxu0 0.0
    %5682 = vmatpush1.msra.mxu0 0.0
    %5683 = vmatprep.subr.mxu0 0.0
    %5684 = vmatpush1.msra.mxu0 0.0
    %5685 = vmatprep.subr.mxu0 0.0
    %5686 = vmatpush1.msra.mxu0 0.0
    %5687 = vmatprep.subr.mxu0 0.0
    %5688 = vmatpush1.msra.mxu0 0.0
    %5689 = vmatprep.subr.mxu0 0.0
    %5690 = vmatpush1.msra.mxu0 0.0
    %5691 = vmatprep.subr.mxu0 0.0
    %5692 = vmatpush1.msra.mxu0 0.0
    %5693 = vmatprep.subr.mxu0 0.0
    %5694 = vmatpush1.msra.mxu0 0.0
    %5695 = vmatprep.subr.mxu0 0.0
    %5696 = vmatpush1.msra.mxu0 0.0
    %5697 = vmatprep.subr.mxu0 0.0
    %5698 = vmatpush1.msra.mxu0 0.0
    %5699 = vmatprep.subr.mxu0 0.0
    %5700 = vmatpush1.msra.mxu0 %v5663
    %5701 = vmatprep.subr.mxu0 0.0
    %5702 = vmatpush1.msra.mxu0 %v5662
    %5703 = vmatprep.subr.mxu0 0.0
    %5704 = vmatpush1.msra.mxu0 %v5661
    %5705 = vmatprep.subr.mxu0 0.0
    %5706 = vmatpush1.msra.mxu0 %v5660
    %5707 = vmatprep.subr.mxu0 0.0
    %5708 = vmatpush2.msra.mxu0 0.0
    %5709 = vmatprep.subr.mxu0 0.0
    %5710 = vmatpush2.msra.mxu0 0.0
    %5711 = vmatprep.subr.mxu0 0.0
    %5712 = vmatpush2.msra.mxu0 0.0
    %5713 = vmatprep.subr.mxu0 0.0
    %5714 = vmatpush2.msra.mxu0 0.0
    %5715 = vmatprep.subr.mxu0 0.0
    %5716 = vmatpush2.msra.mxu0 0.0
    %5717 = vmatprep.subr.mxu0 0.0
    %5718 = vmatpush2.msra.mxu0 0.0
    %5719 = vmatprep.subr.mxu0 0.0
    %5720 = vmatpush2.msra.mxu0 0.0
    %5721 = vmatprep.subr.mxu0 0.0
    %5722 = vmatpush2.msra.mxu0 0.0
    %5723 = vmatprep.subr.mxu0 0.0
    %5724 = vmatpush2.msra.mxu0 0.0
    %5725 = vmatprep.subr.mxu0 0.0
    %5726 = vmatpush2.msra.mxu0 0.0
    %5727 = vmatprep.subr.mxu0 0.0
    %5728 = vmatpush2.msra.mxu0 0.0
    %5729 = vmatprep.subr.mxu0 0.0
    %5730 = vmatpush2.msra.mxu0 0.0
    %5731 = vmatprep.subr.mxu0 0.0
    %5732 = vmatpush2.msra.mxu0 0.0
    %5733 = vmatprep.subr.mxu0 0.0
    %5734 = vmatpush2.msra.mxu0 0.0
    %5735 = vmatprep.subr.mxu0 0.0
    %5736 = vmatpush2.msra.mxu0 0.0
    %5737 = vmatprep.subr.mxu0 0.0
    %5738 = vmatpush2.msra.mxu0 0.0
    %5739 = vmatprep.mubr.f32.mxu0 0.0
    %5740 = vmatmul.mubr.f32.gmra.mxu0 %v5670
    %v5741 = vpop.f32.mrf.mxu0
    %v5742 = vadd.f32 %v5668, %v5741
    %v5743 = vpop.f32.mrf.mxu0
    %5744 = vmatprep.mubr.f32.mxu0 0.0
    %5745 = vmatmul.mubr.f32.gmra.mxu0 %v5673
    %v5746 = vpop.f32.mrf.mxu0
    %v5747 = vadd.f32 %v5668, %v5746
    %v5748 = vpop.f32.mrf.mxu0
    %5749 = vdwg.mxu0
    %v5750 = vmax.f32 %v5742, 0.0
    %v5751 = vmax.f32 %v5747, 0.0
    %s5752 = scalar_lea.vmem %s4, 64
    %v5753 = vld [vmem:[%s5752] sm:$0xff]
    %v5754 = vld [vmem:[%s5752 + $0x8] sm:$0xff]
    %v5755 = vld [vmem:[%s5752 + $0x10] sm:$0xff]
    %v5756 = vld [vmem:[%s5752 + $0x18] sm:$0xff]
    %v5757 = vld [vmem:[%s5752 + $0x20] sm:$0xff]
    %v5758 = vld [vmem:[%s5752 + $0x28] sm:$0xff]
    %v5759 = vld [vmem:[%s5752 + $0x30] sm:$0xff]
    %v5760 = vld [vmem:[%s5752 + $0x38] sm:$0xff]
    %v5761 = vld [vmem:[%s2962 + $0xe] sm:$0x1]
    %v5762 = vlaneseq
    %v5763 = vshrl.u32 %v5762, 7
    %v5764 = vsub.s32 0, %v5763
    %v5765 = vrot.slane %v5761, %v5764
    %v5767 = vsel %vm2833, %v5750, 0
    %v5770 = vsel %vm2833, %v5751, 0
    %5772 = vmatprep.subr.mxu0 0.0
    %5773 = vmatpush1.msra.mxu0 0.0
    %5774 = vmatprep.subr.mxu0 0.0
    %5775 = vmatpush1.msra.mxu0 0.0
    %5776 = vmatprep.subr.mxu0 0.0
    %5777 = vmatpush1.msra.mxu0 0.0
    %5778 = vmatprep.subr.mxu0 0.0
    %5779 = vmatpush1.msra.mxu0 0.0
    %5780 = vmatprep.subr.mxu0 0.0
    %5781 = vmatpush1.msra.mxu0 0.0
    %5782 = vmatprep.subr.mxu0 0.0
    %5783 = vmatpush1.msra.mxu0 0.0
    %5784 = vmatprep.subr.mxu0 0.0
    %5785 = vmatpush1.msra.mxu0 0.0
    %5786 = vmatprep.subr.mxu0 0.0
    %5787 = vmatpush1.msra.mxu0 0.0
    %5788 = vmatprep.subr.mxu0 0.0
    %5789 = vmatpush1.msra.mxu0 %v5760
    %5790 = vmatprep.subr.mxu0 0.0
    %5791 = vmatpush1.msra.mxu0 %v5759
    %5792 = vmatprep.subr.mxu0 0.0
    %5793 = vmatpush1.msra.mxu0 %v5758
    %5794 = vmatprep.subr.mxu0 0.0
    %5795 = vmatpush1.msra.mxu0 %v5757
    %5796 = vmatprep.subr.mxu0 0.0
    %5797 = vmatpush1.msra.mxu0 %v5756
    %5798 = vmatprep.subr.mxu0 0.0
    %5799 = vmatpush1.msra.mxu0 %v5755
    %5800 = vmatprep.subr.mxu0 0.0
    %5801 = vmatpush1.msra.mxu0 %v5754
    %5802 = vmatprep.subr.mxu0 0.0
    %5803 = vmatpush1.msra.mxu0 %v5753
    %5804 = vmatprep.subr.mxu0 0.0
    %5805 = vmatpush2.msra.mxu0 0.0
    %5806 = vmatprep.subr.mxu0 0.0
    %5807 = vmatpush2.msra.mxu0 0.0
    %5808 = vmatprep.subr.mxu0 0.0
    %5809 = vmatpush2.msra.mxu0 0.0
    %5810 = vmatprep.subr.mxu0 0.0
    %5811 = vmatpush2.msra.mxu0 0.0
    %5812 = vmatprep.subr.mxu0 0.0
    %5813 = vmatpush2.msra.mxu0 0.0
    %5814 = vmatprep.subr.mxu0 0.0
    %5815 = vmatpush2.msra.mxu0 0.0
    %5816 = vmatprep.subr.mxu0 0.0
    %5817 = vmatpush2.msra.mxu0 0.0
    %5818 = vmatprep.subr.mxu0 0.0
    %5819 = vmatpush2.msra.mxu0 0.0
    %5820 = vmatprep.subr.mxu0 0.0
    %5821 = vmatpush2.msra.mxu0 0.0
    %5822 = vmatprep.subr.mxu0 0.0
    %5823 = vmatpush2.msra.mxu0 0.0
    %5824 = vmatprep.subr.mxu0 0.0
    %5825 = vmatpush2.msra.mxu0 0.0
    %5826 = vmatprep.subr.mxu0 0.0
    %5827 = vmatpush2.msra.mxu0 0.0
    %5828 = vmatprep.subr.mxu0 0.0
    %5829 = vmatpush2.msra.mxu0 0.0
    %5830 = vmatprep.subr.mxu0 0.0
    %5831 = vmatpush2.msra.mxu0 0.0
    %5832 = vmatprep.subr.mxu0 0.0
    %5833 = vmatpush2.msra.mxu0 0.0
    %5834 = vmatprep.subr.mxu0 0.0
    %5835 = vmatpush2.msra.mxu0 0.0
    %5836 = vmatprep.mubr.f32.mxu0 0.0
    %5837 = vmatmul.mubr.f32.gmra.mxu0 %v5767
    %v5838 = vpop.f32.mrf.mxu0
    %v5839 = vadd.f32 %v5765, %v5838
    %v5840 = vpop.f32.mrf.mxu0
    %5841 = vmatprep.mubr.f32.mxu0 0.0
    %5842 = vmatmul.mubr.f32.gmra.mxu0 %v5770
    %v5843 = vpop.f32.mrf.mxu0
    %v5844 = vadd.f32 %v5765, %v5843
    %v5845 = vpop.f32.mrf.mxu0
    %5846 = vdwg.mxu0
    %v5847 = vadd.f32 %v5657, %v5839
    %v5848 = vadd.f32 %v5658, %v5844
    %v5849 = vsel %vm35, %v5847, 0.0
    %5850 = vadd.xlane.f32.xlu0 %v5849
    %v5851 = vpop.xlane.xlu0 %5850
    %v5852 = vsel %vm35, %v5848, 0.0
    %5853 = vadd.xlane.f32.xlu0 %v5852
    %v5854 = vpop.xlane.xlu0 %5853
    %v5855 = vmul.f32 %v5851, %v2693
    %v5856 = vmul.f32 %v5854, %v2693
    %v5857 = vsub.f32 %v5847, %v5855
    %v5858 = vsub.f32 %v5848, %v5856
    %v5859 = vmul.f32 %v5857, %v5857
    %v5860 = vmul.f32 %v5858, %v5858
    %v5861 = vsel %vm35, %v5859, 0.0
    %5862 = vadd.xlane.f32.xlu0 %v5861
    %v5863 = vpop.xlane.xlu0 %5862
    %v5864 = vsel %vm35, %v5860, 0.0
    %5865 = vadd.xlane.f32.xlu0 %v5864
    %v5866 = vpop.xlane.xlu0 %5865
    %v5867 = vmul.f32 %v5863, %v2693
    %v5868 = vmul.f32 %v5866, %v2693
    %v5869 = vadd.f32 %v5867, 1e-05
    %v5870 = vadd.f32 %v5868, 1e-05
    %v5871 = vrsqrt.pop %v5869
    %v5872 = vrsqrt.pop %v5870
    %v5873 = vmul.f32 %v5857, %v5871
    %v5874 = vmul.f32 %v5858, %v5872
    %v5875 = vld [vmem:[%s2962 + $0x11] sm:$0x1]
    %v5876 = vlaneseq
    %v5877 = vshrl.u32 %v5876, 7
    %v5878 = vsub.s32 0, %v5877
    %v5879 = vrot.slane %v5875, %v5878
    %v5880 = vmul.f32 %v5873, %v5879
    %v5881 = vmul.f32 %v5874, %v5879
    %v5882 = vld [vmem:[%s2962 + $0x12] sm:$0x1]
    %v5883 = vlaneseq
    %v5884 = vshrl.u32 %v5883, 7
    %v5885 = vsub.s32 0, %v5884
    %v5886 = vrot.slane %v5882, %v5885
    %v5887 = vadd.f32 %v5880, %v5886
    %v5888 = vadd.f32 %v5881, %v5886
    %5889 = vst.msk [vmem:[#allocation2] sm:$0xff] %vm35, %v5887
    %5890 = vst.msk [vmem:[#allocation2 + $0x8] sm:$0xff] %vm35, %v5888
    // Predicated region
    $region26: #{encoder_forward.1} parent=1 // pred_check
      _
    $region27: #{encoder_forward.1} parent=1 // pred_check_branch
      %5892 = sbr.rel (0) target = $region29
    $region28: #{encoder_forward.1} parent=1 // pred_region
      %s5894 = ssub.s32 256, 256
      %5895 = vsyncadd [#allocation3], %s5894
      %s5896 = sshll.u32 [#allocation2], 4
      %s5897 = int_to_ptr.vmem [resolvable:$true] %s5896
      %5902 = dma.vmem_to_hbm [thread:$0]  %s5897, 256, %s6, [#allocation3], 128, 128, 8
    $region29: #{encoder_forward.1} parent=1 // pred_fallthru
      _
    // Predicated region
    $region30: #{encoder_forward.1} parent=1 // pred_check
      _
    $region31: #{encoder_forward.1} parent=1 // pred_check_branch
      %5904 = sbr.rel (0) target = $region33
    $region32: #{encoder_forward.1} parent=1 // pred_region
      %5905 = dma.done [#allocation3], 256
    $region33: #{encoder_forward.1} parent=1 // pred_fallthru
      _
    %5906 = vsyncpa [#allocation3], 1

</llo_original>
